<compile_context>
chip_gen: v7x
topology: tpu7x:2x2x1
jax: 0.10.0
libtpu: 0.0.40
codegen_flags: <defaults>
</compile_context>

<pallas_src>
import functools

import numpy as np
import jax
import jax.numpy as jnp
from jax import lax
from jax.experimental import pallas as pl
from jax.experimental.pallas import tpu as pltpu

NEG_SLOPE = 0.01   # nn.LeakyReLU default
LN_EPS = 1e-5      # nn.LayerNorm default


def _gelu(x):
    # TODO(synk): PyTorch nn.GELU default is the exact-erf form; the tanh
    # approximation is used here (and in the in-script reference) since erf has
    # no guaranteed Mosaic lowering.
    return jax.nn.gelu(x, approximate=True)


# ----------------------------------------------------------------------------
# Kernel 1: depthwise 3x3x3 positional conv + norm1 + window attention + proj
# ----------------------------------------------------------------------------
def _attn_kernel(nW, wh, ww, heads,
                 xw_ref, w3d_ref, b3d_ref, g1_ref, be1_ref,
                 wq_ref, bq_ref, wkv_ref, bkv_ref, rb_ref, wp_ref, bp_ref,
                 o_ref, pad_ref):
    C = xw_ref.shape[4]
    N = wh * ww
    M = nW * N
    hd = C // heads
    scale = float(hd) ** -0.5

    # ---- depthwise 3x3x3 positional-embedding conv over (nW, wh, ww) ----
    # zero scratch every step (tiny, and correct even when the batch axis is
    # sharded across TensorCores), then write the interior.
    pad_ref[...] = jnp.zeros_like(pad_ref)
    xw = xw_ref[0].astype(jnp.float32)                      # (nW, wh, ww, C)
    pad_ref[1:nW + 1, 1:wh + 1, 1:ww + 1, :] = xw

    acc = jnp.zeros((nW, wh, ww, C), jnp.float32)
    for kd in range(3):
        for kh in range(3):
            for kw in range(3):
                w_tap = w3d_ref[kd, kh, kw:kw + 1, :]       # (1, C)
                acc = acc + pad_ref[kd:kd + nW, kh:kh + wh, kw:kw + ww, :] * w_tap
    t = xw + acc + b3d_ref[...]                             # x + win_pos_embed(x)

    # ---- LayerNorm (norm1) over channels ----
    tm = t.reshape(M, C)
    mu = jnp.mean(tm, axis=-1, keepdims=True)
    var = jnp.mean(jnp.square(tm - mu), axis=-1, keepdims=True)
    tn = (tm - mu) * lax.rsqrt(var + LN_EPS)
    tn = tn * g1_ref[...] + be1_ref[...]

    # ---- q / kv projections (single lane-dense matmuls, default precision) ----
    q = (jnp.dot(tn, wq_ref[...], preferred_element_type=jnp.float32)
         + bq_ref[...]) * scale
    kv = jnp.dot(tn, wkv_ref[...], preferred_element_type=jnp.float32) + bkv_ref[...]
    k = kv[:, :C]
    v = kv[:, C:]

    # ---- window attention, per head (2-D / rank-3 batched dots only) ----
    out = jnp.zeros((M, C), jnp.float32)
    for h in range(heads):
        sl = slice(h * hd, (h + 1) * hd)
        q_h = q[:, sl].reshape(nW, N, hd)
        k_h = k[:, sl].reshape(nW, N, hd)
        v_h = v[:, sl].reshape(nW, N, hd)
        logits = jnp.einsum('wnd,wmd->wnm', q_h, k_h,
                            preferred_element_type=jnp.float32)
        logits = logits + rb_ref[h]                         # relative position bias
        m = jnp.max(logits, axis=-1, keepdims=True)
        p = jnp.exp(logits - m)
        a = p / jnp.sum(p, axis=-1, keepdims=True)
        o_h = jnp.einsum('wnm,wmd->wnd', a, v_h,
                         preferred_element_type=jnp.float32)
        # concat_h(o_h) @ Wp  ==  sum_h  o_h @ Wp[h*hd:(h+1)*hd, :]
        out = out + jnp.dot(o_h.reshape(M, hd), wp_ref[sl, :],
                            preferred_element_type=jnp.float32)
    out = out + bp_ref[...]
    o_ref[...] = out[None].astype(o_ref.dtype)


def _attn_windows_pallas(xw, p, heads, rb):
    B, nW, wh, ww, C = xw.shape
    N = wh * ww
    kernel = functools.partial(_attn_kernel, nW, wh, ww, heads)
    return pl.pallas_call(
        kernel,
        out_shape=jax.ShapeDtypeStruct((B, nW * N, C), xw.dtype),
        grid_spec=pltpu.PrefetchScalarGridSpec(
            num_scalar_prefetch=0,
            grid=(B,),
            in_specs=[
                pl.BlockSpec((1, nW, wh, ww, C), lambda b: (b, 0, 0, 0, 0)),
                pl.BlockSpec((3, 3, 3, C), lambda b: (0, 0, 0, 0)),
                pl.BlockSpec((1, C), lambda b: (0, 0)),
                pl.BlockSpec((1, C), lambda b: (0, 0)),
                pl.BlockSpec((1, C), lambda b: (0, 0)),
                pl.BlockSpec((C, C), lambda b: (0, 0)),
                pl.BlockSpec((1, C), lambda b: (0, 0)),
                pl.BlockSpec((C, 2 * C), lambda b: (0, 0)),
                pl.BlockSpec((1, 2 * C), lambda b: (0, 0)),
                pl.BlockSpec((heads, N, N), lambda b: (0, 0, 0)),
                pl.BlockSpec((C, C), lambda b: (0, 0)),
                pl.BlockSpec((1, C), lambda b: (0, 0)),
            ],
            out_specs=pl.BlockSpec((1, nW * N, C), lambda b: (b, 0, 0)),
            scratch_shapes=[pltpu.VMEM((nW + 2, wh + 2, ww + 2, C), jnp.float32)],
        ),
        compiler_params=pltpu.CompilerParams(
            dimension_semantics=("parallel",)),
    )(xw, p['w3d'], p['b3d'], p['g1'], p['be1'],
      p['wq'], p['bq'], p['wkv'], p['bkv'], rb, p['wp'], p['bp'])


# ----------------------------------------------------------------------------
# Kernel 2: conv_fft (1x1 conv + LeakyReLU + 1x1 conv), lane-dense (2C, B*H*Wf)
# ----------------------------------------------------------------------------
def _fft_conv_kernel(x_ref, w1_ref, b1_ref, w2_ref, b2_ref, o_ref):
    x = x_ref[...]                                           # (2C, M)
    y = jnp.dot(w1_ref[...], x, preferred_element_type=jnp.float32) + b1_ref[...]
    y = jnp.where(y > 0, y, NEG_SLOPE * y)
    y = jnp.dot(w2_ref[...], y, preferred_element_type=jnp.float32) + b2_ref[...]
    o_ref[...] = y.astype(o_ref.dtype)


def _fft_conv_pallas(X, p):
    C2, M = X.shape
    return pl.pallas_call(
        _fft_conv_kernel,
        out_shape=jax.ShapeDtypeStruct((C2, M), jnp.float32),
        grid_spec=pltpu.PrefetchScalarGridSpec(
            num_scalar_prefetch=0,
            grid=(1,),
            in_specs=[
                pl.BlockSpec((C2, M), lambda i: (0, 0)),
                pl.BlockSpec((C2, C2), lambda i: (0, 0)),
                pl.BlockSpec((C2, 1), lambda i: (0, 0)),
                pl.BlockSpec((C2, C2), lambda i: (0, 0)),
                pl.BlockSpec((C2, 1), lambda i: (0, 0)),
            ],
            out_specs=pl.BlockSpec((C2, M), lambda i: (0, 0)),
        ),
        compiler_params=pltpu.CompilerParams(
            dimension_semantics=("arbitrary",)),
    )(X, p['wf1'], p['bf1'], p['wf2'], p['bf2'])


# ----------------------------------------------------------------------------
# Kernel 3: norm2 + LeFF (linear1+GELU, depthwise 3x3 conv+GELU, linear2),
#           returning xn + mlp(xn)
# ----------------------------------------------------------------------------
def _leff_kernel(H, W,
                 x_ref, g2_ref, be2_ref, wl1_ref, bl1_ref, wd_ref, bd_ref,
                 wl2_ref, bl2_ref, o_ref, pad_ref):
    HW = x_ref.shape[1]
    C = x_ref.shape[2]
    hidden = wl1_ref.shape[1]

    x = x_ref[0].astype(jnp.float32)                         # (HW, C)
    mu = jnp.mean(x, axis=-1, keepdims=True)
    var = jnp.mean(jnp.square(x - mu), axis=-1, keepdims=True)
    xn = (x - mu) * lax.rsqrt(var + LN_EPS)
    xn = xn * g2_ref[...] + be2_ref[...]                     # norm2(x)

    # linear1 + GELU  (hidden on lanes)
    h = jnp.dot(xn, wl1_ref[...], preferred_element_type=jnp.float32) + bl1_ref[...]
    h = _gelu(h)

    # depthwise 3x3 conv over (H, W)
    pad_ref[...] = jnp.zeros_like(pad_ref)
    pad_ref[1:H + 1, 1:W + 1, :] = h.reshape(H, W, hidden)
    acc = jnp.zeros((H, W, hidden), jnp.float32)
    for kh in range(3):
        for kw in range(3):
            acc = acc + pad_ref[kh:kh + H, kw:kw + W, :] * wd_ref[kh, kw:kw + 1, :]
    acc = _gelu(acc + bd_ref[...])

    # linear2
    y = jnp.dot(acc.reshape(HW, hidden), wl2_ref[...],
                preferred_element_type=jnp.float32) + bl2_ref[...]
    o_ref[...] = (xn + y)[None].astype(o_ref.dtype)


def _leff_pallas(x_res, p, H, W):
    B, HW, C = x_res.shape
    hidden = p['wl1'].shape[1]
    kernel = functools.partial(_leff_kernel, H, W)
    return pl.pallas_call(
        kernel,
        out_shape=jax.ShapeDtypeStruct((B, HW, C), x_res.dtype),
        grid_spec=pltpu.PrefetchScalarGridSpec(
            num_scalar_prefetch=0,
            grid=(B,),
            in_specs=[
                pl.BlockSpec((1, HW, C), lambda b: (b, 0, 0)),
                pl.BlockSpec((1, C), lambda b: (0, 0)),
                pl.BlockSpec((1, C), lambda b: (0, 0)),
                pl.BlockSpec((C, hidden), lambda b: (0, 0)),
                pl.BlockSpec((1, hidden), lambda b: (0, 0)),
                pl.BlockSpec((3, 3, hidden), lambda b: (0, 0, 0)),
                pl.BlockSpec((1, hidden), lambda b: (0, 0)),
                pl.BlockSpec((hidden, C), lambda b: (0, 0)),
                pl.BlockSpec((1, C), lambda b: (0, 0)),
            ],
            out_specs=pl.BlockSpec((1, HW, C), lambda b: (b, 0, 0)),
            scratch_shapes=[pltpu.VMEM((H + 2, W + 2, hidden), jnp.float32)],
        ),
        compiler_params=pltpu.CompilerParams(
            dimension_semantics=("parallel",)),
    )(x_res, p['g2'], p['be2'], p['wl1'], p['bl1'], p['wd'], p['bd'],
      p['wl2'], p['bl2'])


# ----------------------------------------------------------------------------
# Full block forward (wrapper: layout ops + FFT around the Pallas kernels)
# ----------------------------------------------------------------------------
def _relative_position_bias(table, win_size, num_heads):
    wh, ww = win_size
    N = wh * ww
    coords = np.stack(np.meshgrid(np.arange(wh), np.arange(ww), indexing='ij'))
    coords_flat = coords.reshape(2, -1)
    rel = coords_flat[:, :, None] - coords_flat[:, None, :]
    rel = rel.transpose(1, 2, 0).copy()
    rel[..., 0] += wh - 1
    rel[..., 1] += ww - 1
    rel[..., 0] *= 2 * ww - 1
    idx = rel.sum(-1).reshape(-1)                            # (N*N,) static
    bias = table[idx].reshape(N, N, num_heads)
    return jnp.transpose(bias, (2, 0, 1)).astype(jnp.float32)  # (heads, N, N)


def scse_block_forward(x, p, *, win_size, num_heads):
    B, C, H, W = x.shape
    wh, ww = win_size
    if H <= wh:                                              # module win-size adjust
        wh = H
    if W <= ww:
        ww = W
    nW = (H // wh) * (W // ww)
    N = wh * ww

    x_nhwc = jnp.transpose(x, (0, 2, 3, 1))
    shortcut = x_nhwc.reshape(B, H * W, C)

    # window partition (pure layout ops)
    xw = (x_nhwc.reshape(B, H // wh, wh, W // ww, ww, C)
          .transpose(0, 1, 3, 2, 4, 5)
          .reshape(B, nW, wh, ww, C))

    rb = _relative_position_bias(p['rpb_table'], (wh, ww), num_heads)
    attn_out = _attn_windows_pallas(xw, p, num_heads, rb)    # (B, nW*N, C)

    # window reverse + attention residual
    attn_hw = (attn_out.reshape(B, H // wh, W // ww, wh, ww, C)
               .transpose(0, 1, 3, 2, 4, 5)
               .reshape(B, H * W, C))
    x_res = shortcut + attn_hw

    # ---- spectral branch: FFTs in XLA, conv_fft in Pallas ----
    x_res_nchw = x_res.reshape(B, H, W, C).transpose(0, 3, 1, 2)
    xf = jnp.fft.rfft2(x_res_nchw, norm='backward')          # (B, C, H, Wf)
    Wf = xf.shape[-1]
    y_cat = jnp.concatenate([jnp.real(xf), jnp.imag(xf)], axis=1)   # (B, 2C, H, Wf)
    X = y_cat.transpose(1, 0, 2, 3).reshape(2 * C, B * H * Wf)      # lane-dense
    Y = _fft_conv_pallas(X, p)
    y_cat2 = Y.reshape(2 * C, B, H, Wf).transpose(1, 0, 2, 3)
    y_re, y_im = jnp.split(y_cat2, 2, axis=1)
    y_spec = jnp.fft.irfft2(lax.complex(y_re, y_im), s=(H, W), norm='backward')

    # ---- norm2 + LeFF (fused): z = norm2(x_res) + mlp(norm2(x_res)) ----
    z = _leff_pallas(x_res, p, H, W)                         # (B, H*W, C)

    out_nhwc = z.reshape(B, H, W, C) + jnp.transpose(y_spec, (0, 2, 3, 1))
    return jnp.transpose(out_nhwc, (0, 3, 1, 2))             # NCHW


# ----------------------------------------------------------------------------
# Pure-JAX reference (mirrors the PyTorch module, HIGHEST-precision matmuls)
# ----------------------------------------------------------------------------
def _layernorm(x, g, b):
    mu = jnp.mean(x, axis=-1, keepdims=True)
    var = jnp.mean(jnp.square(x - mu), axis=-1, keepdims=True)
    return (x - mu) * lax.rsqrt(var + LN_EPS) * g + b


def reference_forward(x, p, *, win_size, num_heads):
    PREC = lax.Precision.HIGHEST
    B, C, H, W = x.shape
    wh, ww = win_size
    if H <= wh:
        wh = H
    if W <= ww:
        ww = W
    nW = (H // wh) * (W // ww)
    N = wh * ww
    hd = C // num_heads
    scale = hd ** -0.5

    x_nhwc = jnp.transpose(x, (0, 2, 3, 1))
    shortcut = x_nhwc.reshape(B, H * W, C)

    xw = (x_nhwc.reshape(B, H // wh, wh, W // ww, ww, C)
          .transpose(0, 1, 3, 2, 4, 5)
          .reshape(B, nW, wh, ww, C))

    # depthwise 3x3x3 positional conv (cross-correlation, zero pad 1)
    xp = jnp.pad(xw, ((0, 0), (1, 1), (1, 1), (1, 1), (0, 0)))
    conv = jnp.zeros_like(xw)
    for kd in range(3):
        for kh in range(3):
            for kw in range(3):
                conv = conv + (xp[:, kd:kd + nW, kh:kh + wh, kw:kw + ww, :]
                               * p['w3d'][kd, kh, kw, :])
    t = xw + conv + p['b3d'][0]

    t = t.reshape(B * nW, N, C)
    t = _layernorm(t, p['g1'][0], p['be1'][0])

    q = jnp.einsum('bnc,cd->bnd', t, p['wq'], precision=PREC) + p['bq'][0]
    kv = jnp.einsum('bnc,cd->bnd', t, p['wkv'], precision=PREC) + p['bkv'][0]
    k, v = kv[..., :C], kv[..., C:]
    q = q * scale

    qh = q.reshape(B * nW, N, num_heads, hd).transpose(0, 2, 1, 3)
    kh_ = k.reshape(B * nW, N, num_heads, hd).transpose(0, 2, 1, 3)
    vh = v.reshape(B * nW, N, num_heads, hd).transpose(0, 2, 1, 3)

    rb = _relative_position_bias(p['rpb_table'], (wh, ww), num_heads)
    logits = jnp.einsum('bhnd,bhmd->bhnm', qh, kh_, precision=PREC) + rb[None]
    attn = jax.nn.softmax(logits, axis=-1)
    o = jnp.einsum('bhnm,bhmd->bhnd', attn, vh, precision=PREC)
    o = o.transpose(0, 2, 1, 3).reshape(B * nW, N, C)
    o = jnp.einsum('bnc,cd->bnd', o, p['wp'], precision=PREC) + p['bp'][0]

    attn_hw = (o.reshape(B, H // wh, W // ww, wh, ww, C)
               .transpose(0, 1, 3, 2, 4, 5)
               .reshape(B, H * W, C))
    x_res = shortcut + attn_hw

    # spectral branch
    x_res_nchw = x_res.reshape(B, H, W, C).transpose(0, 3, 1, 2)
    xf = jnp.fft.rfft2(x_res_nchw, norm='backward')
    y_cat = jnp.concatenate([jnp.real(xf), jnp.imag(xf)], axis=1)
    y1 = (jnp.einsum('oc,bchw->bohw', p['wf1'], y_cat, precision=PREC)
          + p['bf1'][:, 0][None, :, None, None])
    y1 = jnp.where(y1 > 0, y1, NEG_SLOPE * y1)
    y2 = (jnp.einsum('oc,bchw->bohw', p['wf2'], y1, precision=PREC)
          + p['bf2'][:, 0][None, :, None, None])
    y_re, y_im = jnp.split(y2, 2, axis=1)
    y_spec = jnp.fft.irfft2(lax.complex(y_re, y_im), s=(H, W), norm='backward')

    # norm2 + LeFF
    xn = _layernorm(x_res, p['g2'][0], p['be2'][0])
    h = jnp.einsum('bnc,ch->bnh', xn, p['wl1'], precision=PREC) + p['bl1'][0]
    h = _gelu(h)
    hh = h.reshape(B, H, W, -1)
    hpad = jnp.pad(hh, ((0, 0), (1, 1), (1, 1), (0, 0)))
    dwa = jnp.zeros_like(hh)
    for kh in range(3):
        for kw in range(3):
            dwa = dwa + hpad[:, kh:kh + H, kw:kw + W, :] * p['wd'][kh, kw, :]
    dwa = _gelu(dwa + p['bd'][0])
    y = (jnp.einsum('bnh,hc->bnc', dwa.reshape(B, H * W, -1), p['wl2'],
                    precision=PREC) + p['bl2'][0])

    out_nhwc = (xn + y).reshape(B, H, W, C) + jnp.transpose(y_spec, (0, 2, 3, 1))
    return jnp.transpose(out_nhwc, (0, 3, 1, 2))


# ----------------------------------------------------------------------------
# Parameter init (kernel-friendly layouts; PyTorch layout noted in comments)
# ----------------------------------------------------------------------------
def init_params(key, C, num_heads, win_size, hidden):
    wh, ww = win_size
    ks = jax.random.split(key, 19)

    def nrm(k, shape, s=0.1):
        return jax.random.normal(k, shape, jnp.float32) * s

    return dict(
        # win_pos_embed: Conv3d(C, C, 3, groups=C); torch weight (C,1,3,3,3) -> (3,3,3,C)
        w3d=nrm(ks[0], (3, 3, 3, C)),
        b3d=nrm(ks[1], (1, C), 0.05),
        g1=jnp.ones((1, C), jnp.float32),                    # norm1 (weight=1, bias=0)
        be1=jnp.zeros((1, C), jnp.float32),
        # LinearProjection: torch to_q (C,C), to_kv (2C,C) -> transposed (in,out)
        wq=nrm(ks[2], (C, C)),
        bq=nrm(ks[3], (1, C), 0.05),
        wkv=nrm(ks[4], (C, 2 * C)),
        bkv=nrm(ks[5], (1, 2 * C), 0.05),
        rpb_table=nrm(ks[6], ((2 * wh - 1) * (2 * ww - 1), num_heads), 0.02),
        wp=nrm(ks[7], (C, C)),                               # attn proj (in,out)
        bp=nrm(ks[8], (1, C), 0.05),
        # conv_fft: two 1x1 Conv2d(2C,2C); torch weight (2C,2C,1,1) -> (2C,2C)
        wf1=nrm(ks[9], (2 * C, 2 * C)),
        bf1=nrm(ks[10], (2 * C, 1), 0.05),
        wf2=nrm(ks[11], (2 * C, 2 * C)),
        bf2=nrm(ks[12], (2 * C, 1), 0.05),
        g2=jnp.ones((1, C), jnp.float32),                    # norm2
        be2=jnp.zeros((1, C), jnp.float32),
        # LeFF: linear1 (hidden,C)->(C,hidden); dwconv (hidden,1,3,3)->(3,3,hidden);
        #       linear2 (C,hidden)->(hidden,C)
        wl1=nrm(ks[13], (C, hidden)),
        bl1=nrm(ks[14], (1, hidden), 0.05),
        wd=nrm(ks[15], (3, 3, hidden)),
        bd=nrm(ks[16], (1, hidden), 0.05),
        wl2=nrm(ks[17], (hidden, C)),
        bl2=nrm(ks[18], (1, C), 0.05),
    )


if __name__ == "__main__":
    # ScSeTransformerBlock(dim=32, num_heads=4, win_size=(4,16), idx=0, mlp_ratio=4)
    B, C, H, W = 2, 32, 8, 16
    num_heads = 4
    win_size = (4, 16)
    hidden = int(C * 4.0)
    assert C % num_heads == 0

    key = jax.random.PRNGKey(0)
    kx, kp = jax.random.split(key)
    x = jax.random.normal(kx, (B, C, H, W), dtype=jnp.float32)
    params = init_params(kp, C, num_heads, win_size, hidden)

    fwd = jax.jit(functools.partial(scse_block_forward,
                                    win_size=win_size, num_heads=num_heads))
    out = jax.block_until_ready(fwd(x, params))

    ref = reference_forward(x, params, win_size=win_size, num_heads=num_heads)
    assert out.shape == (B, C, H, W)
    # Kernel matmuls use default MXU precision (vs HIGHEST in the reference):
    # loosened tolerance accordingly.
    assert jnp.allclose(out, ref, atol=5e-2, rtol=5e-2), (
        f"mismatch vs reference, max abs err = {float(jnp.max(jnp.abs(out - ref)))}")

    print("KERNEL_OK")
</pallas_src>

<mosaic_0001>
module attributes {stable_mosaic.version = 11 : i64} {
  func.func @_attn_kernel(%arg0: i32, %arg1: memref<1x2x4x16x32xf32, #tpu.memory_space<vmem>>, %arg2: memref<3x3x3x32xf32, #tpu.memory_space<vmem>>, %arg3: memref<1x32xf32, #tpu.memory_space<vmem>>, %arg4: memref<1x32xf32, #tpu.memory_space<vmem>>, %arg5: memref<1x32xf32, #tpu.memory_space<vmem>>, %arg6: memref<32x32xf32, #tpu.memory_space<vmem>>, %arg7: memref<1x32xf32, #tpu.memory_space<vmem>>, %arg8: memref<32x64xf32, #tpu.memory_space<vmem>>, %arg9: memref<1x64xf32, #tpu.memory_space<vmem>>, %arg10: memref<4x64x64xf32, #tpu.memory_space<vmem>>, %arg11: memref<32x32xf32, #tpu.memory_space<vmem>>, %arg12: memref<1x32xf32, #tpu.memory_space<vmem>>, %arg13: memref<1x128x32xf32, #tpu.memory_space<vmem>>, %arg14: memref<4x6x18x32xf32, #tpu.memory_space<vmem>>) attributes {dimension_semantics = [#tpu.dimension_semantics<parallel>], iteration_bounds = array<i64: 2>, scalar_prefetch = 0 : i64, scratch_operands = 1 : i64, tpu.core_type = #tpu.core_type<tc>, window_params = [{transform_indices = @transform_0, window_bounds = array<i64: 1, 2, 4, 16, 32>}, {pipeline_mode = #tpu.pipeline_mode<synchronous>, transform_indices = @transform_1, window_bounds = array<i64: 3, 3, 3, 32>}, {pipeline_mode = #tpu.pipeline_mode<synchronous>, transform_indices = @transform_2, window_bounds = array<i64: 1, 32>}, {pipeline_mode = #tpu.pipeline_mode<synchronous>, transform_indices = @transform_3, window_bounds = array<i64: 1, 32>}, {pipeline_mode = #tpu.pipeline_mode<synchronous>, transform_indices = @transform_4, window_bounds = array<i64: 1, 32>}, {pipeline_mode = #tpu.pipeline_mode<synchronous>, transform_indices = @transform_5, window_bounds = array<i64: 32, 32>}, {pipeline_mode = #tpu.pipeline_mode<synchronous>, transform_indices = @transform_6, window_bounds = array<i64: 1, 32>}, {pipeline_mode = #tpu.pipeline_mode<synchronous>, transform_indices = @transform_7, window_bounds = array<i64: 32, 64>}, {pipeline_mode = #tpu.pipeline_mode<synchronous>, transform_indices = @transform_8, window_bounds = array<i64: 1, 64>}, {pipeline_mode = #tpu.pipeline_mode<synchronous>, transform_indices = @transform_9, window_bounds = array<i64: 4, 64, 64>}, {pipeline_mode = #tpu.pipeline_mode<synchronous>, transform_indices = @transform_10, window_bounds = array<i64: 32, 32>}, {pipeline_mode = #tpu.pipeline_mode<synchronous>, transform_indices = @transform_11, window_bounds = array<i64: 1, 32>}, {transform_indices = @transform_12, window_bounds = array<i64: 1, 128, 32>}]} {
    %cst = arith.constant 0.000000e+00 : f32
    %0 = vector.broadcast %cst : f32 to vector<4x6x18x32xf32>
    %c0 = arith.constant 0 : index
    %c0_0 = arith.constant 0 : index
    %c0_1 = arith.constant 0 : index
    %c0_2 = arith.constant 0 : index
    %1 = vector.load %arg14[%c0, %c0_0, %c0_1, %c0_2] : memref<4x6x18x32xf32, #tpu.memory_space<vmem>>, vector<4x6x18x32xf32>
    tpu.vector_store %arg14[%c0, %c0_0, %c0_1, %c0_2], %0 {strides = array<i32>} : memref<4x6x18x32xf32, #tpu.memory_space<vmem>>, vector<4x6x18x32xf32>,
    %c0_3 = arith.constant 0 : index
    %c0_4 = arith.constant 0 : index
    %c0_5 = arith.constant 0 : index
    %c0_6 = arith.constant 0 : index
    %c0_7 = arith.constant 0 : index
    %2 = vector.load %arg1[%c0_3, %c0_4, %c0_5, %c0_6, %c0_7] : memref<1x2x4x16x32xf32, #tpu.memory_space<vmem>>, vector<1x2x4x16x32xf32>
    %3 = vector.shape_cast %2 : vector<1x2x4x16x32xf32> to vector<2x4x16x32xf32>
    %c1 = arith.constant 1 : index
    %c1_8 = arith.constant 1 : index
    %c1_9 = arith.constant 1 : index
    %c0_10 = arith.constant 0 : index
    %4 = vector.load %arg14[%c1, %c1_8, %c1_9, %c0_10] : memref<4x6x18x32xf32, #tpu.memory_space<vmem>>, vector<2x4x16x32xf32>
    tpu.vector_store %arg14[%c1, %c1_8, %c1_9, %c0_10], %3 {strides = array<i32>} : memref<4x6x18x32xf32, #tpu.memory_space<vmem>>, vector<2x4x16x32xf32>,
    %cst_11 = arith.constant 0.000000e+00 : f32
    %5 = vector.broadcast %cst_11 : f32 to vector<2x4x16x32xf32>
    %c0_12 = arith.constant 0 : index
    %c0_13 = arith.constant 0 : index
    %c0_14 = arith.constant 0 : index
    %c0_15 = arith.constant 0 : index
    %6 = vector.load %arg2[%c0_12, %c0_13, %c0_14, %c0_15] : memref<3x3x3x32xf32, #tpu.memory_space<vmem>>, vector<1x1x1x32xf32>
    %7 = vector.shape_cast %6 : vector<1x1x1x32xf32> to vector<1x32xf32>
    %c0_16 = arith.constant 0 : index
    %c0_17 = arith.constant 0 : index
    %c0_18 = arith.constant 0 : index
    %c0_19 = arith.constant 0 : index
    %8 = vector.load %arg14[%c0_16, %c0_17, %c0_18, %c0_19] : memref<4x6x18x32xf32, #tpu.memory_space<vmem>>, vector<2x4x16x32xf32>
    %9 = vector.shape_cast %7 : vector<1x32xf32> to vector<1x1x1x32xf32>
    %10 = vector.broadcast %9 : vector<1x1x1x32xf32> to vector<2x4x16x32xf32>
    %11 = arith.mulf %8, %10 : vector<2x4x16x32xf32>
    %12 = arith.addf %5, %11 : vector<2x4x16x32xf32>
    %c0_20 = arith.constant 0 : index
    %c0_21 = arith.constant 0 : index
    %c1_22 = arith.constant 1 : index
    %c0_23 = arith.constant 0 : index
    %13 = vector.load %arg2[%c0_20, %c0_21, %c1_22, %c0_23] : memref<3x3x3x32xf32, #tpu.memory_space<vmem>>, vector<1x1x1x32xf32>
    %14 = vector.shape_cast %13 : vector<1x1x1x32xf32> to vector<1x32xf32>
    %c0_24 = arith.constant 0 : index
    %c0_25 = arith.constant 0 : index
    %c1_26 = arith.constant 1 : index
    %c0_27 = arith.constant 0 : index
    %15 = vector.load %arg14[%c0_24, %c0_25, %c1_26, %c0_27] : memref<4x6x18x32xf32, #tpu.memory_space<vmem>>, vector<2x4x16x32xf32>
    %16 = vector.shape_cast %14 : vector<1x32xf32> to vector<1x1x1x32xf32>
    %17 = vector.broadcast %16 : vector<1x1x1x32xf32> to vector<2x4x16x32xf32>
    %18 = arith.mulf %15, %17 : vector<2x4x16x32xf32>
    %19 = arith.addf %12, %18 : vector<2x4x16x32xf32>
    %c0_28 = arith.constant 0 : index
    %c0_29 = arith.constant 0 : index
    %c2 = arith.constant 2 : index
    %c0_30 = arith.constant 0 : index
    %20 = vector.load %arg2[%c0_28, %c0_29, %c2, %c0_30] : memref<3x3x3x32xf32, #tpu.memory_space<vmem>>, vector<1x1x1x32xf32>
    %21 = vector.shape_cast %20 : vector<1x1x1x32xf32> to vector<1x32xf32>
    %c0_31 = arith.constant 0 : index
    %c0_32 = arith.constant 0 : index
    %c2_33 = arith.constant 2 : index
    %c0_34 = arith.constant 0 : index
    %22 = vector.load %arg14[%c0_31, %c0_32, %c2_33, %c0_34] : memref<4x6x18x32xf32, #tpu.memory_space<vmem>>, vector<2x4x16x32xf32>
    %23 = vector.shape_cast %21 : vector<1x32xf32> to vector<1x1x1x32xf32>
    %24 = vector.broadcast %23 : vector<1x1x1x32xf32> to vector<2x4x16x32xf32>
    %25 = arith.mulf %22, %24 : vector<2x4x16x32xf32>
    %26 = arith.addf %19, %25 : vector<2x4x16x32xf32>
    %c0_35 = arith.constant 0 : index
    %c1_36 = arith.constant 1 : index
    %c0_37 = arith.constant 0 : index
    %c0_38 = arith.constant 0 : index
    %27 = vector.load %arg2[%c0_35, %c1_36, %c0_37, %c0_38] : memref<3x3x3x32xf32, #tpu.memory_space<vmem>>, vector<1x1x1x32xf32>
    %28 = vector.shape_cast %27 : vector<1x1x1x32xf32> to vector<1x32xf32>
    %c0_39 = arith.constant 0 : index
    %c1_40 = arith.constant 1 : index
    %c0_41 = arith.constant 0 : index
    %c0_42 = arith.constant 0 : index
    %29 = vector.load %arg14[%c0_39, %c1_40, %c0_41, %c0_42] : memref<4x6x18x32xf32, #tpu.memory_space<vmem>>, vector<2x4x16x32xf32>
    %30 = vector.shape_cast %28 : vector<1x32xf32> to vector<1x1x1x32xf32>
    %31 = vector.broadcast %30 : vector<1x1x1x32xf32> to vector<2x4x16x32xf32>
    %32 = arith.mulf %29, %31 : vector<2x4x16x32xf32>
    %33 = arith.addf %26, %32 : vector<2x4x16x32xf32>
    %c0_43 = arith.constant 0 : index
    %c1_44 = arith.constant 1 : index
    %c1_45 = arith.constant 1 : index
    %c0_46 = arith.constant 0 : index
    %34 = vector.load %arg2[%c0_43, %c1_44, %c1_45, %c0_46] : memref<3x3x3x32xf32, #tpu.memory_space<vmem>>, vector<1x1x1x32xf32>
    %35 = vector.shape_cast %34 : vector<1x1x1x32xf32> to vector<1x32xf32>
    %c0_47 = arith.constant 0 : index
    %c1_48 = arith.constant 1 : index
    %c1_49 = arith.constant 1 : index
    %c0_50 = arith.constant 0 : index
    %36 = vector.load %arg14[%c0_47, %c1_48, %c1_49, %c0_50] : memref<4x6x18x32xf32, #tpu.memory_space<vmem>>, vector<2x4x16x32xf32>
    %37 = vector.shape_cast %35 : vector<1x32xf32> to vector<1x1x1x32xf32>
    %38 = vector.broadcast %37 : vector<1x1x1x32xf32> to vector<2x4x16x32xf32>
    %39 = arith.mulf %36, %38 : vector<2x4x16x32xf32>
    %40 = arith.addf %33, %39 : vector<2x4x16x32xf32>
    %c0_51 = arith.constant 0 : index
    %c1_52 = arith.constant 1 : index
    %c2_53 = arith.constant 2 : index
    %c0_54 = arith.constant 0 : index
    %41 = vector.load %arg2[%c0_51, %c1_52, %c2_53, %c0_54] : memref<3x3x3x32xf32, #tpu.memory_space<vmem>>, vector<1x1x1x32xf32>
    %42 = vector.shape_cast %41 : vector<1x1x1x32xf32> to vector<1x32xf32>
    %c0_55 = arith.constant 0 : index
    %c1_56 = arith.constant 1 : index
    %c2_57 = arith.constant 2 : index
    %c0_58 = arith.constant 0 : index
    %43 = vector.load %arg14[%c0_55, %c1_56, %c2_57, %c0_58] : memref<4x6x18x32xf32, #tpu.memory_space<vmem>>, vector<2x4x16x32xf32>
    %44 = vector.shape_cast %42 : vector<1x32xf32> to vector<1x1x1x32xf32>
    %45 = vector.broadcast %44 : vector<1x1x1x32xf32> to vector<2x4x16x32xf32>
    %46 = arith.mulf %43, %45 : vector<2x4x16x32xf32>
    %47 = arith.addf %40, %46 : vector<2x4x16x32xf32>
    %c0_59 = arith.constant 0 : index
    %c2_60 = arith.constant 2 : index
    %c0_61 = arith.constant 0 : index
    %c0_62 = arith.constant 0 : index
    %48 = vector.load %arg2[%c0_59, %c2_60, %c0_61, %c0_62] : memref<3x3x3x32xf32, #tpu.memory_space<vmem>>, vector<1x1x1x32xf32>
    %49 = vector.shape_cast %48 : vector<1x1x1x32xf32> to vector<1x32xf32>
    %c0_63 = arith.constant 0 : index
    %c2_64 = arith.constant 2 : index
    %c0_65 = arith.constant 0 : index
    %c0_66 = arith.constant 0 : index
    %50 = vector.load %arg14[%c0_63, %c2_64, %c0_65, %c0_66] : memref<4x6x18x32xf32, #tpu.memory_space<vmem>>, vector<2x4x16x32xf32>
    %51 = vector.shape_cast %49 : vector<1x32xf32> to vector<1x1x1x32xf32>
    %52 = vector.broadcast %51 : vector<1x1x1x32xf32> to vector<2x4x16x32xf32>
    %53 = arith.mulf %50, %52 : vector<2x4x16x32xf32>
    %54 = arith.addf %47, %53 : vector<2x4x16x32xf32>
    %c0_67 = arith.constant 0 : index
    %c2_68 = arith.constant 2 : index
    %c1_69 = arith.constant 1 : index
    %c0_70 = arith.constant 0 : index
    %55 = vector.load %arg2[%c0_67, %c2_68, %c1_69, %c0_70] : memref<3x3x3x32xf32, #tpu.memory_space<vmem>>, vector<1x1x1x32xf32>
    %56 = vector.shape_cast %55 : vector<1x1x1x32xf32> to vector<1x32xf32>
    %c0_71 = arith.constant 0 : index
    %c2_72 = arith.constant 2 : index
    %c1_73 = arith.constant 1 : index
    %c0_74 = arith.constant 0 : index
    %57 = vector.load %arg14[%c0_71, %c2_72, %c1_73, %c0_74] : memref<4x6x18x32xf32, #tpu.memory_space<vmem>>, vector<2x4x16x32xf32>
    %58 = vector.shape_cast %56 : vector<1x32xf32> to vector<1x1x1x32xf32>
    %59 = vector.broadcast %58 : vector<1x1x1x32xf32> to vector<2x4x16x32xf32>
    %60 = arith.mulf %57, %59 : vector<2x4x16x32xf32>
    %61 = arith.addf %54, %60 : vector<2x4x16x32xf32>
    %c0_75 = arith.constant 0 : index
    %c2_76 = arith.constant 2 : index
    %c2_77 = arith.constant 2 : index
    %c0_78 = arith.constant 0 : index
    %62 = vector.load %arg2[%c0_75, %c2_76, %c2_77, %c0_78] : memref<3x3x3x32xf32, #tpu.memory_space<vmem>>, vector<1x1x1x32xf32>
    %63 = vector.shape_cast %62 : vector<1x1x1x32xf32> to vector<1x32xf32>
    %c0_79 = arith.constant 0 : index
    %c2_80 = arith.constant 2 : index
    %c2_81 = arith.constant 2 : index
    %c0_82 = arith.constant 0 : index
    %64 = vector.load %arg14[%c0_79, %c2_80, %c2_81, %c0_82] : memref<4x6x18x32xf32, #tpu.memory_space<vmem>>, vector<2x4x16x32xf32>
    %65 = vector.shape_cast %63 : vector<1x32xf32> to vector<1x1x1x32xf32>
    %66 = vector.broadcast %65 : vector<1x1x1x32xf32> to vector<2x4x16x32xf32>
    %67 = arith.mulf %64, %66 : vector<2x4x16x32xf32>
    %68 = arith.addf %61, %67 : vector<2x4x16x32xf32>
    %c1_83 = arith.constant 1 : index
    %c0_84 = arith.constant 0 : index
    %c0_85 = arith.constant 0 : index
    %c0_86 = arith.constant 0 : index
    %69 = vector.load %arg2[%c1_83, %c0_84, %c0_85, %c0_86] : memref<3x3x3x32xf32, #tpu.memory_space<vmem>>, vector<1x1x1x32xf32>
    %70 = vector.shape_cast %69 : vector<1x1x1x32xf32> to vector<1x32xf32>
    %c1_87 = arith.constant 1 : index
    %c0_88 = arith.constant 0 : index
    %c0_89 = arith.constant 0 : index
    %c0_90 = arith.constant 0 : index
    %71 = vector.load %arg14[%c1_87, %c0_88, %c0_89, %c0_90] : memref<4x6x18x32xf32, #tpu.memory_space<vmem>>, vector<2x4x16x32xf32>
    %72 = vector.shape_cast %70 : vector<1x32xf32> to vector<1x1x1x32xf32>
    %73 = vector.broadcast %72 : vector<1x1x1x32xf32> to vector<2x4x16x32xf32>
    %74 = arith.mulf %71, %73 : vector<2x4x16x32xf32>
    %75 = arith.addf %68, %74 : vector<2x4x16x32xf32>
    %c1_91 = arith.constant 1 : index
    %c0_92 = arith.constant 0 : index
    %c1_93 = arith.constant 1 : index
    %c0_94 = arith.constant 0 : index
    %76 = vector.load %arg2[%c1_91, %c0_92, %c1_93, %c0_94] : memref<3x3x3x32xf32, #tpu.memory_space<vmem>>, vector<1x1x1x32xf32>
    %77 = vector.shape_cast %76 : vector<1x1x1x32xf32> to vector<1x32xf32>
    %c1_95 = arith.constant 1 : index
    %c0_96 = arith.constant 0 : index
    %c1_97 = arith.constant 1 : index
    %c0_98 = arith.constant 0 : index
    %78 = vector.load %arg14[%c1_95, %c0_96, %c1_97, %c0_98] : memref<4x6x18x32xf32, #tpu.memory_space<vmem>>, vector<2x4x16x32xf32>
    %79 = vector.shape_cast %77 : vector<1x32xf32> to vector<1x1x1x32xf32>
    %80 = vector.broadcast %79 : vector<1x1x1x32xf32> to vector<2x4x16x32xf32>
    %81 = arith.mulf %78, %80 : vector<2x4x16x32xf32>
    %82 = arith.addf %75, %81 : vector<2x4x16x32xf32>
    %c1_99 = arith.constant 1 : index
    %c0_100 = arith.constant 0 : index
    %c2_101 = arith.constant 2 : index
    %c0_102 = arith.constant 0 : index
    %83 = vector.load %arg2[%c1_99, %c0_100, %c2_101, %c0_102] : memref<3x3x3x32xf32, #tpu.memory_space<vmem>>, vector<1x1x1x32xf32>
    %84 = vector.shape_cast %83 : vector<1x1x1x32xf32> to vector<1x32xf32>
    %c1_103 = arith.constant 1 : index
    %c0_104 = arith.constant 0 : index
    %c2_105 = arith.constant 2 : index
    %c0_106 = arith.constant 0 : index
    %85 = vector.load %arg14[%c1_103, %c0_104, %c2_105, %c0_106] : memref<4x6x18x32xf32, #tpu.memory_space<vmem>>, vector<2x4x16x32xf32>
    %86 = vector.shape_cast %84 : vector<1x32xf32> to vector<1x1x1x32xf32>
    %87 = vector.broadcast %86 : vector<1x1x1x32xf32> to vector<2x4x16x32xf32>
    %88 = arith.mulf %85, %87 : vector<2x4x16x32xf32>
    %89 = arith.addf %82, %88 : vector<2x4x16x32xf32>
    %c1_107 = arith.constant 1 : index
    %c1_108 = arith.constant 1 : index
    %c0_109 = arith.constant 0 : index
    %c0_110 = arith.constant 0 : index
    %90 = vector.load %arg2[%c1_107, %c1_108, %c0_109, %c0_110] : memref<3x3x3x32xf32, #tpu.memory_space<vmem>>, vector<1x1x1x32xf32>
    %91 = vector.shape_cast %90 : vector<1x1x1x32xf32> to vector<1x32xf32>
    %c1_111 = arith.constant 1 : index
    %c1_112 = arith.constant 1 : index
    %c0_113 = arith.constant 0 : index
    %c0_114 = arith.constant 0 : index
    %92 = vector.load %arg14[%c1_111, %c1_112, %c0_113, %c0_114] : memref<4x6x18x32xf32, #tpu.memory_space<vmem>>, vector<2x4x16x32xf32>
    %93 = vector.shape_cast %91 : vector<1x32xf32> to vector<1x1x1x32xf32>
    %94 = vector.broadcast %93 : vector<1x1x1x32xf32> to vector<2x4x16x32xf32>
    %95 = arith.mulf %92, %94 : vector<2x4x16x32xf32>
    %96 = arith.addf %89, %95 : vector<2x4x16x32xf32>
    %c1_115 = arith.constant 1 : index
    %c1_116 = arith.constant 1 : index
    %c1_117 = arith.constant 1 : index
    %c0_118 = arith.constant 0 : index
    %97 = vector.load %arg2[%c1_115, %c1_116, %c1_117, %c0_118] : memref<3x3x3x32xf32, #tpu.memory_space<vmem>>, vector<1x1x1x32xf32>
    %98 = vector.shape_cast %97 : vector<1x1x1x32xf32> to vector<1x32xf32>
    %c1_119 = arith.constant 1 : index
    %c1_120 = arith.constant 1 : index
    %c1_121 = arith.constant 1 : index
    %c0_122 = arith.constant 0 : index
    %99 = vector.load %arg14[%c1_119, %c1_120, %c1_121, %c0_122] : memref<4x6x18x32xf32, #tpu.memory_space<vmem>>, vector<2x4x16x32xf32>
    %100 = vector.shape_cast %98 : vector<1x32xf32> to vector<1x1x1x32xf32>
    %101 = vector.broadcast %100 : vector<1x1x1x32xf32> to vector<2x4x16x32xf32>
    %102 = arith.mulf %99, %101 : vector<2x4x16x32xf32>
    %103 = arith.addf %96, %102 : vector<2x4x16x32xf32>
    %c1_123 = arith.constant 1 : index
    %c1_124 = arith.constant 1 : index
    %c2_125 = arith.constant 2 : index
    %c0_126 = arith.constant 0 : index
    %104 = vector.load %arg2[%c1_123, %c1_124, %c2_125, %c0_126] : memref<3x3x3x32xf32, #tpu.memory_space<vmem>>, vector<1x1x1x32xf32>
    %105 = vector.shape_cast %104 : vector<1x1x1x32xf32> to vector<1x32xf32>
    %c1_127 = arith.constant 1 : index
    %c1_128 = arith.constant 1 : index
    %c2_129 = arith.constant 2 : index
    %c0_130 = arith.constant 0 : index
    %106 = vector.load %arg14[%c1_127, %c1_128, %c2_129, %c0_130] : memref<4x6x18x32xf32, #tpu.memory_space<vmem>>, vector<2x4x16x32xf32>
    %107 = vector.shape_cast %105 : vector<1x32xf32> to vector<1x1x1x32xf32>
    %108 = vector.broadcast %107 : vector<1x1x1x32xf32> to vector<2x4x16x32xf32>
    %109 = arith.mulf %106, %108 : vector<2x4x16x32xf32>
    %110 = arith.addf %103, %109 : vector<2x4x16x32xf32>
    %c1_131 = arith.constant 1 : index
    %c2_132 = arith.constant 2 : index
    %c0_133 = arith.constant 0 : index
    %c0_134 = arith.constant 0 : index
    %111 = vector.load %arg2[%c1_131, %c2_132, %c0_133, %c0_134] : memref<3x3x3x32xf32, #tpu.memory_space<vmem>>, vector<1x1x1x32xf32>
    %112 = vector.shape_cast %111 : vector<1x1x1x32xf32> to vector<1x32xf32>
    %c1_135 = arith.constant 1 : index
    %c2_136 = arith.constant 2 : index
    %c0_137 = arith.constant 0 : index
    %c0_138 = arith.constant 0 : index
    %113 = vector.load %arg14[%c1_135, %c2_136, %c0_137, %c0_138] : memref<4x6x18x32xf32, #tpu.memory_space<vmem>>, vector<2x4x16x32xf32>
    %114 = vector.shape_cast %112 : vector<1x32xf32> to vector<1x1x1x32xf32>
    %115 = vector.broadcast %114 : vector<1x1x1x32xf32> to vector<2x4x16x32xf32>
    %116 = arith.mulf %113, %115 : vector<2x4x16x32xf32>
    %117 = arith.addf %110, %116 : vector<2x4x16x32xf32>
    %c1_139 = arith.constant 1 : index
    %c2_140 = arith.constant 2 : index
    %c1_141 = arith.constant 1 : index
    %c0_142 = arith.constant 0 : index
    %118 = vector.load %arg2[%c1_139, %c2_140, %c1_141, %c0_142] : memref<3x3x3x32xf32, #tpu.memory_space<vmem>>, vector<1x1x1x32xf32>
    %119 = vector.shape_cast %118 : vector<1x1x1x32xf32> to vector<1x32xf32>
    %c1_143 = arith.constant 1 : index
    %c2_144 = arith.constant 2 : index
    %c1_145 = arith.constant 1 : index
    %c0_146 = arith.constant 0 : index
    %120 = vector.load %arg14[%c1_143, %c2_144, %c1_145, %c0_146] : memref<4x6x18x32xf32, #tpu.memory_space<vmem>>, vector<2x4x16x32xf32>
    %121 = vector.shape_cast %119 : vector<1x32xf32> to vector<1x1x1x32xf32>
    %122 = vector.broadcast %121 : vector<1x1x1x32xf32> to vector<2x4x16x32xf32>
    %123 = arith.mulf %120, %122 : vector<2x4x16x32xf32>
    %124 = arith.addf %117, %123 : vector<2x4x16x32xf32>
    %c1_147 = arith.constant 1 : index
    %c2_148 = arith.constant 2 : index
    %c2_149 = arith.constant 2 : index
    %c0_150 = arith.constant 0 : index
    %125 = vector.load %arg2[%c1_147, %c2_148, %c2_149, %c0_150] : memref<3x3x3x32xf32, #tpu.memory_space<vmem>>, vector<1x1x1x32xf32>
    %126 = vector.shape_cast %125 : vector<1x1x1x32xf32> to vector<1x32xf32>
    %c1_151 = arith.constant 1 : index
    %c2_152 = arith.constant 2 : index
    %c2_153 = arith.constant 2 : index
    %c0_154 = arith.constant 0 : index
    %127 = vector.load %arg14[%c1_151, %c2_152, %c2_153, %c0_154] : memref<4x6x18x32xf32, #tpu.memory_space<vmem>>, vector<2x4x16x32xf32>
    %128 = vector.shape_cast %126 : vector<1x32xf32> to vector<1x1x1x32xf32>
    %129 = vector.broadcast %128 : vector<1x1x1x32xf32> to vector<2x4x16x32xf32>
    %130 = arith.mulf %127, %129 : vector<2x4x16x32xf32>
    %131 = arith.addf %124, %130 : vector<2x4x16x32xf32>
    %c2_155 = arith.constant 2 : index
    %c0_156 = arith.constant 0 : index
    %c0_157 = arith.constant 0 : index
    %c0_158 = arith.constant 0 : index
    %132 = vector.load %arg2[%c2_155, %c0_156, %c0_157, %c0_158] : memref<3x3x3x32xf32, #tpu.memory_space<vmem>>, vector<1x1x1x32xf32>
    %133 = vector.shape_cast %132 : vector<1x1x1x32xf32> to vector<1x32xf32>
    %c2_159 = arith.constant 2 : index
    %c0_160 = arith.constant 0 : index
    %c0_161 = arith.constant 0 : index
    %c0_162 = arith.constant 0 : index
    %134 = vector.load %arg14[%c2_159, %c0_160, %c0_161, %c0_162] : memref<4x6x18x32xf32, #tpu.memory_space<vmem>>, vector<2x4x16x32xf32>
    %135 = vector.shape_cast %133 : vector<1x32xf32> to vector<1x1x1x32xf32>
    %136 = vector.broadcast %135 : vector<1x1x1x32xf32> to vector<2x4x16x32xf32>
    %137 = arith.mulf %134, %136 : vector<2x4x16x32xf32>
    %138 = arith.addf %131, %137 : vector<2x4x16x32xf32>
    %c2_163 = arith.constant 2 : index
    %c0_164 = arith.constant 0 : index
    %c1_165 = arith.constant 1 : index
    %c0_166 = arith.constant 0 : index
    %139 = vector.load %arg2[%c2_163, %c0_164, %c1_165, %c0_166] : memref<3x3x3x32xf32, #tpu.memory_space<vmem>>, vector<1x1x1x32xf32>
    %140 = vector.shape_cast %139 : vector<1x1x1x32xf32> to vector<1x32xf32>
    %c2_167 = arith.constant 2 : index
    %c0_168 = arith.constant 0 : index
    %c1_169 = arith.constant 1 : index
    %c0_170 = arith.constant 0 : index
    %141 = vector.load %arg14[%c2_167, %c0_168, %c1_169, %c0_170] : memref<4x6x18x32xf32, #tpu.memory_space<vmem>>, vector<2x4x16x32xf32>
    %142 = vector.shape_cast %140 : vector<1x32xf32> to vector<1x1x1x32xf32>
    %143 = vector.broadcast %142 : vector<1x1x1x32xf32> to vector<2x4x16x32xf32>
    %144 = arith.mulf %141, %143 : vector<2x4x16x32xf32>
    %145 = arith.addf %138, %144 : vector<2x4x16x32xf32>
    %c2_171 = arith.constant 2 : index
    %c0_172 = arith.constant 0 : index
    %c2_173 = arith.constant 2 : index
    %c0_174 = arith.constant 0 : index
    %146 = vector.load %arg2[%c2_171, %c0_172, %c2_173, %c0_174] : memref<3x3x3x32xf32, #tpu.memory_space<vmem>>, vector<1x1x1x32xf32>
    %147 = vector.shape_cast %146 : vector<1x1x1x32xf32> to vector<1x32xf32>
    %c2_175 = arith.constant 2 : index
    %c0_176 = arith.constant 0 : index
    %c2_177 = arith.constant 2 : index
    %c0_178 = arith.constant 0 : index
    %148 = vector.load %arg14[%c2_175, %c0_176, %c2_177, %c0_178] : memref<4x6x18x32xf32, #tpu.memory_space<vmem>>, vector<2x4x16x32xf32>
    %149 = vector.shape_cast %147 : vector<1x32xf32> to vector<1x1x1x32xf32>
    %150 = vector.broadcast %149 : vector<1x1x1x32xf32> to vector<2x4x16x32xf32>
    %151 = arith.mulf %148, %150 : vector<2x4x16x32xf32>
    %152 = arith.addf %145, %151 : vector<2x4x16x32xf32>
    %c2_179 = arith.constant 2 : index
    %c1_180 = arith.constant 1 : index
    %c0_181 = arith.constant 0 : index
    %c0_182 = arith.constant 0 : index
    %153 = vector.load %arg2[%c2_179, %c1_180, %c0_181, %c0_182] : memref<3x3x3x32xf32, #tpu.memory_space<vmem>>, vector<1x1x1x32xf32>
    %154 = vector.shape_cast %153 : vector<1x1x1x32xf32> to vector<1x32xf32>
    %c2_183 = arith.constant 2 : index
    %c1_184 = arith.constant 1 : index
    %c0_185 = arith.constant 0 : index
    %c0_186 = arith.constant 0 : index
    %155 = vector.load %arg14[%c2_183, %c1_184, %c0_185, %c0_186] : memref<4x6x18x32xf32, #tpu.memory_space<vmem>>, vector<2x4x16x32xf32>
    %156 = vector.shape_cast %154 : vector<1x32xf32> to vector<1x1x1x32xf32>
    %157 = vector.broadcast %156 : vector<1x1x1x32xf32> to vector<2x4x16x32xf32>
    %158 = arith.mulf %155, %157 : vector<2x4x16x32xf32>
    %159 = arith.addf %152, %158 : vector<2x4x16x32xf32>
    %c2_187 = arith.constant 2 : index
    %c1_188 = arith.constant 1 : index
    %c1_189 = arith.constant 1 : index
    %c0_190 = arith.constant 0 : index
    %160 = vector.load %arg2[%c2_187, %c1_188, %c1_189, %c0_190] : memref<3x3x3x32xf32, #tpu.memory_space<vmem>>, vector<1x1x1x32xf32>
    %161 = vector.shape_cast %160 : vector<1x1x1x32xf32> to vector<1x32xf32>
    %c2_191 = arith.constant 2 : index
    %c1_192 = arith.constant 1 : index
    %c1_193 = arith.constant 1 : index
    %c0_194 = arith.constant 0 : index
    %162 = vector.load %arg14[%c2_191, %c1_192, %c1_193, %c0_194] : memref<4x6x18x32xf32, #tpu.memory_space<vmem>>, vector<2x4x16x32xf32>
    %163 = vector.shape_cast %161 : vector<1x32xf32> to vector<1x1x1x32xf32>
    %164 = vector.broadcast %163 : vector<1x1x1x32xf32> to vector<2x4x16x32xf32>
    %165 = arith.mulf %162, %164 : vector<2x4x16x32xf32>
    %166 = arith.addf %159, %165 : vector<2x4x16x32xf32>
    %c2_195 = arith.constant 2 : index
    %c1_196 = arith.constant 1 : index
    %c2_197 = arith.constant 2 : index
    %c0_198 = arith.constant 0 : index
    %167 = vector.load %arg2[%c2_195, %c1_196, %c2_197, %c0_198] : memref<3x3x3x32xf32, #tpu.memory_space<vmem>>, vector<1x1x1x32xf32>
    %168 = vector.shape_cast %167 : vector<1x1x1x32xf32> to vector<1x32xf32>
    %c2_199 = arith.constant 2 : index
    %c1_200 = arith.constant 1 : index
    %c2_201 = arith.constant 2 : index
    %c0_202 = arith.constant 0 : index
    %169 = vector.load %arg14[%c2_199, %c1_200, %c2_201, %c0_202] : memref<4x6x18x32xf32, #tpu.memory_space<vmem>>, vector<2x4x16x32xf32>
    %170 = vector.shape_cast %168 : vector<1x32xf32> to vector<1x1x1x32xf32>
    %171 = vector.broadcast %170 : vector<1x1x1x32xf32> to vector<2x4x16x32xf32>
    %172 = arith.mulf %169, %171 : vector<2x4x16x32xf32>
    %173 = arith.addf %166, %172 : vector<2x4x16x32xf32>
    %c2_203 = arith.constant 2 : index
    %c2_204 = arith.constant 2 : index
    %c0_205 = arith.constant 0 : index
    %c0_206 = arith.constant 0 : index
    %174 = vector.load %arg2[%c2_203, %c2_204, %c0_205, %c0_206] : memref<3x3x3x32xf32, #tpu.memory_space<vmem>>, vector<1x1x1x32xf32>
    %175 = vector.shape_cast %174 : vector<1x1x1x32xf32> to vector<1x32xf32>
    %c2_207 = arith.constant 2 : index
    %c2_208 = arith.constant 2 : index
    %c0_209 = arith.constant 0 : index
    %c0_210 = arith.constant 0 : index
    %176 = vector.load %arg14[%c2_207, %c2_208, %c0_209, %c0_210] : memref<4x6x18x32xf32, #tpu.memory_space<vmem>>, vector<2x4x16x32xf32>
    %177 = vector.shape_cast %175 : vector<1x32xf32> to vector<1x1x1x32xf32>
    %178 = vector.broadcast %177 : vector<1x1x1x32xf32> to vector<2x4x16x32xf32>
    %179 = arith.mulf %176, %178 : vector<2x4x16x32xf32>
    %180 = arith.addf %173, %179 : vector<2x4x16x32xf32>
    %c2_211 = arith.constant 2 : index
    %c2_212 = arith.constant 2 : index
    %c1_213 = arith.constant 1 : index
    %c0_214 = arith.constant 0 : index
    %181 = vector.load %arg2[%c2_211, %c2_212, %c1_213, %c0_214] : memref<3x3x3x32xf32, #tpu.memory_space<vmem>>, vector<1x1x1x32xf32>
    %182 = vector.shape_cast %181 : vector<1x1x1x32xf32> to vector<1x32xf32>
    %c2_215 = arith.constant 2 : index
    %c2_216 = arith.constant 2 : index
    %c1_217 = arith.constant 1 : index
    %c0_218 = arith.constant 0 : index
    %183 = vector.load %arg14[%c2_215, %c2_216, %c1_217, %c0_218] : memref<4x6x18x32xf32, #tpu.memory_space<vmem>>, vector<2x4x16x32xf32>
    %184 = vector.shape_cast %182 : vector<1x32xf32> to vector<1x1x1x32xf32>
    %185 = vector.broadcast %184 : vector<1x1x1x32xf32> to vector<2x4x16x32xf32>
    %186 = arith.mulf %183, %185 : vector<2x4x16x32xf32>
    %187 = arith.addf %180, %186 : vector<2x4x16x32xf32>
    %c2_219 = arith.constant 2 : index
    %c2_220 = arith.constant 2 : index
    %c2_221 = arith.constant 2 : index
    %c0_222 = arith.constant 0 : index
    %188 = vector.load %arg2[%c2_219, %c2_220, %c2_221, %c0_222] : memref<3x3x3x32xf32, #tpu.memory_space<vmem>>, vector<1x1x1x32xf32>
    %189 = vector.shape_cast %188 : vector<1x1x1x32xf32> to vector<1x32xf32>
    %c2_223 = arith.constant 2 : index
    %c2_224 = arith.constant 2 : index
    %c2_225 = arith.constant 2 : index
    %c0_226 = arith.constant 0 : index
    %190 = vector.load %arg14[%c2_223, %c2_224, %c2_225, %c0_226] : memref<4x6x18x32xf32, #tpu.memory_space<vmem>>, vector<2x4x16x32xf32>
    %191 = vector.shape_cast %189 : vector<1x32xf32> to vector<1x1x1x32xf32>
    %192 = vector.broadcast %191 : vector<1x1x1x32xf32> to vector<2x4x16x32xf32>
    %193 = arith.mulf %190, %192 : vector<2x4x16x32xf32>
    %194 = arith.addf %187, %193 : vector<2x4x16x32xf32>
    %195 = arith.addf %3, %194 : vector<2x4x16x32xf32>
    %c0_227 = arith.constant 0 : index
    %c0_228 = arith.constant 0 : index
    %196 = vector.load %arg3[%c0_227, %c0_228] : memref<1x32xf32, #tpu.memory_space<vmem>>, vector<1x32xf32>
    %197 = vector.shape_cast %196 : vector<1x32xf32> to vector<1x1x1x32xf32>
    %198 = vector.broadcast %197 : vector<1x1x1x32xf32> to vector<2x4x16x32xf32>
    %199 = arith.addf %195, %198 : vector<2x4x16x32xf32>
    %200 = vector.shape_cast %199 : vector<2x4x16x32xf32> to vector<128x32xf32>
    %cst_229 = arith.constant dense<0.000000e+00> : vector<128xf32>
    %201 = vector.multi_reduction <add>, %200, %cst_229 [1] : vector<128x32xf32> to vector<128xf32>
    %202 = vector.shape_cast %201 : vector<128xf32> to vector<128x1xf32>
    %cst_230 = arith.constant 3.200000e+01 : f32
    %203 = vector.broadcast %cst_230 : f32 to vector<128x1xf32>
    %204 = arith.divf %202, %203 : vector<128x1xf32>
    %205 = vector.broadcast %204 : vector<128x1xf32> to vector<128x32xf32>
    %206 = arith.subf %200, %205 : vector<128x32xf32>
    %207 = arith.mulf %206, %206 : vector<128x32xf32>
    %cst_231 = arith.constant dense<0.000000e+00> : vector<128xf32>
    %208 = vector.multi_reduction <add>, %207, %cst_231 [1] : vector<128x32xf32> to vector<128xf32>
    %209 = vector.shape_cast %208 : vector<128xf32> to vector<128x1xf32>
    %cst_232 = arith.constant 3.200000e+01 : f32
    %210 = vector.broadcast %cst_232 : f32 to vector<128x1xf32>
    %211 = arith.divf %209, %210 : vector<128x1xf32>
    %212 = vector.broadcast %204 : vector<128x1xf32> to vector<128x32xf32>
    %213 = arith.subf %200, %212 : vector<128x32xf32>
    %cst_233 = arith.constant 9.99999974E-6 : f32
    %214 = vector.broadcast %cst_233 : f32 to vector<128x1xf32>
    %215 = arith.addf %211, %214 : vector<128x1xf32>
    %216 = math.rsqrt %215 : vector<128x1xf32>
    %217 = vector.broadcast %216 : vector<128x1xf32> to vector<128x32xf32>
    %218 = arith.mulf %213, %217 : vector<128x32xf32>
    %c0_234 = arith.constant 0 : index
    %c0_235 = arith.constant 0 : index
    %219 = vector.load %arg4[%c0_234, %c0_235] : memref<1x32xf32, #tpu.memory_space<vmem>>, vector<1x32xf32>
    %220 = vector.broadcast %219 : vector<1x32xf32> to vector<128x32xf32>
    %221 = arith.mulf %218, %220 : vector<128x32xf32>
    %c0_236 = arith.constant 0 : index
    %c0_237 = arith.constant 0 : index
    %222 = vector.load %arg5[%c0_236, %c0_237] : memref<1x32xf32, #tpu.memory_space<vmem>>, vector<1x32xf32>
    %223 = vector.broadcast %222 : vector<1x32xf32> to vector<128x32xf32>
    %224 = arith.addf %221, %223 : vector<128x32xf32>
    %c0_238 = arith.constant 0 : index
    %c0_239 = arith.constant 0 : index
    %225 = vector.load %arg6[%c0_238, %c0_239] : memref<32x32xf32, #tpu.memory_space<vmem>>, vector<32x32xf32>
    %cst_240 = arith.constant dense<0.000000e+00> : vector<128x32xf32>
    %226 = tpu.matmul %224, %225, %cst_240 {dimension_numbers = #tpu.dot_dimension_numbers<[1], [0], [0], [1], [0, 0, 1, 1], [], []>} : vector<128x32xf32>, vector<32x32xf32>, vector<128x32xf32> -> vector<128x32xf32>
    %c0_241 = arith.constant 0 : index
    %c0_242 = arith.constant 0 : index
    %227 = vector.load %arg7[%c0_241, %c0_242] : memref<1x32xf32, #tpu.memory_space<vmem>>, vector<1x32xf32>
    %228 = vector.broadcast %227 : vector<1x32xf32> to vector<128x32xf32>
    %229 = arith.addf %226, %228 : vector<128x32xf32>
    %cst_243 = arith.constant 0.353553385 : f32
    %230 = vector.broadcast %cst_243 : f32 to vector<128x32xf32>
    %231 = arith.mulf %229, %230 : vector<128x32xf32>
    %c0_244 = arith.constant 0 : index
    %c0_245 = arith.constant 0 : index
    %232 = vector.load %arg8[%c0_244, %c0_245] : memref<32x64xf32, #tpu.memory_space<vmem>>, vector<32x64xf32>
    %cst_246 = arith.constant dense<0.000000e+00> : vector<128x64xf32>
    %233 = tpu.matmul %224, %232, %cst_246 {dimension_numbers = #tpu.dot_dimension_numbers<[1], [0], [0], [1], [0, 0, 1, 1], [], []>} : vector<128x32xf32>, vector<32x64xf32>, vector<128x64xf32> -> vector<128x64xf32>
    %c0_247 = arith.constant 0 : index
    %c0_248 = arith.constant 0 : index
    %234 = vector.load %arg9[%c0_247, %c0_248] : memref<1x64xf32, #tpu.memory_space<vmem>>, vector<1x64xf32>
    %235 = vector.broadcast %234 : vector<1x64xf32> to vector<128x64xf32>
    %236 = arith.addf %233, %235 : vector<128x64xf32>
    %237 = vector.extract_strided_slice %236 {offsets = [0, 0], sizes = [128, 32], strides = [1, 1]} : vector<128x64xf32> to vector<128x32xf32>
    %238 = vector.extract_strided_slice %236 {offsets = [0, 32], sizes = [128, 32], strides = [1, 1]} : vector<128x64xf32> to vector<128x32xf32>
    %cst_249 = arith.constant 0.000000e+00 : f32
    %239 = vector.broadcast %cst_249 : f32 to vector<128x32xf32>
    %240 = vector.extract_strided_slice %231 {offsets = [0, 0], sizes = [128, 8], strides = [1, 1]} : vector<128x32xf32> to vector<128x8xf32>
    %241 = vector.shape_cast %240 : vector<128x8xf32> to vector<2x64x8xf32>
    %242 = vector.extract_strided_slice %237 {offsets = [0, 0], sizes = [128, 8], strides = [1, 1]} : vector<128x32xf32> to vector<128x8xf32>
    %243 = vector.shape_cast %242 : vector<128x8xf32> to vector<2x64x8xf32>
    %244 = vector.extract_strided_slice %238 {offsets = [0, 0], sizes = [128, 8], strides = [1, 1]} : vector<128x32xf32> to vector<128x8xf32>
    %245 = vector.shape_cast %244 : vector<128x8xf32> to vector<2x64x8xf32>
    "tpu.trace_start"() <{level = 10 : i32, message = "wnd,wmd->wnm"}> : () -> ()
    %cst_250 = arith.constant dense<0.000000e+00> : vector<2x64x64xf32>
    %246 = tpu.matmul %241, %243, %cst_250 {dimension_numbers = #tpu.dot_dimension_numbers<[2], [2], [1], [1], [0, 0, 0, 1, 1, 1], [0], [0]>} : vector<2x64x8xf32>, vector<2x64x8xf32>, vector<2x64x64xf32> -> vector<2x64x64xf32>
    "tpu.trace_stop"() : () -> ()
    %c0_251 = arith.constant 0 : index
    %c0_252 = arith.constant 0 : index
    %c0_253 = arith.constant 0 : index
    %247 = vector.load %arg10[%c0_251, %c0_252, %c0_253] : memref<4x64x64xf32, #tpu.memory_space<vmem>>, vector<1x64x64xf32>
    %248 = vector.shape_cast %247 : vector<1x64x64xf32> to vector<64x64xf32>
    %249 = vector.shape_cast %248 : vector<64x64xf32> to vector<1x64x64xf32>
    %250 = vector.broadcast %249 : vector<1x64x64xf32> to vector<2x64x64xf32>
    %251 = arith.addf %246, %250 : vector<2x64x64xf32>
    %cst_254 = arith.constant dense<0xFF800000> : vector<2x64xf32>
    %252 = vector.multi_reduction <maximumf>, %251, %cst_254 [2] : vector<2x64x64xf32> to vector<2x64xf32>
    %253 = vector.shape_cast %252 : vector<2x64xf32> to vector<2x64x1xf32>
    %254 = vector.broadcast %253 : vector<2x64x1xf32> to vector<2x64x64xf32>
    %255 = arith.subf %251, %254 : vector<2x64x64xf32>
    %256 = math.exp %255 : vector<2x64x64xf32>
    %cst_255 = arith.constant dense<0.000000e+00> : vector<2x64xf32>
    %257 = vector.multi_reduction <add>, %256, %cst_255 [2] : vector<2x64x64xf32> to vector<2x64xf32>
    %258 = vector.shape_cast %257 : vector<2x64xf32> to vector<2x64x1xf32>
    %259 = vector.broadcast %258 : vector<2x64x1xf32> to vector<2x64x64xf32>
    %260 = arith.divf %256, %259 : vector<2x64x64xf32>
    "tpu.trace_start"() <{level = 10 : i32, message = "wnm,wmd->wnd"}> : () -> ()
    %cst_256 = arith.constant dense<0.000000e+00> : vector<2x64x8xf32>
    %261 = tpu.matmul %260, %245, %cst_256 {dimension_numbers = #tpu.dot_dimension_numbers<[2], [1], [1], [2], [0, 0, 0, 1, 1, 2], [0], [0]>} : vector<2x64x64xf32>, vector<2x64x8xf32>, vector<2x64x8xf32> -> vector<2x64x8xf32>
    "tpu.trace_stop"() : () -> ()
    %262 = vector.shape_cast %261 : vector<2x64x8xf32> to vector<128x8xf32>
    %c0_257 = arith.constant 0 : index
    %c0_258 = arith.constant 0 : index
    %263 = vector.load %arg11[%c0_257, %c0_258] : memref<32x32xf32, #tpu.memory_space<vmem>>, vector<8x32xf32>
    %cst_259 = arith.constant dense<0.000000e+00> : vector<128x32xf32>
    %264 = tpu.matmul %262, %263, %cst_259 {dimension_numbers = #tpu.dot_dimension_numbers<[1], [0], [0], [1], [0, 0, 1, 1], [], []>} : vector<128x8xf32>, vector<8x32xf32>, vector<128x32xf32> -> vector<128x32xf32>
    %265 = arith.addf %239, %264 : vector<128x32xf32>
    %266 = vector.extract_strided_slice %231 {offsets = [0, 8], sizes = [128, 8], strides = [1, 1]} : vector<128x32xf32> to vector<128x8xf32>
    %267 = vector.shape_cast %266 : vector<128x8xf32> to vector<2x64x8xf32>
    %268 = vector.extract_strided_slice %237 {offsets = [0, 8], sizes = [128, 8], strides = [1, 1]} : vector<128x32xf32> to vector<128x8xf32>
    %269 = vector.shape_cast %268 : vector<128x8xf32> to vector<2x64x8xf32>
    %270 = vector.extract_strided_slice %238 {offsets = [0, 8], sizes = [128, 8], strides = [1, 1]} : vector<128x32xf32> to vector<128x8xf32>
    %271 = vector.shape_cast %270 : vector<128x8xf32> to vector<2x64x8xf32>
    "tpu.trace_start"() <{level = 10 : i32, message = "wnd,wmd->wnm"}> : () -> ()
    %cst_260 = arith.constant dense<0.000000e+00> : vector<2x64x64xf32>
    %272 = tpu.matmul %267, %269, %cst_260 {dimension_numbers = #tpu.dot_dimension_numbers<[2], [2], [1], [1], [0, 0, 0, 1, 1, 1], [0], [0]>} : vector<2x64x8xf32>, vector<2x64x8xf32>, vector<2x64x64xf32> -> vector<2x64x64xf32>
    "tpu.trace_stop"() : () -> ()
    %c1_261 = arith.constant 1 : index
    %c0_262 = arith.constant 0 : index
    %c0_263 = arith.constant 0 : index
    %273 = vector.load %arg10[%c1_261, %c0_262, %c0_263] : memref<4x64x64xf32, #tpu.memory_space<vmem>>, vector<1x64x64xf32>
    %274 = vector.shape_cast %273 : vector<1x64x64xf32> to vector<64x64xf32>
    %275 = vector.shape_cast %274 : vector<64x64xf32> to vector<1x64x64xf32>
    %276 = vector.broadcast %275 : vector<1x64x64xf32> to vector<2x64x64xf32>
    %277 = arith.addf %272, %276 : vector<2x64x64xf32>
    %cst_264 = arith.constant dense<0xFF800000> : vector<2x64xf32>
    %278 = vector.multi_reduction <maximumf>, %277, %cst_264 [2] : vector<2x64x64xf32> to vector<2x64xf32>
    %279 = vector.shape_cast %278 : vector<2x64xf32> to vector<2x64x1xf32>
    %280 = vector.broadcast %279 : vector<2x64x1xf32> to vector<2x64x64xf32>
    %281 = arith.subf %277, %280 : vector<2x64x64xf32>
    %282 = math.exp %281 : vector<2x64x64xf32>
    %cst_265 = arith.constant dense<0.000000e+00> : vector<2x64xf32>
    %283 = vector.multi_reduction <add>, %282, %cst_265 [2] : vector<2x64x64xf32> to vector<2x64xf32>
    %284 = vector.shape_cast %283 : vector<2x64xf32> to vector<2x64x1xf32>
    %285 = vector.broadcast %284 : vector<2x64x1xf32> to vector<2x64x64xf32>
    %286 = arith.divf %282, %285 : vector<2x64x64xf32>
    "tpu.trace_start"() <{level = 10 : i32, message = "wnm,wmd->wnd"}> : () -> ()
    %cst_266 = arith.constant dense<0.000000e+00> : vector<2x64x8xf32>
    %287 = tpu.matmul %286, %271, %cst_266 {dimension_numbers = #tpu.dot_dimension_numbers<[2], [1], [1], [2], [0, 0, 0, 1, 1, 2], [0], [0]>} : vector<2x64x64xf32>, vector<2x64x8xf32>, vector<2x64x8xf32> -> vector<2x64x8xf32>
    "tpu.trace_stop"() : () -> ()
    %288 = vector.shape_cast %287 : vector<2x64x8xf32> to vector<128x8xf32>
    %c8 = arith.constant 8 : index
    %c0_267 = arith.constant 0 : index
    %289 = vector.load %arg11[%c8, %c0_267] : memref<32x32xf32, #tpu.memory_space<vmem>>, vector<8x32xf32>
    %cst_268 = arith.constant dense<0.000000e+00> : vector<128x32xf32>
    %290 = tpu.matmul %288, %289, %cst_268 {dimension_numbers = #tpu.dot_dimension_numbers<[1], [0], [0], [1], [0, 0, 1, 1], [], []>} : vector<128x8xf32>, vector<8x32xf32>, vector<128x32xf32> -> vector<128x32xf32>
    %291 = arith.addf %265, %290 : vector<128x32xf32>
    %292 = vector.extract_strided_slice %231 {offsets = [0, 16], sizes = [128, 8], strides = [1, 1]} : vector<128x32xf32> to vector<128x8xf32>
    %293 = vector.shape_cast %292 : vector<128x8xf32> to vector<2x64x8xf32>
    %294 = vector.extract_strided_slice %237 {offsets = [0, 16], sizes = [128, 8], strides = [1, 1]} : vector<128x32xf32> to vector<128x8xf32>
    %295 = vector.shape_cast %294 : vector<128x8xf32> to vector<2x64x8xf32>
    %296 = vector.extract_strided_slice %238 {offsets = [0, 16], sizes = [128, 8], strides = [1, 1]} : vector<128x32xf32> to vector<128x8xf32>
    %297 = vector.shape_cast %296 : vector<128x8xf32> to vector<2x64x8xf32>
    "tpu.trace_start"() <{level = 10 : i32, message = "wnd,wmd->wnm"}> : () -> ()
    %cst_269 = arith.constant dense<0.000000e+00> : vector<2x64x64xf32>
    %298 = tpu.matmul %293, %295, %cst_269 {dimension_numbers = #tpu.dot_dimension_numbers<[2], [2], [1], [1], [0, 0, 0, 1, 1, 1], [0], [0]>} : vector<2x64x8xf32>, vector<2x64x8xf32>, vector<2x64x64xf32> -> vector<2x64x64xf32>
    "tpu.trace_stop"() : () -> ()
    %c2_270 = arith.constant 2 : index
    %c0_271 = arith.constant 0 : index
    %c0_272 = arith.constant 0 : index
    %299 = vector.load %arg10[%c2_270, %c0_271, %c0_272] : memref<4x64x64xf32, #tpu.memory_space<vmem>>, vector<1x64x64xf32>
    %300 = vector.shape_cast %299 : vector<1x64x64xf32> to vector<64x64xf32>
    %301 = vector.shape_cast %300 : vector<64x64xf32> to vector<1x64x64xf32>
    %302 = vector.broadcast %301 : vector<1x64x64xf32> to vector<2x64x64xf32>
    %303 = arith.addf %298, %302 : vector<2x64x64xf32>
    %cst_273 = arith.constant dense<0xFF800000> : vector<2x64xf32>
    %304 = vector.multi_reduction <maximumf>, %303, %cst_273 [2] : vector<2x64x64xf32> to vector<2x64xf32>
    %305 = vector.shape_cast %304 : vector<2x64xf32> to vector<2x64x1xf32>
    %306 = vector.broadcast %305 : vector<2x64x1xf32> to vector<2x64x64xf32>
    %307 = arith.subf %303, %306 : vector<2x64x64xf32>
    %308 = math.exp %307 : vector<2x64x64xf32>
    %cst_274 = arith.constant dense<0.000000e+00> : vector<2x64xf32>
    %309 = vector.multi_reduction <add>, %308, %cst_274 [2] : vector<2x64x64xf32> to vector<2x64xf32>
    %310 = vector.shape_cast %309 : vector<2x64xf32> to vector<2x64x1xf32>
    %311 = vector.broadcast %310 : vector<2x64x1xf32> to vector<2x64x64xf32>
    %312 = arith.divf %308, %311 : vector<2x64x64xf32>
    "tpu.trace_start"() <{level = 10 : i32, message = "wnm,wmd->wnd"}> : () -> ()
    %cst_275 = arith.constant dense<0.000000e+00> : vector<2x64x8xf32>
    %313 = tpu.matmul %312, %297, %cst_275 {dimension_numbers = #tpu.dot_dimension_numbers<[2], [1], [1], [2], [0, 0, 0, 1, 1, 2], [0], [0]>} : vector<2x64x64xf32>, vector<2x64x8xf32>, vector<2x64x8xf32> -> vector<2x64x8xf32>
    "tpu.trace_stop"() : () -> ()
    %314 = vector.shape_cast %313 : vector<2x64x8xf32> to vector<128x8xf32>
    %c16 = arith.constant 16 : index
    %c0_276 = arith.constant 0 : index
    %315 = vector.load %arg11[%c16, %c0_276] : memref<32x32xf32, #tpu.memory_space<vmem>>, vector<8x32xf32>
    %cst_277 = arith.constant dense<0.000000e+00> : vector<128x32xf32>
    %316 = tpu.matmul %314, %315, %cst_277 {dimension_numbers = #tpu.dot_dimension_numbers<[1], [0], [0], [1], [0, 0, 1, 1], [], []>} : vector<128x8xf32>, vector<8x32xf32>, vector<128x32xf32> -> vector<128x32xf32>
    %317 = arith.addf %291, %316 : vector<128x32xf32>
    %318 = vector.extract_strided_slice %231 {offsets = [0, 24], sizes = [128, 8], strides = [1, 1]} : vector<128x32xf32> to vector<128x8xf32>
    %319 = vector.shape_cast %318 : vector<128x8xf32> to vector<2x64x8xf32>
    %320 = vector.extract_strided_slice %237 {offsets = [0, 24], sizes = [128, 8], strides = [1, 1]} : vector<128x32xf32> to vector<128x8xf32>
    %321 = vector.shape_cast %320 : vector<128x8xf32> to vector<2x64x8xf32>
    %322 = vector.extract_strided_slice %238 {offsets = [0, 24], sizes = [128, 8], strides = [1, 1]} : vector<128x32xf32> to vector<128x8xf32>
    %323 = vector.shape_cast %322 : vector<128x8xf32> to vector<2x64x8xf32>
    "tpu.trace_start"() <{level = 10 : i32, message = "wnd,wmd->wnm"}> : () -> ()
    %cst_278 = arith.constant dense<0.000000e+00> : vector<2x64x64xf32>
    %324 = tpu.matmul %319, %321, %cst_278 {dimension_numbers = #tpu.dot_dimension_numbers<[2], [2], [1], [1], [0, 0, 0, 1, 1, 1], [0], [0]>} : vector<2x64x8xf32>, vector<2x64x8xf32>, vector<2x64x64xf32> -> vector<2x64x64xf32>
    "tpu.trace_stop"() : () -> ()
    %c3 = arith.constant 3 : index
    %c0_279 = arith.constant 0 : index
    %c0_280 = arith.constant 0 : index
    %325 = vector.load %arg10[%c3, %c0_279, %c0_280] : memref<4x64x64xf32, #tpu.memory_space<vmem>>, vector<1x64x64xf32>
    %326 = vector.shape_cast %325 : vector<1x64x64xf32> to vector<64x64xf32>
    %327 = vector.shape_cast %326 : vector<64x64xf32> to vector<1x64x64xf32>
    %328 = vector.broadcast %327 : vector<1x64x64xf32> to vector<2x64x64xf32>
    %329 = arith.addf %324, %328 : vector<2x64x64xf32>
    %cst_281 = arith.constant dense<0xFF800000> : vector<2x64xf32>
    %330 = vector.multi_reduction <maximumf>, %329, %cst_281 [2] : vector<2x64x64xf32> to vector<2x64xf32>
    %331 = vector.shape_cast %330 : vector<2x64xf32> to vector<2x64x1xf32>
    %332 = vector.broadcast %331 : vector<2x64x1xf32> to vector<2x64x64xf32>
    %333 = arith.subf %329, %332 : vector<2x64x64xf32>
    %334 = math.exp %333 : vector<2x64x64xf32>
    %cst_282 = arith.constant dense<0.000000e+00> : vector<2x64xf32>
    %335 = vector.multi_reduction <add>, %334, %cst_282 [2] : vector<2x64x64xf32> to vector<2x64xf32>
    %336 = vector.shape_cast %335 : vector<2x64xf32> to vector<2x64x1xf32>
    %337 = vector.broadcast %336 : vector<2x64x1xf32> to vector<2x64x64xf32>
    %338 = arith.divf %334, %337 : vector<2x64x64xf32>
    "tpu.trace_start"() <{level = 10 : i32, message = "wnm,wmd->wnd"}> : () -> ()
    %cst_283 = arith.constant dense<0.000000e+00> : vector<2x64x8xf32>
    %339 = tpu.matmul %338, %323, %cst_283 {dimension_numbers = #tpu.dot_dimension_numbers<[2], [1], [1], [2], [0, 0, 0, 1, 1, 2], [0], [0]>} : vector<2x64x64xf32>, vector<2x64x8xf32>, vector<2x64x8xf32> -> vector<2x64x8xf32>
    "tpu.trace_stop"() : () -> ()
    %340 = vector.shape_cast %339 : vector<2x64x8xf32> to vector<128x8xf32>
    %c24 = arith.constant 24 : index
    %c0_284 = arith.constant 0 : index
    %341 = vector.load %arg11[%c24, %c0_284] : memref<32x32xf32, #tpu.memory_space<vmem>>, vector<8x32xf32>
    %cst_285 = arith.constant dense<0.000000e+00> : vector<128x32xf32>
    %342 = tpu.matmul %340, %341, %cst_285 {dimension_numbers = #tpu.dot_dimension_numbers<[1], [0], [0], [1], [0, 0, 1, 1], [], []>} : vector<128x8xf32>, vector<8x32xf32>, vector<128x32xf32> -> vector<128x32xf32>
    %343 = arith.addf %317, %342 : vector<128x32xf32>
    %c0_286 = arith.constant 0 : index
    %c0_287 = arith.constant 0 : index
    %344 = vector.load %arg12[%c0_286, %c0_287] : memref<1x32xf32, #tpu.memory_space<vmem>>, vector<1x32xf32>
    %345 = vector.broadcast %344 : vector<1x32xf32> to vector<128x32xf32>
    %346 = arith.addf %343, %345 : vector<128x32xf32>
    %347 = vector.shape_cast %346 : vector<128x32xf32> to vector<1x128x32xf32>
    %c0_288 = arith.constant 0 : index
    %c0_289 = arith.constant 0 : index
    %c0_290 = arith.constant 0 : index
    %348 = vector.load %arg13[%c0_288, %c0_289, %c0_290] : memref<1x128x32xf32, #tpu.memory_space<vmem>>, vector<1x128x32xf32>
    tpu.vector_store %arg13[%c0_288, %c0_289, %c0_290], %347 {strides = array<i32>} : memref<1x128x32xf32, #tpu.memory_space<vmem>>, vector<1x128x32xf32>,
    return
  }
  func.func @transform_0(%arg0: i32) -> (i32, i32, i32, i32, i32) {
    %c0_i32 = arith.constant 0 : i32
    %c0_i32_0 = arith.constant 0 : i32
    %c0_i32_1 = arith.constant 0 : i32
    %c0_i32_2 = arith.constant 0 : i32
    %c0_i32_3 = arith.constant 0 : i32
    return %arg0, %c0_i32, %c0_i32_0, %c0_i32_1, %c0_i32_2 : i32, i32, i32, i32, i32
  }
  func.func @transform_1(%arg0: i32) -> (i32, i32, i32, i32) {
    %c0_i32 = arith.constant 0 : i32
    %c0_i32_0 = arith.constant 0 : i32
    %c0_i32_1 = arith.constant 0 : i32
    %c0_i32_2 = arith.constant 0 : i32
    %c0_i32_3 = arith.constant 0 : i32
    return %c0_i32, %c0_i32_0, %c0_i32_1, %c0_i32_2 : i32, i32, i32, i32
  }
  func.func @transform_2(%arg0: i32) -> (i32, i32) {
    %c0_i32 = arith.constant 0 : i32
    %c0_i32_0 = arith.constant 0 : i32
    %c0_i32_1 = arith.constant 0 : i32
    return %c0_i32, %c0_i32_0 : i32, i32
  }
  func.func @transform_3(%arg0: i32) -> (i32, i32) {
    %c0_i32 = arith.constant 0 : i32
    %c0_i32_0 = arith.constant 0 : i32
    %c0_i32_1 = arith.constant 0 : i32
    return %c0_i32, %c0_i32_0 : i32, i32
  }
  func.func @transform_4(%arg0: i32) -> (i32, i32) {
    %c0_i32 = arith.constant 0 : i32
    %c0_i32_0 = arith.constant 0 : i32
    %c0_i32_1 = arith.constant 0 : i32
    return %c0_i32, %c0_i32_0 : i32, i32
  }
  func.func @transform_5(%arg0: i32) -> (i32, i32) {
    %c0_i32 = arith.constant 0 : i32
    %c0_i32_0 = arith.constant 0 : i32
    %c0_i32_1 = arith.constant 0 : i32
    return %c0_i32, %c0_i32_0 : i32, i32
  }
  func.func @transform_6(%arg0: i32) -> (i32, i32) {
    %c0_i32 = arith.constant 0 : i32
    %c0_i32_0 = arith.constant 0 : i32
    %c0_i32_1 = arith.constant 0 : i32
    return %c0_i32, %c0_i32_0 : i32, i32
  }
  func.func @transform_7(%arg0: i32) -> (i32, i32) {
    %c0_i32 = arith.constant 0 : i32
    %c0_i32_0 = arith.constant 0 : i32
    %c0_i32_1 = arith.constant 0 : i32
    return %c0_i32, %c0_i32_0 : i32, i32
  }
  func.func @transform_8(%arg0: i32) -> (i32, i32) {
    %c0_i32 = arith.constant 0 : i32
    %c0_i32_0 = arith.constant 0 : i32
    %c0_i32_1 = arith.constant 0 : i32
    return %c0_i32, %c0_i32_0 : i32, i32
  }
  func.func @transform_9(%arg0: i32) -> (i32, i32, i32) {
    %c0_i32 = arith.constant 0 : i32
    %c0_i32_0 = arith.constant 0 : i32
    %c0_i32_1 = arith.constant 0 : i32
    %c0_i32_2 = arith.constant 0 : i32
    return %c0_i32, %c0_i32_0, %c0_i32_1 : i32, i32, i32
  }
  func.func @transform_10(%arg0: i32) -> (i32, i32) {
    %c0_i32 = arith.constant 0 : i32
    %c0_i32_0 = arith.constant 0 : i32
    %c0_i32_1 = arith.constant 0 : i32
    return %c0_i32, %c0_i32_0 : i32, i32
  }
  func.func @transform_11(%arg0: i32) -> (i32, i32) {
    %c0_i32 = arith.constant 0 : i32
    %c0_i32_0 = arith.constant 0 : i32
    %c0_i32_1 = arith.constant 0 : i32
    return %c0_i32, %c0_i32_0 : i32, i32
  }
  func.func @transform_12(%arg0: i32) -> (i32, i32, i32) {
    %c0_i32 = arith.constant 0 : i32
    %c0_i32_0 = arith.constant 0 : i32
    %c0_i32_1 = arith.constant 0 : i32
    return %arg0, %c0_i32, %c0_i32_0 : i32, i32, i32
  }
}

module attributes {stable_mosaic.version = 11 : i64} {
  func.func @_fft_conv_kernel(%arg0: i32, %arg1: memref<64x144xf32, #tpu.memory_space<vmem>>, %arg2: memref<64x64xf32, #tpu.memory_space<vmem>>, %arg3: memref<64x1xf32, #tpu.memory_space<vmem>>, %arg4: memref<64x64xf32, #tpu.memory_space<vmem>>, %arg5: memref<64x1xf32, #tpu.memory_space<vmem>>, %arg6: memref<64x144xf32, #tpu.memory_space<vmem>>) attributes {dimension_semantics = [#tpu.dimension_semantics<arbitrary>], iteration_bounds = array<i64: 1>, scalar_prefetch = 0 : i64, scratch_operands = 0 : i64, tpu.core_type = #tpu.core_type<tc>, window_params = [{pipeline_mode = #tpu.pipeline_mode<synchronous>, transform_indices = @transform_0, window_bounds = array<i64: 64, 144>}, {pipeline_mode = #tpu.pipeline_mode<synchronous>, transform_indices = @transform_1, window_bounds = array<i64: 64, 64>}, {pipeline_mode = #tpu.pipeline_mode<synchronous>, transform_indices = @transform_2, window_bounds = array<i64: 64, 1>}, {pipeline_mode = #tpu.pipeline_mode<synchronous>, transform_indices = @transform_3, window_bounds = array<i64: 64, 64>}, {pipeline_mode = #tpu.pipeline_mode<synchronous>, transform_indices = @transform_4, window_bounds = array<i64: 64, 1>}, {pipeline_mode = #tpu.pipeline_mode<synchronous>, transform_indices = @transform_5, window_bounds = array<i64: 64, 144>}]} {
    %c0 = arith.constant 0 : index
    %c0_0 = arith.constant 0 : index
    %0 = vector.load %arg1[%c0, %c0_0] : memref<64x144xf32, #tpu.memory_space<vmem>>, vector<64x144xf32>
    %c0_1 = arith.constant 0 : index
    %c0_2 = arith.constant 0 : index
    %1 = vector.load %arg2[%c0_1, %c0_2] : memref<64x64xf32, #tpu.memory_space<vmem>>, vector<64x64xf32>
    %cst = arith.constant dense<0.000000e+00> : vector<64x144xf32>
    %2 = tpu.matmul %1, %0, %cst {dimension_numbers = #tpu.dot_dimension_numbers<[1], [0], [0], [1], [0, 0, 1, 1], [], []>} : vector<64x64xf32>, vector<64x144xf32>, vector<64x144xf32> -> vector<64x144xf32>
    %c0_3 = arith.constant 0 : index
    %c0_4 = arith.constant 0 : index
    %3 = vector.load %arg3[%c0_3, %c0_4] : memref<64x1xf32, #tpu.memory_space<vmem>>, vector<64x1xf32>
    %4 = vector.broadcast %3 : vector<64x1xf32> to vector<64x144xf32>
    %5 = arith.addf %2, %4 : vector<64x144xf32>
    %cst_5 = arith.constant 0.000000e+00 : f32
    %6 = vector.broadcast %cst_5 : f32 to vector<64x144xf32>
    %7 = arith.cmpf ogt, %5, %6 : vector<64x144xf32>
    %cst_6 = arith.constant 0.00999999977 : f32
    %8 = vector.broadcast %cst_6 : f32 to vector<64x144xf32>
    %9 = arith.mulf %8, %5 : vector<64x144xf32>
    %10 = arith.select %7, %5, %9 : vector<64x144xi1>, vector<64x144xf32>
    %c0_7 = arith.constant 0 : index
    %c0_8 = arith.constant 0 : index
    %11 = vector.load %arg4[%c0_7, %c0_8] : memref<64x64xf32, #tpu.memory_space<vmem>>, vector<64x64xf32>
    %cst_9 = arith.constant dense<0.000000e+00> : vector<64x144xf32>
    %12 = tpu.matmul %11, %10, %cst_9 {dimension_numbers = #tpu.dot_dimension_numbers<[1], [0], [0], [1], [0, 0, 1, 1], [], []>} : vector<64x64xf32>, vector<64x144xf32>, vector<64x144xf32> -> vector<64x144xf32>
    %c0_10 = arith.constant 0 : index
    %c0_11 = arith.constant 0 : index
    %13 = vector.load %arg5[%c0_10, %c0_11] : memref<64x1xf32, #tpu.memory_space<vmem>>, vector<64x1xf32>
    %14 = vector.broadcast %13 : vector<64x1xf32> to vector<64x144xf32>
    %15 = arith.addf %12, %14 : vector<64x144xf32>
    %c0_12 = arith.constant 0 : index
    %c0_13 = arith.constant 0 : index
    %16 = vector.load %arg6[%c0_12, %c0_13] : memref<64x144xf32, #tpu.memory_space<vmem>>, vector<64x144xf32>
    tpu.vector_store %arg6[%c0_12, %c0_13], %15 {strides = array<i32>} : memref<64x144xf32, #tpu.memory_space<vmem>>, vector<64x144xf32>,
    return
  }
  func.func @transform_0(%arg0: i32) -> (i32, i32) {
    %c0_i32 = arith.constant 0 : i32
    %c0_i32_0 = arith.constant 0 : i32
    %c0_i32_1 = arith.constant 0 : i32
    return %c0_i32, %c0_i32_0 : i32, i32
  }
  func.func @transform_1(%arg0: i32) -> (i32, i32) {
    %c0_i32 = arith.constant 0 : i32
    %c0_i32_0 = arith.constant 0 : i32
    %c0_i32_1 = arith.constant 0 : i32
    return %c0_i32, %c0_i32_0 : i32, i32
  }
  func.func @transform_2(%arg0: i32) -> (i32, i32) {
    %c0_i32 = arith.constant 0 : i32
    %c0_i32_0 = arith.constant 0 : i32
    %c0_i32_1 = arith.constant 0 : i32
    return %c0_i32, %c0_i32_0 : i32, i32
  }
  func.func @transform_3(%arg0: i32) -> (i32, i32) {
    %c0_i32 = arith.constant 0 : i32
    %c0_i32_0 = arith.constant 0 : i32
    %c0_i32_1 = arith.constant 0 : i32
    return %c0_i32, %c0_i32_0 : i32, i32
  }
  func.func @transform_4(%arg0: i32) -> (i32, i32) {
    %c0_i32 = arith.constant 0 : i32
    %c0_i32_0 = arith.constant 0 : i32
    %c0_i32_1 = arith.constant 0 : i32
    return %c0_i32, %c0_i32_0 : i32, i32
  }
  func.func @transform_5(%arg0: i32) -> (i32, i32) {
    %c0_i32 = arith.constant 0 : i32
    %c0_i32_0 = arith.constant 0 : i32
    %c0_i32_1 = arith.constant 0 : i32
    return %c0_i32, %c0_i32_0 : i32, i32
  }
}

module attributes {stable_mosaic.version = 11 : i64} {
  func.func @_leff_kernel(%arg0: i32, %arg1: memref<1x128x32xf32, #tpu.memory_space<vmem>>, %arg2: memref<1x32xf32, #tpu.memory_space<vmem>>, %arg3: memref<1x32xf32, #tpu.memory_space<vmem>>, %arg4: memref<32x128xf32, #tpu.memory_space<vmem>>, %arg5: memref<1x128xf32, #tpu.memory_space<vmem>>, %arg6: memref<3x3x128xf32, #tpu.memory_space<vmem>>, %arg7: memref<1x128xf32, #tpu.memory_space<vmem>>, %arg8: memref<128x32xf32, #tpu.memory_space<vmem>>, %arg9: memref<1x32xf32, #tpu.memory_space<vmem>>, %arg10: memref<1x128x32xf32, #tpu.memory_space<vmem>>, %arg11: memref<10x18x128xf32, #tpu.memory_space<vmem>>) attributes {dimension_semantics = [#tpu.dimension_semantics<parallel>], iteration_bounds = array<i64: 2>, scalar_prefetch = 0 : i64, scratch_operands = 1 : i64, tpu.core_type = #tpu.core_type<tc>, window_params = [{transform_indices = @transform_0, window_bounds = array<i64: 1, 128, 32>}, {pipeline_mode = #tpu.pipeline_mode<synchronous>, transform_indices = @transform_1, window_bounds = array<i64: 1, 32>}, {pipeline_mode = #tpu.pipeline_mode<synchronous>, transform_indices = @transform_2, window_bounds = array<i64: 1, 32>}, {pipeline_mode = #tpu.pipeline_mode<synchronous>, transform_indices = @transform_3, window_bounds = array<i64: 32, 128>}, {pipeline_mode = #tpu.pipeline_mode<synchronous>, transform_indices = @transform_4, window_bounds = array<i64: 1, 128>}, {pipeline_mode = #tpu.pipeline_mode<synchronous>, transform_indices = @transform_5, window_bounds = array<i64: 3, 3, 128>}, {pipeline_mode = #tpu.pipeline_mode<synchronous>, transform_indices = @transform_6, window_bounds = array<i64: 1, 128>}, {pipeline_mode = #tpu.pipeline_mode<synchronous>, transform_indices = @transform_7, window_bounds = array<i64: 128, 32>}, {pipeline_mode = #tpu.pipeline_mode<synchronous>, transform_indices = @transform_8, window_bounds = array<i64: 1, 32>}, {transform_indices = @transform_9, window_bounds = array<i64: 1, 128, 32>}]} {
    %c0 = arith.constant 0 : index
    %c0_0 = arith.constant 0 : index
    %c0_1 = arith.constant 0 : index
    %0 = vector.load %arg1[%c0, %c0_0, %c0_1] : memref<1x128x32xf32, #tpu.memory_space<vmem>>, vector<1x128x32xf32>
    %1 = vector.shape_cast %0 : vector<1x128x32xf32> to vector<128x32xf32>
    %cst = arith.constant dense<0.000000e+00> : vector<128xf32>
    %2 = vector.multi_reduction <add>, %1, %cst [1] : vector<128x32xf32> to vector<128xf32>
    %3 = vector.shape_cast %2 : vector<128xf32> to vector<128x1xf32>
    %cst_2 = arith.constant 3.200000e+01 : f32
    %4 = vector.broadcast %cst_2 : f32 to vector<128x1xf32>
    %5 = arith.divf %3, %4 : vector<128x1xf32>
    %6 = vector.broadcast %5 : vector<128x1xf32> to vector<128x32xf32>
    %7 = arith.subf %1, %6 : vector<128x32xf32>
    %8 = arith.mulf %7, %7 : vector<128x32xf32>
    %cst_3 = arith.constant dense<0.000000e+00> : vector<128xf32>
    %9 = vector.multi_reduction <add>, %8, %cst_3 [1] : vector<128x32xf32> to vector<128xf32>
    %10 = vector.shape_cast %9 : vector<128xf32> to vector<128x1xf32>
    %cst_4 = arith.constant 3.200000e+01 : f32
    %11 = vector.broadcast %cst_4 : f32 to vector<128x1xf32>
    %12 = arith.divf %10, %11 : vector<128x1xf32>
    %13 = vector.broadcast %5 : vector<128x1xf32> to vector<128x32xf32>
    %14 = arith.subf %1, %13 : vector<128x32xf32>
    %cst_5 = arith.constant 9.99999974E-6 : f32
    %15 = vector.broadcast %cst_5 : f32 to vector<128x1xf32>
    %16 = arith.addf %12, %15 : vector<128x1xf32>
    %17 = math.rsqrt %16 : vector<128x1xf32>
    %18 = vector.broadcast %17 : vector<128x1xf32> to vector<128x32xf32>
    %19 = arith.mulf %14, %18 : vector<128x32xf32>
    %c0_6 = arith.constant 0 : index
    %c0_7 = arith.constant 0 : index
    %20 = vector.load %arg2[%c0_6, %c0_7] : memref<1x32xf32, #tpu.memory_space<vmem>>, vector<1x32xf32>
    %21 = vector.broadcast %20 : vector<1x32xf32> to vector<128x32xf32>
    %22 = arith.mulf %19, %21 : vector<128x32xf32>
    %c0_8 = arith.constant 0 : index
    %c0_9 = arith.constant 0 : index
    %23 = vector.load %arg3[%c0_8, %c0_9] : memref<1x32xf32, #tpu.memory_space<vmem>>, vector<1x32xf32>
    %24 = vector.broadcast %23 : vector<1x32xf32> to vector<128x32xf32>
    %25 = arith.addf %22, %24 : vector<128x32xf32>
    %c0_10 = arith.constant 0 : index
    %c0_11 = arith.constant 0 : index
    %26 = vector.load %arg4[%c0_10, %c0_11] : memref<32x128xf32, #tpu.memory_space<vmem>>, vector<32x128xf32>
    %cst_12 = arith.constant dense<0.000000e+00> : vector<128x128xf32>
    %27 = tpu.matmul %25, %26, %cst_12 {dimension_numbers = #tpu.dot_dimension_numbers<[1], [0], [0], [1], [0, 0, 1, 1], [], []>} : vector<128x32xf32>, vector<32x128xf32>, vector<128x128xf32> -> vector<128x128xf32>
    %c0_13 = arith.constant 0 : index
    %c0_14 = arith.constant 0 : index
    %28 = vector.load %arg5[%c0_13, %c0_14] : memref<1x128xf32, #tpu.memory_space<vmem>>, vector<1x128xf32>
    %29 = vector.broadcast %28 : vector<1x128xf32> to vector<128x128xf32>
    %30 = arith.addf %27, %29 : vector<128x128xf32>
    %31 = arith.mulf %30, %30 : vector<128x128xf32>
    %32 = arith.mulf %30, %31 : vector<128x128xf32>
    %cst_15 = arith.constant 4.471500e-02 : f32
    %33 = vector.broadcast %cst_15 : f32 to vector<128x128xf32>
    %34 = arith.mulf %33, %32 : vector<128x128xf32>
    %35 = arith.addf %30, %34 : vector<128x128xf32>
    %cst_16 = arith.constant 0.797884583 : f32
    %36 = vector.broadcast %cst_16 : f32 to vector<128x128xf32>
    %37 = arith.mulf %36, %35 : vector<128x128xf32>
    %38 = math.tanh %37 : vector<128x128xf32>
    %cst_17 = arith.constant 1.000000e+00 : f32
    %39 = vector.broadcast %cst_17 : f32 to vector<128x128xf32>
    %40 = arith.addf %39, %38 : vector<128x128xf32>
    %cst_18 = arith.constant 5.000000e-01 : f32
    %41 = vector.broadcast %cst_18 : f32 to vector<128x128xf32>
    %42 = arith.mulf %41, %40 : vector<128x128xf32>
    %43 = arith.mulf %30, %42 : vector<128x128xf32>
    %cst_19 = arith.constant 0.000000e+00 : f32
    %44 = vector.broadcast %cst_19 : f32 to vector<10x18x128xf32>
    %c0_20 = arith.constant 0 : index
    %c0_21 = arith.constant 0 : index
    %c0_22 = arith.constant 0 : index
    %45 = vector.load %arg11[%c0_20, %c0_21, %c0_22] : memref<10x18x128xf32, #tpu.memory_space<vmem>>, vector<10x18x128xf32>
    tpu.vector_store %arg11[%c0_20, %c0_21, %c0_22], %44 {strides = array<i32>} : memref<10x18x128xf32, #tpu.memory_space<vmem>>, vector<10x18x128xf32>,
    %46 = vector.shape_cast %43 : vector<128x128xf32> to vector<8x16x128xf32>
    %c1 = arith.constant 1 : index
    %c1_23 = arith.constant 1 : index
    %c0_24 = arith.constant 0 : index
    %47 = vector.load %arg11[%c1, %c1_23, %c0_24] : memref<10x18x128xf32, #tpu.memory_space<vmem>>, vector<8x16x128xf32>
    tpu.vector_store %arg11[%c1, %c1_23, %c0_24], %46 {strides = array<i32>} : memref<10x18x128xf32, #tpu.memory_space<vmem>>, vector<8x16x128xf32>,
    %cst_25 = arith.constant 0.000000e+00 : f32
    %48 = vector.broadcast %cst_25 : f32 to vector<8x16x128xf32>
    %c0_26 = arith.constant 0 : index
    %c0_27 = arith.constant 0 : index
    %c0_28 = arith.constant 0 : index
    %49 = vector.load %arg11[%c0_26, %c0_27, %c0_28] : memref<10x18x128xf32, #tpu.memory_space<vmem>>, vector<8x16x128xf32>
    %c0_29 = arith.constant 0 : index
    %c0_30 = arith.constant 0 : index
    %c0_31 = arith.constant 0 : index
    %50 = vector.load %arg6[%c0_29, %c0_30, %c0_31] : memref<3x3x128xf32, #tpu.memory_space<vmem>>, vector<1x1x128xf32>
    %51 = vector.shape_cast %50 : vector<1x1x128xf32> to vector<1x128xf32>
    %52 = vector.shape_cast %51 : vector<1x128xf32> to vector<1x1x128xf32>
    %53 = vector.broadcast %52 : vector<1x1x128xf32> to vector<8x16x128xf32>
    %54 = arith.mulf %49, %53 : vector<8x16x128xf32>
    %55 = arith.addf %48, %54 : vector<8x16x128xf32>
    %c0_32 = arith.constant 0 : index
    %c1_33 = arith.constant 1 : index
    %c0_34 = arith.constant 0 : index
    %56 = vector.load %arg11[%c0_32, %c1_33, %c0_34] : memref<10x18x128xf32, #tpu.memory_space<vmem>>, vector<8x16x128xf32>
    %c0_35 = arith.constant 0 : index
    %c1_36 = arith.constant 1 : index
    %c0_37 = arith.constant 0 : index
    %57 = vector.load %arg6[%c0_35, %c1_36, %c0_37] : memref<3x3x128xf32, #tpu.memory_space<vmem>>, vector<1x1x128xf32>
    %58 = vector.shape_cast %57 : vector<1x1x128xf32> to vector<1x128xf32>
    %59 = vector.shape_cast %58 : vector<1x128xf32> to vector<1x1x128xf32>
    %60 = vector.broadcast %59 : vector<1x1x128xf32> to vector<8x16x128xf32>
    %61 = arith.mulf %56, %60 : vector<8x16x128xf32>
    %62 = arith.addf %55, %61 : vector<8x16x128xf32>
    %c0_38 = arith.constant 0 : index
    %c2 = arith.constant 2 : index
    %c0_39 = arith.constant 0 : index
    %63 = vector.load %arg11[%c0_38, %c2, %c0_39] : memref<10x18x128xf32, #tpu.memory_space<vmem>>, vector<8x16x128xf32>
    %c0_40 = arith.constant 0 : index
    %c2_41 = arith.constant 2 : index
    %c0_42 = arith.constant 0 : index
    %64 = vector.load %arg6[%c0_40, %c2_41, %c0_42] : memref<3x3x128xf32, #tpu.memory_space<vmem>>, vector<1x1x128xf32>
    %65 = vector.shape_cast %64 : vector<1x1x128xf32> to vector<1x128xf32>
    %66 = vector.shape_cast %65 : vector<1x128xf32> to vector<1x1x128xf32>
    %67 = vector.broadcast %66 : vector<1x1x128xf32> to vector<8x16x128xf32>
    %68 = arith.mulf %63, %67 : vector<8x16x128xf32>
    %69 = arith.addf %62, %68 : vector<8x16x128xf32>
    %c1_43 = arith.constant 1 : index
    %c0_44 = arith.constant 0 : index
    %c0_45 = arith.constant 0 : index
    %70 = vector.load %arg11[%c1_43, %c0_44, %c0_45] : memref<10x18x128xf32, #tpu.memory_space<vmem>>, vector<8x16x128xf32>
    %c1_46 = arith.constant 1 : index
    %c0_47 = arith.constant 0 : index
    %c0_48 = arith.constant 0 : index
    %71 = vector.load %arg6[%c1_46, %c0_47, %c0_48] : memref<3x3x128xf32, #tpu.memory_space<vmem>>, vector<1x1x128xf32>
    %72 = vector.shape_cast %71 : vector<1x1x128xf32> to vector<1x128xf32>
    %73 = vector.shape_cast %72 : vector<1x128xf32> to vector<1x1x128xf32>
    %74 = vector.broadcast %73 : vector<1x1x128xf32> to vector<8x16x128xf32>
    %75 = arith.mulf %70, %74 : vector<8x16x128xf32>
    %76 = arith.addf %69, %75 : vector<8x16x128xf32>
    %c1_49 = arith.constant 1 : index
    %c1_50 = arith.constant 1 : index
    %c0_51 = arith.constant 0 : index
    %77 = vector.load %arg11[%c1_49, %c1_50, %c0_51] : memref<10x18x128xf32, #tpu.memory_space<vmem>>, vector<8x16x128xf32>
    %c1_52 = arith.constant 1 : index
    %c1_53 = arith.constant 1 : index
    %c0_54 = arith.constant 0 : index
    %78 = vector.load %arg6[%c1_52, %c1_53, %c0_54] : memref<3x3x128xf32, #tpu.memory_space<vmem>>, vector<1x1x128xf32>
    %79 = vector.shape_cast %78 : vector<1x1x128xf32> to vector<1x128xf32>
    %80 = vector.shape_cast %79 : vector<1x128xf32> to vector<1x1x128xf32>
    %81 = vector.broadcast %80 : vector<1x1x128xf32> to vector<8x16x128xf32>
    %82 = arith.mulf %77, %81 : vector<8x16x128xf32>
    %83 = arith.addf %76, %82 : vector<8x16x128xf32>
    %c1_55 = arith.constant 1 : index
    %c2_56 = arith.constant 2 : index
    %c0_57 = arith.constant 0 : index
    %84 = vector.load %arg11[%c1_55, %c2_56, %c0_57] : memref<10x18x128xf32, #tpu.memory_space<vmem>>, vector<8x16x128xf32>
    %c1_58 = arith.constant 1 : index
    %c2_59 = arith.constant 2 : index
    %c0_60 = arith.constant 0 : index
    %85 = vector.load %arg6[%c1_58, %c2_59, %c0_60] : memref<3x3x128xf32, #tpu.memory_space<vmem>>, vector<1x1x128xf32>
    %86 = vector.shape_cast %85 : vector<1x1x128xf32> to vector<1x128xf32>
    %87 = vector.shape_cast %86 : vector<1x128xf32> to vector<1x1x128xf32>
    %88 = vector.broadcast %87 : vector<1x1x128xf32> to vector<8x16x128xf32>
    %89 = arith.mulf %84, %88 : vector<8x16x128xf32>
    %90 = arith.addf %83, %89 : vector<8x16x128xf32>
    %c2_61 = arith.constant 2 : index
    %c0_62 = arith.constant 0 : index
    %c0_63 = arith.constant 0 : index
    %91 = vector.load %arg11[%c2_61, %c0_62, %c0_63] : memref<10x18x128xf32, #tpu.memory_space<vmem>>, vector<8x16x128xf32>
    %c2_64 = arith.constant 2 : index
    %c0_65 = arith.constant 0 : index
    %c0_66 = arith.constant 0 : index
    %92 = vector.load %arg6[%c2_64, %c0_65, %c0_66] : memref<3x3x128xf32, #tpu.memory_space<vmem>>, vector<1x1x128xf32>
    %93 = vector.shape_cast %92 : vector<1x1x128xf32> to vector<1x128xf32>
    %94 = vector.shape_cast %93 : vector<1x128xf32> to vector<1x1x128xf32>
    %95 = vector.broadcast %94 : vector<1x1x128xf32> to vector<8x16x128xf32>
    %96 = arith.mulf %91, %95 : vector<8x16x128xf32>
    %97 = arith.addf %90, %96 : vector<8x16x128xf32>
    %c2_67 = arith.constant 2 : index
    %c1_68 = arith.constant 1 : index
    %c0_69 = arith.constant 0 : index
    %98 = vector.load %arg11[%c2_67, %c1_68, %c0_69] : memref<10x18x128xf32, #tpu.memory_space<vmem>>, vector<8x16x128xf32>
    %c2_70 = arith.constant 2 : index
    %c1_71 = arith.constant 1 : index
    %c0_72 = arith.constant 0 : index
    %99 = vector.load %arg6[%c2_70, %c1_71, %c0_72] : memref<3x3x128xf32, #tpu.memory_space<vmem>>, vector<1x1x128xf32>
    %100 = vector.shape_cast %99 : vector<1x1x128xf32> to vector<1x128xf32>
    %101 = vector.shape_cast %100 : vector<1x128xf32> to vector<1x1x128xf32>
    %102 = vector.broadcast %101 : vector<1x1x128xf32> to vector<8x16x128xf32>
    %103 = arith.mulf %98, %102 : vector<8x16x128xf32>
    %104 = arith.addf %97, %103 : vector<8x16x128xf32>
    %c2_73 = arith.constant 2 : index
    %c2_74 = arith.constant 2 : index
    %c0_75 = arith.constant 0 : index
    %105 = vector.load %arg11[%c2_73, %c2_74, %c0_75] : memref<10x18x128xf32, #tpu.memory_space<vmem>>, vector<8x16x128xf32>
    %c2_76 = arith.constant 2 : index
    %c2_77 = arith.constant 2 : index
    %c0_78 = arith.constant 0 : index
    %106 = vector.load %arg6[%c2_76, %c2_77, %c0_78] : memref<3x3x128xf32, #tpu.memory_space<vmem>>, vector<1x1x128xf32>
    %107 = vector.shape_cast %106 : vector<1x1x128xf32> to vector<1x128xf32>
    %108 = vector.shape_cast %107 : vector<1x128xf32> to vector<1x1x128xf32>
    %109 = vector.broadcast %108 : vector<1x1x128xf32> to vector<8x16x128xf32>
    %110 = arith.mulf %105, %109 : vector<8x16x128xf32>
    %111 = arith.addf %104, %110 : vector<8x16x128xf32>
    %c0_79 = arith.constant 0 : index
    %c0_80 = arith.constant 0 : index
    %112 = vector.load %arg7[%c0_79, %c0_80] : memref<1x128xf32, #tpu.memory_space<vmem>>, vector<1x128xf32>
    %113 = vector.shape_cast %112 : vector<1x128xf32> to vector<1x1x128xf32>
    %114 = vector.broadcast %113 : vector<1x1x128xf32> to vector<8x16x128xf32>
    %115 = arith.addf %111, %114 : vector<8x16x128xf32>
    %116 = arith.mulf %115, %115 : vector<8x16x128xf32>
    %117 = arith.mulf %115, %116 : vector<8x16x128xf32>
    %cst_81 = arith.constant 4.471500e-02 : f32
    %118 = vector.broadcast %cst_81 : f32 to vector<8x16x128xf32>
    %119 = arith.mulf %118, %117 : vector<8x16x128xf32>
    %120 = arith.addf %115, %119 : vector<8x16x128xf32>
    %cst_82 = arith.constant 0.797884583 : f32
    %121 = vector.broadcast %cst_82 : f32 to vector<8x16x128xf32>
    %122 = arith.mulf %121, %120 : vector<8x16x128xf32>
    %123 = math.tanh %122 : vector<8x16x128xf32>
    %cst_83 = arith.constant 1.000000e+00 : f32
    %124 = vector.broadcast %cst_83 : f32 to vector<8x16x128xf32>
    %125 = arith.addf %124, %123 : vector<8x16x128xf32>
    %cst_84 = arith.constant 5.000000e-01 : f32
    %126 = vector.broadcast %cst_84 : f32 to vector<8x16x128xf32>
    %127 = arith.mulf %126, %125 : vector<8x16x128xf32>
    %128 = arith.mulf %115, %127 : vector<8x16x128xf32>
    %129 = vector.shape_cast %128 : vector<8x16x128xf32> to vector<128x128xf32>
    %c0_85 = arith.constant 0 : index
    %c0_86 = arith.constant 0 : index
    %130 = vector.load %arg8[%c0_85, %c0_86] : memref<128x32xf32, #tpu.memory_space<vmem>>, vector<128x32xf32>
    %cst_87 = arith.constant dense<0.000000e+00> : vector<128x32xf32>
    %131 = tpu.matmul %129, %130, %cst_87 {dimension_numbers = #tpu.dot_dimension_numbers<[1], [0], [0], [1], [0, 0, 1, 1], [], []>} : vector<128x128xf32>, vector<128x32xf32>, vector<128x32xf32> -> vector<128x32xf32>
    %c0_88 = arith.constant 0 : index
    %c0_89 = arith.constant 0 : index
    %132 = vector.load %arg9[%c0_88, %c0_89] : memref<1x32xf32, #tpu.memory_space<vmem>>, vector<1x32xf32>
    %133 = vector.broadcast %132 : vector<1x32xf32> to vector<128x32xf32>
    %134 = arith.addf %131, %133 : vector<128x32xf32>
    %135 = arith.addf %25, %134 : vector<128x32xf32>
    %136 = vector.shape_cast %135 : vector<128x32xf32> to vector<1x128x32xf32>
    %c0_90 = arith.constant 0 : index
    %c0_91 = arith.constant 0 : index
    %c0_92 = arith.constant 0 : index
    %137 = vector.load %arg10[%c0_90, %c0_91, %c0_92] : memref<1x128x32xf32, #tpu.memory_space<vmem>>, vector<1x128x32xf32>
    tpu.vector_store %arg10[%c0_90, %c0_91, %c0_92], %136 {strides = array<i32>} : memref<1x128x32xf32, #tpu.memory_space<vmem>>, vector<1x128x32xf32>,
    return
  }
  func.func @transform_0(%arg0: i32) -> (i32, i32, i32) {
    %c0_i32 = arith.constant 0 : i32
    %c0_i32_0 = arith.constant 0 : i32
    %c0_i32_1 = arith.constant 0 : i32
    return %arg0, %c0_i32, %c0_i32_0 : i32, i32, i32
  }
  func.func @transform_1(%arg0: i32) -> (i32, i32) {
    %c0_i32 = arith.constant 0 : i32
    %c0_i32_0 = arith.constant 0 : i32
    %c0_i32_1 = arith.constant 0 : i32
    return %c0_i32, %c0_i32_0 : i32, i32
  }
  func.func @transform_2(%arg0: i32) -> (i32, i32) {
    %c0_i32 = arith.constant 0 : i32
    %c0_i32_0 = arith.constant 0 : i32
    %c0_i32_1 = arith.constant 0 : i32
    return %c0_i32, %c0_i32_0 : i32, i32
  }
  func.func @transform_3(%arg0: i32) -> (i32, i32) {
    %c0_i32 = arith.constant 0 : i32
    %c0_i32_0 = arith.constant 0 : i32
    %c0_i32_1 = arith.constant 0 : i32
    return %c0_i32, %c0_i32_0 : i32, i32
  }
  func.func @transform_4(%arg0: i32) -> (i32, i32) {
    %c0_i32 = arith.constant 0 : i32
    %c0_i32_0 = arith.constant 0 : i32
    %c0_i32_1 = arith.constant 0 : i32
    return %c0_i32, %c0_i32_0 : i32, i32
  }
  func.func @transform_5(%arg0: i32) -> (i32, i32, i32) {
    %c0_i32 = arith.constant 0 : i32
    %c0_i32_0 = arith.constant 0 : i32
    %c0_i32_1 = arith.constant 0 : i32
    %c0_i32_2 = arith.constant 0 : i32
    return %c0_i32, %c0_i32_0, %c0_i32_1 : i32, i32, i32
  }
  func.func @transform_6(%arg0: i32) -> (i32, i32) {
    %c0_i32 = arith.constant 0 : i32
    %c0_i32_0 = arith.constant 0 : i32
    %c0_i32_1 = arith.constant 0 : i32
    return %c0_i32, %c0_i32_0 : i32, i32
  }
  func.func @transform_7(%arg0: i32) -> (i32, i32) {
    %c0_i32 = arith.constant 0 : i32
    %c0_i32_0 = arith.constant 0 : i32
    %c0_i32_1 = arith.constant 0 : i32
    return %c0_i32, %c0_i32_0 : i32, i32
  }
  func.func @transform_8(%arg0: i32) -> (i32, i32) {
    %c0_i32 = arith.constant 0 : i32
    %c0_i32_0 = arith.constant 0 : i32
    %c0_i32_1 = arith.constant 0 : i32
    return %c0_i32, %c0_i32_0 : i32, i32
  }
  func.func @transform_9(%arg0: i32) -> (i32, i32, i32) {
    %c0_i32 = arith.constant 0 : i32
    %c0_i32_0 = arith.constant 0 : i32
    %c0_i32_1 = arith.constant 0 : i32
    return %arg0, %c0_i32, %c0_i32_0 : i32, i32, i32
  }
}

</mosaic_0001>

<llo_original>
// kernel: scse_block_forward.5
$region0: #{scse_block_forward.5}
  #allocation0 [shape = 'u32[]', space=smem, size = 0x4, offset = 0x4, fixed_abs, tag = 'smem constant byte address 0x4 - core index']
  #allocation1 [shape = 'u32[144,128]{1,0:T(1,128)}', space=vmem, size = 0x12000, scoped, tag = 'internal scratch']
  %s0 = inlined_call_operand.vmem [shape: f32[64,144], index: 0, kind: input, shape index: {}]
  %s1 = inlined_call_operand.vmem [shape: f32[64,64], index: 1, kind: input, shape index: {}]
  %s2 = inlined_call_operand.vmem [shape: f32[64,1], index: 2, kind: input, shape index: {}]
  %s3 = inlined_call_operand.vmem [shape: f32[64,64], index: 3, kind: input, shape index: {}]
  %s4 = inlined_call_operand.vmem [shape: f32[64,1], index: 4, kind: input, shape index: {}]
  %s5 = inlined_call_operand.vmem [shape: f32[64,144], index: 5, kind: output, shape index: {}]
  %s6 = sld [smem:[#allocation0]]
  $region30: #{scse_block_forward.5} parent=0
    _
  %s8 = ssub.s32 1, %s6
  %s9 = scalar_select 0, %s8, %s6
  // Predicated region
  $region2: #{scse_block_forward.5} parent=0 // pred_check
    _
  $region3: #{scse_block_forward.5} parent=0 // pred_check_branch
    %11 = sbr.rel (0) target = $region5
  $region4: #{scse_block_forward.5} parent=0 // pred_region
    _
  $region5: #{scse_block_forward.5} parent=0 // pred_fallthru
    _
  // Predicated region
  $region6: #{scse_block_forward.5} parent=0 // pred_check
    _
  $region7: #{scse_block_forward.5} parent=0 // pred_check_branch
    %13 = sbr.rel (0) target = $region9
  $region8: #{scse_block_forward.5} parent=0 // pred_region
    _
  $region9: #{scse_block_forward.5} parent=0 // pred_fallthru
    _
  // Predicated region
  $region10: #{scse_block_forward.5} parent=0 // pred_check
    _
  $region11: #{scse_block_forward.5} parent=0 // pred_check_branch
    %15 = sbr.rel (0) target = $region13
  $region12: #{scse_block_forward.5} parent=0 // pred_region
    _
  $region13: #{scse_block_forward.5} parent=0 // pred_fallthru
    _
  // Predicated region
  $region14: #{scse_block_forward.5} parent=0 // pred_check
    _
  $region15: #{scse_block_forward.5} parent=0 // pred_check_branch
    %17 = sbr.rel (0) target = $region17
  $region16: #{scse_block_forward.5} parent=0 // pred_region
    _
  $region17: #{scse_block_forward.5} parent=0 // pred_fallthru
    _
  // Predicated region
  $region18: #{scse_block_forward.5} parent=0 // pred_check
    _
  $region19: #{scse_block_forward.5} parent=0 // pred_check_branch
    %19 = sbr.rel (0) target = $region21
  $region20: #{scse_block_forward.5} parent=0 // pred_region
    _
  $region21: #{scse_block_forward.5} parent=0 // pred_fallthru
    _
  %v20 = vld [vmem:[%s0] sm:$0xff]
  %v21 = vld [vmem:[%s0 + $0x8] sm:$0xff]
  %v22 = vld [vmem:[%s0 + $0x10] sm:$0xff]
  %v23 = vld [vmem:[%s0 + $0x18] sm:$0xff]
  %v24 = vld [vmem:[%s0 + $0x20] sm:$0xff]
  %v25 = vld [vmem:[%s0 + $0x28] sm:$0xff]
  %v26 = vld [vmem:[%s0 + $0x30] sm:$0xff]
  %v27 = vld [vmem:[%s0 + $0x38] sm:$0xff]
  %v28 = vld [vmem:[%s0 + $0x40] sm:$0xff]
  %v29 = vld [vmem:[%s0 + $0x48] sm:$0xff]
  %v30 = vld [vmem:[%s0 + $0x50] sm:$0xff]
  %v31 = vld [vmem:[%s0 + $0x58] sm:$0xff]
  %v32 = vld [vmem:[%s0 + $0x60] sm:$0xff]
  %v33 = vld [vmem:[%s0 + $0x68] sm:$0xff]
  %v34 = vld [vmem:[%s0 + $0x70] sm:$0xff]
  %v35 = vld [vmem:[%s0 + $0x78] sm:$0xff]
  %v36 = vld [vmem:[%s1] sm:$0xff]
  %v37 = vld [vmem:[%s1 + $0x8] sm:$0xff]
  %v38 = vld [vmem:[%s1 + $0x10] sm:$0xff]
  %v39 = vld [vmem:[%s1 + $0x18] sm:$0xff]
  %v40 = vld [vmem:[%s1 + $0x20] sm:$0xff]
  %v41 = vld [vmem:[%s1 + $0x28] sm:$0xff]
  %v42 = vld [vmem:[%s1 + $0x30] sm:$0xff]
  %v43 = vld [vmem:[%s1 + $0x38] sm:$0xff]
  %v44 = vld [vmem:[%s2] sm:$0xff]
  %v45 = vld [vmem:[%s2 + $0x8] sm:$0xff]
  %v46 = vld [vmem:[%s2 + $0x10] sm:$0xff]
  %v47 = vld [vmem:[%s2 + $0x18] sm:$0xff]
  %v48 = vld [vmem:[%s2 + $0x20] sm:$0xff]
  %v49 = vld [vmem:[%s2 + $0x28] sm:$0xff]
  %v50 = vld [vmem:[%s2 + $0x30] sm:$0xff]
  %v51 = vld [vmem:[%s2 + $0x38] sm:$0xff]
  %53 = vset.pattern.permute.xlu0 0
  %54 = vperm.xlu0 %53, %v44
  %v55 = vpop.permute.xlu0 %54
  %58 = vset.pattern.permute.xlu0 0
  %59 = vperm.xlu0 %58, %v45
  %v60 = vpop.permute.xlu0 %59
  %63 = vset.pattern.permute.xlu0 0
  %64 = vperm.xlu0 %63, %v46
  %v65 = vpop.permute.xlu0 %64
  %68 = vset.pattern.permute.xlu0 0
  %69 = vperm.xlu0 %68, %v47
  %v70 = vpop.permute.xlu0 %69
  %73 = vset.pattern.permute.xlu0 0
  %74 = vperm.xlu0 %73, %v48
  %v75 = vpop.permute.xlu0 %74
  %78 = vset.pattern.permute.xlu0 0
  %79 = vperm.xlu0 %78, %v49
  %v80 = vpop.permute.xlu0 %79
  %83 = vset.pattern.permute.xlu0 0
  %84 = vperm.xlu0 %83, %v50
  %v85 = vpop.permute.xlu0 %84
  %88 = vset.pattern.permute.xlu0 0
  %89 = vperm.xlu0 %88, %v51
  %v90 = vpop.permute.xlu0 %89
  %vm92 = vcmask 523264
  %v94 = vsel %vm92, %v36, 0
  %v97 = vsel %vm92, %v37, 0
  %v100 = vsel %vm92, %v38, 0
  %v103 = vsel %vm92, %v39, 0
  %v106 = vsel %vm92, %v40, 0
  %v109 = vsel %vm92, %v41, 0
  %v112 = vsel %vm92, %v42, 0
  %v115 = vsel %vm92, %v43, 0
  %117 = vmatprep.subr.mxu0 %v21
  %118 = vmatpush1.msra.mxu0 %v20
  %119 = vmatprep.subr.mxu0 %v23
  %120 = vmatpush1.msra.mxu0 %v22
  %121 = vmatprep.subr.mxu0 %v25
  %122 = vmatpush1.msra.mxu0 %v24
  %123 = vmatprep.subr.mxu0 %v27
  %124 = vmatpush1.msra.mxu0 %v26
  %125 = vmatprep.subr.mxu0 %v29
  %126 = vmatpush1.msra.mxu0 %v28
  %127 = vmatprep.subr.mxu0 %v31
  %128 = vmatpush1.msra.mxu0 %v30
  %129 = vmatprep.subr.mxu0 %v33
  %130 = vmatpush1.msra.mxu0 %v32
  %131 = vmatprep.subr.mxu0 %v35
  %132 = vmatpush1.msra.mxu0 %v34
  %133 = vmatprep.subr.mxu0 0.0
  %134 = vmatpush1.msra.mxu0 0.0
  %135 = vmatprep.subr.mxu0 0.0
  %136 = vmatpush1.msra.mxu0 0.0
  %137 = vmatprep.subr.mxu0 0.0
  %138 = vmatpush1.msra.mxu0 0.0
  %139 = vmatprep.subr.mxu0 0.0
  %140 = vmatpush1.msra.mxu0 0.0
  %141 = vmatprep.subr.mxu0 0.0
  %142 = vmatpush1.msra.mxu0 0.0
  %143 = vmatprep.subr.mxu0 0.0
  %144 = vmatpush1.msra.mxu0 0.0
  %145 = vmatprep.subr.mxu0 0.0
  %146 = vmatpush1.msra.mxu0 0.0
  %147 = vmatprep.subr.mxu0 0.0
  %148 = vmatpush1.msra.mxu0 0.0
  %149 = vmatprep.subr.mxu0 0.0
  %150 = vmatpush1.msra.mxu0 0.0
  %151 = vmatprep.subr.mxu0 0.0
  %152 = vmatpush1.msra.mxu0 0.0
  %153 = vmatprep.subr.mxu0 0.0
  %154 = vmatpush1.msra.mxu0 0.0
  %155 = vmatprep.subr.mxu0 0.0
  %156 = vmatpush1.msra.mxu0 0.0
  %157 = vmatprep.subr.mxu0 0.0
  %158 = vmatpush1.msra.mxu0 0.0
  %159 = vmatprep.subr.mxu0 0.0
  %160 = vmatpush1.msra.mxu0 0.0
  %161 = vmatprep.subr.mxu0 0.0
  %162 = vmatpush1.msra.mxu0 0.0
  %163 = vmatprep.subr.mxu0 0.0
  %164 = vmatpush1.msra.mxu0 0.0
  %165 = vmatprep.subr.mxu0 0.0
  %166 = vmatpush1.msra.mxu0 0.0
  %167 = vmatprep.subr.mxu0 0.0
  %168 = vmatpush1.msra.mxu0 0.0
  %169 = vmatprep.subr.mxu0 0.0
  %170 = vmatpush1.msra.mxu0 0.0
  %171 = vmatprep.subr.mxu0 0.0
  %172 = vmatpush1.msra.mxu0 0.0
  %173 = vmatprep.subr.mxu0 0.0
  %174 = vmatpush1.msra.mxu0 0.0
  %175 = vmatprep.subr.mxu0 0.0
  %176 = vmatpush1.msra.mxu0 0.0
  %177 = vmatprep.subr.mxu0 0.0
  %178 = vmatpush1.msra.mxu0 0.0
  %179 = vmatprep.subr.mxu0 0.0
  %180 = vmatpush1.msra.mxu0 0.0
  %181 = vmatprep.mubr.f32.mxu0 0.0
  %182 = vmatmul.mubr.f32.gmra.mrb[0].mxu0 %v94
  %v183 = vpop.f32.mrb[0].mxu0
  %v184 = vadd.f32 %v55, %v183
  %v185 = vpop.f32.mrb[0].mxu0
  %v186 = vadd.f32 %v55, %v185
  %187 = vmatprep.mubr.f32.mxu0 0.0
  %188 = vmatmul.mubr.f32.gmra.mrb[0].mxu0 %v97
  %v189 = vpop.f32.mrb[0].mxu0
  %v190 = vadd.f32 %v60, %v189
  %v191 = vpop.f32.mrb[0].mxu0
  %v192 = vadd.f32 %v60, %v191
  %193 = vmatprep.mubr.f32.mxu0 0.0
  %194 = vmatmul.mubr.f32.gmra.mrb[0].mxu0 %v100
  %v195 = vpop.f32.mrb[0].mxu0
  %v196 = vadd.f32 %v65, %v195
  %v197 = vpop.f32.mrb[0].mxu0
  %v198 = vadd.f32 %v65, %v197
  %199 = vmatprep.mubr.f32.mxu0 0.0
  %200 = vmatmul.mubr.f32.gmra.mrb[0].mxu0 %v103
  %v201 = vpop.f32.mrb[0].mxu0
  %v202 = vadd.f32 %v70, %v201
  %v203 = vpop.f32.mrb[0].mxu0
  %v204 = vadd.f32 %v70, %v203
  %205 = vmatprep.mubr.f32.mxu0 0.0
  %206 = vmatmul.mubr.f32.gmra.mrb[0].mxu0 %v106
  %v207 = vpop.f32.mrb[0].mxu0
  %v208 = vadd.f32 %v75, %v207
  %v209 = vpop.f32.mrb[0].mxu0
  %v210 = vadd.f32 %v75, %v209
  %211 = vmatprep.mubr.f32.mxu0 0.0
  %212 = vmatmul.mubr.f32.gmra.mrb[0].mxu0 %v109
  %v213 = vpop.f32.mrb[0].mxu0
  %v214 = vadd.f32 %v80, %v213
  %v215 = vpop.f32.mrb[0].mxu0
  %v216 = vadd.f32 %v80, %v215
  %217 = vmatprep.mubr.f32.mxu0 0.0
  %218 = vmatmul.mubr.f32.gmra.mrb[0].mxu0 %v112
  %v219 = vpop.f32.mrb[0].mxu0
  %v220 = vadd.f32 %v85, %v219
  %v221 = vpop.f32.mrb[0].mxu0
  %v222 = vadd.f32 %v85, %v221
  %223 = vmatprep.mubr.f32.mxu0 0.0
  %224 = vmatmul.mubr.f32.gmra.mrb[0].mxu0 %v115
  %v225 = vpop.f32.mrb[0].mxu0
  %v226 = vadd.f32 %v90, %v225
  %v227 = vpop.f32.mrb[0].mxu0
  %v228 = vadd.f32 %v90, %v227
  %229 = vdwg.mxu0
  %vm230 = vcmp.gt.f32.partialorder %v184, 0.0
  %vm231 = vcmp.gt.f32.partialorder %v186, 0.0
  %vm232 = vcmp.gt.f32.partialorder %v190, 0.0
  %vm233 = vcmp.gt.f32.partialorder %v192, 0.0
  %vm234 = vcmp.gt.f32.partialorder %v196, 0.0
  %vm235 = vcmp.gt.f32.partialorder %v198, 0.0
  %vm236 = vcmp.gt.f32.partialorder %v202, 0.0
  %vm237 = vcmp.gt.f32.partialorder %v204, 0.0
  %vm238 = vcmp.gt.f32.partialorder %v208, 0.0
  %vm239 = vcmp.gt.f32.partialorder %v210, 0.0
  %vm240 = vcmp.gt.f32.partialorder %v214, 0.0
  %vm241 = vcmp.gt.f32.partialorder %v216, 0.0
  %vm242 = vcmp.gt.f32.partialorder %v220, 0.0
  %vm243 = vcmp.gt.f32.partialorder %v222, 0.0
  %vm244 = vcmp.gt.f32.partialorder %v226, 0.0
  %vm245 = vcmp.gt.f32.partialorder %v228, 0.0
  %v246 = vmul.f32 %v184, 0.01
  %v247 = vmul.f32 %v186, 0.01
  %v248 = vmul.f32 %v190, 0.01
  %v249 = vmul.f32 %v192, 0.01
  %v250 = vmul.f32 %v196, 0.01
  %v251 = vmul.f32 %v198, 0.01
  %v252 = vmul.f32 %v202, 0.01
  %v253 = vmul.f32 %v204, 0.01
  %v254 = vmul.f32 %v208, 0.01
  %v255 = vmul.f32 %v210, 0.01
  %v256 = vmul.f32 %v214, 0.01
  %v257 = vmul.f32 %v216, 0.01
  %v258 = vmul.f32 %v220, 0.01
  %v259 = vmul.f32 %v222, 0.01
  %v260 = vmul.f32 %v226, 0.01
  %v261 = vmul.f32 %v228, 0.01
  %v262 = vsel %vm230, %v184, %v246
  %v263 = vsel %vm231, %v186, %v247
  %v264 = vsel %vm232, %v190, %v248
  %v265 = vsel %vm233, %v192, %v249
  %v266 = vsel %vm234, %v196, %v250
  %v267 = vsel %vm235, %v198, %v251
  %v268 = vsel %vm236, %v202, %v252
  %v269 = vsel %vm237, %v204, %v253
  %v270 = vsel %vm238, %v208, %v254
  %v271 = vsel %vm239, %v210, %v255
  %v272 = vsel %vm240, %v214, %v256
  %v273 = vsel %vm241, %v216, %v257
  %v274 = vsel %vm242, %v220, %v258
  %v275 = vsel %vm243, %v222, %v259
  %v276 = vsel %vm244, %v226, %v260
  %v277 = vsel %vm245, %v228, %v261
  %v278 = vld [vmem:[%s3] sm:$0xff]
  %v279 = vld [vmem:[%s3 + $0x8] sm:$0xff]
  %v280 = vld [vmem:[%s3 + $0x10] sm:$0xff]
  %v281 = vld [vmem:[%s3 + $0x18] sm:$0xff]
  %v282 = vld [vmem:[%s3 + $0x20] sm:$0xff]
  %v283 = vld [vmem:[%s3 + $0x28] sm:$0xff]
  %v284 = vld [vmem:[%s3 + $0x30] sm:$0xff]
  %v285 = vld [vmem:[%s3 + $0x38] sm:$0xff]
  %v286 = vld [vmem:[%s4] sm:$0xff]
  %v287 = vld [vmem:[%s4 + $0x8] sm:$0xff]
  %v288 = vld [vmem:[%s4 + $0x10] sm:$0xff]
  %v289 = vld [vmem:[%s4 + $0x18] sm:$0xff]
  %v290 = vld [vmem:[%s4 + $0x20] sm:$0xff]
  %v291 = vld [vmem:[%s4 + $0x28] sm:$0xff]
  %v292 = vld [vmem:[%s4 + $0x30] sm:$0xff]
  %v293 = vld [vmem:[%s4 + $0x38] sm:$0xff]
  %295 = vset.pattern.permute.xlu0 0
  %296 = vperm.xlu0 %295, %v286
  %v297 = vpop.permute.xlu0 %296
  %300 = vset.pattern.permute.xlu0 0
  %301 = vperm.xlu0 %300, %v287
  %v302 = vpop.permute.xlu0 %301
  %305 = vset.pattern.permute.xlu0 0
  %306 = vperm.xlu0 %305, %v288
  %v307 = vpop.permute.xlu0 %306
  %310 = vset.pattern.permute.xlu0 0
  %311 = vperm.xlu0 %310, %v289
  %v312 = vpop.permute.xlu0 %311
  %315 = vset.pattern.permute.xlu0 0
  %316 = vperm.xlu0 %315, %v290
  %v317 = vpop.permute.xlu0 %316
  %320 = vset.pattern.permute.xlu0 0
  %321 = vperm.xlu0 %320, %v291
  %v322 = vpop.permute.xlu0 %321
  %325 = vset.pattern.permute.xlu0 0
  %326 = vperm.xlu0 %325, %v292
  %v327 = vpop.permute.xlu0 %326
  %330 = vset.pattern.permute.xlu0 0
  %331 = vperm.xlu0 %330, %v293
  %v332 = vpop.permute.xlu0 %331
  %v335 = vsel %vm92, %v278, 0
  %v338 = vsel %vm92, %v279, 0
  %v341 = vsel %vm92, %v280, 0
  %v344 = vsel %vm92, %v281, 0
  %v347 = vsel %vm92, %v282, 0
  %v350 = vsel %vm92, %v283, 0
  %v353 = vsel %vm92, %v284, 0
  %v356 = vsel %vm92, %v285, 0
  %358 = vmatprep.subr.mxu0 %v263
  %359 = vmatpush1.msra.mxu0 %v262
  %360 = vmatprep.subr.mxu0 %v265
  %361 = vmatpush1.msra.mxu0 %v264
  %362 = vmatprep.subr.mxu0 %v267
  %363 = vmatpush1.msra.mxu0 %v266
  %364 = vmatprep.subr.mxu0 %v269
  %365 = vmatpush1.msra.mxu0 %v268
  %366 = vmatprep.subr.mxu0 %v271
  %367 = vmatpush1.msra.mxu0 %v270
  %368 = vmatprep.subr.mxu0 %v273
  %369 = vmatpush1.msra.mxu0 %v272
  %370 = vmatprep.subr.mxu0 %v275
  %371 = vmatpush1.msra.mxu0 %v274
  %372 = vmatprep.subr.mxu0 %v277
  %373 = vmatpush1.msra.mxu0 %v276
  %374 = vmatprep.subr.mxu0 0.0
  %375 = vmatpush1.msra.mxu0 0.0
  %376 = vmatprep.subr.mxu0 0.0
  %377 = vmatpush1.msra.mxu0 0.0
  %378 = vmatprep.subr.mxu0 0.0
  %379 = vmatpush1.msra.mxu0 0.0
  %380 = vmatprep.subr.mxu0 0.0
  %381 = vmatpush1.msra.mxu0 0.0
  %382 = vmatprep.subr.mxu0 0.0
  %383 = vmatpush1.msra.mxu0 0.0
  %384 = vmatprep.subr.mxu0 0.0
  %385 = vmatpush1.msra.mxu0 0.0
  %386 = vmatprep.subr.mxu0 0.0
  %387 = vmatpush1.msra.mxu0 0.0
  %388 = vmatprep.subr.mxu0 0.0
  %389 = vmatpush1.msra.mxu0 0.0
  %390 = vmatprep.subr.mxu0 0.0
  %391 = vmatpush1.msra.mxu0 0.0
  %392 = vmatprep.subr.mxu0 0.0
  %393 = vmatpush1.msra.mxu0 0.0
  %394 = vmatprep.subr.mxu0 0.0
  %395 = vmatpush1.msra.mxu0 0.0
  %396 = vmatprep.subr.mxu0 0.0
  %397 = vmatpush1.msra.mxu0 0.0
  %398 = vmatprep.subr.mxu0 0.0
  %399 = vmatpush1.msra.mxu0 0.0
  %400 = vmatprep.subr.mxu0 0.0
  %401 = vmatpush1.msra.mxu0 0.0
  %402 = vmatprep.subr.mxu0 0.0
  %403 = vmatpush1.msra.mxu0 0.0
  %404 = vmatprep.subr.mxu0 0.0
  %405 = vmatpush1.msra.mxu0 0.0
  %406 = vmatprep.subr.mxu0 0.0
  %407 = vmatpush1.msra.mxu0 0.0
  %408 = vmatprep.subr.mxu0 0.0
  %409 = vmatpush1.msra.mxu0 0.0
  %410 = vmatprep.subr.mxu0 0.0
  %411 = vmatpush1.msra.mxu0 0.0
  %412 = vmatprep.subr.mxu0 0.0
  %413 = vmatpush1.msra.mxu0 0.0
  %414 = vmatprep.subr.mxu0 0.0
  %415 = vmatpush1.msra.mxu0 0.0
  %416 = vmatprep.subr.mxu0 0.0
  %417 = vmatpush1.msra.mxu0 0.0
  %418 = vmatprep.subr.mxu0 0.0
  %419 = vmatpush1.msra.mxu0 0.0
  %420 = vmatprep.subr.mxu0 0.0
  %421 = vmatpush1.msra.mxu0 0.0
  %422 = vmatprep.mubr.f32.mxu0 0.0
  %423 = vmatmul.mubr.f32.gmra.mrb[0].mxu0 %v335
  %v424 = vpop.f32.mrb[0].mxu0
  %v425 = vadd.f32 %v297, %v424
  %v426 = vpop.f32.mrb[0].mxu0
  %v427 = vadd.f32 %v297, %v426
  %428 = vmatprep.mubr.f32.mxu0 0.0
  %429 = vmatmul.mubr.f32.gmra.mrb[0].mxu0 %v338
  %v430 = vpop.f32.mrb[0].mxu0
  %v431 = vadd.f32 %v302, %v430
  %v432 = vpop.f32.mrb[0].mxu0
  %v433 = vadd.f32 %v302, %v432
  %434 = vmatprep.mubr.f32.mxu0 0.0
  %435 = vmatmul.mubr.f32.gmra.mrb[0].mxu0 %v341
  %v436 = vpop.f32.mrb[0].mxu0
  %v437 = vadd.f32 %v307, %v436
  %v438 = vpop.f32.mrb[0].mxu0
  %v439 = vadd.f32 %v307, %v438
  %440 = vmatprep.mubr.f32.mxu0 0.0
  %441 = vmatmul.mubr.f32.gmra.mrb[0].mxu0 %v344
  %v442 = vpop.f32.mrb[0].mxu0
  %v443 = vadd.f32 %v312, %v442
  %v444 = vpop.f32.mrb[0].mxu0
  %v445 = vadd.f32 %v312, %v444
  %446 = vmatprep.mubr.f32.mxu0 0.0
  %447 = vmatmul.mubr.f32.gmra.mrb[0].mxu0 %v347
  %v448 = vpop.f32.mrb[0].mxu0
  %v449 = vadd.f32 %v317, %v448
  %v450 = vpop.f32.mrb[0].mxu0
  %v451 = vadd.f32 %v317, %v450
  %452 = vmatprep.mubr.f32.mxu0 0.0
  %453 = vmatmul.mubr.f32.gmra.mrb[0].mxu0 %v350
  %v454 = vpop.f32.mrb[0].mxu0
  %v455 = vadd.f32 %v322, %v454
  %v456 = vpop.f32.mrb[0].mxu0
  %v457 = vadd.f32 %v322, %v456
  %458 = vmatprep.mubr.f32.mxu0 0.0
  %459 = vmatmul.mubr.f32.gmra.mrb[0].mxu0 %v353
  %v460 = vpop.f32.mrb[0].mxu0
  %v461 = vadd.f32 %v327, %v460
  %v462 = vpop.f32.mrb[0].mxu0
  %v463 = vadd.f32 %v327, %v462
  %464 = vmatprep.mubr.f32.mxu0 0.0
  %465 = vmatmul.mubr.f32.gmra.mrb[0].mxu0 %v356
  %v466 = vpop.f32.mrb[0].mxu0
  %v467 = vadd.f32 %v332, %v466
  %v468 = vpop.f32.mrb[0].mxu0
  %v469 = vadd.f32 %v332, %v468
  %470 = vdwg.mxu0
  %471 = vst [vmem:[%s5] sm:$0xff] %v425
  %vm472 = vcmask 130048
  %473 = vst.msk [vmem:[%s5 + $0x8] sm:$0xff] %vm472, %v427
  %474 = vst [vmem:[%s5 + $0x10] sm:$0xff] %v431
  %475 = vst.msk [vmem:[%s5 + $0x18] sm:$0xff] %vm472, %v433
  %476 = vst [vmem:[%s5 + $0x20] sm:$0xff] %v437
  %477 = vst.msk [vmem:[%s5 + $0x28] sm:$0xff] %vm472, %v439
  %478 = vst [vmem:[%s5 + $0x30] sm:$0xff] %v443
  %479 = vst.msk [vmem:[%s5 + $0x38] sm:$0xff] %vm472, %v445
  %480 = vst [vmem:[%s5 + $0x40] sm:$0xff] %v449
  %481 = vst.msk [vmem:[%s5 + $0x48] sm:$0xff] %vm472, %v451
  %482 = vst [vmem:[%s5 + $0x50] sm:$0xff] %v455
  %483 = vst.msk [vmem:[%s5 + $0x58] sm:$0xff] %vm472, %v457
  %484 = vst [vmem:[%s5 + $0x60] sm:$0xff] %v461
  %485 = vst.msk [vmem:[%s5 + $0x68] sm:$0xff] %vm472, %v463
  %486 = vst [vmem:[%s5 + $0x70] sm:$0xff] %v467
  %487 = vst.msk [vmem:[%s5 + $0x78] sm:$0xff] %vm472, %v469
  // Predicated region
  $region22: #{scse_block_forward.5} parent=0 // pred_check
    _
  $region23: #{scse_block_forward.5} parent=0 // pred_check_branch
    %489 = sbr.rel (0) target = $region25
  $region24: #{scse_block_forward.5} parent=0 // pred_region
    _
  $region25: #{scse_block_forward.5} parent=0 // pred_fallthru
    _
  // Predicated region
  $region26: #{scse_block_forward.5} parent=0 // pred_check
    _
  $region27: #{scse_block_forward.5} parent=0 // pred_check_branch
    %491 = sbr.rel (0) target = $region29
  $region28: #{scse_block_forward.5} parent=0 // pred_region
    _
  $region29: #{scse_block_forward.5} parent=0 // pred_fallthru
    _

// kernel: reverse.1
$region0: #{reverse.1}
  #allocation0 [shape = 's32[1]{0}', space=sflag, size = 0x4, scoped, tag = 'scoped memory for reverse.1']
  %s0 = inlined_call_operand.vmem [shape: f32[2,32,8,7], index: 0, kind: input, shape index: {}]
  %s1 = inlined_call_operand.vmem [shape: f32[2,32,8,7], index: 1, kind: output, shape index: {}]
  %s2 = scalar_lea.vmem %s0, 48
  %v3 = vld [vmem:[%s2] sm:$0xff]
  %4 = vst [vmem:[%s1] sm:$0xff] %v3
  %s5 = scalar_lea.vmem %s0, 104
  %v6 = vld [vmem:[%s5] sm:$0xff]
  %s7 = scalar_lea.vmem %s1, 56
  %8 = vst [vmem:[%s7] sm:$0xff] %v6
  %s9 = scalar_lea.vmem %s0, 40
  %v10 = vld [vmem:[%s9] sm:$0xff]
  %s11 = scalar_lea.vmem %s1, 8
  %12 = vst [vmem:[%s11] sm:$0xff] %v10
  %s13 = scalar_lea.vmem %s0, 96
  %v14 = vld [vmem:[%s13] sm:$0xff]
  %s15 = scalar_lea.vmem %s1, 64
  %16 = vst [vmem:[%s15] sm:$0xff] %v14
  %s17 = scalar_lea.vmem %s0, 32
  %v18 = vld [vmem:[%s17] sm:$0xff]
  %s19 = scalar_lea.vmem %s1, 16
  %20 = vst [vmem:[%s19] sm:$0xff] %v18
  %s21 = scalar_lea.vmem %s0, 88
  %v22 = vld [vmem:[%s21] sm:$0xff]
  %s23 = scalar_lea.vmem %s1, 72
  %24 = vst [vmem:[%s23] sm:$0xff] %v22
  %s25 = scalar_lea.vmem %s0, 24
  %v26 = vld [vmem:[%s25] sm:$0xff]
  %s27 = scalar_lea.vmem %s1, 24
  %28 = vst [vmem:[%s27] sm:$0xff] %v26
  %s29 = scalar_lea.vmem %s0, 80
  %v30 = vld [vmem:[%s29] sm:$0xff]
  %s31 = scalar_lea.vmem %s1, 80
  %32 = vst [vmem:[%s31] sm:$0xff] %v30
  %s33 = scalar_lea.vmem %s0, 16
  %v34 = vld [vmem:[%s33] sm:$0xff]
  %s35 = scalar_lea.vmem %s1, 32
  %36 = vst [vmem:[%s35] sm:$0xff] %v34
  %s37 = scalar_lea.vmem %s0, 72
  %v38 = vld [vmem:[%s37] sm:$0xff]
  %s39 = scalar_lea.vmem %s1, 88
  %40 = vst [vmem:[%s39] sm:$0xff] %v38
  %s41 = scalar_lea.vmem %s0, 8
  %v42 = vld [vmem:[%s41] sm:$0xff]
  %s43 = scalar_lea.vmem %s1, 40
  %44 = vst [vmem:[%s43] sm:$0xff] %v42
  %s45 = scalar_lea.vmem %s0, 64
  %v46 = vld [vmem:[%s45] sm:$0xff]
  %s47 = scalar_lea.vmem %s1, 96
  %48 = vst [vmem:[%s47] sm:$0xff] %v46
  %v49 = vld [vmem:[%s0] sm:$0xff]
  %s50 = scalar_lea.vmem %s1, 48
  %51 = vst [vmem:[%s50] sm:$0xff] %v49
  %s52 = scalar_lea.vmem %s0, 56
  %v53 = vld [vmem:[%s52] sm:$0xff]
  %s54 = scalar_lea.vmem %s1, 104
  %55 = vst [vmem:[%s54] sm:$0xff] %v53

// kernel: scse_block_forward.3
$region0: #{scse_block_forward.3}
  #allocation0 [shape = 'u32[]', space=smem, size = 0x4, offset = 0x4, fixed_abs, tag = 'smem constant byte address 0x4 - core index']
  #allocation1 [shape = 'u32[144,128]{1,0:T(1,128)}', space=vmem, size = 0x12000, scoped, tag = 'internal scratch']
  #allocation2 [shape = 'f32[4,6,18,32]{3,2,1,0:T(8,128)}', space=vmem, size = 0x48000, scoped, tag = 'scratch operand']
  %s0 = inlined_call_operand.vmem [shape: f32[2,2,4,16,32], index: 0, kind: input, shape index: {}]
  %s1 = inlined_call_operand.vmem [shape: f32[3,3,3,32], index: 1, kind: input, shape index: {}]
  %s2 = inlined_call_operand.vmem [shape: f32[1,32], index: 2, kind: input, shape index: {}]
  %s3 = inlined_call_operand.vmem [shape: f32[1,32], index: 3, kind: input, shape index: {}]
  %s4 = inlined_call_operand.vmem [shape: f32[1,32], index: 4, kind: input, shape index: {}]
  %s5 = inlined_call_operand.vmem [shape: f32[32,32], index: 5, kind: input, shape index: {}]
  %s6 = inlined_call_operand.vmem [shape: f32[1,32], index: 6, kind: input, shape index: {}]
  %s7 = inlined_call_operand.vmem [shape: f32[32,64], index: 7, kind: input, shape index: {}]
  %s8 = inlined_call_operand.vmem [shape: f32[1,64], index: 8, kind: input, shape index: {}]
  %s9 = inlined_call_operand.vmem [shape: f32[4,64,64], index: 9, kind: input, shape index: {}]
  %s10 = inlined_call_operand.vmem [shape: f32[32,32], index: 10, kind: input, shape index: {}]
  %s11 = inlined_call_operand.vmem [shape: f32[1,32], index: 11, kind: input, shape index: {}]
  %s12 = inlined_call_operand.vmem [shape: f32[2,128,32], index: 12, kind: output, shape index: {}]
  %s13 = sld [smem:[#allocation0]]
  $region81: #{scse_block_forward.3} parent=0
    _
  %s15 = ssub.s32 1, %s13
  %s16 = scalar_select 0, %s15, %s13
  loop: start=0, step=1, limit=4
  $region2: #{scse_block_forward.3} parent=0 // loop_pre_header
    _
  $region3: #{scse_block_forward.3} parent=0 // loop_header
    %s18 = sphi 0, %s22
    %p19 = scmp.ge.s32.totalorder %s18, 4
    %s28 = sphi 0, %s30
    %s31 = sphi 0, %s28
    %s32 = sphi 0, %s31
    %s48 = sphi 0, %s32
    %s52 = sphi 0, %s52
    %s54 = sphi 0, %s52
    %s55 = sphi 0, %s54
    %s69 = sphi 0, %s55
    %s73 = sphi 0, %s73
    %s75 = sphi 0, %s73
    %s76 = sphi 0, %s75
    %s90 = sphi 0, %s76
    %s94 = sphi 0, %s94
    %s96 = sphi 0, %s94
    %s97 = sphi 0, %s96
    %s111 = sphi 0, %s97
    %s115 = sphi 0, %s115
    %s117 = sphi 0, %s115
    %s118 = sphi 0, %s117
    %s132 = sphi 0, %s118
    %s136 = sphi 0, %s136
    %s138 = sphi 0, %s136
    %s139 = sphi 0, %s138
    %s153 = sphi 0, %s139
    %s157 = sphi 0, %s157
    %s159 = sphi 0, %s157
    %s160 = sphi 0, %s159
    %s174 = sphi 0, %s160
    %s178 = sphi 0, %s178
    %s180 = sphi 0, %s178
    %s181 = sphi 0, %s180
    %s195 = sphi 0, %s181
    %s199 = sphi 0, %s199
    %s201 = sphi 0, %s199
    %s202 = sphi 0, %s201
    %s216 = sphi 0, %s202
    %s220 = sphi 0, %s220
    %s222 = sphi 0, %s220
    %s223 = sphi 0, %s222
    %s237 = sphi 0, %s223
    %s241 = sphi 0, %s241
    %s243 = sphi 0, %s241
    %s244 = sphi 0, %s243
    %s258 = sphi 0, %s244
    %s262 = sphi 0, %s262
    %s264 = sphi 0, %s262
    %s265 = sphi 0, %s264
    %s279 = sphi 0, %s265
    %s285 = sphi 0, %s287
    %s288 = sphi 0, %s285
    %s289 = sphi 0, %s288
    %s305 = sphi 0, %s289
  $region4: #{scse_block_forward.3} parent=0 // loop_header_branch
    %21 = sbr.rel (%p19) target = $region8
  $region5: #{scse_block_forward.3} parent=0 // loop_body
    %s23 = ssub.s32 %s18, 1
    %s24 = ssub.s32 %s18, 2
    %s25 = sadd.s32 %s18, 1
    %s26 = ssub.s32 %s18, %s25
    %p27 = scmp.eq.s32.totalorder %s26, 0
    %s29 = sadd.s32 %s28, 1
    %s30 = scalar_select %p27, %s28, %s29
    %p33 = pneg %p27
    %p34 = scmp.eq.s32.totalorder %s18, 1
    %p35 = por %p33, %p34
    %p36 = scmp.ne.s32.totalorder %s28, %s31
    %p37 = scmp.eq.s32.totalorder %s18, 0
    %p38 = por %p36, %p37
    %p39 = scmp.ne.s32.totalorder %s28, %s31
    %p40 = scmp.eq.s32.totalorder %s23, 1
    %p41 = por %p39, %p40
    %p42 = scmp.ne.s32.totalorder %s31, %s32
    %p43 = scmp.eq.s32.totalorder %s23, 0
    %p44 = por %p42, %p43
    %p45 = scmp.ne.s32.totalorder %s31, %s32
    %p46 = scmp.eq.s32.totalorder %s24, 1
    %p47 = por %p45, %p46
    %p49 = scmp.ne.s32.totalorder %s32, %s48
    %p50 = scmp.eq.s32.totalorder %s24, 0
    %p51 = por %p49, %p50
    %s53 = sadd.s32 %s52, 1
    %p56 = scmp.eq.s32.totalorder %s18, 1
    %p57 = scmp.ne.s32.totalorder %s52, %s54
    %p58 = scmp.eq.s32.totalorder %s18, 0
    %p59 = por %p57, %p58
    %p60 = scmp.ne.s32.totalorder %s52, %s54
    %p61 = scmp.eq.s32.totalorder %s23, 1
    %p62 = por %p60, %p61
    %p63 = scmp.ne.s32.totalorder %s54, %s55
    %p64 = scmp.eq.s32.totalorder %s23, 0
    %p65 = por %p63, %p64
    %p66 = scmp.ne.s32.totalorder %s54, %s55
    %p67 = scmp.eq.s32.totalorder %s24, 1
    %p68 = por %p66, %p67
    %p70 = scmp.ne.s32.totalorder %s55, %s69
    %p71 = scmp.eq.s32.totalorder %s24, 0
    %p72 = por %p70, %p71
    %s74 = sadd.s32 %s73, 1
    %p77 = scmp.eq.s32.totalorder %s18, 1
    %p78 = scmp.ne.s32.totalorder %s73, %s75
    %p79 = scmp.eq.s32.totalorder %s18, 0
    %p80 = por %p78, %p79
    %p81 = scmp.ne.s32.totalorder %s73, %s75
    %p82 = scmp.eq.s32.totalorder %s23, 1
    %p83 = por %p81, %p82
    %p84 = scmp.ne.s32.totalorder %s75, %s76
    %p85 = scmp.eq.s32.totalorder %s23, 0
    %p86 = por %p84, %p85
    %p87 = scmp.ne.s32.totalorder %s75, %s76
    %p88 = scmp.eq.s32.totalorder %s24, 1
    %p89 = por %p87, %p88
    %p91 = scmp.ne.s32.totalorder %s76, %s90
    %p92 = scmp.eq.s32.totalorder %s24, 0
    %p93 = por %p91, %p92
    %s95 = sadd.s32 %s94, 1
    %p98 = scmp.eq.s32.totalorder %s18, 1
    %p99 = scmp.ne.s32.totalorder %s94, %s96
    %p100 = scmp.eq.s32.totalorder %s18, 0
    %p101 = por %p99, %p100
    %p102 = scmp.ne.s32.totalorder %s94, %s96
    %p103 = scmp.eq.s32.totalorder %s23, 1
    %p104 = por %p102, %p103
    %p105 = scmp.ne.s32.totalorder %s96, %s97
    %p106 = scmp.eq.s32.totalorder %s23, 0
    %p107 = por %p105, %p106
    %p108 = scmp.ne.s32.totalorder %s96, %s97
    %p109 = scmp.eq.s32.totalorder %s24, 1
    %p110 = por %p108, %p109
    %p112 = scmp.ne.s32.totalorder %s97, %s111
    %p113 = scmp.eq.s32.totalorder %s24, 0
    %p114 = por %p112, %p113
    %s116 = sadd.s32 %s115, 1
    %p119 = scmp.eq.s32.totalorder %s18, 1
    %p120 = scmp.ne.s32.totalorder %s115, %s117
    %p121 = scmp.eq.s32.totalorder %s18, 0
    %p122 = por %p120, %p121
    %p123 = scmp.ne.s32.totalorder %s115, %s117
    %p124 = scmp.eq.s32.totalorder %s23, 1
    %p125 = por %p123, %p124
    %p126 = scmp.ne.s32.totalorder %s117, %s118
    %p127 = scmp.eq.s32.totalorder %s23, 0
    %p128 = por %p126, %p127
    %p129 = scmp.ne.s32.totalorder %s117, %s118
    %p130 = scmp.eq.s32.totalorder %s24, 1
    %p131 = por %p129, %p130
    %p133 = scmp.ne.s32.totalorder %s118, %s132
    %p134 = scmp.eq.s32.totalorder %s24, 0
    %p135 = por %p133, %p134
    %s137 = sadd.s32 %s136, 1
    %p140 = scmp.eq.s32.totalorder %s18, 1
    %p141 = scmp.ne.s32.totalorder %s136, %s138
    %p142 = scmp.eq.s32.totalorder %s18, 0
    %p143 = por %p141, %p142
    %p144 = scmp.ne.s32.totalorder %s136, %s138
    %p145 = scmp.eq.s32.totalorder %s23, 1
    %p146 = por %p144, %p145
    %p147 = scmp.ne.s32.totalorder %s138, %s139
    %p148 = scmp.eq.s32.totalorder %s23, 0
    %p149 = por %p147, %p148
    %p150 = scmp.ne.s32.totalorder %s138, %s139
    %p151 = scmp.eq.s32.totalorder %s24, 1
    %p152 = por %p150, %p151
    %p154 = scmp.ne.s32.totalorder %s139, %s153
    %p155 = scmp.eq.s32.totalorder %s24, 0
    %p156 = por %p154, %p155
    %s158 = sadd.s32 %s157, 1
    %p161 = scmp.eq.s32.totalorder %s18, 1
    %p162 = scmp.ne.s32.totalorder %s157, %s159
    %p163 = scmp.eq.s32.totalorder %s18, 0
    %p164 = por %p162, %p163
    %p165 = scmp.ne.s32.totalorder %s157, %s159
    %p166 = scmp.eq.s32.totalorder %s23, 1
    %p167 = por %p165, %p166
    %p168 = scmp.ne.s32.totalorder %s159, %s160
    %p169 = scmp.eq.s32.totalorder %s23, 0
    %p170 = por %p168, %p169
    %p171 = scmp.ne.s32.totalorder %s159, %s160
    %p172 = scmp.eq.s32.totalorder %s24, 1
    %p173 = por %p171, %p172
    %p175 = scmp.ne.s32.totalorder %s160, %s174
    %p176 = scmp.eq.s32.totalorder %s24, 0
    %p177 = por %p175, %p176
    %s179 = sadd.s32 %s178, 1
    %p182 = scmp.eq.s32.totalorder %s18, 1
    %p183 = scmp.ne.s32.totalorder %s178, %s180
    %p184 = scmp.eq.s32.totalorder %s18, 0
    %p185 = por %p183, %p184
    %p186 = scmp.ne.s32.totalorder %s178, %s180
    %p187 = scmp.eq.s32.totalorder %s23, 1
    %p188 = por %p186, %p187
    %p189 = scmp.ne.s32.totalorder %s180, %s181
    %p190 = scmp.eq.s32.totalorder %s23, 0
    %p191 = por %p189, %p190
    %p192 = scmp.ne.s32.totalorder %s180, %s181
    %p193 = scmp.eq.s32.totalorder %s24, 1
    %p194 = por %p192, %p193
    %p196 = scmp.ne.s32.totalorder %s181, %s195
    %p197 = scmp.eq.s32.totalorder %s24, 0
    %p198 = por %p196, %p197
    %s200 = sadd.s32 %s199, 1
    %p203 = scmp.eq.s32.totalorder %s18, 1
    %p204 = scmp.ne.s32.totalorder %s199, %s201
    %p205 = scmp.eq.s32.totalorder %s18, 0
    %p206 = por %p204, %p205
    %p207 = scmp.ne.s32.totalorder %s199, %s201
    %p208 = scmp.eq.s32.totalorder %s23, 1
    %p209 = por %p207, %p208
    %p210 = scmp.ne.s32.totalorder %s201, %s202
    %p211 = scmp.eq.s32.totalorder %s23, 0
    %p212 = por %p210, %p211
    %p213 = scmp.ne.s32.totalorder %s201, %s202
    %p214 = scmp.eq.s32.totalorder %s24, 1
    %p215 = por %p213, %p214
    %p217 = scmp.ne.s32.totalorder %s202, %s216
    %p218 = scmp.eq.s32.totalorder %s24, 0
    %p219 = por %p217, %p218
    %s221 = sadd.s32 %s220, 1
    %p224 = scmp.eq.s32.totalorder %s18, 1
    %p225 = scmp.ne.s32.totalorder %s220, %s222
    %p226 = scmp.eq.s32.totalorder %s18, 0
    %p227 = por %p225, %p226
    %p228 = scmp.ne.s32.totalorder %s220, %s222
    %p229 = scmp.eq.s32.totalorder %s23, 1
    %p230 = por %p228, %p229
    %p231 = scmp.ne.s32.totalorder %s222, %s223
    %p232 = scmp.eq.s32.totalorder %s23, 0
    %p233 = por %p231, %p232
    %p234 = scmp.ne.s32.totalorder %s222, %s223
    %p235 = scmp.eq.s32.totalorder %s24, 1
    %p236 = por %p234, %p235
    %p238 = scmp.ne.s32.totalorder %s223, %s237
    %p239 = scmp.eq.s32.totalorder %s24, 0
    %p240 = por %p238, %p239
    %s242 = sadd.s32 %s241, 1
    %p245 = scmp.eq.s32.totalorder %s18, 1
    %p246 = scmp.ne.s32.totalorder %s241, %s243
    %p247 = scmp.eq.s32.totalorder %s18, 0
    %p248 = por %p246, %p247
    %p249 = scmp.ne.s32.totalorder %s241, %s243
    %p250 = scmp.eq.s32.totalorder %s23, 1
    %p251 = por %p249, %p250
    %p252 = scmp.ne.s32.totalorder %s243, %s244
    %p253 = scmp.eq.s32.totalorder %s23, 0
    %p254 = por %p252, %p253
    %p255 = scmp.ne.s32.totalorder %s243, %s244
    %p256 = scmp.eq.s32.totalorder %s24, 1
    %p257 = por %p255, %p256
    %p259 = scmp.ne.s32.totalorder %s244, %s258
    %p260 = scmp.eq.s32.totalorder %s24, 0
    %p261 = por %p259, %p260
    %s263 = sadd.s32 %s262, 1
    %p266 = scmp.eq.s32.totalorder %s18, 1
    %p267 = scmp.ne.s32.totalorder %s262, %s264
    %p268 = scmp.eq.s32.totalorder %s18, 0
    %p269 = por %p267, %p268
    %p270 = scmp.ne.s32.totalorder %s262, %s264
    %p271 = scmp.eq.s32.totalorder %s23, 1
    %p272 = por %p270, %p271
    %p273 = scmp.ne.s32.totalorder %s264, %s265
    %p274 = scmp.eq.s32.totalorder %s23, 0
    %p275 = por %p273, %p274
    %p276 = scmp.ne.s32.totalorder %s264, %s265
    %p277 = scmp.eq.s32.totalorder %s24, 1
    %p278 = por %p276, %p277
    %p280 = scmp.ne.s32.totalorder %s265, %s279
    %p281 = scmp.eq.s32.totalorder %s24, 0
    %p282 = por %p280, %p281
    %s283 = ssub.s32 %s18, %s25
    %p284 = scmp.eq.s32.totalorder %s283, 0
    %s286 = sadd.s32 %s285, 1
    %s287 = scalar_select %p284, %s285, %s286
    %p290 = pneg %p284
    %p291 = scmp.eq.s32.totalorder %s18, 1
    %p292 = por %p290, %p291
    %p293 = scmp.ne.s32.totalorder %s285, %s288
    %p294 = scmp.eq.s32.totalorder %s18, 0
    %p295 = por %p293, %p294
    %p296 = scmp.ne.s32.totalorder %s285, %s288
    %p297 = scmp.eq.s32.totalorder %s23, 1
    %p298 = por %p296, %p297
    %p299 = scmp.ne.s32.totalorder %s288, %s289
    %p300 = scmp.eq.s32.totalorder %s23, 0
    %p301 = por %p299, %p300
    %p302 = scmp.ne.s32.totalorder %s288, %s289
    %p303 = scmp.eq.s32.totalorder %s24, 1
    %p304 = por %p302, %p303
    %p306 = scmp.ne.s32.totalorder %s289, %s305
    %p307 = scmp.eq.s32.totalorder %s24, 0
    %p308 = por %p306, %p307
    %p309 = scmp.le.s32.totalorder 1, %s18
    %p310 = scmp.lt.s32.totalorder %s18, 3
    %p311 = pnand %p309, %p310
    %p312 = pneg %p311
    // Predicated region
    $region9: #{scse_block_forward.3} parent=5 // pred_check
      _
    $region10: #{scse_block_forward.3} parent=5 // pred_check_branch
      %314 = sbr.rel (%p311) target = $region12
    $region11: #{scse_block_forward.3} parent=5 // pred_region
      %s315 = ssub.s32 %s18, 1
      // Predicated region
      $region13: #{scse_block_forward.3} parent=11 // pred_check
        %p316 = pneg %p65
      $region14: #{scse_block_forward.3} parent=11 // pred_check_branch
        %318 = sbr.rel (%p316) target = $region16
      $region15: #{scse_block_forward.3} parent=11 // pred_region
        _
      $region16: #{scse_block_forward.3} parent=11 // pred_fallthru
        _
      // Predicated region
      $region17: #{scse_block_forward.3} parent=11 // pred_check
        %p319 = pneg %p86
      $region18: #{scse_block_forward.3} parent=11 // pred_check_branch
        %321 = sbr.rel (%p319) target = $region20
      $region19: #{scse_block_forward.3} parent=11 // pred_region
        _
      $region20: #{scse_block_forward.3} parent=11 // pred_fallthru
        _
      // Predicated region
      $region21: #{scse_block_forward.3} parent=11 // pred_check
        %p322 = pneg %p107
      $region22: #{scse_block_forward.3} parent=11 // pred_check_branch
        %324 = sbr.rel (%p322) target = $region24
      $region23: #{scse_block_forward.3} parent=11 // pred_region
        _
      $region24: #{scse_block_forward.3} parent=11 // pred_fallthru
        _
      // Predicated region
      $region25: #{scse_block_forward.3} parent=11 // pred_check
        %p325 = pneg %p128
      $region26: #{scse_block_forward.3} parent=11 // pred_check_branch
        %327 = sbr.rel (%p325) target = $region28
      $region27: #{scse_block_forward.3} parent=11 // pred_region
        _
      $region28: #{scse_block_forward.3} parent=11 // pred_fallthru
        _
      // Predicated region
      $region29: #{scse_block_forward.3} parent=11 // pred_check
        %p328 = pneg %p149
      $region30: #{scse_block_forward.3} parent=11 // pred_check_branch
        %330 = sbr.rel (%p328) target = $region32
      $region31: #{scse_block_forward.3} parent=11 // pred_region
        _
      $region32: #{scse_block_forward.3} parent=11 // pred_fallthru
        _
      // Predicated region
      $region33: #{scse_block_forward.3} parent=11 // pred_check
        %p331 = pneg %p170
      $region34: #{scse_block_forward.3} parent=11 // pred_check_branch
        %333 = sbr.rel (%p331) target = $region36
      $region35: #{scse_block_forward.3} parent=11 // pred_region
        _
      $region36: #{scse_block_forward.3} parent=11 // pred_fallthru
        _
      // Predicated region
      $region37: #{scse_block_forward.3} parent=11 // pred_check
        %p334 = pneg %p191
      $region38: #{scse_block_forward.3} parent=11 // pred_check_branch
        %336 = sbr.rel (%p334) target = $region40
      $region39: #{scse_block_forward.3} parent=11 // pred_region
        _
      $region40: #{scse_block_forward.3} parent=11 // pred_fallthru
        _
      // Predicated region
      $region41: #{scse_block_forward.3} parent=11 // pred_check
        %p337 = pneg %p212
      $region42: #{scse_block_forward.3} parent=11 // pred_check_branch
        %339 = sbr.rel (%p337) target = $region44
      $region43: #{scse_block_forward.3} parent=11 // pred_region
        _
      $region44: #{scse_block_forward.3} parent=11 // pred_fallthru
        _
      // Predicated region
      $region45: #{scse_block_forward.3} parent=11 // pred_check
        %p340 = pneg %p233
      $region46: #{scse_block_forward.3} parent=11 // pred_check_branch
        %342 = sbr.rel (%p340) target = $region48
      $region47: #{scse_block_forward.3} parent=11 // pred_region
        _
      $region48: #{scse_block_forward.3} parent=11 // pred_fallthru
        _
      // Predicated region
      $region49: #{scse_block_forward.3} parent=11 // pred_check
        %p343 = pneg %p254
      $region50: #{scse_block_forward.3} parent=11 // pred_check_branch
        %345 = sbr.rel (%p343) target = $region52
      $region51: #{scse_block_forward.3} parent=11 // pred_region
        _
      $region52: #{scse_block_forward.3} parent=11 // pred_fallthru
        _
      // Predicated region
      $region53: #{scse_block_forward.3} parent=11 // pred_check
        %p346 = pneg %p275
      $region54: #{scse_block_forward.3} parent=11 // pred_check_branch
        %348 = sbr.rel (%p346) target = $region56
      $region55: #{scse_block_forward.3} parent=11 // pred_region
        _
      $region56: #{scse_block_forward.3} parent=11 // pred_fallthru
        _
    $region12: #{scse_block_forward.3} parent=5 // pred_fallthru
      _
    %p349 = scmp.lt.s32.totalorder %s18, 2
    // Predicated region
    $region57: #{scse_block_forward.3} parent=5 // pred_check
      %p350 = pneg %p349
    $region58: #{scse_block_forward.3} parent=5 // pred_check_branch
      %352 = sbr.rel (%p350) target = $region60
    $region59: #{scse_block_forward.3} parent=5 // pred_region
      // Predicated region
      $region61: #{scse_block_forward.3} parent=59 // pred_check
        %p353 = pneg %p38
      $region62: #{scse_block_forward.3} parent=59 // pred_check_branch
        %355 = sbr.rel (%p353) target = $region64
      $region63: #{scse_block_forward.3} parent=59 // pred_region
        %p356 = scmp.lt.s32.totalorder %s18, 1
        %s357 = scalar_select %p356, %s18, 1
        %s358 = smul.addr %s357, 16
        %s359 = smul.addr %s358, 8
        %s360 = scalar_lea.vmem %s0, %s359
      $region64: #{scse_block_forward.3} parent=59 // pred_fallthru
        _
    $region60: #{scse_block_forward.3} parent=5 // pred_fallthru
      _
    %p361 = scmp.le.s32.totalorder 1, %s18
    %p362 = scmp.lt.s32.totalorder %s18, 3
    %p363 = pnand %p361, %p362
    %p364 = pneg %p363
    // Predicated region
    $region65: #{scse_block_forward.3} parent=5 // pred_check
      _
    $region66: #{scse_block_forward.3} parent=5 // pred_check_branch
      %366 = sbr.rel (%p363) target = $region68
    $region67: #{scse_block_forward.3} parent=5 // pred_region
      %s367 = ssub.s32 %s18, 1
      %p368 = scmp.lt.s32.totalorder %s23, 1
      %s369 = scalar_select %p368, %s23, 1
      %s370 = smul.addr %s369, 16
      %s371 = smul.addr %s370, 8
      %s372 = scalar_lea.vmem %s0, %s371
      %p373 = pneg %p44
      %p374 = pneg %p41
      %p375 = pneg %p65
      %p376 = pneg %p62
      %p377 = pneg %p86
      %p378 = pneg %p83
      %p379 = pneg %p107
      %p380 = pneg %p104
      %p381 = pneg %p128
      %p382 = pneg %p125
      %p383 = pneg %p149
      %p384 = pneg %p146
      %p385 = pneg %p170
      %p386 = pneg %p167
      %p387 = pneg %p191
      %p388 = pneg %p188
      %p389 = pneg %p212
      %p390 = pneg %p209
      %p391 = pneg %p233
      %p392 = pneg %p230
      %p393 = pneg %p254
      %p394 = pneg %p251
      %p395 = pneg %p275
      %p396 = pneg %p272
      %p397 = pneg %p301
      %p398 = pneg %p298
      %p399 = scmp.lt.s32.totalorder %s23, 1
      %s400 = scalar_select %p399, %s23, 1
      %s401 = smul.addr %s400, 16
      %s402 = smul.addr %s401, 8
      %s403 = scalar_lea.vmem %s12, %s402
      %p404 = scmp.lt.s32.totalorder %s23, 1
      %s405 = scalar_select %p404, %s23, 1
      %s406 = smul.addr %s405, 16
      %s407 = smul.addr %s406, 8
      %s408 = scalar_lea.vmem %s0, %s407
      %p409 = scmp.lt.s32.totalorder %s23, 1
      %s410 = scalar_select %p409, %s23, 1
      %s411 = smul.addr %s410, 16
      %s412 = smul.addr %s411, 8
      %s413 = scalar_lea.vmem %s12, %s412
      %vm414 = vcmask 261120
      %415 = vst.msk [vmem:[#allocation2] sm:$0xff] %vm414, 0.0
      %416 = vst.msk [vmem:[#allocation2 + $0x8] sm:$0xff] %vm414, 0.0
      %vm417 = vcmask 254976
      %418 = vst.msk [vmem:[#allocation2 + $0x10] sm:$0x3] %vm417, 0.0
      %419 = vst.msk [vmem:[#allocation2 + $0x18] sm:$0xff] %vm414, 0.0
      %420 = vst.msk [vmem:[#allocation2 + $0x20] sm:$0xff] %vm414, 0.0
      %421 = vst.msk [vmem:[#allocation2 + $0x28] sm:$0x3] %vm417, 0.0
      %422 = vst.msk [vmem:[#allocation2 + $0x30] sm:$0xff] %vm414, 0.0
      %423 = vst.msk [vmem:[#allocation2 + $0x38] sm:$0xff] %vm414, 0.0
      %424 = vst.msk [vmem:[#allocation2 + $0x40] sm:$0x3] %vm417, 0.0
      %425 = vst.msk [vmem:[#allocation2 + $0x48] sm:$0xff] %vm414, 0.0
      %426 = vst.msk [vmem:[#allocation2 + $0x50] sm:$0xff] %vm414, 0.0
      %427 = vst.msk [vmem:[#allocation2 + $0x58] sm:$0x3] %vm417, 0.0
      %428 = vst.msk [vmem:[#allocation2 + $0x60] sm:$0xff] %vm414, 0.0
      %429 = vst.msk [vmem:[#allocation2 + $0x68] sm:$0xff] %vm414, 0.0
      %430 = vst.msk [vmem:[#allocation2 + $0x70] sm:$0x3] %vm417, 0.0
      %431 = vst.msk [vmem:[#allocation2 + $0x78] sm:$0xff] %vm414, 0.0
      %432 = vst.msk [vmem:[#allocation2 + $0x80] sm:$0xff] %vm414, 0.0
      %433 = vst.msk [vmem:[#allocation2 + $0x88] sm:$0x3] %vm417, 0.0
      %434 = vst.msk [vmem:[#allocation2 + $0x90] sm:$0xff] %vm414, 0.0
      %435 = vst.msk [vmem:[#allocation2 + $0x98] sm:$0xff] %vm414, 0.0
      %436 = vst.msk [vmem:[#allocation2 + $0xa0] sm:$0x3] %vm417, 0.0
      %437 = vst.msk [vmem:[#allocation2 + $0xa8] sm:$0xff] %vm414, 0.0
      %438 = vst.msk [vmem:[#allocation2 + $0xb0] sm:$0xff] %vm414, 0.0
      %439 = vst.msk [vmem:[#allocation2 + $0xb8] sm:$0x3] %vm417, 0.0
      %440 = vst.msk [vmem:[#allocation2 + $0xc0] sm:$0xff] %vm414, 0.0
      %441 = vst.msk [vmem:[#allocation2 + $0xc8] sm:$0xff] %vm414, 0.0
      %442 = vst.msk [vmem:[#allocation2 + $0xd0] sm:$0x3] %vm417, 0.0
      %443 = vst.msk [vmem:[#allocation2 + $0xd8] sm:$0xff] %vm414, 0.0
      %444 = vst.msk [vmem:[#allocation2 + $0xe0] sm:$0xff] %vm414, 0.0
      %445 = vst.msk [vmem:[#allocation2 + $0xe8] sm:$0x3] %vm417, 0.0
      %446 = vst.msk [vmem:[#allocation2 + $0xf0] sm:$0xff] %vm414, 0.0
      %447 = vst.msk [vmem:[#allocation2 + $0xf8] sm:$0xff] %vm414, 0.0
      %448 = vst.msk [vmem:[#allocation2 + $0x100] sm:$0x3] %vm417, 0.0
      %449 = vst.msk [vmem:[#allocation2 + $0x108] sm:$0xff] %vm414, 0.0
      %450 = vst.msk [vmem:[#allocation2 + $0x110] sm:$0xff] %vm414, 0.0
      %451 = vst.msk [vmem:[#allocation2 + $0x118] sm:$0x3] %vm417, 0.0
      %452 = vst.msk [vmem:[#allocation2 + $0x120] sm:$0xff] %vm414, 0.0
      %453 = vst.msk [vmem:[#allocation2 + $0x128] sm:$0xff] %vm414, 0.0
      %454 = vst.msk [vmem:[#allocation2 + $0x130] sm:$0x3] %vm417, 0.0
      %455 = vst.msk [vmem:[#allocation2 + $0x138] sm:$0xff] %vm414, 0.0
      %456 = vst.msk [vmem:[#allocation2 + $0x140] sm:$0xff] %vm414, 0.0
      %457 = vst.msk [vmem:[#allocation2 + $0x148] sm:$0x3] %vm417, 0.0
      %458 = vst.msk [vmem:[#allocation2 + $0x150] sm:$0xff] %vm414, 0.0
      %459 = vst.msk [vmem:[#allocation2 + $0x158] sm:$0xff] %vm414, 0.0
      %460 = vst.msk [vmem:[#allocation2 + $0x160] sm:$0x3] %vm417, 0.0
      %461 = vst.msk [vmem:[#allocation2 + $0x168] sm:$0xff] %vm414, 0.0
      %462 = vst.msk [vmem:[#allocation2 + $0x170] sm:$0xff] %vm414, 0.0
      %463 = vst.msk [vmem:[#allocation2 + $0x178] sm:$0x3] %vm417, 0.0
      %464 = vst.msk [vmem:[#allocation2 + $0x180] sm:$0xff] %vm414, 0.0
      %465 = vst.msk [vmem:[#allocation2 + $0x188] sm:$0xff] %vm414, 0.0
      %466 = vst.msk [vmem:[#allocation2 + $0x190] sm:$0x3] %vm417, 0.0
      %467 = vst.msk [vmem:[#allocation2 + $0x198] sm:$0xff] %vm414, 0.0
      %468 = vst.msk [vmem:[#allocation2 + $0x1a0] sm:$0xff] %vm414, 0.0
      %469 = vst.msk [vmem:[#allocation2 + $0x1a8] sm:$0x3] %vm417, 0.0
      %470 = vst.msk [vmem:[#allocation2 + $0x1b0] sm:$0xff] %vm414, 0.0
      %471 = vst.msk [vmem:[#allocation2 + $0x1b8] sm:$0xff] %vm414, 0.0
      %472 = vst.msk [vmem:[#allocation2 + $0x1c0] sm:$0x3] %vm417, 0.0
      %473 = vst.msk [vmem:[#allocation2 + $0x1c8] sm:$0xff] %vm414, 0.0
      %474 = vst.msk [vmem:[#allocation2 + $0x1d0] sm:$0xff] %vm414, 0.0
      %475 = vst.msk [vmem:[#allocation2 + $0x1d8] sm:$0x3] %vm417, 0.0
      %476 = vst.msk [vmem:[#allocation2 + $0x1e0] sm:$0xff] %vm414, 0.0
      %477 = vst.msk [vmem:[#allocation2 + $0x1e8] sm:$0xff] %vm414, 0.0
      %478 = vst.msk [vmem:[#allocation2 + $0x1f0] sm:$0x3] %vm417, 0.0
      %479 = vst.msk [vmem:[#allocation2 + $0x1f8] sm:$0xff] %vm414, 0.0
      %480 = vst.msk [vmem:[#allocation2 + $0x200] sm:$0xff] %vm414, 0.0
      %481 = vst.msk [vmem:[#allocation2 + $0x208] sm:$0x3] %vm417, 0.0
      %482 = vst.msk [vmem:[#allocation2 + $0x210] sm:$0xff] %vm414, 0.0
      %483 = vst.msk [vmem:[#allocation2 + $0x218] sm:$0xff] %vm414, 0.0
      %484 = vst.msk [vmem:[#allocation2 + $0x220] sm:$0x3] %vm417, 0.0
      %485 = vst.msk [vmem:[#allocation2 + $0x228] sm:$0xff] %vm414, 0.0
      %486 = vst.msk [vmem:[#allocation2 + $0x230] sm:$0xff] %vm414, 0.0
      %487 = vst.msk [vmem:[#allocation2 + $0x238] sm:$0x3] %vm417, 0.0
      %v488 = vld [vmem:[%s408] sm:$0xff]
      %v489 = vld [vmem:[%s408 + $0x8] sm:$0xff]
      %v490 = vld [vmem:[%s408 + $0x10] sm:$0xff]
      %v491 = vld [vmem:[%s408 + $0x18] sm:$0xff]
      %v492 = vld [vmem:[%s408 + $0x20] sm:$0xff]
      %v493 = vld [vmem:[%s408 + $0x28] sm:$0xff]
      %v494 = vld [vmem:[%s408 + $0x30] sm:$0xff]
      %v495 = vld [vmem:[%s408 + $0x38] sm:$0xff]
      %v496 = vld [vmem:[%s408 + $0x40] sm:$0xff]
      %v497 = vld [vmem:[%s408 + $0x48] sm:$0xff]
      %v498 = vld [vmem:[%s408 + $0x50] sm:$0xff]
      %v499 = vld [vmem:[%s408 + $0x58] sm:$0xff]
      %v500 = vld [vmem:[%s408 + $0x60] sm:$0xff]
      %v501 = vld [vmem:[%s408 + $0x68] sm:$0xff]
      %v502 = vld [vmem:[%s408 + $0x70] sm:$0xff]
      %v503 = vld [vmem:[%s408 + $0x78] sm:$0xff]
      %s504 = scalar_lea.vmem [#allocation2], 168
      %505 = vst.msk [vmem:[%s504 + $0x1] sm:$0xff] %vm414, %v488
      %506 = vst.msk [vmem:[%s504 + $0x9] sm:$0xff] %vm414, %v489
      %507 = vst.msk [vmem:[%s504 + $0x19] sm:$0xff] %vm414, %v490
      %508 = vst.msk [vmem:[%s504 + $0x21] sm:$0xff] %vm414, %v491
      %509 = vst.msk [vmem:[%s504 + $0x31] sm:$0xff] %vm414, %v492
      %510 = vst.msk [vmem:[%s504 + $0x39] sm:$0xff] %vm414, %v493
      %511 = vst.msk [vmem:[%s504 + $0x49] sm:$0xff] %vm414, %v494
      %512 = vst.msk [vmem:[%s504 + $0x51] sm:$0xff] %vm414, %v495
      %513 = vst.msk [vmem:[%s504 + $0x91] sm:$0xff] %vm414, %v496
      %514 = vst.msk [vmem:[%s504 + $0x99] sm:$0xff] %vm414, %v497
      %515 = vst.msk [vmem:[%s504 + $0xa9] sm:$0xff] %vm414, %v498
      %516 = vst.msk [vmem:[%s504 + $0xb1] sm:$0xff] %vm414, %v499
      %517 = vst.msk [vmem:[%s504 + $0xc1] sm:$0xff] %vm414, %v500
      %518 = vst.msk [vmem:[%s504 + $0xc9] sm:$0xff] %vm414, %v501
      %519 = vst.msk [vmem:[%s504 + $0xd9] sm:$0xff] %vm414, %v502
      %520 = vst.msk [vmem:[%s504 + $0xe1] sm:$0xff] %vm414, %v503
      %v521 = vld [vmem:[%s1] sm:$0x1]
      %v522 = vld [vmem:[#allocation2] sm:$0xff]
      %v523 = vld [vmem:[#allocation2 + $0x8] sm:$0xff]
      %v524 = vld [vmem:[#allocation2 + $0x18] sm:$0xff]
      %v525 = vld [vmem:[#allocation2 + $0x20] sm:$0xff]
      %v526 = vld [vmem:[#allocation2 + $0x30] sm:$0xff]
      %v527 = vld [vmem:[#allocation2 + $0x38] sm:$0xff]
      %v528 = vld [vmem:[#allocation2 + $0x48] sm:$0xff]
      %v529 = vld [vmem:[#allocation2 + $0x50] sm:$0xff]
      %v530 = vld [vmem:[#allocation2 + $0x90] sm:$0xff]
      %v531 = vld [vmem:[#allocation2 + $0x98] sm:$0xff]
      %v532 = vld [vmem:[#allocation2 + $0xa8] sm:$0xff]
      %v533 = vld [vmem:[#allocation2 + $0xb0] sm:$0xff]
      %v534 = vld [vmem:[#allocation2 + $0xc0] sm:$0xff]
      %v535 = vld [vmem:[#allocation2 + $0xc8] sm:$0xff]
      %v536 = vld [vmem:[#allocation2 + $0xd8] sm:$0xff]
      %v537 = vld [vmem:[#allocation2 + $0xe0] sm:$0xff]
      %v538 = vlaneseq
      %v539 = vshrl.u32 %v538, 7
      %v540 = vsub.s32 0, %v539
      %v541 = vrot.slane %v521, %v540
      %v542 = vmul.f32 %v522, %v541
      %v543 = vmul.f32 %v523, %v541
      %v544 = vmul.f32 %v524, %v541
      %v545 = vmul.f32 %v525, %v541
      %v546 = vmul.f32 %v526, %v541
      %v547 = vmul.f32 %v527, %v541
      %v548 = vmul.f32 %v528, %v541
      %v549 = vmul.f32 %v529, %v541
      %v550 = vmul.f32 %v530, %v541
      %v551 = vmul.f32 %v531, %v541
      %v552 = vmul.f32 %v532, %v541
      %v553 = vmul.f32 %v533, %v541
      %v554 = vmul.f32 %v534, %v541
      %v555 = vmul.f32 %v535, %v541
      %v556 = vmul.f32 %v536, %v541
      %v557 = vmul.f32 %v537, %v541
      %v558 = vadd.f32 %v542, 0.0
      %v559 = vadd.f32 %v543, 0.0
      %v560 = vadd.f32 %v544, 0.0
      %v561 = vadd.f32 %v545, 0.0
      %v562 = vadd.f32 %v546, 0.0
      %v563 = vadd.f32 %v547, 0.0
      %v564 = vadd.f32 %v548, 0.0
      %v565 = vadd.f32 %v549, 0.0
      %v566 = vadd.f32 %v550, 0.0
      %v567 = vadd.f32 %v551, 0.0
      %v568 = vadd.f32 %v552, 0.0
      %v569 = vadd.f32 %v553, 0.0
      %v570 = vadd.f32 %v554, 0.0
      %v571 = vadd.f32 %v555, 0.0
      %v572 = vadd.f32 %v556, 0.0
      %v573 = vadd.f32 %v557, 0.0
      %v574 = vld [vmem:[%s1 + $0x1] sm:$0x1]
      %v575 = vld [vmem:[#allocation2 + $0x1] sm:$0xff]
      %v576 = vld [vmem:[#allocation2 + $0x9] sm:$0xff]
      %v577 = vld [vmem:[#allocation2 + $0x19] sm:$0xff]
      %v578 = vld [vmem:[#allocation2 + $0x21] sm:$0xff]
      %v579 = vld [vmem:[#allocation2 + $0x31] sm:$0xff]
      %v580 = vld [vmem:[#allocation2 + $0x39] sm:$0xff]
      %v581 = vld [vmem:[#allocation2 + $0x49] sm:$0xff]
      %v582 = vld [vmem:[#allocation2 + $0x51] sm:$0xff]
      %v583 = vld [vmem:[#allocation2 + $0x91] sm:$0xff]
      %v584 = vld [vmem:[#allocation2 + $0x99] sm:$0xff]
      %v585 = vld [vmem:[#allocation2 + $0xa9] sm:$0xff]
      %v586 = vld [vmem:[#allocation2 + $0xb1] sm:$0xff]
      %v587 = vld [vmem:[#allocation2 + $0xc1] sm:$0xff]
      %v588 = vld [vmem:[#allocation2 + $0xc9] sm:$0xff]
      %v589 = vld [vmem:[#allocation2 + $0xd9] sm:$0xff]
      %v590 = vld [vmem:[#allocation2 + $0xe1] sm:$0xff]
      %v591 = vlaneseq
      %v592 = vshrl.u32 %v591, 7
      %v593 = vsub.s32 0, %v592
      %v594 = vrot.slane %v574, %v593
      %v595 = vmul.f32 %v575, %v594
      %v596 = vmul.f32 %v576, %v594
      %v597 = vmul.f32 %v577, %v594
      %v598 = vmul.f32 %v578, %v594
      %v599 = vmul.f32 %v579, %v594
      %v600 = vmul.f32 %v580, %v594
      %v601 = vmul.f32 %v581, %v594
      %v602 = vmul.f32 %v582, %v594
      %v603 = vmul.f32 %v583, %v594
      %v604 = vmul.f32 %v584, %v594
      %v605 = vmul.f32 %v585, %v594
      %v606 = vmul.f32 %v586, %v594
      %v607 = vmul.f32 %v587, %v594
      %v608 = vmul.f32 %v588, %v594
      %v609 = vmul.f32 %v589, %v594
      %v610 = vmul.f32 %v590, %v594
      %v611 = vadd.f32 %v558, %v595
      %v612 = vadd.f32 %v559, %v596
      %v613 = vadd.f32 %v560, %v597
      %v614 = vadd.f32 %v561, %v598
      %v615 = vadd.f32 %v562, %v599
      %v616 = vadd.f32 %v563, %v600
      %v617 = vadd.f32 %v564, %v601
      %v618 = vadd.f32 %v565, %v602
      %v619 = vadd.f32 %v566, %v603
      %v620 = vadd.f32 %v567, %v604
      %v621 = vadd.f32 %v568, %v605
      %v622 = vadd.f32 %v569, %v606
      %v623 = vadd.f32 %v570, %v607
      %v624 = vadd.f32 %v571, %v608
      %v625 = vadd.f32 %v572, %v609
      %v626 = vadd.f32 %v573, %v610
      %v627 = vld [vmem:[%s1 + $0x2] sm:$0x1]
      %v628 = vld [vmem:[#allocation2 + $0x2] sm:$0xff]
      %v629 = vld [vmem:[#allocation2 + $0xa] sm:$0xff]
      %v630 = vld [vmem:[#allocation2 + $0x1a] sm:$0xff]
      %v631 = vld [vmem:[#allocation2 + $0x22] sm:$0xff]
      %v632 = vld [vmem:[#allocation2 + $0x32] sm:$0xff]
      %v633 = vld [vmem:[#allocation2 + $0x3a] sm:$0xff]
      %v634 = vld [vmem:[#allocation2 + $0x4a] sm:$0xff]
      %v635 = vld [vmem:[#allocation2 + $0x52] sm:$0xff]
      %v636 = vld [vmem:[#allocation2 + $0x92] sm:$0xff]
      %v637 = vld [vmem:[#allocation2 + $0x9a] sm:$0xff]
      %v638 = vld [vmem:[#allocation2 + $0xaa] sm:$0xff]
      %v639 = vld [vmem:[#allocation2 + $0xb2] sm:$0xff]
      %v640 = vld [vmem:[#allocation2 + $0xc2] sm:$0xff]
      %v641 = vld [vmem:[#allocation2 + $0xca] sm:$0xff]
      %v642 = vld [vmem:[#allocation2 + $0xda] sm:$0xff]
      %v643 = vld [vmem:[#allocation2 + $0xe2] sm:$0xff]
      %v644 = vlaneseq
      %v645 = vshrl.u32 %v644, 7
      %v646 = vsub.s32 0, %v645
      %v647 = vrot.slane %v627, %v646
      %v648 = vmul.f32 %v628, %v647
      %v649 = vmul.f32 %v629, %v647
      %v650 = vmul.f32 %v630, %v647
      %v651 = vmul.f32 %v631, %v647
      %v652 = vmul.f32 %v632, %v647
      %v653 = vmul.f32 %v633, %v647
      %v654 = vmul.f32 %v634, %v647
      %v655 = vmul.f32 %v635, %v647
      %v656 = vmul.f32 %v636, %v647
      %v657 = vmul.f32 %v637, %v647
      %v658 = vmul.f32 %v638, %v647
      %v659 = vmul.f32 %v639, %v647
      %v660 = vmul.f32 %v640, %v647
      %v661 = vmul.f32 %v641, %v647
      %v662 = vmul.f32 %v642, %v647
      %v663 = vmul.f32 %v643, %v647
      %v664 = vadd.f32 %v611, %v648
      %v665 = vadd.f32 %v612, %v649
      %v666 = vadd.f32 %v613, %v650
      %v667 = vadd.f32 %v614, %v651
      %v668 = vadd.f32 %v615, %v652
      %v669 = vadd.f32 %v616, %v653
      %v670 = vadd.f32 %v617, %v654
      %v671 = vadd.f32 %v618, %v655
      %v672 = vadd.f32 %v619, %v656
      %v673 = vadd.f32 %v620, %v657
      %v674 = vadd.f32 %v621, %v658
      %v675 = vadd.f32 %v622, %v659
      %v676 = vadd.f32 %v623, %v660
      %v677 = vadd.f32 %v624, %v661
      %v678 = vadd.f32 %v625, %v662
      %v679 = vadd.f32 %v626, %v663
      %s680 = scalar_lea.vmem %s1, 4
      %v681 = vld [vmem:[%s680] sm:$0x1]
      %s682 = scalar_lea.vmem [#allocation2], 24
      %v683 = vld [vmem:[%s682] sm:$0xff]
      %v684 = vld [vmem:[%s682 + $0x8] sm:$0xff]
      %v685 = vld [vmem:[%s682 + $0x18] sm:$0xff]
      %v686 = vld [vmem:[%s682 + $0x20] sm:$0xff]
      %v687 = vld [vmem:[%s682 + $0x30] sm:$0xff]
      %v688 = vld [vmem:[%s682 + $0x38] sm:$0xff]
      %v689 = vld [vmem:[%s682 + $0x48] sm:$0xff]
      %v690 = vld [vmem:[%s682 + $0x50] sm:$0xff]
      %v691 = vld [vmem:[%s682 + $0x90] sm:$0xff]
      %v692 = vld [vmem:[%s682 + $0x98] sm:$0xff]
      %v693 = vld [vmem:[%s682 + $0xa8] sm:$0xff]
      %v694 = vld [vmem:[%s682 + $0xb0] sm:$0xff]
      %v695 = vld [vmem:[%s682 + $0xc0] sm:$0xff]
      %v696 = vld [vmem:[%s682 + $0xc8] sm:$0xff]
      %v697 = vld [vmem:[%s682 + $0xd8] sm:$0xff]
      %v698 = vld [vmem:[%s682 + $0xe0] sm:$0xff]
      %v699 = vlaneseq
      %v700 = vshrl.u32 %v699, 7
      %v701 = vsub.s32 0, %v700
      %v702 = vrot.slane %v681, %v701
      %v703 = vmul.f32 %v683, %v702
      %v704 = vmul.f32 %v684, %v702
      %v705 = vmul.f32 %v685, %v702
      %v706 = vmul.f32 %v686, %v702
      %v707 = vmul.f32 %v687, %v702
      %v708 = vmul.f32 %v688, %v702
      %v709 = vmul.f32 %v689, %v702
      %v710 = vmul.f32 %v690, %v702
      %v711 = vmul.f32 %v691, %v702
      %v712 = vmul.f32 %v692, %v702
      %v713 = vmul.f32 %v693, %v702
      %v714 = vmul.f32 %v694, %v702
      %v715 = vmul.f32 %v695, %v702
      %v716 = vmul.f32 %v696, %v702
      %v717 = vmul.f32 %v697, %v702
      %v718 = vmul.f32 %v698, %v702
      %v719 = vadd.f32 %v664, %v703
      %v720 = vadd.f32 %v665, %v704
      %v721 = vadd.f32 %v666, %v705
      %v722 = vadd.f32 %v667, %v706
      %v723 = vadd.f32 %v668, %v707
      %v724 = vadd.f32 %v669, %v708
      %v725 = vadd.f32 %v670, %v709
      %v726 = vadd.f32 %v671, %v710
      %v727 = vadd.f32 %v672, %v711
      %v728 = vadd.f32 %v673, %v712
      %v729 = vadd.f32 %v674, %v713
      %v730 = vadd.f32 %v675, %v714
      %v731 = vadd.f32 %v676, %v715
      %v732 = vadd.f32 %v677, %v716
      %v733 = vadd.f32 %v678, %v717
      %v734 = vadd.f32 %v679, %v718
      %v735 = vld [vmem:[%s680 + $0x1] sm:$0x1]
      %v736 = vld [vmem:[%s682 + $0x1] sm:$0xff]
      %v737 = vld [vmem:[%s682 + $0x9] sm:$0xff]
      %v738 = vld [vmem:[%s682 + $0x19] sm:$0xff]
      %v739 = vld [vmem:[%s682 + $0x21] sm:$0xff]
      %v740 = vld [vmem:[%s682 + $0x31] sm:$0xff]
      %v741 = vld [vmem:[%s682 + $0x39] sm:$0xff]
      %v742 = vld [vmem:[%s682 + $0x49] sm:$0xff]
      %v743 = vld [vmem:[%s682 + $0x51] sm:$0xff]
      %v744 = vld [vmem:[%s682 + $0x91] sm:$0xff]
      %v745 = vld [vmem:[%s682 + $0x99] sm:$0xff]
      %v746 = vld [vmem:[%s682 + $0xa9] sm:$0xff]
      %v747 = vld [vmem:[%s682 + $0xb1] sm:$0xff]
      %v748 = vld [vmem:[%s682 + $0xc1] sm:$0xff]
      %v749 = vld [vmem:[%s682 + $0xc9] sm:$0xff]
      %v750 = vld [vmem:[%s682 + $0xd9] sm:$0xff]
      %v751 = vld [vmem:[%s682 + $0xe1] sm:$0xff]
      %v752 = vlaneseq
      %v753 = vshrl.u32 %v752, 7
      %v754 = vsub.s32 0, %v753
      %v755 = vrot.slane %v735, %v754
      %v756 = vmul.f32 %v736, %v755
      %v757 = vmul.f32 %v737, %v755
      %v758 = vmul.f32 %v738, %v755
      %v759 = vmul.f32 %v739, %v755
      %v760 = vmul.f32 %v740, %v755
      %v761 = vmul.f32 %v741, %v755
      %v762 = vmul.f32 %v742, %v755
      %v763 = vmul.f32 %v743, %v755
      %v764 = vmul.f32 %v744, %v755
      %v765 = vmul.f32 %v745, %v755
      %v766 = vmul.f32 %v746, %v755
      %v767 = vmul.f32 %v747, %v755
      %v768 = vmul.f32 %v748, %v755
      %v769 = vmul.f32 %v749, %v755
      %v770 = vmul.f32 %v750, %v755
      %v771 = vmul.f32 %v751, %v755
      %v772 = vadd.f32 %v719, %v756
      %v773 = vadd.f32 %v720, %v757
      %v774 = vadd.f32 %v721, %v758
      %v775 = vadd.f32 %v722, %v759
      %v776 = vadd.f32 %v723, %v760
      %v777 = vadd.f32 %v724, %v761
      %v778 = vadd.f32 %v725, %v762
      %v779 = vadd.f32 %v726, %v763
      %v780 = vadd.f32 %v727, %v764
      %v781 = vadd.f32 %v728, %v765
      %v782 = vadd.f32 %v729, %v766
      %v783 = vadd.f32 %v730, %v767
      %v784 = vadd.f32 %v731, %v768
      %v785 = vadd.f32 %v732, %v769
      %v786 = vadd.f32 %v733, %v770
      %v787 = vadd.f32 %v734, %v771
      %v788 = vld [vmem:[%s680 + $0x2] sm:$0x1]
      %v789 = vld [vmem:[%s682 + $0x2] sm:$0xff]
      %v790 = vld [vmem:[%s682 + $0xa] sm:$0xff]
      %v791 = vld [vmem:[%s682 + $0x1a] sm:$0xff]
      %v792 = vld [vmem:[%s682 + $0x22] sm:$0xff]
      %v793 = vld [vmem:[%s682 + $0x32] sm:$0xff]
      %v794 = vld [vmem:[%s682 + $0x3a] sm:$0xff]
      %v795 = vld [vmem:[%s682 + $0x4a] sm:$0xff]
      %v796 = vld [vmem:[%s682 + $0x52] sm:$0xff]
      %v797 = vld [vmem:[%s682 + $0x92] sm:$0xff]
      %v798 = vld [vmem:[%s682 + $0x9a] sm:$0xff]
      %v799 = vld [vmem:[%s682 + $0xaa] sm:$0xff]
      %v800 = vld [vmem:[%s682 + $0xb2] sm:$0xff]
      %v801 = vld [vmem:[%s682 + $0xc2] sm:$0xff]
      %v802 = vld [vmem:[%s682 + $0xca] sm:$0xff]
      %v803 = vld [vmem:[%s682 + $0xda] sm:$0xff]
      %v804 = vld [vmem:[%s682 + $0xe2] sm:$0xff]
      %v805 = vlaneseq
      %v806 = vshrl.u32 %v805, 7
      %v807 = vsub.s32 0, %v806
      %v808 = vrot.slane %v788, %v807
      %v809 = vmul.f32 %v789, %v808
      %v810 = vmul.f32 %v790, %v808
      %v811 = vmul.f32 %v791, %v808
      %v812 = vmul.f32 %v792, %v808
      %v813 = vmul.f32 %v793, %v808
      %v814 = vmul.f32 %v794, %v808
      %v815 = vmul.f32 %v795, %v808
      %v816 = vmul.f32 %v796, %v808
      %v817 = vmul.f32 %v797, %v808
      %v818 = vmul.f32 %v798, %v808
      %v819 = vmul.f32 %v799, %v808
      %v820 = vmul.f32 %v800, %v808
      %v821 = vmul.f32 %v801, %v808
      %v822 = vmul.f32 %v802, %v808
      %v823 = vmul.f32 %v803, %v808
      %v824 = vmul.f32 %v804, %v808
      %v825 = vadd.f32 %v772, %v809
      %v826 = vadd.f32 %v773, %v810
      %v827 = vadd.f32 %v774, %v811
      %v828 = vadd.f32 %v775, %v812
      %v829 = vadd.f32 %v776, %v813
      %v830 = vadd.f32 %v777, %v814
      %v831 = vadd.f32 %v778, %v815
      %v832 = vadd.f32 %v779, %v816
      %v833 = vadd.f32 %v780, %v817
      %v834 = vadd.f32 %v781, %v818
      %v835 = vadd.f32 %v782, %v819
      %v836 = vadd.f32 %v783, %v820
      %v837 = vadd.f32 %v784, %v821
      %v838 = vadd.f32 %v785, %v822
      %v839 = vadd.f32 %v786, %v823
      %v840 = vadd.f32 %v787, %v824
      %s841 = scalar_lea.vmem %s1, 8
      %v842 = vld [vmem:[%s841] sm:$0x1]
      %s843 = scalar_lea.vmem [#allocation2], 48
      %v844 = vld [vmem:[%s843] sm:$0xff]
      %v845 = vld [vmem:[%s843 + $0x8] sm:$0xff]
      %v846 = vld [vmem:[%s843 + $0x18] sm:$0xff]
      %v847 = vld [vmem:[%s843 + $0x20] sm:$0xff]
      %v848 = vld [vmem:[%s843 + $0x30] sm:$0xff]
      %v849 = vld [vmem:[%s843 + $0x38] sm:$0xff]
      %v850 = vld [vmem:[%s843 + $0x48] sm:$0xff]
      %v851 = vld [vmem:[%s843 + $0x50] sm:$0xff]
      %v852 = vld [vmem:[%s843 + $0x90] sm:$0xff]
      %v853 = vld [vmem:[%s843 + $0x98] sm:$0xff]
      %v854 = vld [vmem:[%s843 + $0xa8] sm:$0xff]
      %v855 = vld [vmem:[%s843 + $0xb0] sm:$0xff]
      %v856 = vld [vmem:[%s843 + $0xc0] sm:$0xff]
      %v857 = vld [vmem:[%s843 + $0xc8] sm:$0xff]
      %v858 = vld [vmem:[%s843 + $0xd8] sm:$0xff]
      %v859 = vld [vmem:[%s843 + $0xe0] sm:$0xff]
      %v860 = vlaneseq
      %v861 = vshrl.u32 %v860, 7
      %v862 = vsub.s32 0, %v861
      %v863 = vrot.slane %v842, %v862
      %v864 = vmul.f32 %v844, %v863
      %v865 = vmul.f32 %v845, %v863
      %v866 = vmul.f32 %v846, %v863
      %v867 = vmul.f32 %v847, %v863
      %v868 = vmul.f32 %v848, %v863
      %v869 = vmul.f32 %v849, %v863
      %v870 = vmul.f32 %v850, %v863
      %v871 = vmul.f32 %v851, %v863
      %v872 = vmul.f32 %v852, %v863
      %v873 = vmul.f32 %v853, %v863
      %v874 = vmul.f32 %v854, %v863
      %v875 = vmul.f32 %v855, %v863
      %v876 = vmul.f32 %v856, %v863
      %v877 = vmul.f32 %v857, %v863
      %v878 = vmul.f32 %v858, %v863
      %v879 = vmul.f32 %v859, %v863
      %v880 = vadd.f32 %v825, %v864
      %v881 = vadd.f32 %v826, %v865
      %v882 = vadd.f32 %v827, %v866
      %v883 = vadd.f32 %v828, %v867
      %v884 = vadd.f32 %v829, %v868
      %v885 = vadd.f32 %v830, %v869
      %v886 = vadd.f32 %v831, %v870
      %v887 = vadd.f32 %v832, %v871
      %v888 = vadd.f32 %v833, %v872
      %v889 = vadd.f32 %v834, %v873
      %v890 = vadd.f32 %v835, %v874
      %v891 = vadd.f32 %v836, %v875
      %v892 = vadd.f32 %v837, %v876
      %v893 = vadd.f32 %v838, %v877
      %v894 = vadd.f32 %v839, %v878
      %v895 = vadd.f32 %v840, %v879
      %v896 = vld [vmem:[%s841 + $0x1] sm:$0x1]
      %v897 = vld [vmem:[%s843 + $0x1] sm:$0xff]
      %v898 = vld [vmem:[%s843 + $0x9] sm:$0xff]
      %v899 = vld [vmem:[%s843 + $0x19] sm:$0xff]
      %v900 = vld [vmem:[%s843 + $0x21] sm:$0xff]
      %v901 = vld [vmem:[%s843 + $0x31] sm:$0xff]
      %v902 = vld [vmem:[%s843 + $0x39] sm:$0xff]
      %v903 = vld [vmem:[%s843 + $0x49] sm:$0xff]
      %v904 = vld [vmem:[%s843 + $0x51] sm:$0xff]
      %v905 = vld [vmem:[%s843 + $0x91] sm:$0xff]
      %v906 = vld [vmem:[%s843 + $0x99] sm:$0xff]
      %v907 = vld [vmem:[%s843 + $0xa9] sm:$0xff]
      %v908 = vld [vmem:[%s843 + $0xb1] sm:$0xff]
      %v909 = vld [vmem:[%s843 + $0xc1] sm:$0xff]
      %v910 = vld [vmem:[%s843 + $0xc9] sm:$0xff]
      %v911 = vld [vmem:[%s843 + $0xd9] sm:$0xff]
      %v912 = vld [vmem:[%s843 + $0xe1] sm:$0xff]
      %v913 = vlaneseq
      %v914 = vshrl.u32 %v913, 7
      %v915 = vsub.s32 0, %v914
      %v916 = vrot.slane %v896, %v915
      %v917 = vmul.f32 %v897, %v916
      %v918 = vmul.f32 %v898, %v916
      %v919 = vmul.f32 %v899, %v916
      %v920 = vmul.f32 %v900, %v916
      %v921 = vmul.f32 %v901, %v916
      %v922 = vmul.f32 %v902, %v916
      %v923 = vmul.f32 %v903, %v916
      %v924 = vmul.f32 %v904, %v916
      %v925 = vmul.f32 %v905, %v916
      %v926 = vmul.f32 %v906, %v916
      %v927 = vmul.f32 %v907, %v916
      %v928 = vmul.f32 %v908, %v916
      %v929 = vmul.f32 %v909, %v916
      %v930 = vmul.f32 %v910, %v916
      %v931 = vmul.f32 %v911, %v916
      %v932 = vmul.f32 %v912, %v916
      %v933 = vadd.f32 %v880, %v917
      %v934 = vadd.f32 %v881, %v918
      %v935 = vadd.f32 %v882, %v919
      %v936 = vadd.f32 %v883, %v920
      %v937 = vadd.f32 %v884, %v921
      %v938 = vadd.f32 %v885, %v922
      %v939 = vadd.f32 %v886, %v923
      %v940 = vadd.f32 %v887, %v924
      %v941 = vadd.f32 %v888, %v925
      %v942 = vadd.f32 %v889, %v926
      %v943 = vadd.f32 %v890, %v927
      %v944 = vadd.f32 %v891, %v928
      %v945 = vadd.f32 %v892, %v929
      %v946 = vadd.f32 %v893, %v930
      %v947 = vadd.f32 %v894, %v931
      %v948 = vadd.f32 %v895, %v932
      %v949 = vld [vmem:[%s841 + $0x2] sm:$0x1]
      %v950 = vld [vmem:[%s843 + $0x2] sm:$0xff]
      %v951 = vld [vmem:[%s843 + $0xa] sm:$0xff]
      %v952 = vld [vmem:[%s843 + $0x1a] sm:$0xff]
      %v953 = vld [vmem:[%s843 + $0x22] sm:$0xff]
      %v954 = vld [vmem:[%s843 + $0x32] sm:$0xff]
      %v955 = vld [vmem:[%s843 + $0x3a] sm:$0xff]
      %v956 = vld [vmem:[%s843 + $0x4a] sm:$0xff]
      %v957 = vld [vmem:[%s843 + $0x52] sm:$0xff]
      %v958 = vld [vmem:[%s843 + $0x92] sm:$0xff]
      %v959 = vld [vmem:[%s843 + $0x9a] sm:$0xff]
      %v960 = vld [vmem:[%s843 + $0xaa] sm:$0xff]
      %v961 = vld [vmem:[%s843 + $0xb2] sm:$0xff]
      %v962 = vld [vmem:[%s843 + $0xc2] sm:$0xff]
      %v963 = vld [vmem:[%s843 + $0xca] sm:$0xff]
      %v964 = vld [vmem:[%s843 + $0xda] sm:$0xff]
      %v965 = vld [vmem:[%s843 + $0xe2] sm:$0xff]
      %v966 = vlaneseq
      %v967 = vshrl.u32 %v966, 7
      %v968 = vsub.s32 0, %v967
      %v969 = vrot.slane %v949, %v968
      %v970 = vmul.f32 %v950, %v969
      %v971 = vmul.f32 %v951, %v969
      %v972 = vmul.f32 %v952, %v969
      %v973 = vmul.f32 %v953, %v969
      %v974 = vmul.f32 %v954, %v969
      %v975 = vmul.f32 %v955, %v969
      %v976 = vmul.f32 %v956, %v969
      %v977 = vmul.f32 %v957, %v969
      %v978 = vmul.f32 %v958, %v969
      %v979 = vmul.f32 %v959, %v969
      %v980 = vmul.f32 %v960, %v969
      %v981 = vmul.f32 %v961, %v969
      %v982 = vmul.f32 %v962, %v969
      %v983 = vmul.f32 %v963, %v969
      %v984 = vmul.f32 %v964, %v969
      %v985 = vmul.f32 %v965, %v969
      %v986 = vadd.f32 %v933, %v970
      %v987 = vadd.f32 %v934, %v971
      %v988 = vadd.f32 %v935, %v972
      %v989 = vadd.f32 %v936, %v973
      %v990 = vadd.f32 %v937, %v974
      %v991 = vadd.f32 %v938, %v975
      %v992 = vadd.f32 %v939, %v976
      %v993 = vadd.f32 %v940, %v977
      %v994 = vadd.f32 %v941, %v978
      %v995 = vadd.f32 %v942, %v979
      %v996 = vadd.f32 %v943, %v980
      %v997 = vadd.f32 %v944, %v981
      %v998 = vadd.f32 %v945, %v982
      %v999 = vadd.f32 %v946, %v983
      %v1000 = vadd.f32 %v947, %v984
      %v1001 = vadd.f32 %v948, %v985
      %s1002 = scalar_lea.vmem %s1, 12
      %v1003 = vld [vmem:[%s1002] sm:$0x1]
      %s1004 = scalar_lea.vmem [#allocation2], 144
      %v1005 = vld [vmem:[%s1004] sm:$0xff]
      %v1006 = vld [vmem:[%s1004 + $0x8] sm:$0xff]
      %v1007 = vld [vmem:[%s1004 + $0x18] sm:$0xff]
      %v1008 = vld [vmem:[%s1004 + $0x20] sm:$0xff]
      %v1009 = vld [vmem:[%s1004 + $0x30] sm:$0xff]
      %v1010 = vld [vmem:[%s1004 + $0x38] sm:$0xff]
      %v1011 = vld [vmem:[%s1004 + $0x48] sm:$0xff]
      %v1012 = vld [vmem:[%s1004 + $0x50] sm:$0xff]
      %v1013 = vld [vmem:[%s1004 + $0x90] sm:$0xff]
      %v1014 = vld [vmem:[%s1004 + $0x98] sm:$0xff]
      %v1015 = vld [vmem:[%s1004 + $0xa8] sm:$0xff]
      %v1016 = vld [vmem:[%s1004 + $0xb0] sm:$0xff]
      %v1017 = vld [vmem:[%s1004 + $0xc0] sm:$0xff]
      %v1018 = vld [vmem:[%s1004 + $0xc8] sm:$0xff]
      %v1019 = vld [vmem:[%s1004 + $0xd8] sm:$0xff]
      %v1020 = vld [vmem:[%s1004 + $0xe0] sm:$0xff]
      %v1021 = vlaneseq
      %v1022 = vshrl.u32 %v1021, 7
      %v1023 = vsub.s32 0, %v1022
      %v1024 = vrot.slane %v1003, %v1023
      %v1025 = vmul.f32 %v1005, %v1024
      %v1026 = vmul.f32 %v1006, %v1024
      %v1027 = vmul.f32 %v1007, %v1024
      %v1028 = vmul.f32 %v1008, %v1024
      %v1029 = vmul.f32 %v1009, %v1024
      %v1030 = vmul.f32 %v1010, %v1024
      %v1031 = vmul.f32 %v1011, %v1024
      %v1032 = vmul.f32 %v1012, %v1024
      %v1033 = vmul.f32 %v1013, %v1024
      %v1034 = vmul.f32 %v1014, %v1024
      %v1035 = vmul.f32 %v1015, %v1024
      %v1036 = vmul.f32 %v1016, %v1024
      %v1037 = vmul.f32 %v1017, %v1024
      %v1038 = vmul.f32 %v1018, %v1024
      %v1039 = vmul.f32 %v1019, %v1024
      %v1040 = vmul.f32 %v1020, %v1024
      %v1041 = vadd.f32 %v986, %v1025
      %v1042 = vadd.f32 %v987, %v1026
      %v1043 = vadd.f32 %v988, %v1027
      %v1044 = vadd.f32 %v989, %v1028
      %v1045 = vadd.f32 %v990, %v1029
      %v1046 = vadd.f32 %v991, %v1030
      %v1047 = vadd.f32 %v992, %v1031
      %v1048 = vadd.f32 %v993, %v1032
      %v1049 = vadd.f32 %v994, %v1033
      %v1050 = vadd.f32 %v995, %v1034
      %v1051 = vadd.f32 %v996, %v1035
      %v1052 = vadd.f32 %v997, %v1036
      %v1053 = vadd.f32 %v998, %v1037
      %v1054 = vadd.f32 %v999, %v1038
      %v1055 = vadd.f32 %v1000, %v1039
      %v1056 = vadd.f32 %v1001, %v1040
      %v1057 = vld [vmem:[%s1002 + $0x1] sm:$0x1]
      %v1058 = vld [vmem:[%s1004 + $0x1] sm:$0xff]
      %v1059 = vld [vmem:[%s1004 + $0x9] sm:$0xff]
      %v1060 = vld [vmem:[%s1004 + $0x19] sm:$0xff]
      %v1061 = vld [vmem:[%s1004 + $0x21] sm:$0xff]
      %v1062 = vld [vmem:[%s1004 + $0x31] sm:$0xff]
      %v1063 = vld [vmem:[%s1004 + $0x39] sm:$0xff]
      %v1064 = vld [vmem:[%s1004 + $0x49] sm:$0xff]
      %v1065 = vld [vmem:[%s1004 + $0x51] sm:$0xff]
      %v1066 = vld [vmem:[%s1004 + $0x91] sm:$0xff]
      %v1067 = vld [vmem:[%s1004 + $0x99] sm:$0xff]
      %v1068 = vld [vmem:[%s1004 + $0xa9] sm:$0xff]
      %v1069 = vld [vmem:[%s1004 + $0xb1] sm:$0xff]
      %v1070 = vld [vmem:[%s1004 + $0xc1] sm:$0xff]
      %v1071 = vld [vmem:[%s1004 + $0xc9] sm:$0xff]
      %v1072 = vld [vmem:[%s1004 + $0xd9] sm:$0xff]
      %v1073 = vld [vmem:[%s1004 + $0xe1] sm:$0xff]
      %v1074 = vlaneseq
      %v1075 = vshrl.u32 %v1074, 7
      %v1076 = vsub.s32 0, %v1075
      %v1077 = vrot.slane %v1057, %v1076
      %v1078 = vmul.f32 %v1058, %v1077
      %v1079 = vmul.f32 %v1059, %v1077
      %v1080 = vmul.f32 %v1060, %v1077
      %v1081 = vmul.f32 %v1061, %v1077
      %v1082 = vmul.f32 %v1062, %v1077
      %v1083 = vmul.f32 %v1063, %v1077
      %v1084 = vmul.f32 %v1064, %v1077
      %v1085 = vmul.f32 %v1065, %v1077
      %v1086 = vmul.f32 %v1066, %v1077
      %v1087 = vmul.f32 %v1067, %v1077
      %v1088 = vmul.f32 %v1068, %v1077
      %v1089 = vmul.f32 %v1069, %v1077
      %v1090 = vmul.f32 %v1070, %v1077
      %v1091 = vmul.f32 %v1071, %v1077
      %v1092 = vmul.f32 %v1072, %v1077
      %v1093 = vmul.f32 %v1073, %v1077
      %v1094 = vadd.f32 %v1041, %v1078
      %v1095 = vadd.f32 %v1042, %v1079
      %v1096 = vadd.f32 %v1043, %v1080
      %v1097 = vadd.f32 %v1044, %v1081
      %v1098 = vadd.f32 %v1045, %v1082
      %v1099 = vadd.f32 %v1046, %v1083
      %v1100 = vadd.f32 %v1047, %v1084
      %v1101 = vadd.f32 %v1048, %v1085
      %v1102 = vadd.f32 %v1049, %v1086
      %v1103 = vadd.f32 %v1050, %v1087
      %v1104 = vadd.f32 %v1051, %v1088
      %v1105 = vadd.f32 %v1052, %v1089
      %v1106 = vadd.f32 %v1053, %v1090
      %v1107 = vadd.f32 %v1054, %v1091
      %v1108 = vadd.f32 %v1055, %v1092
      %v1109 = vadd.f32 %v1056, %v1093
      %v1110 = vld [vmem:[%s1002 + $0x2] sm:$0x1]
      %v1111 = vld [vmem:[%s1004 + $0x2] sm:$0xff]
      %v1112 = vld [vmem:[%s1004 + $0xa] sm:$0xff]
      %v1113 = vld [vmem:[%s1004 + $0x1a] sm:$0xff]
      %v1114 = vld [vmem:[%s1004 + $0x22] sm:$0xff]
      %v1115 = vld [vmem:[%s1004 + $0x32] sm:$0xff]
      %v1116 = vld [vmem:[%s1004 + $0x3a] sm:$0xff]
      %v1117 = vld [vmem:[%s1004 + $0x4a] sm:$0xff]
      %v1118 = vld [vmem:[%s1004 + $0x52] sm:$0xff]
      %v1119 = vld [vmem:[%s1004 + $0x92] sm:$0xff]
      %v1120 = vld [vmem:[%s1004 + $0x9a] sm:$0xff]
      %v1121 = vld [vmem:[%s1004 + $0xaa] sm:$0xff]
      %v1122 = vld [vmem:[%s1004 + $0xb2] sm:$0xff]
      %v1123 = vld [vmem:[%s1004 + $0xc2] sm:$0xff]
      %v1124 = vld [vmem:[%s1004 + $0xca] sm:$0xff]
      %v1125 = vld [vmem:[%s1004 + $0xda] sm:$0xff]
      %v1126 = vld [vmem:[%s1004 + $0xe2] sm:$0xff]
      %v1127 = vlaneseq
      %v1128 = vshrl.u32 %v1127, 7
      %v1129 = vsub.s32 0, %v1128
      %v1130 = vrot.slane %v1110, %v1129
      %v1131 = vmul.f32 %v1111, %v1130
      %v1132 = vmul.f32 %v1112, %v1130
      %v1133 = vmul.f32 %v1113, %v1130
      %v1134 = vmul.f32 %v1114, %v1130
      %v1135 = vmul.f32 %v1115, %v1130
      %v1136 = vmul.f32 %v1116, %v1130
      %v1137 = vmul.f32 %v1117, %v1130
      %v1138 = vmul.f32 %v1118, %v1130
      %v1139 = vmul.f32 %v1119, %v1130
      %v1140 = vmul.f32 %v1120, %v1130
      %v1141 = vmul.f32 %v1121, %v1130
      %v1142 = vmul.f32 %v1122, %v1130
      %v1143 = vmul.f32 %v1123, %v1130
      %v1144 = vmul.f32 %v1124, %v1130
      %v1145 = vmul.f32 %v1125, %v1130
      %v1146 = vmul.f32 %v1126, %v1130
      %v1147 = vadd.f32 %v1094, %v1131
      %v1148 = vadd.f32 %v1095, %v1132
      %v1149 = vadd.f32 %v1096, %v1133
      %v1150 = vadd.f32 %v1097, %v1134
      %v1151 = vadd.f32 %v1098, %v1135
      %v1152 = vadd.f32 %v1099, %v1136
      %v1153 = vadd.f32 %v1100, %v1137
      %v1154 = vadd.f32 %v1101, %v1138
      %v1155 = vadd.f32 %v1102, %v1139
      %v1156 = vadd.f32 %v1103, %v1140
      %v1157 = vadd.f32 %v1104, %v1141
      %v1158 = vadd.f32 %v1105, %v1142
      %v1159 = vadd.f32 %v1106, %v1143
      %v1160 = vadd.f32 %v1107, %v1144
      %v1161 = vadd.f32 %v1108, %v1145
      %v1162 = vadd.f32 %v1109, %v1146
      %s1163 = scalar_lea.vmem %s1, 16
      %v1164 = vld [vmem:[%s1163] sm:$0x1]
      %v1165 = vld [vmem:[%s504] sm:$0xff]
      %v1166 = vld [vmem:[%s504 + $0x8] sm:$0xff]
      %v1167 = vld [vmem:[%s504 + $0x18] sm:$0xff]
      %v1168 = vld [vmem:[%s504 + $0x20] sm:$0xff]
      %v1169 = vld [vmem:[%s504 + $0x30] sm:$0xff]
      %v1170 = vld [vmem:[%s504 + $0x38] sm:$0xff]
      %v1171 = vld [vmem:[%s504 + $0x48] sm:$0xff]
      %v1172 = vld [vmem:[%s504 + $0x50] sm:$0xff]
      %v1173 = vld [vmem:[%s504 + $0x90] sm:$0xff]
      %v1174 = vld [vmem:[%s504 + $0x98] sm:$0xff]
      %v1175 = vld [vmem:[%s504 + $0xa8] sm:$0xff]
      %v1176 = vld [vmem:[%s504 + $0xb0] sm:$0xff]
      %v1177 = vld [vmem:[%s504 + $0xc0] sm:$0xff]
      %v1178 = vld [vmem:[%s504 + $0xc8] sm:$0xff]
      %v1179 = vld [vmem:[%s504 + $0xd8] sm:$0xff]
      %v1180 = vld [vmem:[%s504 + $0xe0] sm:$0xff]
      %v1181 = vlaneseq
      %v1182 = vshrl.u32 %v1181, 7
      %v1183 = vsub.s32 0, %v1182
      %v1184 = vrot.slane %v1164, %v1183
      %v1185 = vmul.f32 %v1165, %v1184
      %v1186 = vmul.f32 %v1166, %v1184
      %v1187 = vmul.f32 %v1167, %v1184
      %v1188 = vmul.f32 %v1168, %v1184
      %v1189 = vmul.f32 %v1169, %v1184
      %v1190 = vmul.f32 %v1170, %v1184
      %v1191 = vmul.f32 %v1171, %v1184
      %v1192 = vmul.f32 %v1172, %v1184
      %v1193 = vmul.f32 %v1173, %v1184
      %v1194 = vmul.f32 %v1174, %v1184
      %v1195 = vmul.f32 %v1175, %v1184
      %v1196 = vmul.f32 %v1176, %v1184
      %v1197 = vmul.f32 %v1177, %v1184
      %v1198 = vmul.f32 %v1178, %v1184
      %v1199 = vmul.f32 %v1179, %v1184
      %v1200 = vmul.f32 %v1180, %v1184
      %v1201 = vadd.f32 %v1147, %v1185
      %v1202 = vadd.f32 %v1148, %v1186
      %v1203 = vadd.f32 %v1149, %v1187
      %v1204 = vadd.f32 %v1150, %v1188
      %v1205 = vadd.f32 %v1151, %v1189
      %v1206 = vadd.f32 %v1152, %v1190
      %v1207 = vadd.f32 %v1153, %v1191
      %v1208 = vadd.f32 %v1154, %v1192
      %v1209 = vadd.f32 %v1155, %v1193
      %v1210 = vadd.f32 %v1156, %v1194
      %v1211 = vadd.f32 %v1157, %v1195
      %v1212 = vadd.f32 %v1158, %v1196
      %v1213 = vadd.f32 %v1159, %v1197
      %v1214 = vadd.f32 %v1160, %v1198
      %v1215 = vadd.f32 %v1161, %v1199
      %v1216 = vadd.f32 %v1162, %v1200
      %v1217 = vld [vmem:[%s1163 + $0x1] sm:$0x1]
      %v1218 = vld [vmem:[%s504 + $0x1] sm:$0xff]
      %v1219 = vld [vmem:[%s504 + $0x9] sm:$0xff]
      %v1220 = vld [vmem:[%s504 + $0x19] sm:$0xff]
      %v1221 = vld [vmem:[%s504 + $0x21] sm:$0xff]
      %v1222 = vld [vmem:[%s504 + $0x31] sm:$0xff]
      %v1223 = vld [vmem:[%s504 + $0x39] sm:$0xff]
      %v1224 = vld [vmem:[%s504 + $0x49] sm:$0xff]
      %v1225 = vld [vmem:[%s504 + $0x51] sm:$0xff]
      %v1226 = vld [vmem:[%s504 + $0x91] sm:$0xff]
      %v1227 = vld [vmem:[%s504 + $0x99] sm:$0xff]
      %v1228 = vld [vmem:[%s504 + $0xa9] sm:$0xff]
      %v1229 = vld [vmem:[%s504 + $0xb1] sm:$0xff]
      %v1230 = vld [vmem:[%s504 + $0xc1] sm:$0xff]
      %v1231 = vld [vmem:[%s504 + $0xc9] sm:$0xff]
      %v1232 = vld [vmem:[%s504 + $0xd9] sm:$0xff]
      %v1233 = vld [vmem:[%s504 + $0xe1] sm:$0xff]
      %v1234 = vlaneseq
      %v1235 = vshrl.u32 %v1234, 7
      %v1236 = vsub.s32 0, %v1235
      %v1237 = vrot.slane %v1217, %v1236
      %v1238 = vmul.f32 %v1218, %v1237
      %v1239 = vmul.f32 %v1219, %v1237
      %v1240 = vmul.f32 %v1220, %v1237
      %v1241 = vmul.f32 %v1221, %v1237
      %v1242 = vmul.f32 %v1222, %v1237
      %v1243 = vmul.f32 %v1223, %v1237
      %v1244 = vmul.f32 %v1224, %v1237
      %v1245 = vmul.f32 %v1225, %v1237
      %v1246 = vmul.f32 %v1226, %v1237
      %v1247 = vmul.f32 %v1227, %v1237
      %v1248 = vmul.f32 %v1228, %v1237
      %v1249 = vmul.f32 %v1229, %v1237
      %v1250 = vmul.f32 %v1230, %v1237
      %v1251 = vmul.f32 %v1231, %v1237
      %v1252 = vmul.f32 %v1232, %v1237
      %v1253 = vmul.f32 %v1233, %v1237
      %v1254 = vadd.f32 %v1201, %v1238
      %v1255 = vadd.f32 %v1202, %v1239
      %v1256 = vadd.f32 %v1203, %v1240
      %v1257 = vadd.f32 %v1204, %v1241
      %v1258 = vadd.f32 %v1205, %v1242
      %v1259 = vadd.f32 %v1206, %v1243
      %v1260 = vadd.f32 %v1207, %v1244
      %v1261 = vadd.f32 %v1208, %v1245
      %v1262 = vadd.f32 %v1209, %v1246
      %v1263 = vadd.f32 %v1210, %v1247
      %v1264 = vadd.f32 %v1211, %v1248
      %v1265 = vadd.f32 %v1212, %v1249
      %v1266 = vadd.f32 %v1213, %v1250
      %v1267 = vadd.f32 %v1214, %v1251
      %v1268 = vadd.f32 %v1215, %v1252
      %v1269 = vadd.f32 %v1216, %v1253
      %v1270 = vld [vmem:[%s1163 + $0x2] sm:$0x1]
      %v1271 = vld [vmem:[%s504 + $0x2] sm:$0xff]
      %v1272 = vld [vmem:[%s504 + $0xa] sm:$0xff]
      %v1273 = vld [vmem:[%s504 + $0x1a] sm:$0xff]
      %v1274 = vld [vmem:[%s504 + $0x22] sm:$0xff]
      %v1275 = vld [vmem:[%s504 + $0x32] sm:$0xff]
      %v1276 = vld [vmem:[%s504 + $0x3a] sm:$0xff]
      %v1277 = vld [vmem:[%s504 + $0x4a] sm:$0xff]
      %v1278 = vld [vmem:[%s504 + $0x52] sm:$0xff]
      %v1279 = vld [vmem:[%s504 + $0x92] sm:$0xff]
      %v1280 = vld [vmem:[%s504 + $0x9a] sm:$0xff]
      %v1281 = vld [vmem:[%s504 + $0xaa] sm:$0xff]
      %v1282 = vld [vmem:[%s504 + $0xb2] sm:$0xff]
      %v1283 = vld [vmem:[%s504 + $0xc2] sm:$0xff]
      %v1284 = vld [vmem:[%s504 + $0xca] sm:$0xff]
      %v1285 = vld [vmem:[%s504 + $0xda] sm:$0xff]
      %v1286 = vld [vmem:[%s504 + $0xe2] sm:$0xff]
      %v1287 = vlaneseq
      %v1288 = vshrl.u32 %v1287, 7
      %v1289 = vsub.s32 0, %v1288
      %v1290 = vrot.slane %v1270, %v1289
      %v1291 = vmul.f32 %v1271, %v1290
      %v1292 = vmul.f32 %v1272, %v1290
      %v1293 = vmul.f32 %v1273, %v1290
      %v1294 = vmul.f32 %v1274, %v1290
      %v1295 = vmul.f32 %v1275, %v1290
      %v1296 = vmul.f32 %v1276, %v1290
      %v1297 = vmul.f32 %v1277, %v1290
      %v1298 = vmul.f32 %v1278, %v1290
      %v1299 = vmul.f32 %v1279, %v1290
      %v1300 = vmul.f32 %v1280, %v1290
      %v1301 = vmul.f32 %v1281, %v1290
      %v1302 = vmul.f32 %v1282, %v1290
      %v1303 = vmul.f32 %v1283, %v1290
      %v1304 = vmul.f32 %v1284, %v1290
      %v1305 = vmul.f32 %v1285, %v1290
      %v1306 = vmul.f32 %v1286, %v1290
      %v1307 = vadd.f32 %v1254, %v1291
      %v1308 = vadd.f32 %v1255, %v1292
      %v1309 = vadd.f32 %v1256, %v1293
      %v1310 = vadd.f32 %v1257, %v1294
      %v1311 = vadd.f32 %v1258, %v1295
      %v1312 = vadd.f32 %v1259, %v1296
      %v1313 = vadd.f32 %v1260, %v1297
      %v1314 = vadd.f32 %v1261, %v1298
      %v1315 = vadd.f32 %v1262, %v1299
      %v1316 = vadd.f32 %v1263, %v1300
      %v1317 = vadd.f32 %v1264, %v1301
      %v1318 = vadd.f32 %v1265, %v1302
      %v1319 = vadd.f32 %v1266, %v1303
      %v1320 = vadd.f32 %v1267, %v1304
      %v1321 = vadd.f32 %v1268, %v1305
      %v1322 = vadd.f32 %v1269, %v1306
      %s1323 = scalar_lea.vmem %s1, 20
      %v1324 = vld [vmem:[%s1323] sm:$0x1]
      %s1325 = scalar_lea.vmem [#allocation2], 192
      %v1326 = vld [vmem:[%s1325] sm:$0xff]
      %v1327 = vld [vmem:[%s1325 + $0x8] sm:$0xff]
      %v1328 = vld [vmem:[%s1325 + $0x18] sm:$0xff]
      %v1329 = vld [vmem:[%s1325 + $0x20] sm:$0xff]
      %v1330 = vld [vmem:[%s1325 + $0x30] sm:$0xff]
      %v1331 = vld [vmem:[%s1325 + $0x38] sm:$0xff]
      %v1332 = vld [vmem:[%s1325 + $0x48] sm:$0xff]
      %v1333 = vld [vmem:[%s1325 + $0x50] sm:$0xff]
      %v1334 = vld [vmem:[%s1325 + $0x90] sm:$0xff]
      %v1335 = vld [vmem:[%s1325 + $0x98] sm:$0xff]
      %v1336 = vld [vmem:[%s1325 + $0xa8] sm:$0xff]
      %v1337 = vld [vmem:[%s1325 + $0xb0] sm:$0xff]
      %v1338 = vld [vmem:[%s1325 + $0xc0] sm:$0xff]
      %v1339 = vld [vmem:[%s1325 + $0xc8] sm:$0xff]
      %v1340 = vld [vmem:[%s1325 + $0xd8] sm:$0xff]
      %v1341 = vld [vmem:[%s1325 + $0xe0] sm:$0xff]
      %v1342 = vlaneseq
      %v1343 = vshrl.u32 %v1342, 7
      %v1344 = vsub.s32 0, %v1343
      %v1345 = vrot.slane %v1324, %v1344
      %v1346 = vmul.f32 %v1326, %v1345
      %v1347 = vmul.f32 %v1327, %v1345
      %v1348 = vmul.f32 %v1328, %v1345
      %v1349 = vmul.f32 %v1329, %v1345
      %v1350 = vmul.f32 %v1330, %v1345
      %v1351 = vmul.f32 %v1331, %v1345
      %v1352 = vmul.f32 %v1332, %v1345
      %v1353 = vmul.f32 %v1333, %v1345
      %v1354 = vmul.f32 %v1334, %v1345
      %v1355 = vmul.f32 %v1335, %v1345
      %v1356 = vmul.f32 %v1336, %v1345
      %v1357 = vmul.f32 %v1337, %v1345
      %v1358 = vmul.f32 %v1338, %v1345
      %v1359 = vmul.f32 %v1339, %v1345
      %v1360 = vmul.f32 %v1340, %v1345
      %v1361 = vmul.f32 %v1341, %v1345
      %v1362 = vadd.f32 %v1307, %v1346
      %v1363 = vadd.f32 %v1308, %v1347
      %v1364 = vadd.f32 %v1309, %v1348
      %v1365 = vadd.f32 %v1310, %v1349
      %v1366 = vadd.f32 %v1311, %v1350
      %v1367 = vadd.f32 %v1312, %v1351
      %v1368 = vadd.f32 %v1313, %v1352
      %v1369 = vadd.f32 %v1314, %v1353
      %v1370 = vadd.f32 %v1315, %v1354
      %v1371 = vadd.f32 %v1316, %v1355
      %v1372 = vadd.f32 %v1317, %v1356
      %v1373 = vadd.f32 %v1318, %v1357
      %v1374 = vadd.f32 %v1319, %v1358
      %v1375 = vadd.f32 %v1320, %v1359
      %v1376 = vadd.f32 %v1321, %v1360
      %v1377 = vadd.f32 %v1322, %v1361
      %v1378 = vld [vmem:[%s1323 + $0x1] sm:$0x1]
      %v1379 = vld [vmem:[%s1325 + $0x1] sm:$0xff]
      %v1380 = vld [vmem:[%s1325 + $0x9] sm:$0xff]
      %v1381 = vld [vmem:[%s1325 + $0x19] sm:$0xff]
      %v1382 = vld [vmem:[%s1325 + $0x21] sm:$0xff]
      %v1383 = vld [vmem:[%s1325 + $0x31] sm:$0xff]
      %v1384 = vld [vmem:[%s1325 + $0x39] sm:$0xff]
      %v1385 = vld [vmem:[%s1325 + $0x49] sm:$0xff]
      %v1386 = vld [vmem:[%s1325 + $0x51] sm:$0xff]
      %v1387 = vld [vmem:[%s1325 + $0x91] sm:$0xff]
      %v1388 = vld [vmem:[%s1325 + $0x99] sm:$0xff]
      %v1389 = vld [vmem:[%s1325 + $0xa9] sm:$0xff]
      %v1390 = vld [vmem:[%s1325 + $0xb1] sm:$0xff]
      %v1391 = vld [vmem:[%s1325 + $0xc1] sm:$0xff]
      %v1392 = vld [vmem:[%s1325 + $0xc9] sm:$0xff]
      %v1393 = vld [vmem:[%s1325 + $0xd9] sm:$0xff]
      %v1394 = vld [vmem:[%s1325 + $0xe1] sm:$0xff]
      %v1395 = vlaneseq
      %v1396 = vshrl.u32 %v1395, 7
      %v1397 = vsub.s32 0, %v1396
      %v1398 = vrot.slane %v1378, %v1397
      %v1399 = vmul.f32 %v1379, %v1398
      %v1400 = vmul.f32 %v1380, %v1398
      %v1401 = vmul.f32 %v1381, %v1398
      %v1402 = vmul.f32 %v1382, %v1398
      %v1403 = vmul.f32 %v1383, %v1398
      %v1404 = vmul.f32 %v1384, %v1398
      %v1405 = vmul.f32 %v1385, %v1398
      %v1406 = vmul.f32 %v1386, %v1398
      %v1407 = vmul.f32 %v1387, %v1398
      %v1408 = vmul.f32 %v1388, %v1398
      %v1409 = vmul.f32 %v1389, %v1398
      %v1410 = vmul.f32 %v1390, %v1398
      %v1411 = vmul.f32 %v1391, %v1398
      %v1412 = vmul.f32 %v1392, %v1398
      %v1413 = vmul.f32 %v1393, %v1398
      %v1414 = vmul.f32 %v1394, %v1398
      %v1415 = vadd.f32 %v1362, %v1399
      %v1416 = vadd.f32 %v1363, %v1400
      %v1417 = vadd.f32 %v1364, %v1401
      %v1418 = vadd.f32 %v1365, %v1402
      %v1419 = vadd.f32 %v1366, %v1403
      %v1420 = vadd.f32 %v1367, %v1404
      %v1421 = vadd.f32 %v1368, %v1405
      %v1422 = vadd.f32 %v1369, %v1406
      %v1423 = vadd.f32 %v1370, %v1407
      %v1424 = vadd.f32 %v1371, %v1408
      %v1425 = vadd.f32 %v1372, %v1409
      %v1426 = vadd.f32 %v1373, %v1410
      %v1427 = vadd.f32 %v1374, %v1411
      %v1428 = vadd.f32 %v1375, %v1412
      %v1429 = vadd.f32 %v1376, %v1413
      %v1430 = vadd.f32 %v1377, %v1414
      %v1431 = vld [vmem:[%s1323 + $0x2] sm:$0x1]
      %v1432 = vld [vmem:[%s1325 + $0x2] sm:$0xff]
      %v1433 = vld [vmem:[%s1325 + $0xa] sm:$0xff]
      %v1434 = vld [vmem:[%s1325 + $0x1a] sm:$0xff]
      %v1435 = vld [vmem:[%s1325 + $0x22] sm:$0xff]
      %v1436 = vld [vmem:[%s1325 + $0x32] sm:$0xff]
      %v1437 = vld [vmem:[%s1325 + $0x3a] sm:$0xff]
      %v1438 = vld [vmem:[%s1325 + $0x4a] sm:$0xff]
      %v1439 = vld [vmem:[%s1325 + $0x52] sm:$0xff]
      %v1440 = vld [vmem:[%s1325 + $0x92] sm:$0xff]
      %v1441 = vld [vmem:[%s1325 + $0x9a] sm:$0xff]
      %v1442 = vld [vmem:[%s1325 + $0xaa] sm:$0xff]
      %v1443 = vld [vmem:[%s1325 + $0xb2] sm:$0xff]
      %v1444 = vld [vmem:[%s1325 + $0xc2] sm:$0xff]
      %v1445 = vld [vmem:[%s1325 + $0xca] sm:$0xff]
      %v1446 = vld [vmem:[%s1325 + $0xda] sm:$0xff]
      %v1447 = vld [vmem:[%s1325 + $0xe2] sm:$0xff]
      %v1448 = vlaneseq
      %v1449 = vshrl.u32 %v1448, 7
      %v1450 = vsub.s32 0, %v1449
      %v1451 = vrot.slane %v1431, %v1450
      %v1452 = vmul.f32 %v1432, %v1451
      %v1453 = vmul.f32 %v1433, %v1451
      %v1454 = vmul.f32 %v1434, %v1451
      %v1455 = vmul.f32 %v1435, %v1451
      %v1456 = vmul.f32 %v1436, %v1451
      %v1457 = vmul.f32 %v1437, %v1451
      %v1458 = vmul.f32 %v1438, %v1451
      %v1459 = vmul.f32 %v1439, %v1451
      %v1460 = vmul.f32 %v1440, %v1451
      %v1461 = vmul.f32 %v1441, %v1451
      %v1462 = vmul.f32 %v1442, %v1451
      %v1463 = vmul.f32 %v1443, %v1451
      %v1464 = vmul.f32 %v1444, %v1451
      %v1465 = vmul.f32 %v1445, %v1451
      %v1466 = vmul.f32 %v1446, %v1451
      %v1467 = vmul.f32 %v1447, %v1451
      %v1468 = vadd.f32 %v1415, %v1452
      %v1469 = vadd.f32 %v1416, %v1453
      %v1470 = vadd.f32 %v1417, %v1454
      %v1471 = vadd.f32 %v1418, %v1455
      %v1472 = vadd.f32 %v1419, %v1456
      %v1473 = vadd.f32 %v1420, %v1457
      %v1474 = vadd.f32 %v1421, %v1458
      %v1475 = vadd.f32 %v1422, %v1459
      %v1476 = vadd.f32 %v1423, %v1460
      %v1477 = vadd.f32 %v1424, %v1461
      %v1478 = vadd.f32 %v1425, %v1462
      %v1479 = vadd.f32 %v1426, %v1463
      %v1480 = vadd.f32 %v1427, %v1464
      %v1481 = vadd.f32 %v1428, %v1465
      %v1482 = vadd.f32 %v1429, %v1466
      %v1483 = vadd.f32 %v1430, %v1467
      %s1484 = scalar_lea.vmem %s1, 24
      %v1485 = vld [vmem:[%s1484] sm:$0x1]
      %s1486 = scalar_lea.vmem [#allocation2], 288
      %v1487 = vld [vmem:[%s1486] sm:$0xff]
      %v1488 = vld [vmem:[%s1486 + $0x8] sm:$0xff]
      %v1489 = vld [vmem:[%s1486 + $0x18] sm:$0xff]
      %v1490 = vld [vmem:[%s1486 + $0x20] sm:$0xff]
      %v1491 = vld [vmem:[%s1486 + $0x30] sm:$0xff]
      %v1492 = vld [vmem:[%s1486 + $0x38] sm:$0xff]
      %v1493 = vld [vmem:[%s1486 + $0x48] sm:$0xff]
      %v1494 = vld [vmem:[%s1486 + $0x50] sm:$0xff]
      %v1495 = vld [vmem:[%s1486 + $0x90] sm:$0xff]
      %v1496 = vld [vmem:[%s1486 + $0x98] sm:$0xff]
      %v1497 = vld [vmem:[%s1486 + $0xa8] sm:$0xff]
      %v1498 = vld [vmem:[%s1486 + $0xb0] sm:$0xff]
      %v1499 = vld [vmem:[%s1486 + $0xc0] sm:$0xff]
      %v1500 = vld [vmem:[%s1486 + $0xc8] sm:$0xff]
      %v1501 = vld [vmem:[%s1486 + $0xd8] sm:$0xff]
      %v1502 = vld [vmem:[%s1486 + $0xe0] sm:$0xff]
      %v1503 = vlaneseq
      %v1504 = vshrl.u32 %v1503, 7
      %v1505 = vsub.s32 0, %v1504
      %v1506 = vrot.slane %v1485, %v1505
      %v1507 = vmul.f32 %v1487, %v1506
      %v1508 = vmul.f32 %v1488, %v1506
      %v1509 = vmul.f32 %v1489, %v1506
      %v1510 = vmul.f32 %v1490, %v1506
      %v1511 = vmul.f32 %v1491, %v1506
      %v1512 = vmul.f32 %v1492, %v1506
      %v1513 = vmul.f32 %v1493, %v1506
      %v1514 = vmul.f32 %v1494, %v1506
      %v1515 = vmul.f32 %v1495, %v1506
      %v1516 = vmul.f32 %v1496, %v1506
      %v1517 = vmul.f32 %v1497, %v1506
      %v1518 = vmul.f32 %v1498, %v1506
      %v1519 = vmul.f32 %v1499, %v1506
      %v1520 = vmul.f32 %v1500, %v1506
      %v1521 = vmul.f32 %v1501, %v1506
      %v1522 = vmul.f32 %v1502, %v1506
      %v1523 = vadd.f32 %v1468, %v1507
      %v1524 = vadd.f32 %v1469, %v1508
      %v1525 = vadd.f32 %v1470, %v1509
      %v1526 = vadd.f32 %v1471, %v1510
      %v1527 = vadd.f32 %v1472, %v1511
      %v1528 = vadd.f32 %v1473, %v1512
      %v1529 = vadd.f32 %v1474, %v1513
      %v1530 = vadd.f32 %v1475, %v1514
      %v1531 = vadd.f32 %v1476, %v1515
      %v1532 = vadd.f32 %v1477, %v1516
      %v1533 = vadd.f32 %v1478, %v1517
      %v1534 = vadd.f32 %v1479, %v1518
      %v1535 = vadd.f32 %v1480, %v1519
      %v1536 = vadd.f32 %v1481, %v1520
      %v1537 = vadd.f32 %v1482, %v1521
      %v1538 = vadd.f32 %v1483, %v1522
      %v1539 = vld [vmem:[%s1484 + $0x1] sm:$0x1]
      %v1540 = vld [vmem:[%s1486 + $0x1] sm:$0xff]
      %v1541 = vld [vmem:[%s1486 + $0x9] sm:$0xff]
      %v1542 = vld [vmem:[%s1486 + $0x19] sm:$0xff]
      %v1543 = vld [vmem:[%s1486 + $0x21] sm:$0xff]
      %v1544 = vld [vmem:[%s1486 + $0x31] sm:$0xff]
      %v1545 = vld [vmem:[%s1486 + $0x39] sm:$0xff]
      %v1546 = vld [vmem:[%s1486 + $0x49] sm:$0xff]
      %v1547 = vld [vmem:[%s1486 + $0x51] sm:$0xff]
      %v1548 = vld [vmem:[%s1486 + $0x91] sm:$0xff]
      %v1549 = vld [vmem:[%s1486 + $0x99] sm:$0xff]
      %v1550 = vld [vmem:[%s1486 + $0xa9] sm:$0xff]
      %v1551 = vld [vmem:[%s1486 + $0xb1] sm:$0xff]
      %v1552 = vld [vmem:[%s1486 + $0xc1] sm:$0xff]
      %v1553 = vld [vmem:[%s1486 + $0xc9] sm:$0xff]
      %v1554 = vld [vmem:[%s1486 + $0xd9] sm:$0xff]
      %v1555 = vld [vmem:[%s1486 + $0xe1] sm:$0xff]
      %v1556 = vlaneseq
      %v1557 = vshrl.u32 %v1556, 7
      %v1558 = vsub.s32 0, %v1557
      %v1559 = vrot.slane %v1539, %v1558
      %v1560 = vmul.f32 %v1540, %v1559
      %v1561 = vmul.f32 %v1541, %v1559
      %v1562 = vmul.f32 %v1542, %v1559
      %v1563 = vmul.f32 %v1543, %v1559
      %v1564 = vmul.f32 %v1544, %v1559
      %v1565 = vmul.f32 %v1545, %v1559
      %v1566 = vmul.f32 %v1546, %v1559
      %v1567 = vmul.f32 %v1547, %v1559
      %v1568 = vmul.f32 %v1548, %v1559
      %v1569 = vmul.f32 %v1549, %v1559
      %v1570 = vmul.f32 %v1550, %v1559
      %v1571 = vmul.f32 %v1551, %v1559
      %v1572 = vmul.f32 %v1552, %v1559
      %v1573 = vmul.f32 %v1553, %v1559
      %v1574 = vmul.f32 %v1554, %v1559
      %v1575 = vmul.f32 %v1555, %v1559
      %v1576 = vadd.f32 %v1523, %v1560
      %v1577 = vadd.f32 %v1524, %v1561
      %v1578 = vadd.f32 %v1525, %v1562
      %v1579 = vadd.f32 %v1526, %v1563
      %v1580 = vadd.f32 %v1527, %v1564
      %v1581 = vadd.f32 %v1528, %v1565
      %v1582 = vadd.f32 %v1529, %v1566
      %v1583 = vadd.f32 %v1530, %v1567
      %v1584 = vadd.f32 %v1531, %v1568
      %v1585 = vadd.f32 %v1532, %v1569
      %v1586 = vadd.f32 %v1533, %v1570
      %v1587 = vadd.f32 %v1534, %v1571
      %v1588 = vadd.f32 %v1535, %v1572
      %v1589 = vadd.f32 %v1536, %v1573
      %v1590 = vadd.f32 %v1537, %v1574
      %v1591 = vadd.f32 %v1538, %v1575
      %v1592 = vld [vmem:[%s1484 + $0x2] sm:$0x1]
      %v1593 = vld [vmem:[%s1486 + $0x2] sm:$0xff]
      %v1594 = vld [vmem:[%s1486 + $0xa] sm:$0xff]
      %v1595 = vld [vmem:[%s1486 + $0x1a] sm:$0xff]
      %v1596 = vld [vmem:[%s1486 + $0x22] sm:$0xff]
      %v1597 = vld [vmem:[%s1486 + $0x32] sm:$0xff]
      %v1598 = vld [vmem:[%s1486 + $0x3a] sm:$0xff]
      %v1599 = vld [vmem:[%s1486 + $0x4a] sm:$0xff]
      %v1600 = vld [vmem:[%s1486 + $0x52] sm:$0xff]
      %v1601 = vld [vmem:[%s1486 + $0x92] sm:$0xff]
      %v1602 = vld [vmem:[%s1486 + $0x9a] sm:$0xff]
      %v1603 = vld [vmem:[%s1486 + $0xaa] sm:$0xff]
      %v1604 = vld [vmem:[%s1486 + $0xb2] sm:$0xff]
      %v1605 = vld [vmem:[%s1486 + $0xc2] sm:$0xff]
      %v1606 = vld [vmem:[%s1486 + $0xca] sm:$0xff]
      %v1607 = vld [vmem:[%s1486 + $0xda] sm:$0xff]
      %v1608 = vld [vmem:[%s1486 + $0xe2] sm:$0xff]
      %v1609 = vlaneseq
      %v1610 = vshrl.u32 %v1609, 7
      %v1611 = vsub.s32 0, %v1610
      %v1612 = vrot.slane %v1592, %v1611
      %v1613 = vmul.f32 %v1593, %v1612
      %v1614 = vmul.f32 %v1594, %v1612
      %v1615 = vmul.f32 %v1595, %v1612
      %v1616 = vmul.f32 %v1596, %v1612
      %v1617 = vmul.f32 %v1597, %v1612
      %v1618 = vmul.f32 %v1598, %v1612
      %v1619 = vmul.f32 %v1599, %v1612
      %v1620 = vmul.f32 %v1600, %v1612
      %v1621 = vmul.f32 %v1601, %v1612
      %v1622 = vmul.f32 %v1602, %v1612
      %v1623 = vmul.f32 %v1603, %v1612
      %v1624 = vmul.f32 %v1604, %v1612
      %v1625 = vmul.f32 %v1605, %v1612
      %v1626 = vmul.f32 %v1606, %v1612
      %v1627 = vmul.f32 %v1607, %v1612
      %v1628 = vmul.f32 %v1608, %v1612
      %v1629 = vadd.f32 %v1576, %v1613
      %v1630 = vadd.f32 %v1577, %v1614
      %v1631 = vadd.f32 %v1578, %v1615
      %v1632 = vadd.f32 %v1579, %v1616
      %v1633 = vadd.f32 %v1580, %v1617
      %v1634 = vadd.f32 %v1581, %v1618
      %v1635 = vadd.f32 %v1582, %v1619
      %v1636 = vadd.f32 %v1583, %v1620
      %v1637 = vadd.f32 %v1584, %v1621
      %v1638 = vadd.f32 %v1585, %v1622
      %v1639 = vadd.f32 %v1586, %v1623
      %v1640 = vadd.f32 %v1587, %v1624
      %v1641 = vadd.f32 %v1588, %v1625
      %v1642 = vadd.f32 %v1589, %v1626
      %v1643 = vadd.f32 %v1590, %v1627
      %v1644 = vadd.f32 %v1591, %v1628
      %s1645 = scalar_lea.vmem %s1, 28
      %v1646 = vld [vmem:[%s1645] sm:$0x1]
      %s1647 = scalar_lea.vmem [#allocation2], 312
      %v1648 = vld [vmem:[%s1647] sm:$0xff]
      %v1649 = vld [vmem:[%s1647 + $0x8] sm:$0xff]
      %v1650 = vld [vmem:[%s1647 + $0x18] sm:$0xff]
      %v1651 = vld [vmem:[%s1647 + $0x20] sm:$0xff]
      %v1652 = vld [vmem:[%s1647 + $0x30] sm:$0xff]
      %v1653 = vld [vmem:[%s1647 + $0x38] sm:$0xff]
      %v1654 = vld [vmem:[%s1647 + $0x48] sm:$0xff]
      %v1655 = vld [vmem:[%s1647 + $0x50] sm:$0xff]
      %v1656 = vld [vmem:[%s1647 + $0x90] sm:$0xff]
      %v1657 = vld [vmem:[%s1647 + $0x98] sm:$0xff]
      %v1658 = vld [vmem:[%s1647 + $0xa8] sm:$0xff]
      %v1659 = vld [vmem:[%s1647 + $0xb0] sm:$0xff]
      %v1660 = vld [vmem:[%s1647 + $0xc0] sm:$0xff]
      %v1661 = vld [vmem:[%s1647 + $0xc8] sm:$0xff]
      %v1662 = vld [vmem:[%s1647 + $0xd8] sm:$0xff]
      %v1663 = vld [vmem:[%s1647 + $0xe0] sm:$0xff]
      %v1664 = vlaneseq
      %v1665 = vshrl.u32 %v1664, 7
      %v1666 = vsub.s32 0, %v1665
      %v1667 = vrot.slane %v1646, %v1666
      %v1668 = vmul.f32 %v1648, %v1667
      %v1669 = vmul.f32 %v1649, %v1667
      %v1670 = vmul.f32 %v1650, %v1667
      %v1671 = vmul.f32 %v1651, %v1667
      %v1672 = vmul.f32 %v1652, %v1667
      %v1673 = vmul.f32 %v1653, %v1667
      %v1674 = vmul.f32 %v1654, %v1667
      %v1675 = vmul.f32 %v1655, %v1667
      %v1676 = vmul.f32 %v1656, %v1667
      %v1677 = vmul.f32 %v1657, %v1667
      %v1678 = vmul.f32 %v1658, %v1667
      %v1679 = vmul.f32 %v1659, %v1667
      %v1680 = vmul.f32 %v1660, %v1667
      %v1681 = vmul.f32 %v1661, %v1667
      %v1682 = vmul.f32 %v1662, %v1667
      %v1683 = vmul.f32 %v1663, %v1667
      %v1684 = vadd.f32 %v1629, %v1668
      %v1685 = vadd.f32 %v1630, %v1669
      %v1686 = vadd.f32 %v1631, %v1670
      %v1687 = vadd.f32 %v1632, %v1671
      %v1688 = vadd.f32 %v1633, %v1672
      %v1689 = vadd.f32 %v1634, %v1673
      %v1690 = vadd.f32 %v1635, %v1674
      %v1691 = vadd.f32 %v1636, %v1675
      %v1692 = vadd.f32 %v1637, %v1676
      %v1693 = vadd.f32 %v1638, %v1677
      %v1694 = vadd.f32 %v1639, %v1678
      %v1695 = vadd.f32 %v1640, %v1679
      %v1696 = vadd.f32 %v1641, %v1680
      %v1697 = vadd.f32 %v1642, %v1681
      %v1698 = vadd.f32 %v1643, %v1682
      %v1699 = vadd.f32 %v1644, %v1683
      %v1700 = vld [vmem:[%s1645 + $0x1] sm:$0x1]
      %v1701 = vld [vmem:[%s1647 + $0x1] sm:$0xff]
      %v1702 = vld [vmem:[%s1647 + $0x9] sm:$0xff]
      %v1703 = vld [vmem:[%s1647 + $0x19] sm:$0xff]
      %v1704 = vld [vmem:[%s1647 + $0x21] sm:$0xff]
      %v1705 = vld [vmem:[%s1647 + $0x31] sm:$0xff]
      %v1706 = vld [vmem:[%s1647 + $0x39] sm:$0xff]
      %v1707 = vld [vmem:[%s1647 + $0x49] sm:$0xff]
      %v1708 = vld [vmem:[%s1647 + $0x51] sm:$0xff]
      %v1709 = vld [vmem:[%s1647 + $0x91] sm:$0xff]
      %v1710 = vld [vmem:[%s1647 + $0x99] sm:$0xff]
      %v1711 = vld [vmem:[%s1647 + $0xa9] sm:$0xff]
      %v1712 = vld [vmem:[%s1647 + $0xb1] sm:$0xff]
      %v1713 = vld [vmem:[%s1647 + $0xc1] sm:$0xff]
      %v1714 = vld [vmem:[%s1647 + $0xc9] sm:$0xff]
      %v1715 = vld [vmem:[%s1647 + $0xd9] sm:$0xff]
      %v1716 = vld [vmem:[%s1647 + $0xe1] sm:$0xff]
      %v1717 = vlaneseq
      %v1718 = vshrl.u32 %v1717, 7
      %v1719 = vsub.s32 0, %v1718
      %v1720 = vrot.slane %v1700, %v1719
      %v1721 = vmul.f32 %v1701, %v1720
      %v1722 = vmul.f32 %v1702, %v1720
      %v1723 = vmul.f32 %v1703, %v1720
      %v1724 = vmul.f32 %v1704, %v1720
      %v1725 = vmul.f32 %v1705, %v1720
      %v1726 = vmul.f32 %v1706, %v1720
      %v1727 = vmul.f32 %v1707, %v1720
      %v1728 = vmul.f32 %v1708, %v1720
      %v1729 = vmul.f32 %v1709, %v1720
      %v1730 = vmul.f32 %v1710, %v1720
      %v1731 = vmul.f32 %v1711, %v1720
      %v1732 = vmul.f32 %v1712, %v1720
      %v1733 = vmul.f32 %v1713, %v1720
      %v1734 = vmul.f32 %v1714, %v1720
      %v1735 = vmul.f32 %v1715, %v1720
      %v1736 = vmul.f32 %v1716, %v1720
      %v1737 = vadd.f32 %v1684, %v1721
      %v1738 = vadd.f32 %v1685, %v1722
      %v1739 = vadd.f32 %v1686, %v1723
      %v1740 = vadd.f32 %v1687, %v1724
      %v1741 = vadd.f32 %v1688, %v1725
      %v1742 = vadd.f32 %v1689, %v1726
      %v1743 = vadd.f32 %v1690, %v1727
      %v1744 = vadd.f32 %v1691, %v1728
      %v1745 = vadd.f32 %v1692, %v1729
      %v1746 = vadd.f32 %v1693, %v1730
      %v1747 = vadd.f32 %v1694, %v1731
      %v1748 = vadd.f32 %v1695, %v1732
      %v1749 = vadd.f32 %v1696, %v1733
      %v1750 = vadd.f32 %v1697, %v1734
      %v1751 = vadd.f32 %v1698, %v1735
      %v1752 = vadd.f32 %v1699, %v1736
      %v1753 = vld [vmem:[%s1645 + $0x2] sm:$0x1]
      %v1754 = vld [vmem:[%s1647 + $0x2] sm:$0xff]
      %v1755 = vld [vmem:[%s1647 + $0xa] sm:$0xff]
      %v1756 = vld [vmem:[%s1647 + $0x1a] sm:$0xff]
      %v1757 = vld [vmem:[%s1647 + $0x22] sm:$0xff]
      %v1758 = vld [vmem:[%s1647 + $0x32] sm:$0xff]
      %v1759 = vld [vmem:[%s1647 + $0x3a] sm:$0xff]
      %v1760 = vld [vmem:[%s1647 + $0x4a] sm:$0xff]
      %v1761 = vld [vmem:[%s1647 + $0x52] sm:$0xff]
      %v1762 = vld [vmem:[%s1647 + $0x92] sm:$0xff]
      %v1763 = vld [vmem:[%s1647 + $0x9a] sm:$0xff]
      %v1764 = vld [vmem:[%s1647 + $0xaa] sm:$0xff]
      %v1765 = vld [vmem:[%s1647 + $0xb2] sm:$0xff]
      %v1766 = vld [vmem:[%s1647 + $0xc2] sm:$0xff]
      %v1767 = vld [vmem:[%s1647 + $0xca] sm:$0xff]
      %v1768 = vld [vmem:[%s1647 + $0xda] sm:$0xff]
      %v1769 = vld [vmem:[%s1647 + $0xe2] sm:$0xff]
      %v1770 = vlaneseq
      %v1771 = vshrl.u32 %v1770, 7
      %v1772 = vsub.s32 0, %v1771
      %v1773 = vrot.slane %v1753, %v1772
      %v1774 = vmul.f32 %v1754, %v1773
      %v1775 = vmul.f32 %v1755, %v1773
      %v1776 = vmul.f32 %v1756, %v1773
      %v1777 = vmul.f32 %v1757, %v1773
      %v1778 = vmul.f32 %v1758, %v1773
      %v1779 = vmul.f32 %v1759, %v1773
      %v1780 = vmul.f32 %v1760, %v1773
      %v1781 = vmul.f32 %v1761, %v1773
      %v1782 = vmul.f32 %v1762, %v1773
      %v1783 = vmul.f32 %v1763, %v1773
      %v1784 = vmul.f32 %v1764, %v1773
      %v1785 = vmul.f32 %v1765, %v1773
      %v1786 = vmul.f32 %v1766, %v1773
      %v1787 = vmul.f32 %v1767, %v1773
      %v1788 = vmul.f32 %v1768, %v1773
      %v1789 = vmul.f32 %v1769, %v1773
      %v1790 = vadd.f32 %v1737, %v1774
      %v1791 = vadd.f32 %v1738, %v1775
      %v1792 = vadd.f32 %v1739, %v1776
      %v1793 = vadd.f32 %v1740, %v1777
      %v1794 = vadd.f32 %v1741, %v1778
      %v1795 = vadd.f32 %v1742, %v1779
      %v1796 = vadd.f32 %v1743, %v1780
      %v1797 = vadd.f32 %v1744, %v1781
      %v1798 = vadd.f32 %v1745, %v1782
      %v1799 = vadd.f32 %v1746, %v1783
      %v1800 = vadd.f32 %v1747, %v1784
      %v1801 = vadd.f32 %v1748, %v1785
      %v1802 = vadd.f32 %v1749, %v1786
      %v1803 = vadd.f32 %v1750, %v1787
      %v1804 = vadd.f32 %v1751, %v1788
      %v1805 = vadd.f32 %v1752, %v1789
      %s1806 = scalar_lea.vmem %s1, 32
      %v1807 = vld [vmem:[%s1806] sm:$0x1]
      %s1808 = scalar_lea.vmem [#allocation2], 336
      %v1809 = vld [vmem:[%s1808] sm:$0xff]
      %v1810 = vld [vmem:[%s1808 + $0x8] sm:$0xff]
      %v1811 = vld [vmem:[%s1808 + $0x18] sm:$0xff]
      %v1812 = vld [vmem:[%s1808 + $0x20] sm:$0xff]
      %v1813 = vld [vmem:[%s1808 + $0x30] sm:$0xff]
      %v1814 = vld [vmem:[%s1808 + $0x38] sm:$0xff]
      %v1815 = vld [vmem:[%s1808 + $0x48] sm:$0xff]
      %v1816 = vld [vmem:[%s1808 + $0x50] sm:$0xff]
      %v1817 = vld [vmem:[%s1808 + $0x90] sm:$0xff]
      %v1818 = vld [vmem:[%s1808 + $0x98] sm:$0xff]
      %v1819 = vld [vmem:[%s1808 + $0xa8] sm:$0xff]
      %v1820 = vld [vmem:[%s1808 + $0xb0] sm:$0xff]
      %v1821 = vld [vmem:[%s1808 + $0xc0] sm:$0xff]
      %v1822 = vld [vmem:[%s1808 + $0xc8] sm:$0xff]
      %v1823 = vld [vmem:[%s1808 + $0xd8] sm:$0xff]
      %v1824 = vld [vmem:[%s1808 + $0xe0] sm:$0xff]
      %v1825 = vlaneseq
      %v1826 = vshrl.u32 %v1825, 7
      %v1827 = vsub.s32 0, %v1826
      %v1828 = vrot.slane %v1807, %v1827
      %v1829 = vmul.f32 %v1809, %v1828
      %v1830 = vmul.f32 %v1810, %v1828
      %v1831 = vmul.f32 %v1811, %v1828
      %v1832 = vmul.f32 %v1812, %v1828
      %v1833 = vmul.f32 %v1813, %v1828
      %v1834 = vmul.f32 %v1814, %v1828
      %v1835 = vmul.f32 %v1815, %v1828
      %v1836 = vmul.f32 %v1816, %v1828
      %v1837 = vmul.f32 %v1817, %v1828
      %v1838 = vmul.f32 %v1818, %v1828
      %v1839 = vmul.f32 %v1819, %v1828
      %v1840 = vmul.f32 %v1820, %v1828
      %v1841 = vmul.f32 %v1821, %v1828
      %v1842 = vmul.f32 %v1822, %v1828
      %v1843 = vmul.f32 %v1823, %v1828
      %v1844 = vmul.f32 %v1824, %v1828
      %v1845 = vadd.f32 %v1790, %v1829
      %v1846 = vadd.f32 %v1791, %v1830
      %v1847 = vadd.f32 %v1792, %v1831
      %v1848 = vadd.f32 %v1793, %v1832
      %v1849 = vadd.f32 %v1794, %v1833
      %v1850 = vadd.f32 %v1795, %v1834
      %v1851 = vadd.f32 %v1796, %v1835
      %v1852 = vadd.f32 %v1797, %v1836
      %v1853 = vadd.f32 %v1798, %v1837
      %v1854 = vadd.f32 %v1799, %v1838
      %v1855 = vadd.f32 %v1800, %v1839
      %v1856 = vadd.f32 %v1801, %v1840
      %v1857 = vadd.f32 %v1802, %v1841
      %v1858 = vadd.f32 %v1803, %v1842
      %v1859 = vadd.f32 %v1804, %v1843
      %v1860 = vadd.f32 %v1805, %v1844
      %v1861 = vld [vmem:[%s1806 + $0x1] sm:$0x1]
      %v1862 = vld [vmem:[%s1808 + $0x1] sm:$0xff]
      %v1863 = vld [vmem:[%s1808 + $0x9] sm:$0xff]
      %v1864 = vld [vmem:[%s1808 + $0x19] sm:$0xff]
      %v1865 = vld [vmem:[%s1808 + $0x21] sm:$0xff]
      %v1866 = vld [vmem:[%s1808 + $0x31] sm:$0xff]
      %v1867 = vld [vmem:[%s1808 + $0x39] sm:$0xff]
      %v1868 = vld [vmem:[%s1808 + $0x49] sm:$0xff]
      %v1869 = vld [vmem:[%s1808 + $0x51] sm:$0xff]
      %v1870 = vld [vmem:[%s1808 + $0x91] sm:$0xff]
      %v1871 = vld [vmem:[%s1808 + $0x99] sm:$0xff]
      %v1872 = vld [vmem:[%s1808 + $0xa9] sm:$0xff]
      %v1873 = vld [vmem:[%s1808 + $0xb1] sm:$0xff]
      %v1874 = vld [vmem:[%s1808 + $0xc1] sm:$0xff]
      %v1875 = vld [vmem:[%s1808 + $0xc9] sm:$0xff]
      %v1876 = vld [vmem:[%s1808 + $0xd9] sm:$0xff]
      %v1877 = vld [vmem:[%s1808 + $0xe1] sm:$0xff]
      %v1878 = vlaneseq
      %v1879 = vshrl.u32 %v1878, 7
      %v1880 = vsub.s32 0, %v1879
      %v1881 = vrot.slane %v1861, %v1880
      %v1882 = vmul.f32 %v1862, %v1881
      %v1883 = vmul.f32 %v1863, %v1881
      %v1884 = vmul.f32 %v1864, %v1881
      %v1885 = vmul.f32 %v1865, %v1881
      %v1886 = vmul.f32 %v1866, %v1881
      %v1887 = vmul.f32 %v1867, %v1881
      %v1888 = vmul.f32 %v1868, %v1881
      %v1889 = vmul.f32 %v1869, %v1881
      %v1890 = vmul.f32 %v1870, %v1881
      %v1891 = vmul.f32 %v1871, %v1881
      %v1892 = vmul.f32 %v1872, %v1881
      %v1893 = vmul.f32 %v1873, %v1881
      %v1894 = vmul.f32 %v1874, %v1881
      %v1895 = vmul.f32 %v1875, %v1881
      %v1896 = vmul.f32 %v1876, %v1881
      %v1897 = vmul.f32 %v1877, %v1881
      %v1898 = vadd.f32 %v1845, %v1882
      %v1899 = vadd.f32 %v1846, %v1883
      %v1900 = vadd.f32 %v1847, %v1884
      %v1901 = vadd.f32 %v1848, %v1885
      %v1902 = vadd.f32 %v1849, %v1886
      %v1903 = vadd.f32 %v1850, %v1887
      %v1904 = vadd.f32 %v1851, %v1888
      %v1905 = vadd.f32 %v1852, %v1889
      %v1906 = vadd.f32 %v1853, %v1890
      %v1907 = vadd.f32 %v1854, %v1891
      %v1908 = vadd.f32 %v1855, %v1892
      %v1909 = vadd.f32 %v1856, %v1893
      %v1910 = vadd.f32 %v1857, %v1894
      %v1911 = vadd.f32 %v1858, %v1895
      %v1912 = vadd.f32 %v1859, %v1896
      %v1913 = vadd.f32 %v1860, %v1897
      %v1914 = vld [vmem:[%s1806 + $0x2] sm:$0x1]
      %v1915 = vld [vmem:[%s1808 + $0x2] sm:$0xff]
      %v1916 = vld [vmem:[%s1808 + $0xa] sm:$0xff]
      %v1917 = vld [vmem:[%s1808 + $0x1a] sm:$0xff]
      %v1918 = vld [vmem:[%s1808 + $0x22] sm:$0xff]
      %v1919 = vld [vmem:[%s1808 + $0x32] sm:$0xff]
      %v1920 = vld [vmem:[%s1808 + $0x3a] sm:$0xff]
      %v1921 = vld [vmem:[%s1808 + $0x4a] sm:$0xff]
      %v1922 = vld [vmem:[%s1808 + $0x52] sm:$0xff]
      %v1923 = vld [vmem:[%s1808 + $0x92] sm:$0xff]
      %v1924 = vld [vmem:[%s1808 + $0x9a] sm:$0xff]
      %v1925 = vld [vmem:[%s1808 + $0xaa] sm:$0xff]
      %v1926 = vld [vmem:[%s1808 + $0xb2] sm:$0xff]
      %v1927 = vld [vmem:[%s1808 + $0xc2] sm:$0xff]
      %v1928 = vld [vmem:[%s1808 + $0xca] sm:$0xff]
      %v1929 = vld [vmem:[%s1808 + $0xda] sm:$0xff]
      %v1930 = vld [vmem:[%s1808 + $0xe2] sm:$0xff]
      %v1931 = vlaneseq
      %v1932 = vshrl.u32 %v1931, 7
      %v1933 = vsub.s32 0, %v1932
      %v1934 = vrot.slane %v1914, %v1933
      %v1935 = vmul.f32 %v1915, %v1934
      %v1936 = vmul.f32 %v1916, %v1934
      %v1937 = vmul.f32 %v1917, %v1934
      %v1938 = vmul.f32 %v1918, %v1934
      %v1939 = vmul.f32 %v1919, %v1934
      %v1940 = vmul.f32 %v1920, %v1934
      %v1941 = vmul.f32 %v1921, %v1934
      %v1942 = vmul.f32 %v1922, %v1934
      %v1943 = vmul.f32 %v1923, %v1934
      %v1944 = vmul.f32 %v1924, %v1934
      %v1945 = vmul.f32 %v1925, %v1934
      %v1946 = vmul.f32 %v1926, %v1934
      %v1947 = vmul.f32 %v1927, %v1934
      %v1948 = vmul.f32 %v1928, %v1934
      %v1949 = vmul.f32 %v1929, %v1934
      %v1950 = vmul.f32 %v1930, %v1934
      %v1951 = vadd.f32 %v1898, %v1935
      %v1952 = vadd.f32 %v1899, %v1936
      %v1953 = vadd.f32 %v1900, %v1937
      %v1954 = vadd.f32 %v1901, %v1938
      %v1955 = vadd.f32 %v1902, %v1939
      %v1956 = vadd.f32 %v1903, %v1940
      %v1957 = vadd.f32 %v1904, %v1941
      %v1958 = vadd.f32 %v1905, %v1942
      %v1959 = vadd.f32 %v1906, %v1943
      %v1960 = vadd.f32 %v1907, %v1944
      %v1961 = vadd.f32 %v1908, %v1945
      %v1962 = vadd.f32 %v1909, %v1946
      %v1963 = vadd.f32 %v1910, %v1947
      %v1964 = vadd.f32 %v1911, %v1948
      %v1965 = vadd.f32 %v1912, %v1949
      %v1966 = vadd.f32 %v1913, %v1950
      %v1967 = vadd.f32 %v488, %v1951
      %v1968 = vadd.f32 %v489, %v1952
      %v1969 = vadd.f32 %v490, %v1953
      %v1970 = vadd.f32 %v491, %v1954
      %v1971 = vadd.f32 %v492, %v1955
      %v1972 = vadd.f32 %v493, %v1956
      %v1973 = vadd.f32 %v494, %v1957
      %v1974 = vadd.f32 %v495, %v1958
      %v1975 = vadd.f32 %v496, %v1959
      %v1976 = vadd.f32 %v497, %v1960
      %v1977 = vadd.f32 %v498, %v1961
      %v1978 = vadd.f32 %v499, %v1962
      %v1979 = vadd.f32 %v500, %v1963
      %v1980 = vadd.f32 %v501, %v1964
      %v1981 = vadd.f32 %v502, %v1965
      %v1982 = vadd.f32 %v503, %v1966
      %v1983 = vld [vmem:[%s2] sm:$0x1]
      %v1985 = vlaneseq
      %v1986 = vshrl.u32 %v1985, 7
      %v1987 = vsub.s32 0, %v1986
      %v1988 = vrot.slane %v1983, %v1987
      %v1990 = vadd.f32 %v1967, %v1988
      %v1991 = vadd.f32 %v1968, %v1988
      %v1992 = vadd.f32 %v1969, %v1988
      %v1993 = vadd.f32 %v1970, %v1988
      %v1994 = vadd.f32 %v1971, %v1988
      %v1995 = vadd.f32 %v1972, %v1988
      %v1996 = vadd.f32 %v1973, %v1988
      %v1997 = vadd.f32 %v1974, %v1988
      %v1998 = vadd.f32 %v1975, %v1988
      %v1999 = vadd.f32 %v1976, %v1988
      %v2000 = vadd.f32 %v1977, %v1988
      %v2001 = vadd.f32 %v1978, %v1988
      %v2002 = vadd.f32 %v1979, %v1988
      %v2003 = vadd.f32 %v1980, %v1988
      %v2004 = vadd.f32 %v1981, %v1988
      %v2005 = vadd.f32 %v1982, %v1988
      %v2006 = vsel %vm414, %v1990, 0.0
      %2007 = vadd.xlane.f32.xlu0 %v2006
      %v2008 = vpop.xlane.xlu0 %2007
      %v2009 = vsel %vm414, %v1991, 0.0
      %2010 = vadd.xlane.f32.xlu0 %v2009
      %v2011 = vpop.xlane.xlu0 %2010
      %v2012 = vsel %vm414, %v1992, 0.0
      %2013 = vadd.xlane.f32.xlu0 %v2012
      %v2014 = vpop.xlane.xlu0 %2013
      %v2015 = vsel %vm414, %v1993, 0.0
      %2016 = vadd.xlane.f32.xlu0 %v2015
      %v2017 = vpop.xlane.xlu0 %2016
      %v2018 = vsel %vm414, %v1994, 0.0
      %2019 = vadd.xlane.f32.xlu0 %v2018
      %v2020 = vpop.xlane.xlu0 %2019
      %v2021 = vsel %vm414, %v1995, 0.0
      %2022 = vadd.xlane.f32.xlu0 %v2021
      %v2023 = vpop.xlane.xlu0 %2022
      %v2024 = vsel %vm414, %v1996, 0.0
      %2025 = vadd.xlane.f32.xlu0 %v2024
      %v2026 = vpop.xlane.xlu0 %2025
      %v2027 = vsel %vm414, %v1997, 0.0
      %2028 = vadd.xlane.f32.xlu0 %v2027
      %v2029 = vpop.xlane.xlu0 %2028
      %v2030 = vsel %vm414, %v1998, 0.0
      %2031 = vadd.xlane.f32.xlu0 %v2030
      %v2032 = vpop.xlane.xlu0 %2031
      %v2033 = vsel %vm414, %v1999, 0.0
      %2034 = vadd.xlane.f32.xlu0 %v2033
      %v2035 = vpop.xlane.xlu0 %2034
      %v2036 = vsel %vm414, %v2000, 0.0
      %2037 = vadd.xlane.f32.xlu0 %v2036
      %v2038 = vpop.xlane.xlu0 %2037
      %v2039 = vsel %vm414, %v2001, 0.0
      %2040 = vadd.xlane.f32.xlu0 %v2039
      %v2041 = vpop.xlane.xlu0 %2040
      %v2042 = vsel %vm414, %v2002, 0.0
      %2043 = vadd.xlane.f32.xlu0 %v2042
      %v2044 = vpop.xlane.xlu0 %2043
      %v2045 = vsel %vm414, %v2003, 0.0
      %2046 = vadd.xlane.f32.xlu0 %v2045
      %v2047 = vpop.xlane.xlu0 %2046
      %v2048 = vsel %vm414, %v2004, 0.0
      %2049 = vadd.xlane.f32.xlu0 %v2048
      %v2050 = vpop.xlane.xlu0 %2049
      %v2051 = vsel %vm414, %v2005, 0.0
      %2052 = vadd.xlane.f32.xlu0 %v2051
      %v2053 = vpop.xlane.xlu0 %2052
      %v2054 = vrcp.pop 32.0
      %v2055 = vmul.f32 %v2008, %v2054
      %v2056 = vmul.f32 %v2011, %v2054
      %v2057 = vmul.f32 %v2014, %v2054
      %v2058 = vmul.f32 %v2017, %v2054
      %v2059 = vmul.f32 %v2020, %v2054
      %v2060 = vmul.f32 %v2023, %v2054
      %v2061 = vmul.f32 %v2026, %v2054
      %v2062 = vmul.f32 %v2029, %v2054
      %v2063 = vmul.f32 %v2032, %v2054
      %v2064 = vmul.f32 %v2035, %v2054
      %v2065 = vmul.f32 %v2038, %v2054
      %v2066 = vmul.f32 %v2041, %v2054
      %v2067 = vmul.f32 %v2044, %v2054
      %v2068 = vmul.f32 %v2047, %v2054
      %v2069 = vmul.f32 %v2050, %v2054
      %v2070 = vmul.f32 %v2053, %v2054
      %v2071 = vsub.f32 %v1990, %v2055
      %v2072 = vsub.f32 %v1991, %v2056
      %v2073 = vsub.f32 %v1992, %v2057
      %v2074 = vsub.f32 %v1993, %v2058
      %v2075 = vsub.f32 %v1994, %v2059
      %v2076 = vsub.f32 %v1995, %v2060
      %v2077 = vsub.f32 %v1996, %v2061
      %v2078 = vsub.f32 %v1997, %v2062
      %v2079 = vsub.f32 %v1998, %v2063
      %v2080 = vsub.f32 %v1999, %v2064
      %v2081 = vsub.f32 %v2000, %v2065
      %v2082 = vsub.f32 %v2001, %v2066
      %v2083 = vsub.f32 %v2002, %v2067
      %v2084 = vsub.f32 %v2003, %v2068
      %v2085 = vsub.f32 %v2004, %v2069
      %v2086 = vsub.f32 %v2005, %v2070
      %v2087 = vmul.f32 %v2071, %v2071
      %v2088 = vmul.f32 %v2072, %v2072
      %v2089 = vmul.f32 %v2073, %v2073
      %v2090 = vmul.f32 %v2074, %v2074
      %v2091 = vmul.f32 %v2075, %v2075
      %v2092 = vmul.f32 %v2076, %v2076
      %v2093 = vmul.f32 %v2077, %v2077
      %v2094 = vmul.f32 %v2078, %v2078
      %v2095 = vmul.f32 %v2079, %v2079
      %v2096 = vmul.f32 %v2080, %v2080
      %v2097 = vmul.f32 %v2081, %v2081
      %v2098 = vmul.f32 %v2082, %v2082
      %v2099 = vmul.f32 %v2083, %v2083
      %v2100 = vmul.f32 %v2084, %v2084
      %v2101 = vmul.f32 %v2085, %v2085
      %v2102 = vmul.f32 %v2086, %v2086
      %v2103 = vsel %vm414, %v2087, 0.0
      %2104 = vadd.xlane.f32.xlu0 %v2103
      %v2105 = vpop.xlane.xlu0 %2104
      %v2106 = vsel %vm414, %v2088, 0.0
      %2107 = vadd.xlane.f32.xlu0 %v2106
      %v2108 = vpop.xlane.xlu0 %2107
      %v2109 = vsel %vm414, %v2089, 0.0
      %2110 = vadd.xlane.f32.xlu0 %v2109
      %v2111 = vpop.xlane.xlu0 %2110
      %v2112 = vsel %vm414, %v2090, 0.0
      %2113 = vadd.xlane.f32.xlu0 %v2112
      %v2114 = vpop.xlane.xlu0 %2113
      %v2115 = vsel %vm414, %v2091, 0.0
      %2116 = vadd.xlane.f32.xlu0 %v2115
      %v2117 = vpop.xlane.xlu0 %2116
      %v2118 = vsel %vm414, %v2092, 0.0
      %2119 = vadd.xlane.f32.xlu0 %v2118
      %v2120 = vpop.xlane.xlu0 %2119
      %v2121 = vsel %vm414, %v2093, 0.0
      %2122 = vadd.xlane.f32.xlu0 %v2121
      %v2123 = vpop.xlane.xlu0 %2122
      %v2124 = vsel %vm414, %v2094, 0.0
      %2125 = vadd.xlane.f32.xlu0 %v2124
      %v2126 = vpop.xlane.xlu0 %2125
      %v2127 = vsel %vm414, %v2095, 0.0
      %2128 = vadd.xlane.f32.xlu0 %v2127
      %v2129 = vpop.xlane.xlu0 %2128
      %v2130 = vsel %vm414, %v2096, 0.0
      %2131 = vadd.xlane.f32.xlu0 %v2130
      %v2132 = vpop.xlane.xlu0 %2131
      %v2133 = vsel %vm414, %v2097, 0.0
      %2134 = vadd.xlane.f32.xlu0 %v2133
      %v2135 = vpop.xlane.xlu0 %2134
      %v2136 = vsel %vm414, %v2098, 0.0
      %2137 = vadd.xlane.f32.xlu0 %v2136
      %v2138 = vpop.xlane.xlu0 %2137
      %v2139 = vsel %vm414, %v2099, 0.0
      %2140 = vadd.xlane.f32.xlu0 %v2139
      %v2141 = vpop.xlane.xlu0 %2140
      %v2142 = vsel %vm414, %v2100, 0.0
      %2143 = vadd.xlane.f32.xlu0 %v2142
      %v2144 = vpop.xlane.xlu0 %2143
      %v2145 = vsel %vm414, %v2101, 0.0
      %2146 = vadd.xlane.f32.xlu0 %v2145
      %v2147 = vpop.xlane.xlu0 %2146
      %v2148 = vsel %vm414, %v2102, 0.0
      %2149 = vadd.xlane.f32.xlu0 %v2148
      %v2150 = vpop.xlane.xlu0 %2149
      %v2151 = vmul.f32 %v2105, %v2054
      %v2152 = vmul.f32 %v2108, %v2054
      %v2153 = vmul.f32 %v2111, %v2054
      %v2154 = vmul.f32 %v2114, %v2054
      %v2155 = vmul.f32 %v2117, %v2054
      %v2156 = vmul.f32 %v2120, %v2054
      %v2157 = vmul.f32 %v2123, %v2054
      %v2158 = vmul.f32 %v2126, %v2054
      %v2159 = vmul.f32 %v2129, %v2054
      %v2160 = vmul.f32 %v2132, %v2054
      %v2161 = vmul.f32 %v2135, %v2054
      %v2162 = vmul.f32 %v2138, %v2054
      %v2163 = vmul.f32 %v2141, %v2054
      %v2164 = vmul.f32 %v2144, %v2054
      %v2165 = vmul.f32 %v2147, %v2054
      %v2166 = vmul.f32 %v2150, %v2054
      %v2167 = vadd.f32 %v2151, 1e-05
      %v2168 = vadd.f32 %v2152, 1e-05
      %v2169 = vadd.f32 %v2153, 1e-05
      %v2170 = vadd.f32 %v2154, 1e-05
      %v2171 = vadd.f32 %v2155, 1e-05
      %v2172 = vadd.f32 %v2156, 1e-05
      %v2173 = vadd.f32 %v2157, 1e-05
      %v2174 = vadd.f32 %v2158, 1e-05
      %v2175 = vadd.f32 %v2159, 1e-05
      %v2176 = vadd.f32 %v2160, 1e-05
      %v2177 = vadd.f32 %v2161, 1e-05
      %v2178 = vadd.f32 %v2162, 1e-05
      %v2179 = vadd.f32 %v2163, 1e-05
      %v2180 = vadd.f32 %v2164, 1e-05
      %v2181 = vadd.f32 %v2165, 1e-05
      %v2182 = vadd.f32 %v2166, 1e-05
      %v2183 = vrsqrt.pop %v2167
      %v2184 = vrsqrt.pop %v2168
      %v2185 = vrsqrt.pop %v2169
      %v2186 = vrsqrt.pop %v2170
      %v2187 = vrsqrt.pop %v2171
      %v2188 = vrsqrt.pop %v2172
      %v2189 = vrsqrt.pop %v2173
      %v2190 = vrsqrt.pop %v2174
      %v2191 = vrsqrt.pop %v2175
      %v2192 = vrsqrt.pop %v2176
      %v2193 = vrsqrt.pop %v2177
      %v2194 = vrsqrt.pop %v2178
      %v2195 = vrsqrt.pop %v2179
      %v2196 = vrsqrt.pop %v2180
      %v2197 = vrsqrt.pop %v2181
      %v2198 = vrsqrt.pop %v2182
      %v2199 = vmul.f32 %v2071, %v2183
      %v2200 = vmul.f32 %v2072, %v2184
      %v2201 = vmul.f32 %v2073, %v2185
      %v2202 = vmul.f32 %v2074, %v2186
      %v2203 = vmul.f32 %v2075, %v2187
      %v2204 = vmul.f32 %v2076, %v2188
      %v2205 = vmul.f32 %v2077, %v2189
      %v2206 = vmul.f32 %v2078, %v2190
      %v2207 = vmul.f32 %v2079, %v2191
      %v2208 = vmul.f32 %v2080, %v2192
      %v2209 = vmul.f32 %v2081, %v2193
      %v2210 = vmul.f32 %v2082, %v2194
      %v2211 = vmul.f32 %v2083, %v2195
      %v2212 = vmul.f32 %v2084, %v2196
      %v2213 = vmul.f32 %v2085, %v2197
      %v2214 = vmul.f32 %v2086, %v2198
      %v2215 = vld [vmem:[%s3] sm:$0x1]
      %v2217 = vlaneseq
      %v2218 = vshrl.u32 %v2217, 7
      %v2219 = vsub.s32 0, %v2218
      %v2220 = vrot.slane %v2215, %v2219
      %v2222 = vmul.f32 %v2199, %v2220
      %v2223 = vmul.f32 %v2200, %v2220
      %v2224 = vmul.f32 %v2201, %v2220
      %v2225 = vmul.f32 %v2202, %v2220
      %v2226 = vmul.f32 %v2203, %v2220
      %v2227 = vmul.f32 %v2204, %v2220
      %v2228 = vmul.f32 %v2205, %v2220
      %v2229 = vmul.f32 %v2206, %v2220
      %v2230 = vmul.f32 %v2207, %v2220
      %v2231 = vmul.f32 %v2208, %v2220
      %v2232 = vmul.f32 %v2209, %v2220
      %v2233 = vmul.f32 %v2210, %v2220
      %v2234 = vmul.f32 %v2211, %v2220
      %v2235 = vmul.f32 %v2212, %v2220
      %v2236 = vmul.f32 %v2213, %v2220
      %v2237 = vmul.f32 %v2214, %v2220
      %v2238 = vld [vmem:[%s4] sm:$0x1]
      %v2240 = vlaneseq
      %v2241 = vshrl.u32 %v2240, 7
      %v2242 = vsub.s32 0, %v2241
      %v2243 = vrot.slane %v2238, %v2242
      %v2245 = vadd.f32 %v2222, %v2243
      %v2246 = vadd.f32 %v2223, %v2243
      %v2247 = vadd.f32 %v2224, %v2243
      %v2248 = vadd.f32 %v2225, %v2243
      %v2249 = vadd.f32 %v2226, %v2243
      %v2250 = vadd.f32 %v2227, %v2243
      %v2251 = vadd.f32 %v2228, %v2243
      %v2252 = vadd.f32 %v2229, %v2243
      %v2253 = vadd.f32 %v2230, %v2243
      %v2254 = vadd.f32 %v2231, %v2243
      %v2255 = vadd.f32 %v2232, %v2243
      %v2256 = vadd.f32 %v2233, %v2243
      %v2257 = vadd.f32 %v2234, %v2243
      %v2258 = vadd.f32 %v2235, %v2243
      %v2259 = vadd.f32 %v2236, %v2243
      %v2260 = vadd.f32 %v2237, %v2243
      %v2261 = vld [vmem:[%s5] sm:$0xff]
      %v2262 = vld [vmem:[%s5 + $0x8] sm:$0xff]
      %v2263 = vld [vmem:[%s5 + $0x10] sm:$0xff]
      %v2264 = vld [vmem:[%s5 + $0x18] sm:$0xff]
      %v2265 = vld [vmem:[%s6] sm:$0x1]
      %v2267 = vlaneseq
      %v2268 = vshrl.u32 %v2267, 7
      %v2269 = vsub.s32 0, %v2268
      %v2270 = vrot.slane %v2265, %v2269
      %v2273 = vsel %vm414, %v2245, 0
      %v2276 = vsel %vm414, %v2246, 0
      %v2279 = vsel %vm414, %v2247, 0
      %v2282 = vsel %vm414, %v2248, 0
      %v2285 = vsel %vm414, %v2249, 0
      %v2288 = vsel %vm414, %v2250, 0
      %v2291 = vsel %vm414, %v2251, 0
      %v2294 = vsel %vm414, %v2252, 0
      %v2297 = vsel %vm414, %v2253, 0
      %v2300 = vsel %vm414, %v2254, 0
      %v2303 = vsel %vm414, %v2255, 0
      %v2306 = vsel %vm414, %v2256, 0
      %v2309 = vsel %vm414, %v2257, 0
      %v2312 = vsel %vm414, %v2258, 0
      %v2315 = vsel %vm414, %v2259, 0
      %v2318 = vsel %vm414, %v2260, 0
      %2320 = vmatprep.subr.mxu0 0.0
      %2321 = vmatpush1.msra.mxu0 %v2261
      %2322 = vmatprep.subr.mxu0 0.0
      %2323 = vmatpush1.msra.mxu0 %v2262
      %2324 = vmatprep.subr.mxu0 0.0
      %2325 = vmatpush1.msra.mxu0 %v2263
      %2326 = vmatprep.subr.mxu0 0.0
      %2327 = vmatpush1.msra.mxu0 %v2264
      %2328 = vmatprep.subr.mxu0 0.0
      %2329 = vmatpush1.msra.mxu0 0.0
      %2330 = vmatprep.subr.mxu0 0.0
      %2331 = vmatpush1.msra.mxu0 0.0
      %2332 = vmatprep.subr.mxu0 0.0
      %2333 = vmatpush1.msra.mxu0 0.0
      %2334 = vmatprep.subr.mxu0 0.0
      %2335 = vmatpush1.msra.mxu0 0.0
      %2336 = vmatprep.subr.mxu0 0.0
      %2337 = vmatpush1.msra.mxu0 0.0
      %2338 = vmatprep.subr.mxu0 0.0
      %2339 = vmatpush1.msra.mxu0 0.0
      %2340 = vmatprep.subr.mxu0 0.0
      %2341 = vmatpush1.msra.mxu0 0.0
      %2342 = vmatprep.subr.mxu0 0.0
      %2343 = vmatpush1.msra.mxu0 0.0
      %2344 = vmatprep.subr.mxu0 0.0
      %2345 = vmatpush1.msra.mxu0 0.0
      %2346 = vmatprep.subr.mxu0 0.0
      %2347 = vmatpush1.msra.mxu0 0.0
      %2348 = vmatprep.subr.mxu0 0.0
      %2349 = vmatpush1.msra.mxu0 0.0
      %2350 = vmatprep.subr.mxu0 0.0
      %2351 = vmatpush1.msra.mxu0 0.0
      %2352 = vmatprep.subr.mxu0 0.0
      %2353 = vmatpush1.msra.mxu0 0.0
      %2354 = vmatprep.subr.mxu0 0.0
      %2355 = vmatpush1.msra.mxu0 0.0
      %2356 = vmatprep.subr.mxu0 0.0
      %2357 = vmatpush1.msra.mxu0 0.0
      %2358 = vmatprep.subr.mxu0 0.0
      %2359 = vmatpush1.msra.mxu0 0.0
      %2360 = vmatprep.subr.mxu0 0.0
      %2361 = vmatpush1.msra.mxu0 0.0
      %2362 = vmatprep.subr.mxu0 0.0
      %2363 = vmatpush1.msra.mxu0 0.0
      %2364 = vmatprep.subr.mxu0 0.0
      %2365 = vmatpush1.msra.mxu0 0.0
      %2366 = vmatprep.subr.mxu0 0.0
      %2367 = vmatpush1.msra.mxu0 0.0
      %2368 = vmatprep.subr.mxu0 0.0
      %2369 = vmatpush1.msra.mxu0 0.0
      %2370 = vmatprep.subr.mxu0 0.0
      %2371 = vmatpush1.msra.mxu0 0.0
      %2372 = vmatprep.subr.mxu0 0.0
      %2373 = vmatpush1.msra.mxu0 0.0
      %2374 = vmatprep.subr.mxu0 0.0
      %2375 = vmatpush1.msra.mxu0 0.0
      %2376 = vmatprep.subr.mxu0 0.0
      %2377 = vmatpush1.msra.mxu0 0.0
      %2378 = vmatprep.subr.mxu0 0.0
      %2379 = vmatpush1.msra.mxu0 0.0
      %2380 = vmatprep.subr.mxu0 0.0
      %2381 = vmatpush1.msra.mxu0 0.0
      %2382 = vmatprep.subr.mxu0 0.0
      %2383 = vmatpush1.msra.mxu0 0.0
      %2384 = vmatprep.mubr.f32.mxu0 0.0
      %2385 = vmatmul.mubr.f32.gmra.mrb[0].mxu0 %v2273
      %v2386 = vpop.f32.mrb[0].mxu0
      %v2387 = vadd.f32 %v2270, %v2386
      %v2388 = vpop.f32.mrb[0].mxu0
      %2389 = vmatprep.mubr.f32.mxu0 0.0
      %2390 = vmatmul.mubr.f32.gmra.mrb[0].mxu0 %v2276
      %v2391 = vpop.f32.mrb[0].mxu0
      %v2392 = vadd.f32 %v2270, %v2391
      %v2393 = vpop.f32.mrb[0].mxu0
      %2394 = vmatprep.mubr.f32.mxu0 0.0
      %2395 = vmatmul.mubr.f32.gmra.mrb[0].mxu0 %v2279
      %v2396 = vpop.f32.mrb[0].mxu0
      %v2397 = vadd.f32 %v2270, %v2396
      %v2398 = vpop.f32.mrb[0].mxu0
      %2399 = vmatprep.mubr.f32.mxu0 0.0
      %2400 = vmatmul.mubr.f32.gmra.mrb[0].mxu0 %v2282
      %v2401 = vpop.f32.mrb[0].mxu0
      %v2402 = vadd.f32 %v2270, %v2401
      %v2403 = vpop.f32.mrb[0].mxu0
      %2404 = vmatprep.mubr.f32.mxu0 0.0
      %2405 = vmatmul.mubr.f32.gmra.mrb[0].mxu0 %v2285
      %v2406 = vpop.f32.mrb[0].mxu0
      %v2407 = vadd.f32 %v2270, %v2406
      %v2408 = vpop.f32.mrb[0].mxu0
      %2409 = vmatprep.mubr.f32.mxu0 0.0
      %2410 = vmatmul.mubr.f32.gmra.mrb[0].mxu0 %v2288
      %v2411 = vpop.f32.mrb[0].mxu0
      %v2412 = vadd.f32 %v2270, %v2411
      %v2413 = vpop.f32.mrb[0].mxu0
      %2414 = vmatprep.mubr.f32.mxu0 0.0
      %2415 = vmatmul.mubr.f32.gmra.mrb[0].mxu0 %v2291
      %v2416 = vpop.f32.mrb[0].mxu0
      %v2417 = vadd.f32 %v2270, %v2416
      %v2418 = vpop.f32.mrb[0].mxu0
      %2419 = vmatprep.mubr.f32.mxu0 0.0
      %2420 = vmatmul.mubr.f32.gmra.mrb[0].mxu0 %v2294
      %v2421 = vpop.f32.mrb[0].mxu0
      %v2422 = vadd.f32 %v2270, %v2421
      %v2423 = vpop.f32.mrb[0].mxu0
      %2424 = vmatprep.mubr.f32.mxu0 0.0
      %2425 = vmatmul.mubr.f32.gmra.mrb[0].mxu0 %v2297
      %v2426 = vpop.f32.mrb[0].mxu0
      %v2427 = vadd.f32 %v2270, %v2426
      %v2428 = vpop.f32.mrb[0].mxu0
      %2429 = vmatprep.mubr.f32.mxu0 0.0
      %2430 = vmatmul.mubr.f32.gmra.mrb[0].mxu0 %v2300
      %v2431 = vpop.f32.mrb[0].mxu0
      %v2432 = vadd.f32 %v2270, %v2431
      %v2433 = vpop.f32.mrb[0].mxu0
      %2434 = vmatprep.mubr.f32.mxu0 0.0
      %2435 = vmatmul.mubr.f32.gmra.mrb[0].mxu0 %v2303
      %v2436 = vpop.f32.mrb[0].mxu0
      %v2437 = vadd.f32 %v2270, %v2436
      %v2438 = vpop.f32.mrb[0].mxu0
      %2439 = vmatprep.mubr.f32.mxu0 0.0
      %2440 = vmatmul.mubr.f32.gmra.mrb[0].mxu0 %v2306
      %v2441 = vpop.f32.mrb[0].mxu0
      %v2442 = vadd.f32 %v2270, %v2441
      %v2443 = vpop.f32.mrb[0].mxu0
      %2444 = vmatprep.mubr.f32.mxu0 0.0
      %2445 = vmatmul.mubr.f32.gmra.mrb[0].mxu0 %v2309
      %v2446 = vpop.f32.mrb[0].mxu0
      %v2447 = vadd.f32 %v2270, %v2446
      %v2448 = vpop.f32.mrb[0].mxu0
      %2449 = vmatprep.mubr.f32.mxu0 0.0
      %2450 = vmatmul.mubr.f32.gmra.mrb[0].mxu0 %v2312
      %v2451 = vpop.f32.mrb[0].mxu0
      %v2452 = vadd.f32 %v2270, %v2451
      %v2453 = vpop.f32.mrb[0].mxu0
      %2454 = vmatprep.mubr.f32.mxu0 0.0
      %2455 = vmatmul.mubr.f32.gmra.mrb[0].mxu0 %v2315
      %v2456 = vpop.f32.mrb[0].mxu0
      %v2457 = vadd.f32 %v2270, %v2456
      %v2458 = vpop.f32.mrb[0].mxu0
      %2459 = vmatprep.mubr.f32.mxu0 0.0
      %2460 = vmatmul.mubr.f32.gmra.mrb[0].mxu0 %v2318
      %v2461 = vpop.f32.mrb[0].mxu0
      %v2462 = vadd.f32 %v2270, %v2461
      %v2463 = vpop.f32.mrb[0].mxu0
      %2464 = vdwg.mxu0
      %v2465 = vmul.f32 %v2387, 0.35355338
      %v2466 = vmul.f32 %v2392, 0.35355338
      %v2467 = vmul.f32 %v2397, 0.35355338
      %v2468 = vmul.f32 %v2402, 0.35355338
      %v2469 = vmul.f32 %v2407, 0.35355338
      %v2470 = vmul.f32 %v2412, 0.35355338
      %v2471 = vmul.f32 %v2417, 0.35355338
      %v2472 = vmul.f32 %v2422, 0.35355338
      %v2473 = vmul.f32 %v2427, 0.35355338
      %v2474 = vmul.f32 %v2432, 0.35355338
      %v2475 = vmul.f32 %v2437, 0.35355338
      %v2476 = vmul.f32 %v2442, 0.35355338
      %v2477 = vmul.f32 %v2447, 0.35355338
      %v2478 = vmul.f32 %v2452, 0.35355338
      %v2479 = vmul.f32 %v2457, 0.35355338
      %v2480 = vmul.f32 %v2462, 0.35355338
      %v2481 = vld [vmem:[%s7] sm:$0xff]
      %v2482 = vld [vmem:[%s7 + $0x8] sm:$0xff]
      %v2483 = vld [vmem:[%s7 + $0x10] sm:$0xff]
      %v2484 = vld [vmem:[%s7 + $0x18] sm:$0xff]
      %v2485 = vld [vmem:[%s8] sm:$0x1]
      %v2487 = vlaneseq
      %v2488 = vshrl.u32 %v2487, 7
      %v2489 = vsub.s32 0, %v2488
      %v2490 = vrot.slane %v2485, %v2489
      %2492 = vmatprep.subr.mxu0 0.0
      %2493 = vmatpush1.msra.mxu0 %v2481
      %2494 = vmatprep.subr.mxu0 0.0
      %2495 = vmatpush1.msra.mxu0 %v2482
      %2496 = vmatprep.subr.mxu0 0.0
      %2497 = vmatpush1.msra.mxu0 %v2483
      %2498 = vmatprep.subr.mxu0 0.0
      %2499 = vmatpush1.msra.mxu0 %v2484
      %2500 = vmatprep.subr.mxu0 0.0
      %2501 = vmatpush1.msra.mxu0 0.0
      %2502 = vmatprep.subr.mxu0 0.0
      %2503 = vmatpush1.msra.mxu0 0.0
      %2504 = vmatprep.subr.mxu0 0.0
      %2505 = vmatpush1.msra.mxu0 0.0
      %2506 = vmatprep.subr.mxu0 0.0
      %2507 = vmatpush1.msra.mxu0 0.0
      %2508 = vmatprep.subr.mxu0 0.0
      %2509 = vmatpush1.msra.mxu0 0.0
      %2510 = vmatprep.subr.mxu0 0.0
      %2511 = vmatpush1.msra.mxu0 0.0
      %2512 = vmatprep.subr.mxu0 0.0
      %2513 = vmatpush1.msra.mxu0 0.0
      %2514 = vmatprep.subr.mxu0 0.0
      %2515 = vmatpush1.msra.mxu0 0.0
      %2516 = vmatprep.subr.mxu0 0.0
      %2517 = vmatpush1.msra.mxu0 0.0
      %2518 = vmatprep.subr.mxu0 0.0
      %2519 = vmatpush1.msra.mxu0 0.0
      %2520 = vmatprep.subr.mxu0 0.0
      %2521 = vmatpush1.msra.mxu0 0.0
      %2522 = vmatprep.subr.mxu0 0.0
      %2523 = vmatpush1.msra.mxu0 0.0
      %2524 = vmatprep.subr.mxu0 0.0
      %2525 = vmatpush1.msra.mxu0 0.0
      %2526 = vmatprep.subr.mxu0 0.0
      %2527 = vmatpush1.msra.mxu0 0.0
      %2528 = vmatprep.subr.mxu0 0.0
      %2529 = vmatpush1.msra.mxu0 0.0
      %2530 = vmatprep.subr.mxu0 0.0
      %2531 = vmatpush1.msra.mxu0 0.0
      %2532 = vmatprep.subr.mxu0 0.0
      %2533 = vmatpush1.msra.mxu0 0.0
      %2534 = vmatprep.subr.mxu0 0.0
      %2535 = vmatpush1.msra.mxu0 0.0
      %2536 = vmatprep.subr.mxu0 0.0
      %2537 = vmatpush1.msra.mxu0 0.0
      %2538 = vmatprep.subr.mxu0 0.0
      %2539 = vmatpush1.msra.mxu0 0.0
      %2540 = vmatprep.subr.mxu0 0.0
      %2541 = vmatpush1.msra.mxu0 0.0
      %2542 = vmatprep.subr.mxu0 0.0
      %2543 = vmatpush1.msra.mxu0 0.0
      %2544 = vmatprep.subr.mxu0 0.0
      %2545 = vmatpush1.msra.mxu0 0.0
      %2546 = vmatprep.subr.mxu0 0.0
      %2547 = vmatpush1.msra.mxu0 0.0
      %2548 = vmatprep.subr.mxu0 0.0
      %2549 = vmatpush1.msra.mxu0 0.0
      %2550 = vmatprep.subr.mxu0 0.0
      %2551 = vmatpush1.msra.mxu0 0.0
      %2552 = vmatprep.subr.mxu0 0.0
      %2553 = vmatpush1.msra.mxu0 0.0
      %2554 = vmatprep.subr.mxu0 0.0
      %2555 = vmatpush1.msra.mxu0 0.0
      %2556 = vmatprep.mubr.f32.mxu0 0.0
      %2557 = vmatmul.mubr.f32.gmra.mrb[0].mxu0 %v2273
      %v2558 = vpop.f32.mrb[0].mxu0
      %v2559 = vadd.f32 %v2490, %v2558
      %v2560 = vpop.f32.mrb[0].mxu0
      %2561 = vmatprep.mubr.f32.mxu0 0.0
      %2562 = vmatmul.mubr.f32.gmra.mrb[0].mxu0 %v2276
      %v2563 = vpop.f32.mrb[0].mxu0
      %v2564 = vadd.f32 %v2490, %v2563
      %v2565 = vpop.f32.mrb[0].mxu0
      %2566 = vmatprep.mubr.f32.mxu0 0.0
      %2567 = vmatmul.mubr.f32.gmra.mrb[0].mxu0 %v2279
      %v2568 = vpop.f32.mrb[0].mxu0
      %v2569 = vadd.f32 %v2490, %v2568
      %v2570 = vpop.f32.mrb[0].mxu0
      %2571 = vmatprep.mubr.f32.mxu0 0.0
      %2572 = vmatmul.mubr.f32.gmra.mrb[0].mxu0 %v2282
      %v2573 = vpop.f32.mrb[0].mxu0
      %v2574 = vadd.f32 %v2490, %v2573
      %v2575 = vpop.f32.mrb[0].mxu0
      %2576 = vmatprep.mubr.f32.mxu0 0.0
      %2577 = vmatmul.mubr.f32.gmra.mrb[0].mxu0 %v2285
      %v2578 = vpop.f32.mrb[0].mxu0
      %v2579 = vadd.f32 %v2490, %v2578
      %v2580 = vpop.f32.mrb[0].mxu0
      %2581 = vmatprep.mubr.f32.mxu0 0.0
      %2582 = vmatmul.mubr.f32.gmra.mrb[0].mxu0 %v2288
      %v2583 = vpop.f32.mrb[0].mxu0
      %v2584 = vadd.f32 %v2490, %v2583
      %v2585 = vpop.f32.mrb[0].mxu0
      %2586 = vmatprep.mubr.f32.mxu0 0.0
      %2587 = vmatmul.mubr.f32.gmra.mrb[0].mxu0 %v2291
      %v2588 = vpop.f32.mrb[0].mxu0
      %v2589 = vadd.f32 %v2490, %v2588
      %v2590 = vpop.f32.mrb[0].mxu0
      %2591 = vmatprep.mubr.f32.mxu0 0.0
      %2592 = vmatmul.mubr.f32.gmra.mrb[0].mxu0 %v2294
      %v2593 = vpop.f32.mrb[0].mxu0
      %v2594 = vadd.f32 %v2490, %v2593
      %v2595 = vpop.f32.mrb[0].mxu0
      %2596 = vmatprep.mubr.f32.mxu0 0.0
      %2597 = vmatmul.mubr.f32.gmra.mrb[0].mxu0 %v2297
      %v2598 = vpop.f32.mrb[0].mxu0
      %v2599 = vadd.f32 %v2490, %v2598
      %v2600 = vpop.f32.mrb[0].mxu0
      %2601 = vmatprep.mubr.f32.mxu0 0.0
      %2602 = vmatmul.mubr.f32.gmra.mrb[0].mxu0 %v2300
      %v2603 = vpop.f32.mrb[0].mxu0
      %v2604 = vadd.f32 %v2490, %v2603
      %v2605 = vpop.f32.mrb[0].mxu0
      %2606 = vmatprep.mubr.f32.mxu0 0.0
      %2607 = vmatmul.mubr.f32.gmra.mrb[0].mxu0 %v2303
      %v2608 = vpop.f32.mrb[0].mxu0
      %v2609 = vadd.f32 %v2490, %v2608
      %v2610 = vpop.f32.mrb[0].mxu0
      %2611 = vmatprep.mubr.f32.mxu0 0.0
      %2612 = vmatmul.mubr.f32.gmra.mrb[0].mxu0 %v2306
      %v2613 = vpop.f32.mrb[0].mxu0
      %v2614 = vadd.f32 %v2490, %v2613
      %v2615 = vpop.f32.mrb[0].mxu0
      %2616 = vmatprep.mubr.f32.mxu0 0.0
      %2617 = vmatmul.mubr.f32.gmra.mrb[0].mxu0 %v2309
      %v2618 = vpop.f32.mrb[0].mxu0
      %v2619 = vadd.f32 %v2490, %v2618
      %v2620 = vpop.f32.mrb[0].mxu0
      %2621 = vmatprep.mubr.f32.mxu0 0.0
      %2622 = vmatmul.mubr.f32.gmra.mrb[0].mxu0 %v2312
      %v2623 = vpop.f32.mrb[0].mxu0
      %v2624 = vadd.f32 %v2490, %v2623
      %v2625 = vpop.f32.mrb[0].mxu0
      %2626 = vmatprep.mubr.f32.mxu0 0.0
      %2627 = vmatmul.mubr.f32.gmra.mrb[0].mxu0 %v2315
      %v2628 = vpop.f32.mrb[0].mxu0
      %v2629 = vadd.f32 %v2490, %v2628
      %v2630 = vpop.f32.mrb[0].mxu0
      %2631 = vmatprep.mubr.f32.mxu0 0.0
      %2632 = vmatmul.mubr.f32.gmra.mrb[0].mxu0 %v2318
      %v2633 = vpop.f32.mrb[0].mxu0
      %v2634 = vadd.f32 %v2490, %v2633
      %v2635 = vpop.f32.mrb[0].mxu0
      %2636 = vdwg.mxu0
      %v2637 = vld [vmem:[%s9] sm:$0xff]
      %v2638 = vld [vmem:[%s9 + $0x8] sm:$0xff]
      %v2639 = vld [vmem:[%s9 + $0x10] sm:$0xff]
      %v2640 = vld [vmem:[%s9 + $0x18] sm:$0xff]
      %v2641 = vld [vmem:[%s9 + $0x20] sm:$0xff]
      %v2642 = vld [vmem:[%s9 + $0x28] sm:$0xff]
      %v2643 = vld [vmem:[%s9 + $0x30] sm:$0xff]
      %v2644 = vld [vmem:[%s9 + $0x38] sm:$0xff]
      %vm2645 = vcmask 64512
      %v2647 = vsel %vm2645, %v2465, 0
      %v2650 = vsel %vm2645, %v2466, 0
      %v2653 = vsel %vm2645, %v2467, 0
      %v2656 = vsel %vm2645, %v2468, 0
      %v2659 = vsel %vm2645, %v2469, 0
      %v2662 = vsel %vm2645, %v2470, 0
      %v2665 = vsel %vm2645, %v2471, 0
      %v2668 = vsel %vm2645, %v2472, 0
      %v2671 = vsel %vm2645, %v2559, 0
      %v2674 = vsel %vm2645, %v2564, 0
      %v2677 = vsel %vm2645, %v2569, 0
      %v2680 = vsel %vm2645, %v2574, 0
      %v2683 = vsel %vm2645, %v2579, 0
      %v2686 = vsel %vm2645, %v2584, 0
      %v2689 = vsel %vm2645, %v2589, 0
      %v2692 = vsel %vm2645, %v2594, 0
      %2694 = vmatprep.subr.mxu0 0.0
      %2695 = vmatpush1.xpose.msra.mxu0 %v2671
      %2696 = vmatprep.subr.mxu0 0.0
      %2697 = vmatpush1.xpose.msra.mxu0 %v2674
      %2698 = vmatprep.subr.mxu0 0.0
      %2699 = vmatpush1.xpose.msra.mxu0 %v2677
      %2700 = vmatprep.subr.mxu0 0.0
      %2701 = vmatpush1.xpose.msra.mxu0 %v2680
      %2702 = vmatprep.subr.mxu0 0.0
      %2703 = vmatpush1.xpose.msra.mxu0 %v2683
      %2704 = vmatprep.subr.mxu0 0.0
      %2705 = vmatpush1.xpose.msra.mxu0 %v2686
      %2706 = vmatprep.subr.mxu0 0.0
      %2707 = vmatpush1.xpose.msra.mxu0 %v2689
      %2708 = vmatprep.subr.mxu0 0.0
      %2709 = vmatpush1.xpose.msra.mxu0 %v2692
      %2710 = vmatprep.subr.mxu0 0.0
      %2711 = vmatpush1.xpose.msra.mxu0 0.0
      %2712 = vmatprep.subr.mxu0 0.0
      %2713 = vmatpush1.xpose.msra.mxu0 0.0
      %2714 = vmatprep.subr.mxu0 0.0
      %2715 = vmatpush1.xpose.msra.mxu0 0.0
      %2716 = vmatprep.subr.mxu0 0.0
      %2717 = vmatpush1.xpose.msra.mxu0 0.0
      %2718 = vmatprep.subr.mxu0 0.0
      %2719 = vmatpush1.xpose.msra.mxu0 0.0
      %2720 = vmatprep.subr.mxu0 0.0
      %2721 = vmatpush1.xpose.msra.mxu0 0.0
      %2722 = vmatprep.subr.mxu0 0.0
      %2723 = vmatpush1.xpose.msra.mxu0 0.0
      %2724 = vmatprep.subr.mxu0 0.0
      %2725 = vmatpush1.xpose.msra.mxu0 0.0
      %2726 = vmatprep.subr.mxu0 0.0
      %2727 = vmatpush1.xpose.msra.mxu0 0.0
      %2728 = vmatprep.subr.mxu0 0.0
      %2729 = vmatpush1.xpose.msra.mxu0 0.0
      %2730 = vmatprep.subr.mxu0 0.0
      %2731 = vmatpush1.xpose.msra.mxu0 0.0
      %2732 = vmatprep.subr.mxu0 0.0
      %2733 = vmatpush1.xpose.msra.mxu0 0.0
      %2734 = vmatprep.subr.mxu0 0.0
      %2735 = vmatpush1.xpose.msra.mxu0 0.0
      %2736 = vmatprep.subr.mxu0 0.0
      %2737 = vmatpush1.xpose.msra.mxu0 0.0
      %2738 = vmatprep.subr.mxu0 0.0
      %2739 = vmatpush1.xpose.msra.mxu0 0.0
      %2740 = vmatprep.subr.mxu0 0.0
      %2741 = vmatpush1.xpose.msra.mxu0 0.0
      %2742 = vmatprep.subr.mxu0 0.0
      %2743 = vmatpush1.xpose.msra.mxu0 0.0
      %2744 = vmatprep.subr.mxu0 0.0
      %2745 = vmatpush1.xpose.msra.mxu0 0.0
      %2746 = vmatprep.subr.mxu0 0.0
      %2747 = vmatpush1.xpose.msra.mxu0 0.0
      %2748 = vmatprep.subr.mxu0 0.0
      %2749 = vmatpush1.xpose.msra.mxu0 0.0
      %2750 = vmatprep.subr.mxu0 0.0
      %2751 = vmatpush1.xpose.msra.mxu0 0.0
      %2752 = vmatprep.subr.mxu0 0.0
      %2753 = vmatpush1.xpose.msra.mxu0 0.0
      %2754 = vmatprep.subr.mxu0 0.0
      %2755 = vmatpush1.xpose.msra.mxu0 0.0
      %2756 = vmatprep.subr.mxu0 0.0
      %2757 = vmatpush1.xpose.msra.mxu0 0.0
      %2758 = vmatprep.mubr.f32.mxu0 0.0
      %2759 = vmatmul.mubr.f32.gmra.mrb[0].mxu0 %v2647
      %v2760 = vpop.f32.mrb[0].mxu0
      %v2761 = vadd.f32 %v2637, %v2760
      %v2762 = vpop.f32.mrb[0].mxu0
      %2763 = vmatprep.mubr.f32.mxu0 0.0
      %2764 = vmatmul.mubr.f32.gmra.mrb[0].mxu0 %v2650
      %v2765 = vpop.f32.mrb[0].mxu0
      %v2766 = vadd.f32 %v2638, %v2765
      %v2767 = vpop.f32.mrb[0].mxu0
      %2768 = vmatprep.mubr.f32.mxu0 0.0
      %2769 = vmatmul.mubr.f32.gmra.mrb[0].mxu0 %v2653
      %v2770 = vpop.f32.mrb[0].mxu0
      %v2771 = vadd.f32 %v2639, %v2770
      %v2772 = vpop.f32.mrb[0].mxu0
      %2773 = vmatprep.mubr.f32.mxu0 0.0
      %2774 = vmatmul.mubr.f32.gmra.mrb[0].mxu0 %v2656
      %v2775 = vpop.f32.mrb[0].mxu0
      %v2776 = vadd.f32 %v2640, %v2775
      %v2777 = vpop.f32.mrb[0].mxu0
      %2778 = vmatprep.mubr.f32.mxu0 0.0
      %2779 = vmatmul.mubr.f32.gmra.mrb[0].mxu0 %v2659
      %v2780 = vpop.f32.mrb[0].mxu0
      %v2781 = vadd.f32 %v2641, %v2780
      %v2782 = vpop.f32.mrb[0].mxu0
      %2783 = vmatprep.mubr.f32.mxu0 0.0
      %2784 = vmatmul.mubr.f32.gmra.mrb[0].mxu0 %v2662
      %v2785 = vpop.f32.mrb[0].mxu0
      %v2786 = vadd.f32 %v2642, %v2785
      %v2787 = vpop.f32.mrb[0].mxu0
      %2788 = vmatprep.mubr.f32.mxu0 0.0
      %2789 = vmatmul.mubr.f32.gmra.mrb[0].mxu0 %v2665
      %v2790 = vpop.f32.mrb[0].mxu0
      %v2791 = vadd.f32 %v2643, %v2790
      %v2792 = vpop.f32.mrb[0].mxu0
      %2793 = vmatprep.mubr.f32.mxu0 0.0
      %2794 = vmatmul.mubr.f32.gmra.mrb[0].mxu0 %v2668
      %v2795 = vpop.f32.mrb[0].mxu0
      %v2796 = vadd.f32 %v2644, %v2795
      %v2797 = vpop.f32.mrb[0].mxu0
      %2798 = vdwg.mxu0
      %v2800 = vsel %vm2645, %v2473, 0
      %v2803 = vsel %vm2645, %v2474, 0
      %v2806 = vsel %vm2645, %v2475, 0
      %v2809 = vsel %vm2645, %v2476, 0
      %v2812 = vsel %vm2645, %v2477, 0
      %v2815 = vsel %vm2645, %v2478, 0
      %v2818 = vsel %vm2645, %v2479, 0
      %v2821 = vsel %vm2645, %v2480, 0
      %v2824 = vsel %vm2645, %v2599, 0
      %v2827 = vsel %vm2645, %v2604, 0
      %v2830 = vsel %vm2645, %v2609, 0
      %v2833 = vsel %vm2645, %v2614, 0
      %v2836 = vsel %vm2645, %v2619, 0
      %v2839 = vsel %vm2645, %v2624, 0
      %v2842 = vsel %vm2645, %v2629, 0
      %v2845 = vsel %vm2645, %v2634, 0
      %2847 = vmatprep.subr.mxu0 0.0
      %2848 = vmatpush1.xpose.msra.mxu0 %v2824
      %2849 = vmatprep.subr.mxu0 0.0
      %2850 = vmatpush1.xpose.msra.mxu0 %v2827
      %2851 = vmatprep.subr.mxu0 0.0
      %2852 = vmatpush1.xpose.msra.mxu0 %v2830
      %2853 = vmatprep.subr.mxu0 0.0
      %2854 = vmatpush1.xpose.msra.mxu0 %v2833
      %2855 = vmatprep.subr.mxu0 0.0
      %2856 = vmatpush1.xpose.msra.mxu0 %v2836
      %2857 = vmatprep.subr.mxu0 0.0
      %2858 = vmatpush1.xpose.msra.mxu0 %v2839
      %2859 = vmatprep.subr.mxu0 0.0
      %2860 = vmatpush1.xpose.msra.mxu0 %v2842
      %2861 = vmatprep.subr.mxu0 0.0
      %2862 = vmatpush1.xpose.msra.mxu0 %v2845
      %2863 = vmatprep.subr.mxu0 0.0
      %2864 = vmatpush1.xpose.msra.mxu0 0.0
      %2865 = vmatprep.subr.mxu0 0.0
      %2866 = vmatpush1.xpose.msra.mxu0 0.0
      %2867 = vmatprep.subr.mxu0 0.0
      %2868 = vmatpush1.xpose.msra.mxu0 0.0
      %2869 = vmatprep.subr.mxu0 0.0
      %2870 = vmatpush1.xpose.msra.mxu0 0.0
      %2871 = vmatprep.subr.mxu0 0.0
      %2872 = vmatpush1.xpose.msra.mxu0 0.0
      %2873 = vmatprep.subr.mxu0 0.0
      %2874 = vmatpush1.xpose.msra.mxu0 0.0
      %2875 = vmatprep.subr.mxu0 0.0
      %2876 = vmatpush1.xpose.msra.mxu0 0.0
      %2877 = vmatprep.subr.mxu0 0.0
      %2878 = vmatpush1.xpose.msra.mxu0 0.0
      %2879 = vmatprep.subr.mxu0 0.0
      %2880 = vmatpush1.xpose.msra.mxu0 0.0
      %2881 = vmatprep.subr.mxu0 0.0
      %2882 = vmatpush1.xpose.msra.mxu0 0.0
      %2883 = vmatprep.subr.mxu0 0.0
      %2884 = vmatpush1.xpose.msra.mxu0 0.0
      %2885 = vmatprep.subr.mxu0 0.0
      %2886 = vmatpush1.xpose.msra.mxu0 0.0
      %2887 = vmatprep.subr.mxu0 0.0
      %2888 = vmatpush1.xpose.msra.mxu0 0.0
      %2889 = vmatprep.subr.mxu0 0.0
      %2890 = vmatpush1.xpose.msra.mxu0 0.0
      %2891 = vmatprep.subr.mxu0 0.0
      %2892 = vmatpush1.xpose.msra.mxu0 0.0
      %2893 = vmatprep.subr.mxu0 0.0
      %2894 = vmatpush1.xpose.msra.mxu0 0.0
      %2895 = vmatprep.subr.mxu0 0.0
      %2896 = vmatpush1.xpose.msra.mxu0 0.0
      %2897 = vmatprep.subr.mxu0 0.0
      %2898 = vmatpush1.xpose.msra.mxu0 0.0
      %2899 = vmatprep.subr.mxu0 0.0
      %2900 = vmatpush1.xpose.msra.mxu0 0.0
      %2901 = vmatprep.subr.mxu0 0.0
      %2902 = vmatpush1.xpose.msra.mxu0 0.0
      %2903 = vmatprep.subr.mxu0 0.0
      %2904 = vmatpush1.xpose.msra.mxu0 0.0
      %2905 = vmatprep.subr.mxu0 0.0
      %2906 = vmatpush1.xpose.msra.mxu0 0.0
      %2907 = vmatprep.subr.mxu0 0.0
      %2908 = vmatpush1.xpose.msra.mxu0 0.0
      %2909 = vmatprep.subr.mxu0 0.0
      %2910 = vmatpush1.xpose.msra.mxu0 0.0
      %2911 = vmatprep.mubr.f32.mxu0 0.0
      %2912 = vmatmul.mubr.f32.gmra.mrb[0].mxu0 %v2800
      %v2913 = vpop.f32.mrb[0].mxu0
      %v2914 = vadd.f32 %v2637, %v2913
      %v2915 = vpop.f32.mrb[0].mxu0
      %2916 = vmatprep.mubr.f32.mxu0 0.0
      %2917 = vmatmul.mubr.f32.gmra.mrb[0].mxu0 %v2803
      %v2918 = vpop.f32.mrb[0].mxu0
      %v2919 = vadd.f32 %v2638, %v2918
      %v2920 = vpop.f32.mrb[0].mxu0
      %2921 = vmatprep.mubr.f32.mxu0 0.0
      %2922 = vmatmul.mubr.f32.gmra.mrb[0].mxu0 %v2806
      %v2923 = vpop.f32.mrb[0].mxu0
      %v2924 = vadd.f32 %v2639, %v2923
      %v2925 = vpop.f32.mrb[0].mxu0
      %2926 = vmatprep.mubr.f32.mxu0 0.0
      %2927 = vmatmul.mubr.f32.gmra.mrb[0].mxu0 %v2809
      %v2928 = vpop.f32.mrb[0].mxu0
      %v2929 = vadd.f32 %v2640, %v2928
      %v2930 = vpop.f32.mrb[0].mxu0
      %2931 = vmatprep.mubr.f32.mxu0 0.0
      %2932 = vmatmul.mubr.f32.gmra.mrb[0].mxu0 %v2812
      %v2933 = vpop.f32.mrb[0].mxu0
      %v2934 = vadd.f32 %v2641, %v2933
      %v2935 = vpop.f32.mrb[0].mxu0
      %2936 = vmatprep.mubr.f32.mxu0 0.0
      %2937 = vmatmul.mubr.f32.gmra.mrb[0].mxu0 %v2815
      %v2938 = vpop.f32.mrb[0].mxu0
      %v2939 = vadd.f32 %v2642, %v2938
      %v2940 = vpop.f32.mrb[0].mxu0
      %2941 = vmatprep.mubr.f32.mxu0 0.0
      %2942 = vmatmul.mubr.f32.gmra.mrb[0].mxu0 %v2818
      %v2943 = vpop.f32.mrb[0].mxu0
      %v2944 = vadd.f32 %v2643, %v2943
      %v2945 = vpop.f32.mrb[0].mxu0
      %2946 = vmatprep.mubr.f32.mxu0 0.0
      %2947 = vmatmul.mubr.f32.gmra.mrb[0].mxu0 %v2821
      %v2948 = vpop.f32.mrb[0].mxu0
      %v2949 = vadd.f32 %v2644, %v2948
      %v2950 = vpop.f32.mrb[0].mxu0
      %2951 = vdwg.mxu0
      %vm2952 = vcmask 523264
      %v2953 = vsel %vm2952, %v2761, -inf
      %2954 = vmax.xlane.f32.xlu0 %v2953
      %v2955 = vpop.xlane.xlu0 %2954
      %v2956 = vsel %vm2952, %v2766, -inf
      %2957 = vmax.xlane.f32.xlu0 %v2956
      %v2958 = vpop.xlane.xlu0 %2957
      %v2959 = vsel %vm2952, %v2771, -inf
      %2960 = vmax.xlane.f32.xlu0 %v2959
      %v2961 = vpop.xlane.xlu0 %2960
      %v2962 = vsel %vm2952, %v2776, -inf
      %2963 = vmax.xlane.f32.xlu0 %v2962
      %v2964 = vpop.xlane.xlu0 %2963
      %v2965 = vsel %vm2952, %v2781, -inf
      %2966 = vmax.xlane.f32.xlu0 %v2965
      %v2967 = vpop.xlane.xlu0 %2966
      %v2968 = vsel %vm2952, %v2786, -inf
      %2969 = vmax.xlane.f32.xlu0 %v2968
      %v2970 = vpop.xlane.xlu0 %2969
      %v2971 = vsel %vm2952, %v2791, -inf
      %2972 = vmax.xlane.f32.xlu0 %v2971
      %v2973 = vpop.xlane.xlu0 %2972
      %v2974 = vsel %vm2952, %v2796, -inf
      %2975 = vmax.xlane.f32.xlu0 %v2974
      %v2976 = vpop.xlane.xlu0 %2975
      %v2977 = vsel %vm2952, %v2914, -inf
      %2978 = vmax.xlane.f32.xlu0 %v2977
      %v2979 = vpop.xlane.xlu0 %2978
      %v2980 = vsel %vm2952, %v2919, -inf
      %2981 = vmax.xlane.f32.xlu0 %v2980
      %v2982 = vpop.xlane.xlu0 %2981
      %v2983 = vsel %vm2952, %v2924, -inf
      %2984 = vmax.xlane.f32.xlu0 %v2983
      %v2985 = vpop.xlane.xlu0 %2984
      %v2986 = vsel %vm2952, %v2929, -inf
      %2987 = vmax.xlane.f32.xlu0 %v2986
      %v2988 = vpop.xlane.xlu0 %2987
      %v2989 = vsel %vm2952, %v2934, -inf
      %2990 = vmax.xlane.f32.xlu0 %v2989
      %v2991 = vpop.xlane.xlu0 %2990
      %v2992 = vsel %vm2952, %v2939, -inf
      %2993 = vmax.xlane.f32.xlu0 %v2992
      %v2994 = vpop.xlane.xlu0 %2993
      %v2995 = vsel %vm2952, %v2944, -inf
      %2996 = vmax.xlane.f32.xlu0 %v2995
      %v2997 = vpop.xlane.xlu0 %2996
      %v2998 = vsel %vm2952, %v2949, -inf
      %2999 = vmax.xlane.f32.xlu0 %v2998
      %v3000 = vpop.xlane.xlu0 %2999
      %v3001 = vsub.f32 %v2761, %v2955
      %v3002 = vsub.f32 %v2766, %v2958
      %v3003 = vsub.f32 %v2771, %v2961
      %v3004 = vsub.f32 %v2776, %v2964
      %v3005 = vsub.f32 %v2781, %v2967
      %v3006 = vsub.f32 %v2786, %v2970
      %v3007 = vsub.f32 %v2791, %v2973
      %v3008 = vsub.f32 %v2796, %v2976
      %v3009 = vsub.f32 %v2914, %v2979
      %v3010 = vsub.f32 %v2919, %v2982
      %v3011 = vsub.f32 %v2924, %v2985
      %v3012 = vsub.f32 %v2929, %v2988
      %v3013 = vsub.f32 %v2934, %v2991
      %v3014 = vsub.f32 %v2939, %v2994
      %v3015 = vsub.f32 %v2944, %v2997
      %v3016 = vsub.f32 %v2949, %v3000
      %v3017 = vmul.f32 %v3001, 1.442695
      %v3018 = vpow.pop %v3017
      %v3019 = vmul.f32 %v3002, 1.442695
      %v3020 = vpow.pop %v3019
      %v3021 = vmul.f32 %v3003, 1.442695
      %v3022 = vpow.pop %v3021
      %v3023 = vmul.f32 %v3004, 1.442695
      %v3024 = vpow.pop %v3023
      %v3025 = vmul.f32 %v3005, 1.442695
      %v3026 = vpow.pop %v3025
      %v3027 = vmul.f32 %v3006, 1.442695
      %v3028 = vpow.pop %v3027
      %v3029 = vmul.f32 %v3007, 1.442695
      %v3030 = vpow.pop %v3029
      %v3031 = vmul.f32 %v3008, 1.442695
      %v3032 = vpow.pop %v3031
      %v3033 = vmul.f32 %v3009, 1.442695
      %v3034 = vpow.pop %v3033
      %v3035 = vmul.f32 %v3010, 1.442695
      %v3036 = vpow.pop %v3035
      %v3037 = vmul.f32 %v3011, 1.442695
      %v3038 = vpow.pop %v3037
      %v3039 = vmul.f32 %v3012, 1.442695
      %v3040 = vpow.pop %v3039
      %v3041 = vmul.f32 %v3013, 1.442695
      %v3042 = vpow.pop %v3041
      %v3043 = vmul.f32 %v3014, 1.442695
      %v3044 = vpow.pop %v3043
      %v3045 = vmul.f32 %v3015, 1.442695
      %v3046 = vpow.pop %v3045
      %v3047 = vmul.f32 %v3016, 1.442695
      %v3048 = vpow.pop %v3047
      %v3049 = vsel %vm2952, %v3018, 0.0
      %3050 = vadd.xlane.f32.xlu0 %v3049
      %v3051 = vpop.xlane.xlu0 %3050
      %v3052 = vsel %vm2952, %v3020, 0.0
      %3053 = vadd.xlane.f32.xlu0 %v3052
      %v3054 = vpop.xlane.xlu0 %3053
      %v3055 = vsel %vm2952, %v3022, 0.0
      %3056 = vadd.xlane.f32.xlu0 %v3055
      %v3057 = vpop.xlane.xlu0 %3056
      %v3058 = vsel %vm2952, %v3024, 0.0
      %3059 = vadd.xlane.f32.xlu0 %v3058
      %v3060 = vpop.xlane.xlu0 %3059
      %v3061 = vsel %vm2952, %v3026, 0.0
      %3062 = vadd.xlane.f32.xlu0 %v3061
      %v3063 = vpop.xlane.xlu0 %3062
      %v3064 = vsel %vm2952, %v3028, 0.0
      %3065 = vadd.xlane.f32.xlu0 %v3064
      %v3066 = vpop.xlane.xlu0 %3065
      %v3067 = vsel %vm2952, %v3030, 0.0
      %3068 = vadd.xlane.f32.xlu0 %v3067
      %v3069 = vpop.xlane.xlu0 %3068
      %v3070 = vsel %vm2952, %v3032, 0.0
      %3071 = vadd.xlane.f32.xlu0 %v3070
      %v3072 = vpop.xlane.xlu0 %3071
      %v3073 = vsel %vm2952, %v3034, 0.0
      %3074 = vadd.xlane.f32.xlu0 %v3073
      %v3075 = vpop.xlane.xlu0 %3074
      %v3076 = vsel %vm2952, %v3036, 0.0
      %3077 = vadd.xlane.f32.xlu0 %v3076
      %v3078 = vpop.xlane.xlu0 %3077
      %v3079 = vsel %vm2952, %v3038, 0.0
      %3080 = vadd.xlane.f32.xlu0 %v3079
      %v3081 = vpop.xlane.xlu0 %3080
      %v3082 = vsel %vm2952, %v3040, 0.0
      %3083 = vadd.xlane.f32.xlu0 %v3082
      %v3084 = vpop.xlane.xlu0 %3083
      %v3085 = vsel %vm2952, %v3042, 0.0
      %3086 = vadd.xlane.f32.xlu0 %v3085
      %v3087 = vpop.xlane.xlu0 %3086
      %v3088 = vsel %vm2952, %v3044, 0.0
      %3089 = vadd.xlane.f32.xlu0 %v3088
      %v3090 = vpop.xlane.xlu0 %3089
      %v3091 = vsel %vm2952, %v3046, 0.0
      %3092 = vadd.xlane.f32.xlu0 %v3091
      %v3093 = vpop.xlane.xlu0 %3092
      %v3094 = vsel %vm2952, %v3048, 0.0
      %3095 = vadd.xlane.f32.xlu0 %v3094
      %v3096 = vpop.xlane.xlu0 %3095
      %v3097 = vrcp.pop %v3051
      %v3098 = vmul.f32 %v3018, %v3097
      %v3099 = vrcp.pop %v3054
      %v3100 = vmul.f32 %v3020, %v3099
      %v3101 = vrcp.pop %v3057
      %v3102 = vmul.f32 %v3022, %v3101
      %v3103 = vrcp.pop %v3060
      %v3104 = vmul.f32 %v3024, %v3103
      %v3105 = vrcp.pop %v3063
      %v3106 = vmul.f32 %v3026, %v3105
      %v3107 = vrcp.pop %v3066
      %v3108 = vmul.f32 %v3028, %v3107
      %v3109 = vrcp.pop %v3069
      %v3110 = vmul.f32 %v3030, %v3109
      %v3111 = vrcp.pop %v3072
      %v3112 = vmul.f32 %v3032, %v3111
      %v3113 = vrcp.pop %v3075
      %v3114 = vmul.f32 %v3034, %v3113
      %v3115 = vrcp.pop %v3078
      %v3116 = vmul.f32 %v3036, %v3115
      %v3117 = vrcp.pop %v3081
      %v3118 = vmul.f32 %v3038, %v3117
      %v3119 = vrcp.pop %v3084
      %v3120 = vmul.f32 %v3040, %v3119
      %v3121 = vrcp.pop %v3087
      %v3122 = vmul.f32 %v3042, %v3121
      %v3123 = vrcp.pop %v3090
      %v3124 = vmul.f32 %v3044, %v3123
      %v3125 = vrcp.pop %v3093
      %v3126 = vmul.f32 %v3046, %v3125
      %v3127 = vrcp.pop %v3096
      %v3128 = vmul.f32 %v3048, %v3127
      %3129 = vrot.lane.b32.xlu0 %v2559, 96
      %v3130 = vpop.permute.xlu0 %3129
      %3131 = vrot.lane.b32.xlu0 %v2564, 96
      %v3132 = vpop.permute.xlu0 %3131
      %3133 = vrot.lane.b32.xlu0 %v2569, 96
      %v3134 = vpop.permute.xlu0 %3133
      %3135 = vrot.lane.b32.xlu0 %v2574, 96
      %v3136 = vpop.permute.xlu0 %3135
      %3137 = vrot.lane.b32.xlu0 %v2579, 96
      %v3138 = vpop.permute.xlu0 %3137
      %3139 = vrot.lane.b32.xlu0 %v2584, 96
      %v3140 = vpop.permute.xlu0 %3139
      %3141 = vrot.lane.b32.xlu0 %v2589, 96
      %v3142 = vpop.permute.xlu0 %3141
      %3143 = vrot.lane.b32.xlu0 %v2594, 96
      %v3144 = vpop.permute.xlu0 %3143
      %v3154 = vsel %vm2952, %v3098, 0
      %v3157 = vsel %vm2952, %v3100, 0
      %v3160 = vsel %vm2952, %v3102, 0
      %v3163 = vsel %vm2952, %v3104, 0
      %v3166 = vsel %vm2952, %v3106, 0
      %v3169 = vsel %vm2952, %v3108, 0
      %v3172 = vsel %vm2952, %v3110, 0
      %v3175 = vsel %vm2952, %v3112, 0
      %3177 = vmatprep.subr.mxu0 0.0
      %3178 = vmatpush1.msra.mxu0 %v3130
      %3179 = vmatprep.subr.mxu0 0.0
      %3180 = vmatpush1.msra.mxu0 %v3132
      %3181 = vmatprep.subr.mxu0 0.0
      %3182 = vmatpush1.msra.mxu0 %v3134
      %3183 = vmatprep.subr.mxu0 0.0
      %3184 = vmatpush1.msra.mxu0 %v3136
      %3185 = vmatprep.subr.mxu0 0.0
      %3186 = vmatpush1.msra.mxu0 %v3138
      %3187 = vmatprep.subr.mxu0 0.0
      %3188 = vmatpush1.msra.mxu0 %v3140
      %3189 = vmatprep.subr.mxu0 0.0
      %3190 = vmatpush1.msra.mxu0 %v3142
      %3191 = vmatprep.subr.mxu0 0.0
      %3192 = vmatpush1.msra.mxu0 %v3144
      %3193 = vmatprep.subr.mxu0 0.0
      %3194 = vmatpush1.msra.mxu0 0.0
      %3195 = vmatprep.subr.mxu0 0.0
      %3196 = vmatpush1.msra.mxu0 0.0
      %3197 = vmatprep.subr.mxu0 0.0
      %3198 = vmatpush1.msra.mxu0 0.0
      %3199 = vmatprep.subr.mxu0 0.0
      %3200 = vmatpush1.msra.mxu0 0.0
      %3201 = vmatprep.subr.mxu0 0.0
      %3202 = vmatpush1.msra.mxu0 0.0
      %3203 = vmatprep.subr.mxu0 0.0
      %3204 = vmatpush1.msra.mxu0 0.0
      %3205 = vmatprep.subr.mxu0 0.0
      %3206 = vmatpush1.msra.mxu0 0.0
      %3207 = vmatprep.subr.mxu0 0.0
      %3208 = vmatpush1.msra.mxu0 0.0
      %3209 = vmatprep.subr.mxu0 0.0
      %3210 = vmatpush1.msra.mxu0 0.0
      %3211 = vmatprep.subr.mxu0 0.0
      %3212 = vmatpush1.msra.mxu0 0.0
      %3213 = vmatprep.subr.mxu0 0.0
      %3214 = vmatpush1.msra.mxu0 0.0
      %3215 = vmatprep.subr.mxu0 0.0
      %3216 = vmatpush1.msra.mxu0 0.0
      %3217 = vmatprep.subr.mxu0 0.0
      %3218 = vmatpush1.msra.mxu0 0.0
      %3219 = vmatprep.subr.mxu0 0.0
      %3220 = vmatpush1.msra.mxu0 0.0
      %3221 = vmatprep.subr.mxu0 0.0
      %3222 = vmatpush1.msra.mxu0 0.0
      %3223 = vmatprep.subr.mxu0 0.0
      %3224 = vmatpush1.msra.mxu0 0.0
      %3225 = vmatprep.subr.mxu0 0.0
      %3226 = vmatpush1.msra.mxu0 0.0
      %3227 = vmatprep.subr.mxu0 0.0
      %3228 = vmatpush1.msra.mxu0 0.0
      %3229 = vmatprep.subr.mxu0 0.0
      %3230 = vmatpush1.msra.mxu0 0.0
      %3231 = vmatprep.subr.mxu0 0.0
      %3232 = vmatpush1.msra.mxu0 0.0
      %3233 = vmatprep.subr.mxu0 0.0
      %3234 = vmatpush1.msra.mxu0 0.0
      %3235 = vmatprep.subr.mxu0 0.0
      %3236 = vmatpush1.msra.mxu0 0.0
      %3237 = vmatprep.subr.mxu0 0.0
      %3238 = vmatpush1.msra.mxu0 0.0
      %3239 = vmatprep.subr.mxu0 0.0
      %3240 = vmatpush1.msra.mxu0 0.0
      %3241 = vmatprep.mubr.f32.mxu0 0.0
      %3242 = vmatmul.mubr.f32.gmra.mrb[0].mxu0 %v3154
      %v3243 = vpop.f32.mrb[0].mxu0
      %v3244 = vadd.f32 0.0, %v3243
      %v3245 = vpop.f32.mrb[0].mxu0
      %3246 = vmatprep.mubr.f32.mxu0 0.0
      %3247 = vmatmul.mubr.f32.gmra.mrb[0].mxu0 %v3157
      %v3248 = vpop.f32.mrb[0].mxu0
      %v3249 = vadd.f32 0.0, %v3248
      %v3250 = vpop.f32.mrb[0].mxu0
      %3251 = vmatprep.mubr.f32.mxu0 0.0
      %3252 = vmatmul.mubr.f32.gmra.mrb[0].mxu0 %v3160
      %v3253 = vpop.f32.mrb[0].mxu0
      %v3254 = vadd.f32 0.0, %v3253
      %v3255 = vpop.f32.mrb[0].mxu0
      %3256 = vmatprep.mubr.f32.mxu0 0.0
      %3257 = vmatmul.mubr.f32.gmra.mrb[0].mxu0 %v3163
      %v3258 = vpop.f32.mrb[0].mxu0
      %v3259 = vadd.f32 0.0, %v3258
      %v3260 = vpop.f32.mrb[0].mxu0
      %3261 = vmatprep.mubr.f32.mxu0 0.0
      %3262 = vmatmul.mubr.f32.gmra.mrb[0].mxu0 %v3166
      %v3263 = vpop.f32.mrb[0].mxu0
      %v3264 = vadd.f32 0.0, %v3263
      %v3265 = vpop.f32.mrb[0].mxu0
      %3266 = vmatprep.mubr.f32.mxu0 0.0
      %3267 = vmatmul.mubr.f32.gmra.mrb[0].mxu0 %v3169
      %v3268 = vpop.f32.mrb[0].mxu0
      %v3269 = vadd.f32 0.0, %v3268
      %v3270 = vpop.f32.mrb[0].mxu0
      %3271 = vmatprep.mubr.f32.mxu0 0.0
      %3272 = vmatmul.mubr.f32.gmra.mrb[0].mxu0 %v3172
      %v3273 = vpop.f32.mrb[0].mxu0
      %v3274 = vadd.f32 0.0, %v3273
      %v3275 = vpop.f32.mrb[0].mxu0
      %3276 = vmatprep.mubr.f32.mxu0 0.0
      %3277 = vmatmul.mubr.f32.gmra.mrb[0].mxu0 %v3175
      %v3278 = vpop.f32.mrb[0].mxu0
      %v3279 = vadd.f32 0.0, %v3278
      %v3280 = vpop.f32.mrb[0].mxu0
      %3281 = vdwg.mxu0
      %3282 = vrot.lane.b32.xlu0 %v2599, 96
      %v3283 = vpop.permute.xlu0 %3282
      %3284 = vrot.lane.b32.xlu0 %v2604, 96
      %v3285 = vpop.permute.xlu0 %3284
      %3286 = vrot.lane.b32.xlu0 %v2609, 96
      %v3287 = vpop.permute.xlu0 %3286
      %3288 = vrot.lane.b32.xlu0 %v2614, 96
      %v3289 = vpop.permute.xlu0 %3288
      %3290 = vrot.lane.b32.xlu0 %v2619, 96
      %v3291 = vpop.permute.xlu0 %3290
      %3292 = vrot.lane.b32.xlu0 %v2624, 96
      %v3293 = vpop.permute.xlu0 %3292
      %3294 = vrot.lane.b32.xlu0 %v2629, 96
      %v3295 = vpop.permute.xlu0 %3294
      %3296 = vrot.lane.b32.xlu0 %v2634, 96
      %v3297 = vpop.permute.xlu0 %3296
      %v3307 = vsel %vm2952, %v3114, 0
      %v3310 = vsel %vm2952, %v3116, 0
      %v3313 = vsel %vm2952, %v3118, 0
      %v3316 = vsel %vm2952, %v3120, 0
      %v3319 = vsel %vm2952, %v3122, 0
      %v3322 = vsel %vm2952, %v3124, 0
      %v3325 = vsel %vm2952, %v3126, 0
      %v3328 = vsel %vm2952, %v3128, 0
      %3330 = vmatprep.subr.mxu0 0.0
      %3331 = vmatpush1.msra.mxu0 %v3283
      %3332 = vmatprep.subr.mxu0 0.0
      %3333 = vmatpush1.msra.mxu0 %v3285
      %3334 = vmatprep.subr.mxu0 0.0
      %3335 = vmatpush1.msra.mxu0 %v3287
      %3336 = vmatprep.subr.mxu0 0.0
      %3337 = vmatpush1.msra.mxu0 %v3289
      %3338 = vmatprep.subr.mxu0 0.0
      %3339 = vmatpush1.msra.mxu0 %v3291
      %3340 = vmatprep.subr.mxu0 0.0
      %3341 = vmatpush1.msra.mxu0 %v3293
      %3342 = vmatprep.subr.mxu0 0.0
      %3343 = vmatpush1.msra.mxu0 %v3295
      %3344 = vmatprep.subr.mxu0 0.0
      %3345 = vmatpush1.msra.mxu0 %v3297
      %3346 = vmatprep.subr.mxu0 0.0
      %3347 = vmatpush1.msra.mxu0 0.0
      %3348 = vmatprep.subr.mxu0 0.0
      %3349 = vmatpush1.msra.mxu0 0.0
      %3350 = vmatprep.subr.mxu0 0.0
      %3351 = vmatpush1.msra.mxu0 0.0
      %3352 = vmatprep.subr.mxu0 0.0
      %3353 = vmatpush1.msra.mxu0 0.0
      %3354 = vmatprep.subr.mxu0 0.0
      %3355 = vmatpush1.msra.mxu0 0.0
      %3356 = vmatprep.subr.mxu0 0.0
      %3357 = vmatpush1.msra.mxu0 0.0
      %3358 = vmatprep.subr.mxu0 0.0
      %3359 = vmatpush1.msra.mxu0 0.0
      %3360 = vmatprep.subr.mxu0 0.0
      %3361 = vmatpush1.msra.mxu0 0.0
      %3362 = vmatprep.subr.mxu0 0.0
      %3363 = vmatpush1.msra.mxu0 0.0
      %3364 = vmatprep.subr.mxu0 0.0
      %3365 = vmatpush1.msra.mxu0 0.0
      %3366 = vmatprep.subr.mxu0 0.0
      %3367 = vmatpush1.msra.mxu0 0.0
      %3368 = vmatprep.subr.mxu0 0.0
      %3369 = vmatpush1.msra.mxu0 0.0
      %3370 = vmatprep.subr.mxu0 0.0
      %3371 = vmatpush1.msra.mxu0 0.0
      %3372 = vmatprep.subr.mxu0 0.0
      %3373 = vmatpush1.msra.mxu0 0.0
      %3374 = vmatprep.subr.mxu0 0.0
      %3375 = vmatpush1.msra.mxu0 0.0
      %3376 = vmatprep.subr.mxu0 0.0
      %3377 = vmatpush1.msra.mxu0 0.0
      %3378 = vmatprep.subr.mxu0 0.0
      %3379 = vmatpush1.msra.mxu0 0.0
      %3380 = vmatprep.subr.mxu0 0.0
      %3381 = vmatpush1.msra.mxu0 0.0
      %3382 = vmatprep.subr.mxu0 0.0
      %3383 = vmatpush1.msra.mxu0 0.0
      %3384 = vmatprep.subr.mxu0 0.0
      %3385 = vmatpush1.msra.mxu0 0.0
      %3386 = vmatprep.subr.mxu0 0.0
      %3387 = vmatpush1.msra.mxu0 0.0
      %3388 = vmatprep.subr.mxu0 0.0
      %3389 = vmatpush1.msra.mxu0 0.0
      %3390 = vmatprep.subr.mxu0 0.0
      %3391 = vmatpush1.msra.mxu0 0.0
      %3392 = vmatprep.subr.mxu0 0.0
      %3393 = vmatpush1.msra.mxu0 0.0
      %3394 = vmatprep.mubr.f32.mxu0 0.0
      %3395 = vmatmul.mubr.f32.gmra.mrb[0].mxu0 %v3307
      %v3396 = vpop.f32.mrb[0].mxu0
      %v3397 = vadd.f32 0.0, %v3396
      %v3398 = vpop.f32.mrb[0].mxu0
      %3399 = vmatprep.mubr.f32.mxu0 0.0
      %3400 = vmatmul.mubr.f32.gmra.mrb[0].mxu0 %v3310
      %v3401 = vpop.f32.mrb[0].mxu0
      %v3402 = vadd.f32 0.0, %v3401
      %v3403 = vpop.f32.mrb[0].mxu0
      %3404 = vmatprep.mubr.f32.mxu0 0.0
      %3405 = vmatmul.mubr.f32.gmra.mrb[0].mxu0 %v3313
      %v3406 = vpop.f32.mrb[0].mxu0
      %v3407 = vadd.f32 0.0, %v3406
      %v3408 = vpop.f32.mrb[0].mxu0
      %3409 = vmatprep.mubr.f32.mxu0 0.0
      %3410 = vmatmul.mubr.f32.gmra.mrb[0].mxu0 %v3316
      %v3411 = vpop.f32.mrb[0].mxu0
      %v3412 = vadd.f32 0.0, %v3411
      %v3413 = vpop.f32.mrb[0].mxu0
      %3414 = vmatprep.mubr.f32.mxu0 0.0
      %3415 = vmatmul.mubr.f32.gmra.mrb[0].mxu0 %v3319
      %v3416 = vpop.f32.mrb[0].mxu0
      %v3417 = vadd.f32 0.0, %v3416
      %v3418 = vpop.f32.mrb[0].mxu0
      %3419 = vmatprep.mubr.f32.mxu0 0.0
      %3420 = vmatmul.mubr.f32.gmra.mrb[0].mxu0 %v3322
      %v3421 = vpop.f32.mrb[0].mxu0
      %v3422 = vadd.f32 0.0, %v3421
      %v3423 = vpop.f32.mrb[0].mxu0
      %3424 = vmatprep.mubr.f32.mxu0 0.0
      %3425 = vmatmul.mubr.f32.gmra.mrb[0].mxu0 %v3325
      %v3426 = vpop.f32.mrb[0].mxu0
      %v3427 = vadd.f32 0.0, %v3426
      %v3428 = vpop.f32.mrb[0].mxu0
      %3429 = vmatprep.mubr.f32.mxu0 0.0
      %3430 = vmatmul.mubr.f32.gmra.mrb[0].mxu0 %v3328
      %v3431 = vpop.f32.mrb[0].mxu0
      %v3432 = vadd.f32 0.0, %v3431
      %v3433 = vpop.f32.mrb[0].mxu0
      %3434 = vdwg.mxu0
      %v3435 = vld [vmem:[%s10] sm:$0xff]
      %s3436 = scalar_lea.vmem %s9, 64
      %v3437 = vld [vmem:[%s3436] sm:$0xff]
      %v3438 = vld [vmem:[%s3436 + $0x8] sm:$0xff]
      %v3439 = vld [vmem:[%s3436 + $0x10] sm:$0xff]
      %v3440 = vld [vmem:[%s3436 + $0x18] sm:$0xff]
      %v3441 = vld [vmem:[%s3436 + $0x20] sm:$0xff]
      %v3442 = vld [vmem:[%s3436 + $0x28] sm:$0xff]
      %v3443 = vld [vmem:[%s3436 + $0x30] sm:$0xff]
      %v3444 = vld [vmem:[%s3436 + $0x38] sm:$0xff]
      %3445 = vrot.lane.b32.xlu0 %v2465, 120
      %v3446 = vpop.permute.xlu0 %3445
      %3447 = vrot.lane.b32.xlu0 %v2466, 120
      %v3448 = vpop.permute.xlu0 %3447
      %3449 = vrot.lane.b32.xlu0 %v2467, 120
      %v3450 = vpop.permute.xlu0 %3449
      %3451 = vrot.lane.b32.xlu0 %v2468, 120
      %v3452 = vpop.permute.xlu0 %3451
      %3453 = vrot.lane.b32.xlu0 %v2469, 120
      %v3454 = vpop.permute.xlu0 %3453
      %3455 = vrot.lane.b32.xlu0 %v2470, 120
      %v3456 = vpop.permute.xlu0 %3455
      %3457 = vrot.lane.b32.xlu0 %v2471, 120
      %v3458 = vpop.permute.xlu0 %3457
      %3459 = vrot.lane.b32.xlu0 %v2472, 120
      %v3460 = vpop.permute.xlu0 %3459
      %3461 = vrot.lane.b32.xlu0 %v2559, 120
      %v3462 = vpop.permute.xlu0 %3461
      %3463 = vrot.lane.b32.xlu0 %v2564, 120
      %v3464 = vpop.permute.xlu0 %3463
      %3465 = vrot.lane.b32.xlu0 %v2569, 120
      %v3466 = vpop.permute.xlu0 %3465
      %3467 = vrot.lane.b32.xlu0 %v2574, 120
      %v3468 = vpop.permute.xlu0 %3467
      %3469 = vrot.lane.b32.xlu0 %v2579, 120
      %v3470 = vpop.permute.xlu0 %3469
      %3471 = vrot.lane.b32.xlu0 %v2584, 120
      %v3472 = vpop.permute.xlu0 %3471
      %3473 = vrot.lane.b32.xlu0 %v2589, 120
      %v3474 = vpop.permute.xlu0 %3473
      %3475 = vrot.lane.b32.xlu0 %v2594, 120
      %v3476 = vpop.permute.xlu0 %3475
      %v3477 = vsel %vm2645, %v3446, 0
      %v3479 = vsel %vm2645, %v3448, 0
      %v3481 = vsel %vm2645, %v3450, 0
      %v3483 = vsel %vm2645, %v3452, 0
      %v3485 = vsel %vm2645, %v3454, 0
      %v3487 = vsel %vm2645, %v3456, 0
      %v3489 = vsel %vm2645, %v3458, 0
      %v3491 = vsel %vm2645, %v3460, 0
      %v3493 = vsel %vm2645, %v3462, 0
      %v3495 = vsel %vm2645, %v3464, 0
      %v3497 = vsel %vm2645, %v3466, 0
      %v3499 = vsel %vm2645, %v3468, 0
      %v3501 = vsel %vm2645, %v3470, 0
      %v3503 = vsel %vm2645, %v3472, 0
      %v3505 = vsel %vm2645, %v3474, 0
      %v3507 = vsel %vm2645, %v3476, 0
      %3509 = vmatprep.subr.mxu0 0.0
      %3510 = vmatpush1.xpose.msra.mxu0 %v3493
      %3511 = vmatprep.subr.mxu0 0.0
      %3512 = vmatpush1.xpose.msra.mxu0 %v3495
      %3513 = vmatprep.subr.mxu0 0.0
      %3514 = vmatpush1.xpose.msra.mxu0 %v3497
      %3515 = vmatprep.subr.mxu0 0.0
      %3516 = vmatpush1.xpose.msra.mxu0 %v3499
      %3517 = vmatprep.subr.mxu0 0.0
      %3518 = vmatpush1.xpose.msra.mxu0 %v3501
      %3519 = vmatprep.subr.mxu0 0.0
      %3520 = vmatpush1.xpose.msra.mxu0 %v3503
      %3521 = vmatprep.subr.mxu0 0.0
      %3522 = vmatpush1.xpose.msra.mxu0 %v3505
      %3523 = vmatprep.subr.mxu0 0.0
      %3524 = vmatpush1.xpose.msra.mxu0 %v3507
      %3525 = vmatprep.subr.mxu0 0.0
      %3526 = vmatpush1.xpose.msra.mxu0 0.0
      %3527 = vmatprep.subr.mxu0 0.0
      %3528 = vmatpush1.xpose.msra.mxu0 0.0
      %3529 = vmatprep.subr.mxu0 0.0
      %3530 = vmatpush1.xpose.msra.mxu0 0.0
      %3531 = vmatprep.subr.mxu0 0.0
      %3532 = vmatpush1.xpose.msra.mxu0 0.0
      %3533 = vmatprep.subr.mxu0 0.0
      %3534 = vmatpush1.xpose.msra.mxu0 0.0
      %3535 = vmatprep.subr.mxu0 0.0
      %3536 = vmatpush1.xpose.msra.mxu0 0.0
      %3537 = vmatprep.subr.mxu0 0.0
      %3538 = vmatpush1.xpose.msra.mxu0 0.0
      %3539 = vmatprep.subr.mxu0 0.0
      %3540 = vmatpush1.xpose.msra.mxu0 0.0
      %3541 = vmatprep.subr.mxu0 0.0
      %3542 = vmatpush1.xpose.msra.mxu0 0.0
      %3543 = vmatprep.subr.mxu0 0.0
      %3544 = vmatpush1.xpose.msra.mxu0 0.0
      %3545 = vmatprep.subr.mxu0 0.0
      %3546 = vmatpush1.xpose.msra.mxu0 0.0
      %3547 = vmatprep.subr.mxu0 0.0
      %3548 = vmatpush1.xpose.msra.mxu0 0.0
      %3549 = vmatprep.subr.mxu0 0.0
      %3550 = vmatpush1.xpose.msra.mxu0 0.0
      %3551 = vmatprep.subr.mxu0 0.0
      %3552 = vmatpush1.xpose.msra.mxu0 0.0
      %3553 = vmatprep.subr.mxu0 0.0
      %3554 = vmatpush1.xpose.msra.mxu0 0.0
      %3555 = vmatprep.subr.mxu0 0.0
      %3556 = vmatpush1.xpose.msra.mxu0 0.0
      %3557 = vmatprep.subr.mxu0 0.0
      %3558 = vmatpush1.xpose.msra.mxu0 0.0
      %3559 = vmatprep.subr.mxu0 0.0
      %3560 = vmatpush1.xpose.msra.mxu0 0.0
      %3561 = vmatprep.subr.mxu0 0.0
      %3562 = vmatpush1.xpose.msra.mxu0 0.0
      %3563 = vmatprep.subr.mxu0 0.0
      %3564 = vmatpush1.xpose.msra.mxu0 0.0
      %3565 = vmatprep.subr.mxu0 0.0
      %3566 = vmatpush1.xpose.msra.mxu0 0.0
      %3567 = vmatprep.subr.mxu0 0.0
      %3568 = vmatpush1.xpose.msra.mxu0 0.0
      %3569 = vmatprep.subr.mxu0 0.0
      %3570 = vmatpush1.xpose.msra.mxu0 0.0
      %3571 = vmatprep.subr.mxu0 0.0
      %3572 = vmatpush1.xpose.msra.mxu0 0.0
      %3573 = vmatprep.mubr.f32.mxu0 0.0
      %3574 = vmatmul.mubr.f32.gmra.mrb[0].mxu0 %v3477
      %v3575 = vpop.f32.mrb[0].mxu0
      %v3576 = vadd.f32 %v3437, %v3575
      %v3577 = vpop.f32.mrb[0].mxu0
      %3578 = vmatprep.mubr.f32.mxu0 0.0
      %3579 = vmatmul.mubr.f32.gmra.mrb[0].mxu0 %v3479
      %v3580 = vpop.f32.mrb[0].mxu0
      %v3581 = vadd.f32 %v3438, %v3580
      %v3582 = vpop.f32.mrb[0].mxu0
      %3583 = vmatprep.mubr.f32.mxu0 0.0
      %3584 = vmatmul.mubr.f32.gmra.mrb[0].mxu0 %v3481
      %v3585 = vpop.f32.mrb[0].mxu0
      %v3586 = vadd.f32 %v3439, %v3585
      %v3587 = vpop.f32.mrb[0].mxu0
      %3588 = vmatprep.mubr.f32.mxu0 0.0
      %3589 = vmatmul.mubr.f32.gmra.mrb[0].mxu0 %v3483
      %v3590 = vpop.f32.mrb[0].mxu0
      %v3591 = vadd.f32 %v3440, %v3590
      %v3592 = vpop.f32.mrb[0].mxu0
      %3593 = vmatprep.mubr.f32.mxu0 0.0
      %3594 = vmatmul.mubr.f32.gmra.mrb[0].mxu0 %v3485
      %v3595 = vpop.f32.mrb[0].mxu0
      %v3596 = vadd.f32 %v3441, %v3595
      %v3597 = vpop.f32.mrb[0].mxu0
      %3598 = vmatprep.mubr.f32.mxu0 0.0
      %3599 = vmatmul.mubr.f32.gmra.mrb[0].mxu0 %v3487
      %v3600 = vpop.f32.mrb[0].mxu0
      %v3601 = vadd.f32 %v3442, %v3600
      %v3602 = vpop.f32.mrb[0].mxu0
      %3603 = vmatprep.mubr.f32.mxu0 0.0
      %3604 = vmatmul.mubr.f32.gmra.mrb[0].mxu0 %v3489
      %v3605 = vpop.f32.mrb[0].mxu0
      %v3606 = vadd.f32 %v3443, %v3605
      %v3607 = vpop.f32.mrb[0].mxu0
      %3608 = vmatprep.mubr.f32.mxu0 0.0
      %3609 = vmatmul.mubr.f32.gmra.mrb[0].mxu0 %v3491
      %v3610 = vpop.f32.mrb[0].mxu0
      %v3611 = vadd.f32 %v3444, %v3610
      %v3612 = vpop.f32.mrb[0].mxu0
      %3613 = vdwg.mxu0
      %3614 = vrot.lane.b32.xlu0 %v2473, 120
      %v3615 = vpop.permute.xlu0 %3614
      %3616 = vrot.lane.b32.xlu0 %v2474, 120
      %v3617 = vpop.permute.xlu0 %3616
      %3618 = vrot.lane.b32.xlu0 %v2475, 120
      %v3619 = vpop.permute.xlu0 %3618
      %3620 = vrot.lane.b32.xlu0 %v2476, 120
      %v3621 = vpop.permute.xlu0 %3620
      %3622 = vrot.lane.b32.xlu0 %v2477, 120
      %v3623 = vpop.permute.xlu0 %3622
      %3624 = vrot.lane.b32.xlu0 %v2478, 120
      %v3625 = vpop.permute.xlu0 %3624
      %3626 = vrot.lane.b32.xlu0 %v2479, 120
      %v3627 = vpop.permute.xlu0 %3626
      %3628 = vrot.lane.b32.xlu0 %v2480, 120
      %v3629 = vpop.permute.xlu0 %3628
      %3630 = vrot.lane.b32.xlu0 %v2599, 120
      %v3631 = vpop.permute.xlu0 %3630
      %3632 = vrot.lane.b32.xlu0 %v2604, 120
      %v3633 = vpop.permute.xlu0 %3632
      %3634 = vrot.lane.b32.xlu0 %v2609, 120
      %v3635 = vpop.permute.xlu0 %3634
      %3636 = vrot.lane.b32.xlu0 %v2614, 120
      %v3637 = vpop.permute.xlu0 %3636
      %3638 = vrot.lane.b32.xlu0 %v2619, 120
      %v3639 = vpop.permute.xlu0 %3638
      %3640 = vrot.lane.b32.xlu0 %v2624, 120
      %v3641 = vpop.permute.xlu0 %3640
      %3642 = vrot.lane.b32.xlu0 %v2629, 120
      %v3643 = vpop.permute.xlu0 %3642
      %3644 = vrot.lane.b32.xlu0 %v2634, 120
      %v3645 = vpop.permute.xlu0 %3644
      %v3646 = vsel %vm2645, %v3615, 0
      %v3648 = vsel %vm2645, %v3617, 0
      %v3650 = vsel %vm2645, %v3619, 0
      %v3652 = vsel %vm2645, %v3621, 0
      %v3654 = vsel %vm2645, %v3623, 0
      %v3656 = vsel %vm2645, %v3625, 0
      %v3658 = vsel %vm2645, %v3627, 0
      %v3660 = vsel %vm2645, %v3629, 0
      %v3662 = vsel %vm2645, %v3631, 0
      %v3664 = vsel %vm2645, %v3633, 0
      %v3666 = vsel %vm2645, %v3635, 0
      %v3668 = vsel %vm2645, %v3637, 0
      %v3670 = vsel %vm2645, %v3639, 0
      %v3672 = vsel %vm2645, %v3641, 0
      %v3674 = vsel %vm2645, %v3643, 0
      %v3676 = vsel %vm2645, %v3645, 0
      %3678 = vmatprep.subr.mxu0 0.0
      %3679 = vmatpush1.xpose.msra.mxu0 %v3662
      %3680 = vmatprep.subr.mxu0 0.0
      %3681 = vmatpush1.xpose.msra.mxu0 %v3664
      %3682 = vmatprep.subr.mxu0 0.0
      %3683 = vmatpush1.xpose.msra.mxu0 %v3666
      %3684 = vmatprep.subr.mxu0 0.0
      %3685 = vmatpush1.xpose.msra.mxu0 %v3668
      %3686 = vmatprep.subr.mxu0 0.0
      %3687 = vmatpush1.xpose.msra.mxu0 %v3670
      %3688 = vmatprep.subr.mxu0 0.0
      %3689 = vmatpush1.xpose.msra.mxu0 %v3672
      %3690 = vmatprep.subr.mxu0 0.0
      %3691 = vmatpush1.xpose.msra.mxu0 %v3674
      %3692 = vmatprep.subr.mxu0 0.0
      %3693 = vmatpush1.xpose.msra.mxu0 %v3676
      %3694 = vmatprep.subr.mxu0 0.0
      %3695 = vmatpush1.xpose.msra.mxu0 0.0
      %3696 = vmatprep.subr.mxu0 0.0
      %3697 = vmatpush1.xpose.msra.mxu0 0.0
      %3698 = vmatprep.subr.mxu0 0.0
      %3699 = vmatpush1.xpose.msra.mxu0 0.0
      %3700 = vmatprep.subr.mxu0 0.0
      %3701 = vmatpush1.xpose.msra.mxu0 0.0
      %3702 = vmatprep.subr.mxu0 0.0
      %3703 = vmatpush1.xpose.msra.mxu0 0.0
      %3704 = vmatprep.subr.mxu0 0.0
      %3705 = vmatpush1.xpose.msra.mxu0 0.0
      %3706 = vmatprep.subr.mxu0 0.0
      %3707 = vmatpush1.xpose.msra.mxu0 0.0
      %3708 = vmatprep.subr.mxu0 0.0
      %3709 = vmatpush1.xpose.msra.mxu0 0.0
      %3710 = vmatprep.subr.mxu0 0.0
      %3711 = vmatpush1.xpose.msra.mxu0 0.0
      %3712 = vmatprep.subr.mxu0 0.0
      %3713 = vmatpush1.xpose.msra.mxu0 0.0
      %3714 = vmatprep.subr.mxu0 0.0
      %3715 = vmatpush1.xpose.msra.mxu0 0.0
      %3716 = vmatprep.subr.mxu0 0.0
      %3717 = vmatpush1.xpose.msra.mxu0 0.0
      %3718 = vmatprep.subr.mxu0 0.0
      %3719 = vmatpush1.xpose.msra.mxu0 0.0
      %3720 = vmatprep.subr.mxu0 0.0
      %3721 = vmatpush1.xpose.msra.mxu0 0.0
      %3722 = vmatprep.subr.mxu0 0.0
      %3723 = vmatpush1.xpose.msra.mxu0 0.0
      %3724 = vmatprep.subr.mxu0 0.0
      %3725 = vmatpush1.xpose.msra.mxu0 0.0
      %3726 = vmatprep.subr.mxu0 0.0
      %3727 = vmatpush1.xpose.msra.mxu0 0.0
      %3728 = vmatprep.subr.mxu0 0.0
      %3729 = vmatpush1.xpose.msra.mxu0 0.0
      %3730 = vmatprep.subr.mxu0 0.0
      %3731 = vmatpush1.xpose.msra.mxu0 0.0
      %3732 = vmatprep.subr.mxu0 0.0
      %3733 = vmatpush1.xpose.msra.mxu0 0.0
      %3734 = vmatprep.subr.mxu0 0.0
      %3735 = vmatpush1.xpose.msra.mxu0 0.0
      %3736 = vmatprep.subr.mxu0 0.0
      %3737 = vmatpush1.xpose.msra.mxu0 0.0
      %3738 = vmatprep.subr.mxu0 0.0
      %3739 = vmatpush1.xpose.msra.mxu0 0.0
      %3740 = vmatprep.subr.mxu0 0.0
      %3741 = vmatpush1.xpose.msra.mxu0 0.0
      %3742 = vmatprep.mubr.f32.mxu0 0.0
      %3743 = vmatmul.mubr.f32.gmra.mrb[0].mxu0 %v3646
      %v3744 = vpop.f32.mrb[0].mxu0
      %v3745 = vadd.f32 %v3437, %v3744
      %v3746 = vpop.f32.mrb[0].mxu0
      %3747 = vmatprep.mubr.f32.mxu0 0.0
      %3748 = vmatmul.mubr.f32.gmra.mrb[0].mxu0 %v3648
      %v3749 = vpop.f32.mrb[0].mxu0
      %v3750 = vadd.f32 %v3438, %v3749
      %v3751 = vpop.f32.mrb[0].mxu0
      %3752 = vmatprep.mubr.f32.mxu0 0.0
      %3753 = vmatmul.mubr.f32.gmra.mrb[0].mxu0 %v3650
      %v3754 = vpop.f32.mrb[0].mxu0
      %v3755 = vadd.f32 %v3439, %v3754
      %v3756 = vpop.f32.mrb[0].mxu0
      %3757 = vmatprep.mubr.f32.mxu0 0.0
      %3758 = vmatmul.mubr.f32.gmra.mrb[0].mxu0 %v3652
      %v3759 = vpop.f32.mrb[0].mxu0
      %v3760 = vadd.f32 %v3440, %v3759
      %v3761 = vpop.f32.mrb[0].mxu0
      %3762 = vmatprep.mubr.f32.mxu0 0.0
      %3763 = vmatmul.mubr.f32.gmra.mrb[0].mxu0 %v3654
      %v3764 = vpop.f32.mrb[0].mxu0
      %v3765 = vadd.f32 %v3441, %v3764
      %v3766 = vpop.f32.mrb[0].mxu0
      %3767 = vmatprep.mubr.f32.mxu0 0.0
      %3768 = vmatmul.mubr.f32.gmra.mrb[0].mxu0 %v3656
      %v3769 = vpop.f32.mrb[0].mxu0
      %v3770 = vadd.f32 %v3442, %v3769
      %v3771 = vpop.f32.mrb[0].mxu0
      %3772 = vmatprep.mubr.f32.mxu0 0.0
      %3773 = vmatmul.mubr.f32.gmra.mrb[0].mxu0 %v3658
      %v3774 = vpop.f32.mrb[0].mxu0
      %v3775 = vadd.f32 %v3443, %v3774
      %v3776 = vpop.f32.mrb[0].mxu0
      %3777 = vmatprep.mubr.f32.mxu0 0.0
      %3778 = vmatmul.mubr.f32.gmra.mrb[0].mxu0 %v3660
      %v3779 = vpop.f32.mrb[0].mxu0
      %v3780 = vadd.f32 %v3444, %v3779
      %v3781 = vpop.f32.mrb[0].mxu0
      %3782 = vdwg.mxu0
      %v3783 = vsel %vm2952, %v3576, -inf
      %3784 = vmax.xlane.f32.xlu0 %v3783
      %v3785 = vpop.xlane.xlu0 %3784
      %v3786 = vsel %vm2952, %v3581, -inf
      %3787 = vmax.xlane.f32.xlu0 %v3786
      %v3788 = vpop.xlane.xlu0 %3787
      %v3789 = vsel %vm2952, %v3586, -inf
      %3790 = vmax.xlane.f32.xlu0 %v3789
      %v3791 = vpop.xlane.xlu0 %3790
      %v3792 = vsel %vm2952, %v3591, -inf
      %3793 = vmax.xlane.f32.xlu0 %v3792
      %v3794 = vpop.xlane.xlu0 %3793
      %v3795 = vsel %vm2952, %v3596, -inf
      %3796 = vmax.xlane.f32.xlu0 %v3795
      %v3797 = vpop.xlane.xlu0 %3796
      %v3798 = vsel %vm2952, %v3601, -inf
      %3799 = vmax.xlane.f32.xlu0 %v3798
      %v3800 = vpop.xlane.xlu0 %3799
      %v3801 = vsel %vm2952, %v3606, -inf
      %3802 = vmax.xlane.f32.xlu0 %v3801
      %v3803 = vpop.xlane.xlu0 %3802
      %v3804 = vsel %vm2952, %v3611, -inf
      %3805 = vmax.xlane.f32.xlu0 %v3804
      %v3806 = vpop.xlane.xlu0 %3805
      %v3807 = vsel %vm2952, %v3745, -inf
      %3808 = vmax.xlane.f32.xlu0 %v3807
      %v3809 = vpop.xlane.xlu0 %3808
      %v3810 = vsel %vm2952, %v3750, -inf
      %3811 = vmax.xlane.f32.xlu0 %v3810
      %v3812 = vpop.xlane.xlu0 %3811
      %v3813 = vsel %vm2952, %v3755, -inf
      %3814 = vmax.xlane.f32.xlu0 %v3813
      %v3815 = vpop.xlane.xlu0 %3814
      %v3816 = vsel %vm2952, %v3760, -inf
      %3817 = vmax.xlane.f32.xlu0 %v3816
      %v3818 = vpop.xlane.xlu0 %3817
      %v3819 = vsel %vm2952, %v3765, -inf
      %3820 = vmax.xlane.f32.xlu0 %v3819
      %v3821 = vpop.xlane.xlu0 %3820
      %v3822 = vsel %vm2952, %v3770, -inf
      %3823 = vmax.xlane.f32.xlu0 %v3822
      %v3824 = vpop.xlane.xlu0 %3823
      %v3825 = vsel %vm2952, %v3775, -inf
      %3826 = vmax.xlane.f32.xlu0 %v3825
      %v3827 = vpop.xlane.xlu0 %3826
      %v3828 = vsel %vm2952, %v3780, -inf
      %3829 = vmax.xlane.f32.xlu0 %v3828
      %v3830 = vpop.xlane.xlu0 %3829
      %v3831 = vsub.f32 %v3576, %v3785
      %v3832 = vsub.f32 %v3581, %v3788
      %v3833 = vsub.f32 %v3586, %v3791
      %v3834 = vsub.f32 %v3591, %v3794
      %v3835 = vsub.f32 %v3596, %v3797
      %v3836 = vsub.f32 %v3601, %v3800
      %v3837 = vsub.f32 %v3606, %v3803
      %v3838 = vsub.f32 %v3611, %v3806
      %v3839 = vsub.f32 %v3745, %v3809
      %v3840 = vsub.f32 %v3750, %v3812
      %v3841 = vsub.f32 %v3755, %v3815
      %v3842 = vsub.f32 %v3760, %v3818
      %v3843 = vsub.f32 %v3765, %v3821
      %v3844 = vsub.f32 %v3770, %v3824
      %v3845 = vsub.f32 %v3775, %v3827
      %v3846 = vsub.f32 %v3780, %v3830
      %v3847 = vmul.f32 %v3831, 1.442695
      %v3848 = vpow.pop %v3847
      %v3849 = vmul.f32 %v3832, 1.442695
      %v3850 = vpow.pop %v3849
      %v3851 = vmul.f32 %v3833, 1.442695
      %v3852 = vpow.pop %v3851
      %v3853 = vmul.f32 %v3834, 1.442695
      %v3854 = vpow.pop %v3853
      %v3855 = vmul.f32 %v3835, 1.442695
      %v3856 = vpow.pop %v3855
      %v3857 = vmul.f32 %v3836, 1.442695
      %v3858 = vpow.pop %v3857
      %v3859 = vmul.f32 %v3837, 1.442695
      %v3860 = vpow.pop %v3859
      %v3861 = vmul.f32 %v3838, 1.442695
      %v3862 = vpow.pop %v3861
      %v3863 = vmul.f32 %v3839, 1.442695
      %v3864 = vpow.pop %v3863
      %v3865 = vmul.f32 %v3840, 1.442695
      %v3866 = vpow.pop %v3865
      %v3867 = vmul.f32 %v3841, 1.442695
      %v3868 = vpow.pop %v3867
      %v3869 = vmul.f32 %v3842, 1.442695
      %v3870 = vpow.pop %v3869
      %v3871 = vmul.f32 %v3843, 1.442695
      %v3872 = vpow.pop %v3871
      %v3873 = vmul.f32 %v3844, 1.442695
      %v3874 = vpow.pop %v3873
      %v3875 = vmul.f32 %v3845, 1.442695
      %v3876 = vpow.pop %v3875
      %v3877 = vmul.f32 %v3846, 1.442695
      %v3878 = vpow.pop %v3877
      %v3879 = vsel %vm2952, %v3848, 0.0
      %3880 = vadd.xlane.f32.xlu0 %v3879
      %v3881 = vpop.xlane.xlu0 %3880
      %v3882 = vsel %vm2952, %v3850, 0.0
      %3883 = vadd.xlane.f32.xlu0 %v3882
      %v3884 = vpop.xlane.xlu0 %3883
      %v3885 = vsel %vm2952, %v3852, 0.0
      %3886 = vadd.xlane.f32.xlu0 %v3885
      %v3887 = vpop.xlane.xlu0 %3886
      %v3888 = vsel %vm2952, %v3854, 0.0
      %3889 = vadd.xlane.f32.xlu0 %v3888
      %v3890 = vpop.xlane.xlu0 %3889
      %v3891 = vsel %vm2952, %v3856, 0.0
      %3892 = vadd.xlane.f32.xlu0 %v3891
      %v3893 = vpop.xlane.xlu0 %3892
      %v3894 = vsel %vm2952, %v3858, 0.0
      %3895 = vadd.xlane.f32.xlu0 %v3894
      %v3896 = vpop.xlane.xlu0 %3895
      %v3897 = vsel %vm2952, %v3860, 0.0
      %3898 = vadd.xlane.f32.xlu0 %v3897
      %v3899 = vpop.xlane.xlu0 %3898
      %v3900 = vsel %vm2952, %v3862, 0.0
      %3901 = vadd.xlane.f32.xlu0 %v3900
      %v3902 = vpop.xlane.xlu0 %3901
      %v3903 = vsel %vm2952, %v3864, 0.0
      %3904 = vadd.xlane.f32.xlu0 %v3903
      %v3905 = vpop.xlane.xlu0 %3904
      %v3906 = vsel %vm2952, %v3866, 0.0
      %3907 = vadd.xlane.f32.xlu0 %v3906
      %v3908 = vpop.xlane.xlu0 %3907
      %v3909 = vsel %vm2952, %v3868, 0.0
      %3910 = vadd.xlane.f32.xlu0 %v3909
      %v3911 = vpop.xlane.xlu0 %3910
      %v3912 = vsel %vm2952, %v3870, 0.0
      %3913 = vadd.xlane.f32.xlu0 %v3912
      %v3914 = vpop.xlane.xlu0 %3913
      %v3915 = vsel %vm2952, %v3872, 0.0
      %3916 = vadd.xlane.f32.xlu0 %v3915
      %v3917 = vpop.xlane.xlu0 %3916
      %v3918 = vsel %vm2952, %v3874, 0.0
      %3919 = vadd.xlane.f32.xlu0 %v3918
      %v3920 = vpop.xlane.xlu0 %3919
      %v3921 = vsel %vm2952, %v3876, 0.0
      %3922 = vadd.xlane.f32.xlu0 %v3921
      %v3923 = vpop.xlane.xlu0 %3922
      %v3924 = vsel %vm2952, %v3878, 0.0
      %3925 = vadd.xlane.f32.xlu0 %v3924
      %v3926 = vpop.xlane.xlu0 %3925
      %v3927 = vrcp.pop %v3881
      %v3928 = vmul.f32 %v3848, %v3927
      %v3929 = vrcp.pop %v3884
      %v3930 = vmul.f32 %v3850, %v3929
      %v3931 = vrcp.pop %v3887
      %v3932 = vmul.f32 %v3852, %v3931
      %v3933 = vrcp.pop %v3890
      %v3934 = vmul.f32 %v3854, %v3933
      %v3935 = vrcp.pop %v3893
      %v3936 = vmul.f32 %v3856, %v3935
      %v3937 = vrcp.pop %v3896
      %v3938 = vmul.f32 %v3858, %v3937
      %v3939 = vrcp.pop %v3899
      %v3940 = vmul.f32 %v3860, %v3939
      %v3941 = vrcp.pop %v3902
      %v3942 = vmul.f32 %v3862, %v3941
      %v3943 = vrcp.pop %v3905
      %v3944 = vmul.f32 %v3864, %v3943
      %v3945 = vrcp.pop %v3908
      %v3946 = vmul.f32 %v3866, %v3945
      %v3947 = vrcp.pop %v3911
      %v3948 = vmul.f32 %v3868, %v3947
      %v3949 = vrcp.pop %v3914
      %v3950 = vmul.f32 %v3870, %v3949
      %v3951 = vrcp.pop %v3917
      %v3952 = vmul.f32 %v3872, %v3951
      %v3953 = vrcp.pop %v3920
      %v3954 = vmul.f32 %v3874, %v3953
      %v3955 = vrcp.pop %v3923
      %v3956 = vmul.f32 %v3876, %v3955
      %v3957 = vrcp.pop %v3926
      %v3958 = vmul.f32 %v3878, %v3957
      %3959 = vrot.lane.b32.xlu0 %v2559, 88
      %v3960 = vpop.permute.xlu0 %3959
      %3961 = vrot.lane.b32.xlu0 %v2564, 88
      %v3962 = vpop.permute.xlu0 %3961
      %3963 = vrot.lane.b32.xlu0 %v2569, 88
      %v3964 = vpop.permute.xlu0 %3963
      %3965 = vrot.lane.b32.xlu0 %v2574, 88
      %v3966 = vpop.permute.xlu0 %3965
      %3967 = vrot.lane.b32.xlu0 %v2579, 88
      %v3968 = vpop.permute.xlu0 %3967
      %3969 = vrot.lane.b32.xlu0 %v2584, 88
      %v3970 = vpop.permute.xlu0 %3969
      %3971 = vrot.lane.b32.xlu0 %v2589, 88
      %v3972 = vpop.permute.xlu0 %3971
      %3973 = vrot.lane.b32.xlu0 %v2594, 88
      %v3974 = vpop.permute.xlu0 %3973
      %v3984 = vsel %vm2952, %v3928, 0
      %v3987 = vsel %vm2952, %v3930, 0
      %v3990 = vsel %vm2952, %v3932, 0
      %v3993 = vsel %vm2952, %v3934, 0
      %v3996 = vsel %vm2952, %v3936, 0
      %v3999 = vsel %vm2952, %v3938, 0
      %v4002 = vsel %vm2952, %v3940, 0
      %v4005 = vsel %vm2952, %v3942, 0
      %4007 = vmatprep.subr.mxu0 0.0
      %4008 = vmatpush1.msra.mxu0 %v3960
      %4009 = vmatprep.subr.mxu0 0.0
      %4010 = vmatpush1.msra.mxu0 %v3962
      %4011 = vmatprep.subr.mxu0 0.0
      %4012 = vmatpush1.msra.mxu0 %v3964
      %4013 = vmatprep.subr.mxu0 0.0
      %4014 = vmatpush1.msra.mxu0 %v3966
      %4015 = vmatprep.subr.mxu0 0.0
      %4016 = vmatpush1.msra.mxu0 %v3968
      %4017 = vmatprep.subr.mxu0 0.0
      %4018 = vmatpush1.msra.mxu0 %v3970
      %4019 = vmatprep.subr.mxu0 0.0
      %4020 = vmatpush1.msra.mxu0 %v3972
      %4021 = vmatprep.subr.mxu0 0.0
      %4022 = vmatpush1.msra.mxu0 %v3974
      %4023 = vmatprep.subr.mxu0 0.0
      %4024 = vmatpush1.msra.mxu0 0.0
      %4025 = vmatprep.subr.mxu0 0.0
      %4026 = vmatpush1.msra.mxu0 0.0
      %4027 = vmatprep.subr.mxu0 0.0
      %4028 = vmatpush1.msra.mxu0 0.0
      %4029 = vmatprep.subr.mxu0 0.0
      %4030 = vmatpush1.msra.mxu0 0.0
      %4031 = vmatprep.subr.mxu0 0.0
      %4032 = vmatpush1.msra.mxu0 0.0
      %4033 = vmatprep.subr.mxu0 0.0
      %4034 = vmatpush1.msra.mxu0 0.0
      %4035 = vmatprep.subr.mxu0 0.0
      %4036 = vmatpush1.msra.mxu0 0.0
      %4037 = vmatprep.subr.mxu0 0.0
      %4038 = vmatpush1.msra.mxu0 0.0
      %4039 = vmatprep.subr.mxu0 0.0
      %4040 = vmatpush1.msra.mxu0 0.0
      %4041 = vmatprep.subr.mxu0 0.0
      %4042 = vmatpush1.msra.mxu0 0.0
      %4043 = vmatprep.subr.mxu0 0.0
      %4044 = vmatpush1.msra.mxu0 0.0
      %4045 = vmatprep.subr.mxu0 0.0
      %4046 = vmatpush1.msra.mxu0 0.0
      %4047 = vmatprep.subr.mxu0 0.0
      %4048 = vmatpush1.msra.mxu0 0.0
      %4049 = vmatprep.subr.mxu0 0.0
      %4050 = vmatpush1.msra.mxu0 0.0
      %4051 = vmatprep.subr.mxu0 0.0
      %4052 = vmatpush1.msra.mxu0 0.0
      %4053 = vmatprep.subr.mxu0 0.0
      %4054 = vmatpush1.msra.mxu0 0.0
      %4055 = vmatprep.subr.mxu0 0.0
      %4056 = vmatpush1.msra.mxu0 0.0
      %4057 = vmatprep.subr.mxu0 0.0
      %4058 = vmatpush1.msra.mxu0 0.0
      %4059 = vmatprep.subr.mxu0 0.0
      %4060 = vmatpush1.msra.mxu0 0.0
      %4061 = vmatprep.subr.mxu0 0.0
      %4062 = vmatpush1.msra.mxu0 0.0
      %4063 = vmatprep.subr.mxu0 0.0
      %4064 = vmatpush1.msra.mxu0 0.0
      %4065 = vmatprep.subr.mxu0 0.0
      %4066 = vmatpush1.msra.mxu0 0.0
      %4067 = vmatprep.subr.mxu0 0.0
      %4068 = vmatpush1.msra.mxu0 0.0
      %4069 = vmatprep.subr.mxu0 0.0
      %4070 = vmatpush1.msra.mxu0 0.0
      %4071 = vmatprep.mubr.f32.mxu0 0.0
      %4072 = vmatmul.mubr.f32.gmra.mrb[0].mxu0 %v3984
      %v4073 = vpop.f32.mrb[0].mxu0
      %v4074 = vadd.f32 0.0, %v4073
      %v4075 = vpop.f32.mrb[0].mxu0
      %4076 = vmatprep.mubr.f32.mxu0 0.0
      %4077 = vmatmul.mubr.f32.gmra.mrb[0].mxu0 %v3987
      %v4078 = vpop.f32.mrb[0].mxu0
      %v4079 = vadd.f32 0.0, %v4078
      %v4080 = vpop.f32.mrb[0].mxu0
      %4081 = vmatprep.mubr.f32.mxu0 0.0
      %4082 = vmatmul.mubr.f32.gmra.mrb[0].mxu0 %v3990
      %v4083 = vpop.f32.mrb[0].mxu0
      %v4084 = vadd.f32 0.0, %v4083
      %v4085 = vpop.f32.mrb[0].mxu0
      %4086 = vmatprep.mubr.f32.mxu0 0.0
      %4087 = vmatmul.mubr.f32.gmra.mrb[0].mxu0 %v3993
      %v4088 = vpop.f32.mrb[0].mxu0
      %v4089 = vadd.f32 0.0, %v4088
      %v4090 = vpop.f32.mrb[0].mxu0
      %4091 = vmatprep.mubr.f32.mxu0 0.0
      %4092 = vmatmul.mubr.f32.gmra.mrb[0].mxu0 %v3996
      %v4093 = vpop.f32.mrb[0].mxu0
      %v4094 = vadd.f32 0.0, %v4093
      %v4095 = vpop.f32.mrb[0].mxu0
      %4096 = vmatprep.mubr.f32.mxu0 0.0
      %4097 = vmatmul.mubr.f32.gmra.mrb[0].mxu0 %v3999
      %v4098 = vpop.f32.mrb[0].mxu0
      %v4099 = vadd.f32 0.0, %v4098
      %v4100 = vpop.f32.mrb[0].mxu0
      %4101 = vmatprep.mubr.f32.mxu0 0.0
      %4102 = vmatmul.mubr.f32.gmra.mrb[0].mxu0 %v4002
      %v4103 = vpop.f32.mrb[0].mxu0
      %v4104 = vadd.f32 0.0, %v4103
      %v4105 = vpop.f32.mrb[0].mxu0
      %4106 = vmatprep.mubr.f32.mxu0 0.0
      %4107 = vmatmul.mubr.f32.gmra.mrb[0].mxu0 %v4005
      %v4108 = vpop.f32.mrb[0].mxu0
      %v4109 = vadd.f32 0.0, %v4108
      %v4110 = vpop.f32.mrb[0].mxu0
      %4111 = vdwg.mxu0
      %4112 = vrot.lane.b32.xlu0 %v2599, 88
      %v4113 = vpop.permute.xlu0 %4112
      %4114 = vrot.lane.b32.xlu0 %v2604, 88
      %v4115 = vpop.permute.xlu0 %4114
      %4116 = vrot.lane.b32.xlu0 %v2609, 88
      %v4117 = vpop.permute.xlu0 %4116
      %4118 = vrot.lane.b32.xlu0 %v2614, 88
      %v4119 = vpop.permute.xlu0 %4118
      %4120 = vrot.lane.b32.xlu0 %v2619, 88
      %v4121 = vpop.permute.xlu0 %4120
      %4122 = vrot.lane.b32.xlu0 %v2624, 88
      %v4123 = vpop.permute.xlu0 %4122
      %4124 = vrot.lane.b32.xlu0 %v2629, 88
      %v4125 = vpop.permute.xlu0 %4124
      %4126 = vrot.lane.b32.xlu0 %v2634, 88
      %v4127 = vpop.permute.xlu0 %4126
      %v4137 = vsel %vm2952, %v3944, 0
      %v4140 = vsel %vm2952, %v3946, 0
      %v4143 = vsel %vm2952, %v3948, 0
      %v4146 = vsel %vm2952, %v3950, 0
      %v4149 = vsel %vm2952, %v3952, 0
      %v4152 = vsel %vm2952, %v3954, 0
      %v4155 = vsel %vm2952, %v3956, 0
      %v4158 = vsel %vm2952, %v3958, 0
      %4160 = vmatprep.subr.mxu0 0.0
      %4161 = vmatpush1.msra.mxu0 %v4113
      %4162 = vmatprep.subr.mxu0 0.0
      %4163 = vmatpush1.msra.mxu0 %v4115
      %4164 = vmatprep.subr.mxu0 0.0
      %4165 = vmatpush1.msra.mxu0 %v4117
      %4166 = vmatprep.subr.mxu0 0.0
      %4167 = vmatpush1.msra.mxu0 %v4119
      %4168 = vmatprep.subr.mxu0 0.0
      %4169 = vmatpush1.msra.mxu0 %v4121
      %4170 = vmatprep.subr.mxu0 0.0
      %4171 = vmatpush1.msra.mxu0 %v4123
      %4172 = vmatprep.subr.mxu0 0.0
      %4173 = vmatpush1.msra.mxu0 %v4125
      %4174 = vmatprep.subr.mxu0 0.0
      %4175 = vmatpush1.msra.mxu0 %v4127
      %4176 = vmatprep.subr.mxu0 0.0
      %4177 = vmatpush1.msra.mxu0 0.0
      %4178 = vmatprep.subr.mxu0 0.0
      %4179 = vmatpush1.msra.mxu0 0.0
      %4180 = vmatprep.subr.mxu0 0.0
      %4181 = vmatpush1.msra.mxu0 0.0
      %4182 = vmatprep.subr.mxu0 0.0
      %4183 = vmatpush1.msra.mxu0 0.0
      %4184 = vmatprep.subr.mxu0 0.0
      %4185 = vmatpush1.msra.mxu0 0.0
      %4186 = vmatprep.subr.mxu0 0.0
      %4187 = vmatpush1.msra.mxu0 0.0
      %4188 = vmatprep.subr.mxu0 0.0
      %4189 = vmatpush1.msra.mxu0 0.0
      %4190 = vmatprep.subr.mxu0 0.0
      %4191 = vmatpush1.msra.mxu0 0.0
      %4192 = vmatprep.subr.mxu0 0.0
      %4193 = vmatpush1.msra.mxu0 0.0
      %4194 = vmatprep.subr.mxu0 0.0
      %4195 = vmatpush1.msra.mxu0 0.0
      %4196 = vmatprep.subr.mxu0 0.0
      %4197 = vmatpush1.msra.mxu0 0.0
      %4198 = vmatprep.subr.mxu0 0.0
      %4199 = vmatpush1.msra.mxu0 0.0
      %4200 = vmatprep.subr.mxu0 0.0
      %4201 = vmatpush1.msra.mxu0 0.0
      %4202 = vmatprep.subr.mxu0 0.0
      %4203 = vmatpush1.msra.mxu0 0.0
      %4204 = vmatprep.subr.mxu0 0.0
      %4205 = vmatpush1.msra.mxu0 0.0
      %4206 = vmatprep.subr.mxu0 0.0
      %4207 = vmatpush1.msra.mxu0 0.0
      %4208 = vmatprep.subr.mxu0 0.0
      %4209 = vmatpush1.msra.mxu0 0.0
      %4210 = vmatprep.subr.mxu0 0.0
      %4211 = vmatpush1.msra.mxu0 0.0
      %4212 = vmatprep.subr.mxu0 0.0
      %4213 = vmatpush1.msra.mxu0 0.0
      %4214 = vmatprep.subr.mxu0 0.0
      %4215 = vmatpush1.msra.mxu0 0.0
      %4216 = vmatprep.subr.mxu0 0.0
      %4217 = vmatpush1.msra.mxu0 0.0
      %4218 = vmatprep.subr.mxu0 0.0
      %4219 = vmatpush1.msra.mxu0 0.0
      %4220 = vmatprep.subr.mxu0 0.0
      %4221 = vmatpush1.msra.mxu0 0.0
      %4222 = vmatprep.subr.mxu0 0.0
      %4223 = vmatpush1.msra.mxu0 0.0
      %4224 = vmatprep.mubr.f32.mxu0 0.0
      %4225 = vmatmul.mubr.f32.gmra.mrb[0].mxu0 %v4137
      %v4226 = vpop.f32.mrb[0].mxu0
      %v4227 = vadd.f32 0.0, %v4226
      %v4228 = vpop.f32.mrb[0].mxu0
      %4229 = vmatprep.mubr.f32.mxu0 0.0
      %4230 = vmatmul.mubr.f32.gmra.mrb[0].mxu0 %v4140
      %v4231 = vpop.f32.mrb[0].mxu0
      %v4232 = vadd.f32 0.0, %v4231
      %v4233 = vpop.f32.mrb[0].mxu0
      %4234 = vmatprep.mubr.f32.mxu0 0.0
      %4235 = vmatmul.mubr.f32.gmra.mrb[0].mxu0 %v4143
      %v4236 = vpop.f32.mrb[0].mxu0
      %v4237 = vadd.f32 0.0, %v4236
      %v4238 = vpop.f32.mrb[0].mxu0
      %4239 = vmatprep.mubr.f32.mxu0 0.0
      %4240 = vmatmul.mubr.f32.gmra.mrb[0].mxu0 %v4146
      %v4241 = vpop.f32.mrb[0].mxu0
      %v4242 = vadd.f32 0.0, %v4241
      %v4243 = vpop.f32.mrb[0].mxu0
      %4244 = vmatprep.mubr.f32.mxu0 0.0
      %4245 = vmatmul.mubr.f32.gmra.mrb[0].mxu0 %v4149
      %v4246 = vpop.f32.mrb[0].mxu0
      %v4247 = vadd.f32 0.0, %v4246
      %v4248 = vpop.f32.mrb[0].mxu0
      %4249 = vmatprep.mubr.f32.mxu0 0.0
      %4250 = vmatmul.mubr.f32.gmra.mrb[0].mxu0 %v4152
      %v4251 = vpop.f32.mrb[0].mxu0
      %v4252 = vadd.f32 0.0, %v4251
      %v4253 = vpop.f32.mrb[0].mxu0
      %4254 = vmatprep.mubr.f32.mxu0 0.0
      %4255 = vmatmul.mubr.f32.gmra.mrb[0].mxu0 %v4155
      %v4256 = vpop.f32.mrb[0].mxu0
      %v4257 = vadd.f32 0.0, %v4256
      %v4258 = vpop.f32.mrb[0].mxu0
      %4259 = vmatprep.mubr.f32.mxu0 0.0
      %4260 = vmatmul.mubr.f32.gmra.mrb[0].mxu0 %v4158
      %v4261 = vpop.f32.mrb[0].mxu0
      %v4262 = vadd.f32 0.0, %v4261
      %v4263 = vpop.f32.mrb[0].mxu0
      %4264 = vdwg.mxu0
      %v4265 = vld [vmem:[%s10 + $0x8] sm:$0xff]
      %v4267 = vsel %vm2645, %v4074, 0
      %v4270 = vsel %vm2645, %v4079, 0
      %v4273 = vsel %vm2645, %v4084, 0
      %v4276 = vsel %vm2645, %v4089, 0
      %v4279 = vsel %vm2645, %v4094, 0
      %v4282 = vsel %vm2645, %v4099, 0
      %v4285 = vsel %vm2645, %v4104, 0
      %v4288 = vsel %vm2645, %v4109, 0
      %v4291 = vsel %vm2645, %v4227, 0
      %v4294 = vsel %vm2645, %v4232, 0
      %v4297 = vsel %vm2645, %v4237, 0
      %v4300 = vsel %vm2645, %v4242, 0
      %v4303 = vsel %vm2645, %v4247, 0
      %v4306 = vsel %vm2645, %v4252, 0
      %v4309 = vsel %vm2645, %v4257, 0
      %v4312 = vsel %vm2645, %v4262, 0
      %4314 = vmatprep.subr.mxu0 0.0
      %4315 = vmatpush1.msra.mxu0 %v4265
      %4316 = vmatprep.subr.mxu0 0.0
      %4317 = vmatpush1.msra.mxu0 0.0
      %4318 = vmatprep.subr.mxu0 0.0
      %4319 = vmatpush1.msra.mxu0 0.0
      %4320 = vmatprep.subr.mxu0 0.0
      %4321 = vmatpush1.msra.mxu0 0.0
      %4322 = vmatprep.subr.mxu0 0.0
      %4323 = vmatpush1.msra.mxu0 0.0
      %4324 = vmatprep.subr.mxu0 0.0
      %4325 = vmatpush1.msra.mxu0 0.0
      %4326 = vmatprep.subr.mxu0 0.0
      %4327 = vmatpush1.msra.mxu0 0.0
      %4328 = vmatprep.subr.mxu0 0.0
      %4329 = vmatpush1.msra.mxu0 0.0
      %4330 = vmatprep.subr.mxu0 0.0
      %4331 = vmatpush1.msra.mxu0 0.0
      %4332 = vmatprep.subr.mxu0 0.0
      %4333 = vmatpush1.msra.mxu0 0.0
      %4334 = vmatprep.subr.mxu0 0.0
      %4335 = vmatpush1.msra.mxu0 0.0
      %4336 = vmatprep.subr.mxu0 0.0
      %4337 = vmatpush1.msra.mxu0 0.0
      %4338 = vmatprep.subr.mxu0 0.0
      %4339 = vmatpush1.msra.mxu0 0.0
      %4340 = vmatprep.subr.mxu0 0.0
      %4341 = vmatpush1.msra.mxu0 0.0
      %4342 = vmatprep.subr.mxu0 0.0
      %4343 = vmatpush1.msra.mxu0 0.0
      %4344 = vmatprep.subr.mxu0 0.0
      %4345 = vmatpush1.msra.mxu0 0.0
      %4346 = vmatprep.subr.mxu0 0.0
      %4347 = vmatpush1.msra.mxu0 0.0
      %4348 = vmatprep.subr.mxu0 0.0
      %4349 = vmatpush1.msra.mxu0 0.0
      %4350 = vmatprep.subr.mxu0 0.0
      %4351 = vmatpush1.msra.mxu0 0.0
      %4352 = vmatprep.subr.mxu0 0.0
      %4353 = vmatpush1.msra.mxu0 0.0
      %4354 = vmatprep.subr.mxu0 0.0
      %4355 = vmatpush1.msra.mxu0 0.0
      %4356 = vmatprep.subr.mxu0 0.0
      %4357 = vmatpush1.msra.mxu0 0.0
      %4358 = vmatprep.subr.mxu0 0.0
      %4359 = vmatpush1.msra.mxu0 0.0
      %4360 = vmatprep.subr.mxu0 0.0
      %4361 = vmatpush1.msra.mxu0 0.0
      %4362 = vmatprep.subr.mxu0 0.0
      %4363 = vmatpush1.msra.mxu0 0.0
      %4364 = vmatprep.subr.mxu0 0.0
      %4365 = vmatpush1.msra.mxu0 0.0
      %4366 = vmatprep.subr.mxu0 0.0
      %4367 = vmatpush1.msra.mxu0 0.0
      %4368 = vmatprep.subr.mxu0 0.0
      %4369 = vmatpush1.msra.mxu0 0.0
      %4370 = vmatprep.subr.mxu0 0.0
      %4371 = vmatpush1.msra.mxu0 0.0
      %4372 = vmatprep.subr.mxu0 0.0
      %4373 = vmatpush1.msra.mxu0 0.0
      %4374 = vmatprep.subr.mxu0 0.0
      %4375 = vmatpush1.msra.mxu0 0.0
      %4376 = vmatprep.subr.mxu0 0.0
      %4377 = vmatpush1.msra.mxu0 0.0
      %4378 = vmatprep.mubr.f32.mxu0 0.0
      %4379 = vmatmul.mubr.f32.gmra.mrb[0].mxu0 %v4267
      %v4380 = vpop.f32.mrb[0].mxu0
      %v4381 = vadd.f32 0.0, %v4380
      %v4382 = vpop.f32.mrb[0].mxu0
      %4383 = vmatprep.mubr.f32.mxu0 0.0
      %4384 = vmatmul.mubr.f32.gmra.mrb[0].mxu0 %v4270
      %v4385 = vpop.f32.mrb[0].mxu0
      %v4386 = vadd.f32 0.0, %v4385
      %v4387 = vpop.f32.mrb[0].mxu0
      %4388 = vmatprep.mubr.f32.mxu0 0.0
      %4389 = vmatmul.mubr.f32.gmra.mrb[0].mxu0 %v4273
      %v4390 = vpop.f32.mrb[0].mxu0
      %v4391 = vadd.f32 0.0, %v4390
      %v4392 = vpop.f32.mrb[0].mxu0
      %4393 = vmatprep.mubr.f32.mxu0 0.0
      %4394 = vmatmul.mubr.f32.gmra.mrb[0].mxu0 %v4276
      %v4395 = vpop.f32.mrb[0].mxu0
      %v4396 = vadd.f32 0.0, %v4395
      %v4397 = vpop.f32.mrb[0].mxu0
      %4398 = vmatprep.mubr.f32.mxu0 0.0
      %4399 = vmatmul.mubr.f32.gmra.mrb[0].mxu0 %v4279
      %v4400 = vpop.f32.mrb[0].mxu0
      %v4401 = vadd.f32 0.0, %v4400
      %v4402 = vpop.f32.mrb[0].mxu0
      %4403 = vmatprep.mubr.f32.mxu0 0.0
      %4404 = vmatmul.mubr.f32.gmra.mrb[0].mxu0 %v4282
      %v4405 = vpop.f32.mrb[0].mxu0
      %v4406 = vadd.f32 0.0, %v4405
      %v4407 = vpop.f32.mrb[0].mxu0
      %4408 = vmatprep.mubr.f32.mxu0 0.0
      %4409 = vmatmul.mubr.f32.gmra.mrb[0].mxu0 %v4285
      %v4410 = vpop.f32.mrb[0].mxu0
      %v4411 = vadd.f32 0.0, %v4410
      %v4412 = vpop.f32.mrb[0].mxu0
      %4413 = vmatprep.mubr.f32.mxu0 0.0
      %4414 = vmatmul.mubr.f32.gmra.mrb[0].mxu0 %v4288
      %v4415 = vpop.f32.mrb[0].mxu0
      %v4416 = vadd.f32 0.0, %v4415
      %v4417 = vpop.f32.mrb[0].mxu0
      %4418 = vmatprep.mubr.f32.mxu0 0.0
      %4419 = vmatmul.mubr.f32.gmra.mrb[0].mxu0 %v4291
      %v4420 = vpop.f32.mrb[0].mxu0
      %v4421 = vadd.f32 0.0, %v4420
      %v4422 = vpop.f32.mrb[0].mxu0
      %4423 = vmatprep.mubr.f32.mxu0 0.0
      %4424 = vmatmul.mubr.f32.gmra.mrb[0].mxu0 %v4294
      %v4425 = vpop.f32.mrb[0].mxu0
      %v4426 = vadd.f32 0.0, %v4425
      %v4427 = vpop.f32.mrb[0].mxu0
      %4428 = vmatprep.mubr.f32.mxu0 0.0
      %4429 = vmatmul.mubr.f32.gmra.mrb[0].mxu0 %v4297
      %v4430 = vpop.f32.mrb[0].mxu0
      %v4431 = vadd.f32 0.0, %v4430
      %v4432 = vpop.f32.mrb[0].mxu0
      %4433 = vmatprep.mubr.f32.mxu0 0.0
      %4434 = vmatmul.mubr.f32.gmra.mrb[0].mxu0 %v4300
      %v4435 = vpop.f32.mrb[0].mxu0
      %v4436 = vadd.f32 0.0, %v4435
      %v4437 = vpop.f32.mrb[0].mxu0
      %4438 = vmatprep.mubr.f32.mxu0 0.0
      %4439 = vmatmul.mubr.f32.gmra.mrb[0].mxu0 %v4303
      %v4440 = vpop.f32.mrb[0].mxu0
      %v4441 = vadd.f32 0.0, %v4440
      %v4442 = vpop.f32.mrb[0].mxu0
      %4443 = vmatprep.mubr.f32.mxu0 0.0
      %4444 = vmatmul.mubr.f32.gmra.mrb[0].mxu0 %v4306
      %v4445 = vpop.f32.mrb[0].mxu0
      %v4446 = vadd.f32 0.0, %v4445
      %v4447 = vpop.f32.mrb[0].mxu0
      %4448 = vmatprep.mubr.f32.mxu0 0.0
      %4449 = vmatmul.mubr.f32.gmra.mrb[0].mxu0 %v4309
      %v4450 = vpop.f32.mrb[0].mxu0
      %v4451 = vadd.f32 0.0, %v4450
      %v4452 = vpop.f32.mrb[0].mxu0
      %4453 = vmatprep.mubr.f32.mxu0 0.0
      %4454 = vmatmul.mubr.f32.gmra.mrb[0].mxu0 %v4312
      %v4455 = vpop.f32.mrb[0].mxu0
      %v4456 = vadd.f32 0.0, %v4455
      %v4457 = vpop.f32.mrb[0].mxu0
      %4458 = vdwg.mxu0
      %v4460 = vsel %vm2645, %v3244, 0
      %v4463 = vsel %vm2645, %v3249, 0
      %v4466 = vsel %vm2645, %v3254, 0
      %v4469 = vsel %vm2645, %v3259, 0
      %v4472 = vsel %vm2645, %v3264, 0
      %v4475 = vsel %vm2645, %v3269, 0
      %v4478 = vsel %vm2645, %v3274, 0
      %v4481 = vsel %vm2645, %v3279, 0
      %v4484 = vsel %vm2645, %v3397, 0
      %v4487 = vsel %vm2645, %v3402, 0
      %v4490 = vsel %vm2645, %v3407, 0
      %v4493 = vsel %vm2645, %v3412, 0
      %v4496 = vsel %vm2645, %v3417, 0
      %v4499 = vsel %vm2645, %v3422, 0
      %v4502 = vsel %vm2645, %v3427, 0
      %v4505 = vsel %vm2645, %v3432, 0
      %4507 = vmatprep.subr.mxu0 0.0
      %4508 = vmatpush1.msra.mxu0 %v3435
      %4509 = vmatprep.subr.mxu0 0.0
      %4510 = vmatpush1.msra.mxu0 0.0
      %4511 = vmatprep.subr.mxu0 0.0
      %4512 = vmatpush1.msra.mxu0 0.0
      %4513 = vmatprep.subr.mxu0 0.0
      %4514 = vmatpush1.msra.mxu0 0.0
      %4515 = vmatprep.subr.mxu0 0.0
      %4516 = vmatpush1.msra.mxu0 0.0
      %4517 = vmatprep.subr.mxu0 0.0
      %4518 = vmatpush1.msra.mxu0 0.0
      %4519 = vmatprep.subr.mxu0 0.0
      %4520 = vmatpush1.msra.mxu0 0.0
      %4521 = vmatprep.subr.mxu0 0.0
      %4522 = vmatpush1.msra.mxu0 0.0
      %4523 = vmatprep.subr.mxu0 0.0
      %4524 = vmatpush1.msra.mxu0 0.0
      %4525 = vmatprep.subr.mxu0 0.0
      %4526 = vmatpush1.msra.mxu0 0.0
      %4527 = vmatprep.subr.mxu0 0.0
      %4528 = vmatpush1.msra.mxu0 0.0
      %4529 = vmatprep.subr.mxu0 0.0
      %4530 = vmatpush1.msra.mxu0 0.0
      %4531 = vmatprep.subr.mxu0 0.0
      %4532 = vmatpush1.msra.mxu0 0.0
      %4533 = vmatprep.subr.mxu0 0.0
      %4534 = vmatpush1.msra.mxu0 0.0
      %4535 = vmatprep.subr.mxu0 0.0
      %4536 = vmatpush1.msra.mxu0 0.0
      %4537 = vmatprep.subr.mxu0 0.0
      %4538 = vmatpush1.msra.mxu0 0.0
      %4539 = vmatprep.subr.mxu0 0.0
      %4540 = vmatpush1.msra.mxu0 0.0
      %4541 = vmatprep.subr.mxu0 0.0
      %4542 = vmatpush1.msra.mxu0 0.0
      %4543 = vmatprep.subr.mxu0 0.0
      %4544 = vmatpush1.msra.mxu0 0.0
      %4545 = vmatprep.subr.mxu0 0.0
      %4546 = vmatpush1.msra.mxu0 0.0
      %4547 = vmatprep.subr.mxu0 0.0
      %4548 = vmatpush1.msra.mxu0 0.0
      %4549 = vmatprep.subr.mxu0 0.0
      %4550 = vmatpush1.msra.mxu0 0.0
      %4551 = vmatprep.subr.mxu0 0.0
      %4552 = vmatpush1.msra.mxu0 0.0
      %4553 = vmatprep.subr.mxu0 0.0
      %4554 = vmatpush1.msra.mxu0 0.0
      %4555 = vmatprep.subr.mxu0 0.0
      %4556 = vmatpush1.msra.mxu0 0.0
      %4557 = vmatprep.subr.mxu0 0.0
      %4558 = vmatpush1.msra.mxu0 0.0
      %4559 = vmatprep.subr.mxu0 0.0
      %4560 = vmatpush1.msra.mxu0 0.0
      %4561 = vmatprep.subr.mxu0 0.0
      %4562 = vmatpush1.msra.mxu0 0.0
      %4563 = vmatprep.subr.mxu0 0.0
      %4564 = vmatpush1.msra.mxu0 0.0
      %4565 = vmatprep.subr.mxu0 0.0
      %4566 = vmatpush1.msra.mxu0 0.0
      %4567 = vmatprep.subr.mxu0 0.0
      %4568 = vmatpush1.msra.mxu0 0.0
      %4569 = vmatprep.subr.mxu0 0.0
      %4570 = vmatpush1.msra.mxu0 0.0
      %4571 = vmatprep.mubr.f32.mxu0 0.0
      %4572 = vmatmul.mubr.f32.gmra.mrb[0].mxu0 %v4460
      %v4573 = vpop.f32.mrb[0].mxu0
      %v4574 = vadd.f32 %v4381, %v4573
      %v4575 = vpop.f32.mrb[0].mxu0
      %4576 = vmatprep.mubr.f32.mxu0 0.0
      %4577 = vmatmul.mubr.f32.gmra.mrb[0].mxu0 %v4463
      %v4578 = vpop.f32.mrb[0].mxu0
      %v4579 = vadd.f32 %v4386, %v4578
      %v4580 = vpop.f32.mrb[0].mxu0
      %4581 = vmatprep.mubr.f32.mxu0 0.0
      %4582 = vmatmul.mubr.f32.gmra.mrb[0].mxu0 %v4466
      %v4583 = vpop.f32.mrb[0].mxu0
      %v4584 = vadd.f32 %v4391, %v4583
      %v4585 = vpop.f32.mrb[0].mxu0
      %4586 = vmatprep.mubr.f32.mxu0 0.0
      %4587 = vmatmul.mubr.f32.gmra.mrb[0].mxu0 %v4469
      %v4588 = vpop.f32.mrb[0].mxu0
      %v4589 = vadd.f32 %v4396, %v4588
      %v4590 = vpop.f32.mrb[0].mxu0
      %4591 = vmatprep.mubr.f32.mxu0 0.0
      %4592 = vmatmul.mubr.f32.gmra.mrb[0].mxu0 %v4472
      %v4593 = vpop.f32.mrb[0].mxu0
      %v4594 = vadd.f32 %v4401, %v4593
      %v4595 = vpop.f32.mrb[0].mxu0
      %4596 = vmatprep.mubr.f32.mxu0 0.0
      %4597 = vmatmul.mubr.f32.gmra.mrb[0].mxu0 %v4475
      %v4598 = vpop.f32.mrb[0].mxu0
      %v4599 = vadd.f32 %v4406, %v4598
      %v4600 = vpop.f32.mrb[0].mxu0
      %4601 = vmatprep.mubr.f32.mxu0 0.0
      %4602 = vmatmul.mubr.f32.gmra.mrb[0].mxu0 %v4478
      %v4603 = vpop.f32.mrb[0].mxu0
      %v4604 = vadd.f32 %v4411, %v4603
      %v4605 = vpop.f32.mrb[0].mxu0
      %4606 = vmatprep.mubr.f32.mxu0 0.0
      %4607 = vmatmul.mubr.f32.gmra.mrb[0].mxu0 %v4481
      %v4608 = vpop.f32.mrb[0].mxu0
      %v4609 = vadd.f32 %v4416, %v4608
      %v4610 = vpop.f32.mrb[0].mxu0
      %4611 = vmatprep.mubr.f32.mxu0 0.0
      %4612 = vmatmul.mubr.f32.gmra.mrb[0].mxu0 %v4484
      %v4613 = vpop.f32.mrb[0].mxu0
      %v4614 = vadd.f32 %v4421, %v4613
      %v4615 = vpop.f32.mrb[0].mxu0
      %4616 = vmatprep.mubr.f32.mxu0 0.0
      %4617 = vmatmul.mubr.f32.gmra.mrb[0].mxu0 %v4487
      %v4618 = vpop.f32.mrb[0].mxu0
      %v4619 = vadd.f32 %v4426, %v4618
      %v4620 = vpop.f32.mrb[0].mxu0
      %4621 = vmatprep.mubr.f32.mxu0 0.0
      %4622 = vmatmul.mubr.f32.gmra.mrb[0].mxu0 %v4490
      %v4623 = vpop.f32.mrb[0].mxu0
      %v4624 = vadd.f32 %v4431, %v4623
      %v4625 = vpop.f32.mrb[0].mxu0
      %4626 = vmatprep.mubr.f32.mxu0 0.0
      %4627 = vmatmul.mubr.f32.gmra.mrb[0].mxu0 %v4493
      %v4628 = vpop.f32.mrb[0].mxu0
      %v4629 = vadd.f32 %v4436, %v4628
      %v4630 = vpop.f32.mrb[0].mxu0
      %4631 = vmatprep.mubr.f32.mxu0 0.0
      %4632 = vmatmul.mubr.f32.gmra.mrb[0].mxu0 %v4496
      %v4633 = vpop.f32.mrb[0].mxu0
      %v4634 = vadd.f32 %v4441, %v4633
      %v4635 = vpop.f32.mrb[0].mxu0
      %4636 = vmatprep.mubr.f32.mxu0 0.0
      %4637 = vmatmul.mubr.f32.gmra.mrb[0].mxu0 %v4499
      %v4638 = vpop.f32.mrb[0].mxu0
      %v4639 = vadd.f32 %v4446, %v4638
      %v4640 = vpop.f32.mrb[0].mxu0
      %4641 = vmatprep.mubr.f32.mxu0 0.0
      %4642 = vmatmul.mubr.f32.gmra.mrb[0].mxu0 %v4502
      %v4643 = vpop.f32.mrb[0].mxu0
      %v4644 = vadd.f32 %v4451, %v4643
      %v4645 = vpop.f32.mrb[0].mxu0
      %4646 = vmatprep.mubr.f32.mxu0 0.0
      %4647 = vmatmul.mubr.f32.gmra.mrb[0].mxu0 %v4505
      %v4648 = vpop.f32.mrb[0].mxu0
      %v4649 = vadd.f32 %v4456, %v4648
      %v4650 = vpop.f32.mrb[0].mxu0
      %4651 = vdwg.mxu0
      %s4652 = scalar_lea.vmem %s9, 128
      %v4653 = vld [vmem:[%s4652] sm:$0xff]
      %v4654 = vld [vmem:[%s4652 + $0x8] sm:$0xff]
      %v4655 = vld [vmem:[%s4652 + $0x10] sm:$0xff]
      %v4656 = vld [vmem:[%s4652 + $0x18] sm:$0xff]
      %v4657 = vld [vmem:[%s4652 + $0x20] sm:$0xff]
      %v4658 = vld [vmem:[%s4652 + $0x28] sm:$0xff]
      %v4659 = vld [vmem:[%s4652 + $0x30] sm:$0xff]
      %v4660 = vld [vmem:[%s4652 + $0x38] sm:$0xff]
      %4661 = vrot.lane.b32.xlu0 %v2465, 112
      %v4662 = vpop.permute.xlu0 %4661
      %4663 = vrot.lane.b32.xlu0 %v2466, 112
      %v4664 = vpop.permute.xlu0 %4663
      %4665 = vrot.lane.b32.xlu0 %v2467, 112
      %v4666 = vpop.permute.xlu0 %4665
      %4667 = vrot.lane.b32.xlu0 %v2468, 112
      %v4668 = vpop.permute.xlu0 %4667
      %4669 = vrot.lane.b32.xlu0 %v2469, 112
      %v4670 = vpop.permute.xlu0 %4669
      %4671 = vrot.lane.b32.xlu0 %v2470, 112
      %v4672 = vpop.permute.xlu0 %4671
      %4673 = vrot.lane.b32.xlu0 %v2471, 112
      %v4674 = vpop.permute.xlu0 %4673
      %4675 = vrot.lane.b32.xlu0 %v2472, 112
      %v4676 = vpop.permute.xlu0 %4675
      %4677 = vrot.lane.b32.xlu0 %v2559, 112
      %v4678 = vpop.permute.xlu0 %4677
      %4679 = vrot.lane.b32.xlu0 %v2564, 112
      %v4680 = vpop.permute.xlu0 %4679
      %4681 = vrot.lane.b32.xlu0 %v2569, 112
      %v4682 = vpop.permute.xlu0 %4681
      %4683 = vrot.lane.b32.xlu0 %v2574, 112
      %v4684 = vpop.permute.xlu0 %4683
      %4685 = vrot.lane.b32.xlu0 %v2579, 112
      %v4686 = vpop.permute.xlu0 %4685
      %4687 = vrot.lane.b32.xlu0 %v2584, 112
      %v4688 = vpop.permute.xlu0 %4687
      %4689 = vrot.lane.b32.xlu0 %v2589, 112
      %v4690 = vpop.permute.xlu0 %4689
      %4691 = vrot.lane.b32.xlu0 %v2594, 112
      %v4692 = vpop.permute.xlu0 %4691
      %v4693 = vsel %vm2645, %v4662, 0
      %v4695 = vsel %vm2645, %v4664, 0
      %v4697 = vsel %vm2645, %v4666, 0
      %v4699 = vsel %vm2645, %v4668, 0
      %v4701 = vsel %vm2645, %v4670, 0
      %v4703 = vsel %vm2645, %v4672, 0
      %v4705 = vsel %vm2645, %v4674, 0
      %v4707 = vsel %vm2645, %v4676, 0
      %v4709 = vsel %vm2645, %v4678, 0
      %v4711 = vsel %vm2645, %v4680, 0
      %v4713 = vsel %vm2645, %v4682, 0
      %v4715 = vsel %vm2645, %v4684, 0
      %v4717 = vsel %vm2645, %v4686, 0
      %v4719 = vsel %vm2645, %v4688, 0
      %v4721 = vsel %vm2645, %v4690, 0
      %v4723 = vsel %vm2645, %v4692, 0
      %4725 = vmatprep.subr.mxu0 0.0
      %4726 = vmatpush1.xpose.msra.mxu0 %v4709
      %4727 = vmatprep.subr.mxu0 0.0
      %4728 = vmatpush1.xpose.msra.mxu0 %v4711
      %4729 = vmatprep.subr.mxu0 0.0
      %4730 = vmatpush1.xpose.msra.mxu0 %v4713
      %4731 = vmatprep.subr.mxu0 0.0
      %4732 = vmatpush1.xpose.msra.mxu0 %v4715
      %4733 = vmatprep.subr.mxu0 0.0
      %4734 = vmatpush1.xpose.msra.mxu0 %v4717
      %4735 = vmatprep.subr.mxu0 0.0
      %4736 = vmatpush1.xpose.msra.mxu0 %v4719
      %4737 = vmatprep.subr.mxu0 0.0
      %4738 = vmatpush1.xpose.msra.mxu0 %v4721
      %4739 = vmatprep.subr.mxu0 0.0
      %4740 = vmatpush1.xpose.msra.mxu0 %v4723
      %4741 = vmatprep.subr.mxu0 0.0
      %4742 = vmatpush1.xpose.msra.mxu0 0.0
      %4743 = vmatprep.subr.mxu0 0.0
      %4744 = vmatpush1.xpose.msra.mxu0 0.0
      %4745 = vmatprep.subr.mxu0 0.0
      %4746 = vmatpush1.xpose.msra.mxu0 0.0
      %4747 = vmatprep.subr.mxu0 0.0
      %4748 = vmatpush1.xpose.msra.mxu0 0.0
      %4749 = vmatprep.subr.mxu0 0.0
      %4750 = vmatpush1.xpose.msra.mxu0 0.0
      %4751 = vmatprep.subr.mxu0 0.0
      %4752 = vmatpush1.xpose.msra.mxu0 0.0
      %4753 = vmatprep.subr.mxu0 0.0
      %4754 = vmatpush1.xpose.msra.mxu0 0.0
      %4755 = vmatprep.subr.mxu0 0.0
      %4756 = vmatpush1.xpose.msra.mxu0 0.0
      %4757 = vmatprep.subr.mxu0 0.0
      %4758 = vmatpush1.xpose.msra.mxu0 0.0
      %4759 = vmatprep.subr.mxu0 0.0
      %4760 = vmatpush1.xpose.msra.mxu0 0.0
      %4761 = vmatprep.subr.mxu0 0.0
      %4762 = vmatpush1.xpose.msra.mxu0 0.0
      %4763 = vmatprep.subr.mxu0 0.0
      %4764 = vmatpush1.xpose.msra.mxu0 0.0
      %4765 = vmatprep.subr.mxu0 0.0
      %4766 = vmatpush1.xpose.msra.mxu0 0.0
      %4767 = vmatprep.subr.mxu0 0.0
      %4768 = vmatpush1.xpose.msra.mxu0 0.0
      %4769 = vmatprep.subr.mxu0 0.0
      %4770 = vmatpush1.xpose.msra.mxu0 0.0
      %4771 = vmatprep.subr.mxu0 0.0
      %4772 = vmatpush1.xpose.msra.mxu0 0.0
      %4773 = vmatprep.subr.mxu0 0.0
      %4774 = vmatpush1.xpose.msra.mxu0 0.0
      %4775 = vmatprep.subr.mxu0 0.0
      %4776 = vmatpush1.xpose.msra.mxu0 0.0
      %4777 = vmatprep.subr.mxu0 0.0
      %4778 = vmatpush1.xpose.msra.mxu0 0.0
      %4779 = vmatprep.subr.mxu0 0.0
      %4780 = vmatpush1.xpose.msra.mxu0 0.0
      %4781 = vmatprep.subr.mxu0 0.0
      %4782 = vmatpush1.xpose.msra.mxu0 0.0
      %4783 = vmatprep.subr.mxu0 0.0
      %4784 = vmatpush1.xpose.msra.mxu0 0.0
      %4785 = vmatprep.subr.mxu0 0.0
      %4786 = vmatpush1.xpose.msra.mxu0 0.0
      %4787 = vmatprep.subr.mxu0 0.0
      %4788 = vmatpush1.xpose.msra.mxu0 0.0
      %4789 = vmatprep.mubr.f32.mxu0 0.0
      %4790 = vmatmul.mubr.f32.gmra.mrb[0].mxu0 %v4693
      %v4791 = vpop.f32.mrb[0].mxu0
      %v4792 = vadd.f32 %v4653, %v4791
      %v4793 = vpop.f32.mrb[0].mxu0
      %4794 = vmatprep.mubr.f32.mxu0 0.0
      %4795 = vmatmul.mubr.f32.gmra.mrb[0].mxu0 %v4695
      %v4796 = vpop.f32.mrb[0].mxu0
      %v4797 = vadd.f32 %v4654, %v4796
      %v4798 = vpop.f32.mrb[0].mxu0
      %4799 = vmatprep.mubr.f32.mxu0 0.0
      %4800 = vmatmul.mubr.f32.gmra.mrb[0].mxu0 %v4697
      %v4801 = vpop.f32.mrb[0].mxu0
      %v4802 = vadd.f32 %v4655, %v4801
      %v4803 = vpop.f32.mrb[0].mxu0
      %4804 = vmatprep.mubr.f32.mxu0 0.0
      %4805 = vmatmul.mubr.f32.gmra.mrb[0].mxu0 %v4699
      %v4806 = vpop.f32.mrb[0].mxu0
      %v4807 = vadd.f32 %v4656, %v4806
      %v4808 = vpop.f32.mrb[0].mxu0
      %4809 = vmatprep.mubr.f32.mxu0 0.0
      %4810 = vmatmul.mubr.f32.gmra.mrb[0].mxu0 %v4701
      %v4811 = vpop.f32.mrb[0].mxu0
      %v4812 = vadd.f32 %v4657, %v4811
      %v4813 = vpop.f32.mrb[0].mxu0
      %4814 = vmatprep.mubr.f32.mxu0 0.0
      %4815 = vmatmul.mubr.f32.gmra.mrb[0].mxu0 %v4703
      %v4816 = vpop.f32.mrb[0].mxu0
      %v4817 = vadd.f32 %v4658, %v4816
      %v4818 = vpop.f32.mrb[0].mxu0
      %4819 = vmatprep.mubr.f32.mxu0 0.0
      %4820 = vmatmul.mubr.f32.gmra.mrb[0].mxu0 %v4705
      %v4821 = vpop.f32.mrb[0].mxu0
      %v4822 = vadd.f32 %v4659, %v4821
      %v4823 = vpop.f32.mrb[0].mxu0
      %4824 = vmatprep.mubr.f32.mxu0 0.0
      %4825 = vmatmul.mubr.f32.gmra.mrb[0].mxu0 %v4707
      %v4826 = vpop.f32.mrb[0].mxu0
      %v4827 = vadd.f32 %v4660, %v4826
      %v4828 = vpop.f32.mrb[0].mxu0
      %4829 = vdwg.mxu0
      %4830 = vrot.lane.b32.xlu0 %v2473, 112
      %v4831 = vpop.permute.xlu0 %4830
      %4832 = vrot.lane.b32.xlu0 %v2474, 112
      %v4833 = vpop.permute.xlu0 %4832
      %4834 = vrot.lane.b32.xlu0 %v2475, 112
      %v4835 = vpop.permute.xlu0 %4834
      %4836 = vrot.lane.b32.xlu0 %v2476, 112
      %v4837 = vpop.permute.xlu0 %4836
      %4838 = vrot.lane.b32.xlu0 %v2477, 112
      %v4839 = vpop.permute.xlu0 %4838
      %4840 = vrot.lane.b32.xlu0 %v2478, 112
      %v4841 = vpop.permute.xlu0 %4840
      %4842 = vrot.lane.b32.xlu0 %v2479, 112
      %v4843 = vpop.permute.xlu0 %4842
      %4844 = vrot.lane.b32.xlu0 %v2480, 112
      %v4845 = vpop.permute.xlu0 %4844
      %4846 = vrot.lane.b32.xlu0 %v2599, 112
      %v4847 = vpop.permute.xlu0 %4846
      %4848 = vrot.lane.b32.xlu0 %v2604, 112
      %v4849 = vpop.permute.xlu0 %4848
      %4850 = vrot.lane.b32.xlu0 %v2609, 112
      %v4851 = vpop.permute.xlu0 %4850
      %4852 = vrot.lane.b32.xlu0 %v2614, 112
      %v4853 = vpop.permute.xlu0 %4852
      %4854 = vrot.lane.b32.xlu0 %v2619, 112
      %v4855 = vpop.permute.xlu0 %4854
      %4856 = vrot.lane.b32.xlu0 %v2624, 112
      %v4857 = vpop.permute.xlu0 %4856
      %4858 = vrot.lane.b32.xlu0 %v2629, 112
      %v4859 = vpop.permute.xlu0 %4858
      %4860 = vrot.lane.b32.xlu0 %v2634, 112
      %v4861 = vpop.permute.xlu0 %4860
      %v4862 = vsel %vm2645, %v4831, 0
      %v4864 = vsel %vm2645, %v4833, 0
      %v4866 = vsel %vm2645, %v4835, 0
      %v4868 = vsel %vm2645, %v4837, 0
      %v4870 = vsel %vm2645, %v4839, 0
      %v4872 = vsel %vm2645, %v4841, 0
      %v4874 = vsel %vm2645, %v4843, 0
      %v4876 = vsel %vm2645, %v4845, 0
      %v4878 = vsel %vm2645, %v4847, 0
      %v4880 = vsel %vm2645, %v4849, 0
      %v4882 = vsel %vm2645, %v4851, 0
      %v4884 = vsel %vm2645, %v4853, 0
      %v4886 = vsel %vm2645, %v4855, 0
      %v4888 = vsel %vm2645, %v4857, 0
      %v4890 = vsel %vm2645, %v4859, 0
      %v4892 = vsel %vm2645, %v4861, 0
      %4894 = vmatprep.subr.mxu0 0.0
      %4895 = vmatpush1.xpose.msra.mxu0 %v4878
      %4896 = vmatprep.subr.mxu0 0.0
      %4897 = vmatpush1.xpose.msra.mxu0 %v4880
      %4898 = vmatprep.subr.mxu0 0.0
      %4899 = vmatpush1.xpose.msra.mxu0 %v4882
      %4900 = vmatprep.subr.mxu0 0.0
      %4901 = vmatpush1.xpose.msra.mxu0 %v4884
      %4902 = vmatprep.subr.mxu0 0.0
      %4903 = vmatpush1.xpose.msra.mxu0 %v4886
      %4904 = vmatprep.subr.mxu0 0.0
      %4905 = vmatpush1.xpose.msra.mxu0 %v4888
      %4906 = vmatprep.subr.mxu0 0.0
      %4907 = vmatpush1.xpose.msra.mxu0 %v4890
      %4908 = vmatprep.subr.mxu0 0.0
      %4909 = vmatpush1.xpose.msra.mxu0 %v4892
      %4910 = vmatprep.subr.mxu0 0.0
      %4911 = vmatpush1.xpose.msra.mxu0 0.0
      %4912 = vmatprep.subr.mxu0 0.0
      %4913 = vmatpush1.xpose.msra.mxu0 0.0
      %4914 = vmatprep.subr.mxu0 0.0
      %4915 = vmatpush1.xpose.msra.mxu0 0.0
      %4916 = vmatprep.subr.mxu0 0.0
      %4917 = vmatpush1.xpose.msra.mxu0 0.0
      %4918 = vmatprep.subr.mxu0 0.0
      %4919 = vmatpush1.xpose.msra.mxu0 0.0
      %4920 = vmatprep.subr.mxu0 0.0
      %4921 = vmatpush1.xpose.msra.mxu0 0.0
      %4922 = vmatprep.subr.mxu0 0.0
      %4923 = vmatpush1.xpose.msra.mxu0 0.0
      %4924 = vmatprep.subr.mxu0 0.0
      %4925 = vmatpush1.xpose.msra.mxu0 0.0
      %4926 = vmatprep.subr.mxu0 0.0
      %4927 = vmatpush1.xpose.msra.mxu0 0.0
      %4928 = vmatprep.subr.mxu0 0.0
      %4929 = vmatpush1.xpose.msra.mxu0 0.0
      %4930 = vmatprep.subr.mxu0 0.0
      %4931 = vmatpush1.xpose.msra.mxu0 0.0
      %4932 = vmatprep.subr.mxu0 0.0
      %4933 = vmatpush1.xpose.msra.mxu0 0.0
      %4934 = vmatprep.subr.mxu0 0.0
      %4935 = vmatpush1.xpose.msra.mxu0 0.0
      %4936 = vmatprep.subr.mxu0 0.0
      %4937 = vmatpush1.xpose.msra.mxu0 0.0
      %4938 = vmatprep.subr.mxu0 0.0
      %4939 = vmatpush1.xpose.msra.mxu0 0.0
      %4940 = vmatprep.subr.mxu0 0.0
      %4941 = vmatpush1.xpose.msra.mxu0 0.0
      %4942 = vmatprep.subr.mxu0 0.0
      %4943 = vmatpush1.xpose.msra.mxu0 0.0
      %4944 = vmatprep.subr.mxu0 0.0
      %4945 = vmatpush1.xpose.msra.mxu0 0.0
      %4946 = vmatprep.subr.mxu0 0.0
      %4947 = vmatpush1.xpose.msra.mxu0 0.0
      %4948 = vmatprep.subr.mxu0 0.0
      %4949 = vmatpush1.xpose.msra.mxu0 0.0
      %4950 = vmatprep.subr.mxu0 0.0
      %4951 = vmatpush1.xpose.msra.mxu0 0.0
      %4952 = vmatprep.subr.mxu0 0.0
      %4953 = vmatpush1.xpose.msra.mxu0 0.0
      %4954 = vmatprep.subr.mxu0 0.0
      %4955 = vmatpush1.xpose.msra.mxu0 0.0
      %4956 = vmatprep.subr.mxu0 0.0
      %4957 = vmatpush1.xpose.msra.mxu0 0.0
      %4958 = vmatprep.mubr.f32.mxu0 0.0
      %4959 = vmatmul.mubr.f32.gmra.mrb[0].mxu0 %v4862
      %v4960 = vpop.f32.mrb[0].mxu0
      %v4961 = vadd.f32 %v4653, %v4960
      %v4962 = vpop.f32.mrb[0].mxu0
      %4963 = vmatprep.mubr.f32.mxu0 0.0
      %4964 = vmatmul.mubr.f32.gmra.mrb[0].mxu0 %v4864
      %v4965 = vpop.f32.mrb[0].mxu0
      %v4966 = vadd.f32 %v4654, %v4965
      %v4967 = vpop.f32.mrb[0].mxu0
      %4968 = vmatprep.mubr.f32.mxu0 0.0
      %4969 = vmatmul.mubr.f32.gmra.mrb[0].mxu0 %v4866
      %v4970 = vpop.f32.mrb[0].mxu0
      %v4971 = vadd.f32 %v4655, %v4970
      %v4972 = vpop.f32.mrb[0].mxu0
      %4973 = vmatprep.mubr.f32.mxu0 0.0
      %4974 = vmatmul.mubr.f32.gmra.mrb[0].mxu0 %v4868
      %v4975 = vpop.f32.mrb[0].mxu0
      %v4976 = vadd.f32 %v4656, %v4975
      %v4977 = vpop.f32.mrb[0].mxu0
      %4978 = vmatprep.mubr.f32.mxu0 0.0
      %4979 = vmatmul.mubr.f32.gmra.mrb[0].mxu0 %v4870
      %v4980 = vpop.f32.mrb[0].mxu0
      %v4981 = vadd.f32 %v4657, %v4980
      %v4982 = vpop.f32.mrb[0].mxu0
      %4983 = vmatprep.mubr.f32.mxu0 0.0
      %4984 = vmatmul.mubr.f32.gmra.mrb[0].mxu0 %v4872
      %v4985 = vpop.f32.mrb[0].mxu0
      %v4986 = vadd.f32 %v4658, %v4985
      %v4987 = vpop.f32.mrb[0].mxu0
      %4988 = vmatprep.mubr.f32.mxu0 0.0
      %4989 = vmatmul.mubr.f32.gmra.mrb[0].mxu0 %v4874
      %v4990 = vpop.f32.mrb[0].mxu0
      %v4991 = vadd.f32 %v4659, %v4990
      %v4992 = vpop.f32.mrb[0].mxu0
      %4993 = vmatprep.mubr.f32.mxu0 0.0
      %4994 = vmatmul.mubr.f32.gmra.mrb[0].mxu0 %v4876
      %v4995 = vpop.f32.mrb[0].mxu0
      %v4996 = vadd.f32 %v4660, %v4995
      %v4997 = vpop.f32.mrb[0].mxu0
      %4998 = vdwg.mxu0
      %v4999 = vsel %vm2952, %v4792, -inf
      %5000 = vmax.xlane.f32.xlu0 %v4999
      %v5001 = vpop.xlane.xlu0 %5000
      %v5002 = vsel %vm2952, %v4797, -inf
      %5003 = vmax.xlane.f32.xlu0 %v5002
      %v5004 = vpop.xlane.xlu0 %5003
      %v5005 = vsel %vm2952, %v4802, -inf
      %5006 = vmax.xlane.f32.xlu0 %v5005
      %v5007 = vpop.xlane.xlu0 %5006
      %v5008 = vsel %vm2952, %v4807, -inf
      %5009 = vmax.xlane.f32.xlu0 %v5008
      %v5010 = vpop.xlane.xlu0 %5009
      %v5011 = vsel %vm2952, %v4812, -inf
      %5012 = vmax.xlane.f32.xlu0 %v5011
      %v5013 = vpop.xlane.xlu0 %5012
      %v5014 = vsel %vm2952, %v4817, -inf
      %5015 = vmax.xlane.f32.xlu0 %v5014
      %v5016 = vpop.xlane.xlu0 %5015
      %v5017 = vsel %vm2952, %v4822, -inf
      %5018 = vmax.xlane.f32.xlu0 %v5017
      %v5019 = vpop.xlane.xlu0 %5018
      %v5020 = vsel %vm2952, %v4827, -inf
      %5021 = vmax.xlane.f32.xlu0 %v5020
      %v5022 = vpop.xlane.xlu0 %5021
      %v5023 = vsel %vm2952, %v4961, -inf
      %5024 = vmax.xlane.f32.xlu0 %v5023
      %v5025 = vpop.xlane.xlu0 %5024
      %v5026 = vsel %vm2952, %v4966, -inf
      %5027 = vmax.xlane.f32.xlu0 %v5026
      %v5028 = vpop.xlane.xlu0 %5027
      %v5029 = vsel %vm2952, %v4971, -inf
      %5030 = vmax.xlane.f32.xlu0 %v5029
      %v5031 = vpop.xlane.xlu0 %5030
      %v5032 = vsel %vm2952, %v4976, -inf
      %5033 = vmax.xlane.f32.xlu0 %v5032
      %v5034 = vpop.xlane.xlu0 %5033
      %v5035 = vsel %vm2952, %v4981, -inf
      %5036 = vmax.xlane.f32.xlu0 %v5035
      %v5037 = vpop.xlane.xlu0 %5036
      %v5038 = vsel %vm2952, %v4986, -inf
      %5039 = vmax.xlane.f32.xlu0 %v5038
      %v5040 = vpop.xlane.xlu0 %5039
      %v5041 = vsel %vm2952, %v4991, -inf
      %5042 = vmax.xlane.f32.xlu0 %v5041
      %v5043 = vpop.xlane.xlu0 %5042
      %v5044 = vsel %vm2952, %v4996, -inf
      %5045 = vmax.xlane.f32.xlu0 %v5044
      %v5046 = vpop.xlane.xlu0 %5045
      %v5047 = vsub.f32 %v4792, %v5001
      %v5048 = vsub.f32 %v4797, %v5004
      %v5049 = vsub.f32 %v4802, %v5007
      %v5050 = vsub.f32 %v4807, %v5010
      %v5051 = vsub.f32 %v4812, %v5013
      %v5052 = vsub.f32 %v4817, %v5016
      %v5053 = vsub.f32 %v4822, %v5019
      %v5054 = vsub.f32 %v4827, %v5022
      %v5055 = vsub.f32 %v4961, %v5025
      %v5056 = vsub.f32 %v4966, %v5028
      %v5057 = vsub.f32 %v4971, %v5031
      %v5058 = vsub.f32 %v4976, %v5034
      %v5059 = vsub.f32 %v4981, %v5037
      %v5060 = vsub.f32 %v4986, %v5040
      %v5061 = vsub.f32 %v4991, %v5043
      %v5062 = vsub.f32 %v4996, %v5046
      %v5063 = vmul.f32 %v5047, 1.442695
      %v5064 = vpow.pop %v5063
      %v5065 = vmul.f32 %v5048, 1.442695
      %v5066 = vpow.pop %v5065
      %v5067 = vmul.f32 %v5049, 1.442695
      %v5068 = vpow.pop %v5067
      %v5069 = vmul.f32 %v5050, 1.442695
      %v5070 = vpow.pop %v5069
      %v5071 = vmul.f32 %v5051, 1.442695
      %v5072 = vpow.pop %v5071
      %v5073 = vmul.f32 %v5052, 1.442695
      %v5074 = vpow.pop %v5073
      %v5075 = vmul.f32 %v5053, 1.442695
      %v5076 = vpow.pop %v5075
      %v5077 = vmul.f32 %v5054, 1.442695
      %v5078 = vpow.pop %v5077
      %v5079 = vmul.f32 %v5055, 1.442695
      %v5080 = vpow.pop %v5079
      %v5081 = vmul.f32 %v5056, 1.442695
      %v5082 = vpow.pop %v5081
      %v5083 = vmul.f32 %v5057, 1.442695
      %v5084 = vpow.pop %v5083
      %v5085 = vmul.f32 %v5058, 1.442695
      %v5086 = vpow.pop %v5085
      %v5087 = vmul.f32 %v5059, 1.442695
      %v5088 = vpow.pop %v5087
      %v5089 = vmul.f32 %v5060, 1.442695
      %v5090 = vpow.pop %v5089
      %v5091 = vmul.f32 %v5061, 1.442695
      %v5092 = vpow.pop %v5091
      %v5093 = vmul.f32 %v5062, 1.442695
      %v5094 = vpow.pop %v5093
      %v5095 = vsel %vm2952, %v5064, 0.0
      %5096 = vadd.xlane.f32.xlu0 %v5095
      %v5097 = vpop.xlane.xlu0 %5096
      %v5098 = vsel %vm2952, %v5066, 0.0
      %5099 = vadd.xlane.f32.xlu0 %v5098
      %v5100 = vpop.xlane.xlu0 %5099
      %v5101 = vsel %vm2952, %v5068, 0.0
      %5102 = vadd.xlane.f32.xlu0 %v5101
      %v5103 = vpop.xlane.xlu0 %5102
      %v5104 = vsel %vm2952, %v5070, 0.0
      %5105 = vadd.xlane.f32.xlu0 %v5104
      %v5106 = vpop.xlane.xlu0 %5105
      %v5107 = vsel %vm2952, %v5072, 0.0
      %5108 = vadd.xlane.f32.xlu0 %v5107
      %v5109 = vpop.xlane.xlu0 %5108
      %v5110 = vsel %vm2952, %v5074, 0.0
      %5111 = vadd.xlane.f32.xlu0 %v5110
      %v5112 = vpop.xlane.xlu0 %5111
      %v5113 = vsel %vm2952, %v5076, 0.0
      %5114 = vadd.xlane.f32.xlu0 %v5113
      %v5115 = vpop.xlane.xlu0 %5114
      %v5116 = vsel %vm2952, %v5078, 0.0
      %5117 = vadd.xlane.f32.xlu0 %v5116
      %v5118 = vpop.xlane.xlu0 %5117
      %v5119 = vsel %vm2952, %v5080, 0.0
      %5120 = vadd.xlane.f32.xlu0 %v5119
      %v5121 = vpop.xlane.xlu0 %5120
      %v5122 = vsel %vm2952, %v5082, 0.0
      %5123 = vadd.xlane.f32.xlu0 %v5122
      %v5124 = vpop.xlane.xlu0 %5123
      %v5125 = vsel %vm2952, %v5084, 0.0
      %5126 = vadd.xlane.f32.xlu0 %v5125
      %v5127 = vpop.xlane.xlu0 %5126
      %v5128 = vsel %vm2952, %v5086, 0.0
      %5129 = vadd.xlane.f32.xlu0 %v5128
      %v5130 = vpop.xlane.xlu0 %5129
      %v5131 = vsel %vm2952, %v5088, 0.0
      %5132 = vadd.xlane.f32.xlu0 %v5131
      %v5133 = vpop.xlane.xlu0 %5132
      %v5134 = vsel %vm2952, %v5090, 0.0
      %5135 = vadd.xlane.f32.xlu0 %v5134
      %v5136 = vpop.xlane.xlu0 %5135
      %v5137 = vsel %vm2952, %v5092, 0.0
      %5138 = vadd.xlane.f32.xlu0 %v5137
      %v5139 = vpop.xlane.xlu0 %5138
      %v5140 = vsel %vm2952, %v5094, 0.0
      %5141 = vadd.xlane.f32.xlu0 %v5140
      %v5142 = vpop.xlane.xlu0 %5141
      %v5143 = vrcp.pop %v5097
      %v5144 = vmul.f32 %v5064, %v5143
      %v5145 = vrcp.pop %v5100
      %v5146 = vmul.f32 %v5066, %v5145
      %v5147 = vrcp.pop %v5103
      %v5148 = vmul.f32 %v5068, %v5147
      %v5149 = vrcp.pop %v5106
      %v5150 = vmul.f32 %v5070, %v5149
      %v5151 = vrcp.pop %v5109
      %v5152 = vmul.f32 %v5072, %v5151
      %v5153 = vrcp.pop %v5112
      %v5154 = vmul.f32 %v5074, %v5153
      %v5155 = vrcp.pop %v5115
      %v5156 = vmul.f32 %v5076, %v5155
      %v5157 = vrcp.pop %v5118
      %v5158 = vmul.f32 %v5078, %v5157
      %v5159 = vrcp.pop %v5121
      %v5160 = vmul.f32 %v5080, %v5159
      %v5161 = vrcp.pop %v5124
      %v5162 = vmul.f32 %v5082, %v5161
      %v5163 = vrcp.pop %v5127
      %v5164 = vmul.f32 %v5084, %v5163
      %v5165 = vrcp.pop %v5130
      %v5166 = vmul.f32 %v5086, %v5165
      %v5167 = vrcp.pop %v5133
      %v5168 = vmul.f32 %v5088, %v5167
      %v5169 = vrcp.pop %v5136
      %v5170 = vmul.f32 %v5090, %v5169
      %v5171 = vrcp.pop %v5139
      %v5172 = vmul.f32 %v5092, %v5171
      %v5173 = vrcp.pop %v5142
      %v5174 = vmul.f32 %v5094, %v5173
      %5175 = vrot.lane.b32.xlu0 %v2559, 80
      %v5176 = vpop.permute.xlu0 %5175
      %5177 = vrot.lane.b32.xlu0 %v2564, 80
      %v5178 = vpop.permute.xlu0 %5177
      %5179 = vrot.lane.b32.xlu0 %v2569, 80
      %v5180 = vpop.permute.xlu0 %5179
      %5181 = vrot.lane.b32.xlu0 %v2574, 80
      %v5182 = vpop.permute.xlu0 %5181
      %5183 = vrot.lane.b32.xlu0 %v2579, 80
      %v5184 = vpop.permute.xlu0 %5183
      %5185 = vrot.lane.b32.xlu0 %v2584, 80
      %v5186 = vpop.permute.xlu0 %5185
      %5187 = vrot.lane.b32.xlu0 %v2589, 80
      %v5188 = vpop.permute.xlu0 %5187
      %5189 = vrot.lane.b32.xlu0 %v2594, 80
      %v5190 = vpop.permute.xlu0 %5189
      %v5200 = vsel %vm2952, %v5144, 0
      %v5203 = vsel %vm2952, %v5146, 0
      %v5206 = vsel %vm2952, %v5148, 0
      %v5209 = vsel %vm2952, %v5150, 0
      %v5212 = vsel %vm2952, %v5152, 0
      %v5215 = vsel %vm2952, %v5154, 0
      %v5218 = vsel %vm2952, %v5156, 0
      %v5221 = vsel %vm2952, %v5158, 0
      %5223 = vmatprep.subr.mxu0 0.0
      %5224 = vmatpush1.msra.mxu0 %v5176
      %5225 = vmatprep.subr.mxu0 0.0
      %5226 = vmatpush1.msra.mxu0 %v5178
      %5227 = vmatprep.subr.mxu0 0.0
      %5228 = vmatpush1.msra.mxu0 %v5180
      %5229 = vmatprep.subr.mxu0 0.0
      %5230 = vmatpush1.msra.mxu0 %v5182
      %5231 = vmatprep.subr.mxu0 0.0
      %5232 = vmatpush1.msra.mxu0 %v5184
      %5233 = vmatprep.subr.mxu0 0.0
      %5234 = vmatpush1.msra.mxu0 %v5186
      %5235 = vmatprep.subr.mxu0 0.0
      %5236 = vmatpush1.msra.mxu0 %v5188
      %5237 = vmatprep.subr.mxu0 0.0
      %5238 = vmatpush1.msra.mxu0 %v5190
      %5239 = vmatprep.subr.mxu0 0.0
      %5240 = vmatpush1.msra.mxu0 0.0
      %5241 = vmatprep.subr.mxu0 0.0
      %5242 = vmatpush1.msra.mxu0 0.0
      %5243 = vmatprep.subr.mxu0 0.0
      %5244 = vmatpush1.msra.mxu0 0.0
      %5245 = vmatprep.subr.mxu0 0.0
      %5246 = vmatpush1.msra.mxu0 0.0
      %5247 = vmatprep.subr.mxu0 0.0
      %5248 = vmatpush1.msra.mxu0 0.0
      %5249 = vmatprep.subr.mxu0 0.0
      %5250 = vmatpush1.msra.mxu0 0.0
      %5251 = vmatprep.subr.mxu0 0.0
      %5252 = vmatpush1.msra.mxu0 0.0
      %5253 = vmatprep.subr.mxu0 0.0
      %5254 = vmatpush1.msra.mxu0 0.0
      %5255 = vmatprep.subr.mxu0 0.0
      %5256 = vmatpush1.msra.mxu0 0.0
      %5257 = vmatprep.subr.mxu0 0.0
      %5258 = vmatpush1.msra.mxu0 0.0
      %5259 = vmatprep.subr.mxu0 0.0
      %5260 = vmatpush1.msra.mxu0 0.0
      %5261 = vmatprep.subr.mxu0 0.0
      %5262 = vmatpush1.msra.mxu0 0.0
      %5263 = vmatprep.subr.mxu0 0.0
      %5264 = vmatpush1.msra.mxu0 0.0
      %5265 = vmatprep.subr.mxu0 0.0
      %5266 = vmatpush1.msra.mxu0 0.0
      %5267 = vmatprep.subr.mxu0 0.0
      %5268 = vmatpush1.msra.mxu0 0.0
      %5269 = vmatprep.subr.mxu0 0.0
      %5270 = vmatpush1.msra.mxu0 0.0
      %5271 = vmatprep.subr.mxu0 0.0
      %5272 = vmatpush1.msra.mxu0 0.0
      %5273 = vmatprep.subr.mxu0 0.0
      %5274 = vmatpush1.msra.mxu0 0.0
      %5275 = vmatprep.subr.mxu0 0.0
      %5276 = vmatpush1.msra.mxu0 0.0
      %5277 = vmatprep.subr.mxu0 0.0
      %5278 = vmatpush1.msra.mxu0 0.0
      %5279 = vmatprep.subr.mxu0 0.0
      %5280 = vmatpush1.msra.mxu0 0.0
      %5281 = vmatprep.subr.mxu0 0.0
      %5282 = vmatpush1.msra.mxu0 0.0
      %5283 = vmatprep.subr.mxu0 0.0
      %5284 = vmatpush1.msra.mxu0 0.0
      %5285 = vmatprep.subr.mxu0 0.0
      %5286 = vmatpush1.msra.mxu0 0.0
      %5287 = vmatprep.mubr.f32.mxu0 0.0
      %5288 = vmatmul.mubr.f32.gmra.mrb[0].mxu0 %v5200
      %v5289 = vpop.f32.mrb[0].mxu0
      %v5290 = vadd.f32 0.0, %v5289
      %v5291 = vpop.f32.mrb[0].mxu0
      %5292 = vmatprep.mubr.f32.mxu0 0.0
      %5293 = vmatmul.mubr.f32.gmra.mrb[0].mxu0 %v5203
      %v5294 = vpop.f32.mrb[0].mxu0
      %v5295 = vadd.f32 0.0, %v5294
      %v5296 = vpop.f32.mrb[0].mxu0
      %5297 = vmatprep.mubr.f32.mxu0 0.0
      %5298 = vmatmul.mubr.f32.gmra.mrb[0].mxu0 %v5206
      %v5299 = vpop.f32.mrb[0].mxu0
      %v5300 = vadd.f32 0.0, %v5299
      %v5301 = vpop.f32.mrb[0].mxu0
      %5302 = vmatprep.mubr.f32.mxu0 0.0
      %5303 = vmatmul.mubr.f32.gmra.mrb[0].mxu0 %v5209
      %v5304 = vpop.f32.mrb[0].mxu0
      %v5305 = vadd.f32 0.0, %v5304
      %v5306 = vpop.f32.mrb[0].mxu0
      %5307 = vmatprep.mubr.f32.mxu0 0.0
      %5308 = vmatmul.mubr.f32.gmra.mrb[0].mxu0 %v5212
      %v5309 = vpop.f32.mrb[0].mxu0
      %v5310 = vadd.f32 0.0, %v5309
      %v5311 = vpop.f32.mrb[0].mxu0
      %5312 = vmatprep.mubr.f32.mxu0 0.0
      %5313 = vmatmul.mubr.f32.gmra.mrb[0].mxu0 %v5215
      %v5314 = vpop.f32.mrb[0].mxu0
      %v5315 = vadd.f32 0.0, %v5314
      %v5316 = vpop.f32.mrb[0].mxu0
      %5317 = vmatprep.mubr.f32.mxu0 0.0
      %5318 = vmatmul.mubr.f32.gmra.mrb[0].mxu0 %v5218
      %v5319 = vpop.f32.mrb[0].mxu0
      %v5320 = vadd.f32 0.0, %v5319
      %v5321 = vpop.f32.mrb[0].mxu0
      %5322 = vmatprep.mubr.f32.mxu0 0.0
      %5323 = vmatmul.mubr.f32.gmra.mrb[0].mxu0 %v5221
      %v5324 = vpop.f32.mrb[0].mxu0
      %v5325 = vadd.f32 0.0, %v5324
      %v5326 = vpop.f32.mrb[0].mxu0
      %5327 = vdwg.mxu0
      %5328 = vrot.lane.b32.xlu0 %v2599, 80
      %v5329 = vpop.permute.xlu0 %5328
      %5330 = vrot.lane.b32.xlu0 %v2604, 80
      %v5331 = vpop.permute.xlu0 %5330
      %5332 = vrot.lane.b32.xlu0 %v2609, 80
      %v5333 = vpop.permute.xlu0 %5332
      %5334 = vrot.lane.b32.xlu0 %v2614, 80
      %v5335 = vpop.permute.xlu0 %5334
      %5336 = vrot.lane.b32.xlu0 %v2619, 80
      %v5337 = vpop.permute.xlu0 %5336
      %5338 = vrot.lane.b32.xlu0 %v2624, 80
      %v5339 = vpop.permute.xlu0 %5338
      %5340 = vrot.lane.b32.xlu0 %v2629, 80
      %v5341 = vpop.permute.xlu0 %5340
      %5342 = vrot.lane.b32.xlu0 %v2634, 80
      %v5343 = vpop.permute.xlu0 %5342
      %v5353 = vsel %vm2952, %v5160, 0
      %v5356 = vsel %vm2952, %v5162, 0
      %v5359 = vsel %vm2952, %v5164, 0
      %v5362 = vsel %vm2952, %v5166, 0
      %v5365 = vsel %vm2952, %v5168, 0
      %v5368 = vsel %vm2952, %v5170, 0
      %v5371 = vsel %vm2952, %v5172, 0
      %v5374 = vsel %vm2952, %v5174, 0
      %5376 = vmatprep.subr.mxu0 0.0
      %5377 = vmatpush1.msra.mxu0 %v5329
      %5378 = vmatprep.subr.mxu0 0.0
      %5379 = vmatpush1.msra.mxu0 %v5331
      %5380 = vmatprep.subr.mxu0 0.0
      %5381 = vmatpush1.msra.mxu0 %v5333
      %5382 = vmatprep.subr.mxu0 0.0
      %5383 = vmatpush1.msra.mxu0 %v5335
      %5384 = vmatprep.subr.mxu0 0.0
      %5385 = vmatpush1.msra.mxu0 %v5337
      %5386 = vmatprep.subr.mxu0 0.0
      %5387 = vmatpush1.msra.mxu0 %v5339
      %5388 = vmatprep.subr.mxu0 0.0
      %5389 = vmatpush1.msra.mxu0 %v5341
      %5390 = vmatprep.subr.mxu0 0.0
      %5391 = vmatpush1.msra.mxu0 %v5343
      %5392 = vmatprep.subr.mxu0 0.0
      %5393 = vmatpush1.msra.mxu0 0.0
      %5394 = vmatprep.subr.mxu0 0.0
      %5395 = vmatpush1.msra.mxu0 0.0
      %5396 = vmatprep.subr.mxu0 0.0
      %5397 = vmatpush1.msra.mxu0 0.0
      %5398 = vmatprep.subr.mxu0 0.0
      %5399 = vmatpush1.msra.mxu0 0.0
      %5400 = vmatprep.subr.mxu0 0.0
      %5401 = vmatpush1.msra.mxu0 0.0
      %5402 = vmatprep.subr.mxu0 0.0
      %5403 = vmatpush1.msra.mxu0 0.0
      %5404 = vmatprep.subr.mxu0 0.0
      %5405 = vmatpush1.msra.mxu0 0.0
      %5406 = vmatprep.subr.mxu0 0.0
      %5407 = vmatpush1.msra.mxu0 0.0
      %5408 = vmatprep.subr.mxu0 0.0
      %5409 = vmatpush1.msra.mxu0 0.0
      %5410 = vmatprep.subr.mxu0 0.0
      %5411 = vmatpush1.msra.mxu0 0.0
      %5412 = vmatprep.subr.mxu0 0.0
      %5413 = vmatpush1.msra.mxu0 0.0
      %5414 = vmatprep.subr.mxu0 0.0
      %5415 = vmatpush1.msra.mxu0 0.0
      %5416 = vmatprep.subr.mxu0 0.0
      %5417 = vmatpush1.msra.mxu0 0.0
      %5418 = vmatprep.subr.mxu0 0.0
      %5419 = vmatpush1.msra.mxu0 0.0
      %5420 = vmatprep.subr.mxu0 0.0
      %5421 = vmatpush1.msra.mxu0 0.0
      %5422 = vmatprep.subr.mxu0 0.0
      %5423 = vmatpush1.msra.mxu0 0.0
      %5424 = vmatprep.subr.mxu0 0.0
      %5425 = vmatpush1.msra.mxu0 0.0
      %5426 = vmatprep.subr.mxu0 0.0
      %5427 = vmatpush1.msra.mxu0 0.0
      %5428 = vmatprep.subr.mxu0 0.0
      %5429 = vmatpush1.msra.mxu0 0.0
      %5430 = vmatprep.subr.mxu0 0.0
      %5431 = vmatpush1.msra.mxu0 0.0
      %5432 = vmatprep.subr.mxu0 0.0
      %5433 = vmatpush1.msra.mxu0 0.0
      %5434 = vmatprep.subr.mxu0 0.0
      %5435 = vmatpush1.msra.mxu0 0.0
      %5436 = vmatprep.subr.mxu0 0.0
      %5437 = vmatpush1.msra.mxu0 0.0
      %5438 = vmatprep.subr.mxu0 0.0
      %5439 = vmatpush1.msra.mxu0 0.0
      %5440 = vmatprep.mubr.f32.mxu0 0.0
      %5441 = vmatmul.mubr.f32.gmra.mrb[0].mxu0 %v5353
      %v5442 = vpop.f32.mrb[0].mxu0
      %v5443 = vadd.f32 0.0, %v5442
      %v5444 = vpop.f32.mrb[0].mxu0
      %5445 = vmatprep.mubr.f32.mxu0 0.0
      %5446 = vmatmul.mubr.f32.gmra.mrb[0].mxu0 %v5356
      %v5447 = vpop.f32.mrb[0].mxu0
      %v5448 = vadd.f32 0.0, %v5447
      %v5449 = vpop.f32.mrb[0].mxu0
      %5450 = vmatprep.mubr.f32.mxu0 0.0
      %5451 = vmatmul.mubr.f32.gmra.mrb[0].mxu0 %v5359
      %v5452 = vpop.f32.mrb[0].mxu0
      %v5453 = vadd.f32 0.0, %v5452
      %v5454 = vpop.f32.mrb[0].mxu0
      %5455 = vmatprep.mubr.f32.mxu0 0.0
      %5456 = vmatmul.mubr.f32.gmra.mrb[0].mxu0 %v5362
      %v5457 = vpop.f32.mrb[0].mxu0
      %v5458 = vadd.f32 0.0, %v5457
      %v5459 = vpop.f32.mrb[0].mxu0
      %5460 = vmatprep.mubr.f32.mxu0 0.0
      %5461 = vmatmul.mubr.f32.gmra.mrb[0].mxu0 %v5365
      %v5462 = vpop.f32.mrb[0].mxu0
      %v5463 = vadd.f32 0.0, %v5462
      %v5464 = vpop.f32.mrb[0].mxu0
      %5465 = vmatprep.mubr.f32.mxu0 0.0
      %5466 = vmatmul.mubr.f32.gmra.mrb[0].mxu0 %v5368
      %v5467 = vpop.f32.mrb[0].mxu0
      %v5468 = vadd.f32 0.0, %v5467
      %v5469 = vpop.f32.mrb[0].mxu0
      %5470 = vmatprep.mubr.f32.mxu0 0.0
      %5471 = vmatmul.mubr.f32.gmra.mrb[0].mxu0 %v5371
      %v5472 = vpop.f32.mrb[0].mxu0
      %v5473 = vadd.f32 0.0, %v5472
      %v5474 = vpop.f32.mrb[0].mxu0
      %5475 = vmatprep.mubr.f32.mxu0 0.0
      %5476 = vmatmul.mubr.f32.gmra.mrb[0].mxu0 %v5374
      %v5477 = vpop.f32.mrb[0].mxu0
      %v5478 = vadd.f32 0.0, %v5477
      %v5479 = vpop.f32.mrb[0].mxu0
      %5480 = vdwg.mxu0
      %v5481 = vld [vmem:[%s10 + $0x10] sm:$0xff]
      %v5483 = vsel %vm2645, %v5290, 0
      %v5486 = vsel %vm2645, %v5295, 0
      %v5489 = vsel %vm2645, %v5300, 0
      %v5492 = vsel %vm2645, %v5305, 0
      %v5495 = vsel %vm2645, %v5310, 0
      %v5498 = vsel %vm2645, %v5315, 0
      %v5501 = vsel %vm2645, %v5320, 0
      %v5504 = vsel %vm2645, %v5325, 0
      %v5507 = vsel %vm2645, %v5443, 0
      %v5510 = vsel %vm2645, %v5448, 0
      %v5513 = vsel %vm2645, %v5453, 0
      %v5516 = vsel %vm2645, %v5458, 0
      %v5519 = vsel %vm2645, %v5463, 0
      %v5522 = vsel %vm2645, %v5468, 0
      %v5525 = vsel %vm2645, %v5473, 0
      %v5528 = vsel %vm2645, %v5478, 0
      %5530 = vmatprep.subr.mxu0 0.0
      %5531 = vmatpush1.msra.mxu0 %v5481
      %5532 = vmatprep.subr.mxu0 0.0
      %5533 = vmatpush1.msra.mxu0 0.0
      %5534 = vmatprep.subr.mxu0 0.0
      %5535 = vmatpush1.msra.mxu0 0.0
      %5536 = vmatprep.subr.mxu0 0.0
      %5537 = vmatpush1.msra.mxu0 0.0
      %5538 = vmatprep.subr.mxu0 0.0
      %5539 = vmatpush1.msra.mxu0 0.0
      %5540 = vmatprep.subr.mxu0 0.0
      %5541 = vmatpush1.msra.mxu0 0.0
      %5542 = vmatprep.subr.mxu0 0.0
      %5543 = vmatpush1.msra.mxu0 0.0
      %5544 = vmatprep.subr.mxu0 0.0
      %5545 = vmatpush1.msra.mxu0 0.0
      %5546 = vmatprep.subr.mxu0 0.0
      %5547 = vmatpush1.msra.mxu0 0.0
      %5548 = vmatprep.subr.mxu0 0.0
      %5549 = vmatpush1.msra.mxu0 0.0
      %5550 = vmatprep.subr.mxu0 0.0
      %5551 = vmatpush1.msra.mxu0 0.0
      %5552 = vmatprep.subr.mxu0 0.0
      %5553 = vmatpush1.msra.mxu0 0.0
      %5554 = vmatprep.subr.mxu0 0.0
      %5555 = vmatpush1.msra.mxu0 0.0
      %5556 = vmatprep.subr.mxu0 0.0
      %5557 = vmatpush1.msra.mxu0 0.0
      %5558 = vmatprep.subr.mxu0 0.0
      %5559 = vmatpush1.msra.mxu0 0.0
      %5560 = vmatprep.subr.mxu0 0.0
      %5561 = vmatpush1.msra.mxu0 0.0
      %5562 = vmatprep.subr.mxu0 0.0
      %5563 = vmatpush1.msra.mxu0 0.0
      %5564 = vmatprep.subr.mxu0 0.0
      %5565 = vmatpush1.msra.mxu0 0.0
      %5566 = vmatprep.subr.mxu0 0.0
      %5567 = vmatpush1.msra.mxu0 0.0
      %5568 = vmatprep.subr.mxu0 0.0
      %5569 = vmatpush1.msra.mxu0 0.0
      %5570 = vmatprep.subr.mxu0 0.0
      %5571 = vmatpush1.msra.mxu0 0.0
      %5572 = vmatprep.subr.mxu0 0.0
      %5573 = vmatpush1.msra.mxu0 0.0
      %5574 = vmatprep.subr.mxu0 0.0
      %5575 = vmatpush1.msra.mxu0 0.0
      %5576 = vmatprep.subr.mxu0 0.0
      %5577 = vmatpush1.msra.mxu0 0.0
      %5578 = vmatprep.subr.mxu0 0.0
      %5579 = vmatpush1.msra.mxu0 0.0
      %5580 = vmatprep.subr.mxu0 0.0
      %5581 = vmatpush1.msra.mxu0 0.0
      %5582 = vmatprep.subr.mxu0 0.0
      %5583 = vmatpush1.msra.mxu0 0.0
      %5584 = vmatprep.subr.mxu0 0.0
      %5585 = vmatpush1.msra.mxu0 0.0
      %5586 = vmatprep.subr.mxu0 0.0
      %5587 = vmatpush1.msra.mxu0 0.0
      %5588 = vmatprep.subr.mxu0 0.0
      %5589 = vmatpush1.msra.mxu0 0.0
      %5590 = vmatprep.subr.mxu0 0.0
      %5591 = vmatpush1.msra.mxu0 0.0
      %5592 = vmatprep.subr.mxu0 0.0
      %5593 = vmatpush1.msra.mxu0 0.0
      %5594 = vmatprep.mubr.f32.mxu0 0.0
      %5595 = vmatmul.mubr.f32.gmra.mrb[0].mxu0 %v5483
      %v5596 = vpop.f32.mrb[0].mxu0
      %v5597 = vadd.f32 0.0, %v5596
      %v5598 = vpop.f32.mrb[0].mxu0
      %5599 = vmatprep.mubr.f32.mxu0 0.0
      %5600 = vmatmul.mubr.f32.gmra.mrb[0].mxu0 %v5486
      %v5601 = vpop.f32.mrb[0].mxu0
      %v5602 = vadd.f32 0.0, %v5601
      %v5603 = vpop.f32.mrb[0].mxu0
      %5604 = vmatprep.mubr.f32.mxu0 0.0
      %5605 = vmatmul.mubr.f32.gmra.mrb[0].mxu0 %v5489
      %v5606 = vpop.f32.mrb[0].mxu0
      %v5607 = vadd.f32 0.0, %v5606
      %v5608 = vpop.f32.mrb[0].mxu0
      %5609 = vmatprep.mubr.f32.mxu0 0.0
      %5610 = vmatmul.mubr.f32.gmra.mrb[0].mxu0 %v5492
      %v5611 = vpop.f32.mrb[0].mxu0
      %v5612 = vadd.f32 0.0, %v5611
      %v5613 = vpop.f32.mrb[0].mxu0
      %5614 = vmatprep.mubr.f32.mxu0 0.0
      %5615 = vmatmul.mubr.f32.gmra.mrb[0].mxu0 %v5495
      %v5616 = vpop.f32.mrb[0].mxu0
      %v5617 = vadd.f32 0.0, %v5616
      %v5618 = vpop.f32.mrb[0].mxu0
      %5619 = vmatprep.mubr.f32.mxu0 0.0
      %5620 = vmatmul.mubr.f32.gmra.mrb[0].mxu0 %v5498
      %v5621 = vpop.f32.mrb[0].mxu0
      %v5622 = vadd.f32 0.0, %v5621
      %v5623 = vpop.f32.mrb[0].mxu0
      %5624 = vmatprep.mubr.f32.mxu0 0.0
      %5625 = vmatmul.mubr.f32.gmra.mrb[0].mxu0 %v5501
      %v5626 = vpop.f32.mrb[0].mxu0
      %v5627 = vadd.f32 0.0, %v5626
      %v5628 = vpop.f32.mrb[0].mxu0
      %5629 = vmatprep.mubr.f32.mxu0 0.0
      %5630 = vmatmul.mubr.f32.gmra.mrb[0].mxu0 %v5504
      %v5631 = vpop.f32.mrb[0].mxu0
      %v5632 = vadd.f32 0.0, %v5631
      %v5633 = vpop.f32.mrb[0].mxu0
      %5634 = vmatprep.mubr.f32.mxu0 0.0
      %5635 = vmatmul.mubr.f32.gmra.mrb[0].mxu0 %v5507
      %v5636 = vpop.f32.mrb[0].mxu0
      %v5637 = vadd.f32 0.0, %v5636
      %v5638 = vpop.f32.mrb[0].mxu0
      %5639 = vmatprep.mubr.f32.mxu0 0.0
      %5640 = vmatmul.mubr.f32.gmra.mrb[0].mxu0 %v5510
      %v5641 = vpop.f32.mrb[0].mxu0
      %v5642 = vadd.f32 0.0, %v5641
      %v5643 = vpop.f32.mrb[0].mxu0
      %5644 = vmatprep.mubr.f32.mxu0 0.0
      %5645 = vmatmul.mubr.f32.gmra.mrb[0].mxu0 %v5513
      %v5646 = vpop.f32.mrb[0].mxu0
      %v5647 = vadd.f32 0.0, %v5646
      %v5648 = vpop.f32.mrb[0].mxu0
      %5649 = vmatprep.mubr.f32.mxu0 0.0
      %5650 = vmatmul.mubr.f32.gmra.mrb[0].mxu0 %v5516
      %v5651 = vpop.f32.mrb[0].mxu0
      %v5652 = vadd.f32 0.0, %v5651
      %v5653 = vpop.f32.mrb[0].mxu0
      %5654 = vmatprep.mubr.f32.mxu0 0.0
      %5655 = vmatmul.mubr.f32.gmra.mrb[0].mxu0 %v5519
      %v5656 = vpop.f32.mrb[0].mxu0
      %v5657 = vadd.f32 0.0, %v5656
      %v5658 = vpop.f32.mrb[0].mxu0
      %5659 = vmatprep.mubr.f32.mxu0 0.0
      %5660 = vmatmul.mubr.f32.gmra.mrb[0].mxu0 %v5522
      %v5661 = vpop.f32.mrb[0].mxu0
      %v5662 = vadd.f32 0.0, %v5661
      %v5663 = vpop.f32.mrb[0].mxu0
      %5664 = vmatprep.mubr.f32.mxu0 0.0
      %5665 = vmatmul.mubr.f32.gmra.mrb[0].mxu0 %v5525
      %v5666 = vpop.f32.mrb[0].mxu0
      %v5667 = vadd.f32 0.0, %v5666
      %v5668 = vpop.f32.mrb[0].mxu0
      %5669 = vmatprep.mubr.f32.mxu0 0.0
      %5670 = vmatmul.mubr.f32.gmra.mrb[0].mxu0 %v5528
      %v5671 = vpop.f32.mrb[0].mxu0
      %v5672 = vadd.f32 0.0, %v5671
      %v5673 = vpop.f32.mrb[0].mxu0
      %5674 = vdwg.mxu0
      %v5675 = vadd.f32 %v4574, %v5597
      %v5676 = vadd.f32 %v4579, %v5602
      %v5677 = vadd.f32 %v4584, %v5607
      %v5678 = vadd.f32 %v4589, %v5612
      %v5679 = vadd.f32 %v4594, %v5617
      %v5680 = vadd.f32 %v4599, %v5622
      %v5681 = vadd.f32 %v4604, %v5627
      %v5682 = vadd.f32 %v4609, %v5632
      %v5683 = vadd.f32 %v4614, %v5637
      %v5684 = vadd.f32 %v4619, %v5642
      %v5685 = vadd.f32 %v4624, %v5647
      %v5686 = vadd.f32 %v4629, %v5652
      %v5687 = vadd.f32 %v4634, %v5657
      %v5688 = vadd.f32 %v4639, %v5662
      %v5689 = vadd.f32 %v4644, %v5667
      %v5690 = vadd.f32 %v4649, %v5672
      %s5691 = scalar_lea.vmem %s9, 192
      %v5692 = vld [vmem:[%s5691] sm:$0xff]
      %v5693 = vld [vmem:[%s5691 + $0x8] sm:$0xff]
      %v5694 = vld [vmem:[%s5691 + $0x10] sm:$0xff]
      %v5695 = vld [vmem:[%s5691 + $0x18] sm:$0xff]
      %v5696 = vld [vmem:[%s5691 + $0x20] sm:$0xff]
      %v5697 = vld [vmem:[%s5691 + $0x28] sm:$0xff]
      %v5698 = vld [vmem:[%s5691 + $0x30] sm:$0xff]
      %v5699 = vld [vmem:[%s5691 + $0x38] sm:$0xff]
      %5700 = vrot.lane.b32.xlu0 %v2465, 104
      %v5701 = vpop.permute.xlu0 %5700
      %5702 = vrot.lane.b32.xlu0 %v2466, 104
      %v5703 = vpop.permute.xlu0 %5702
      %5704 = vrot.lane.b32.xlu0 %v2467, 104
      %v5705 = vpop.permute.xlu0 %5704
      %5706 = vrot.lane.b32.xlu0 %v2468, 104
      %v5707 = vpop.permute.xlu0 %5706
      %5708 = vrot.lane.b32.xlu0 %v2469, 104
      %v5709 = vpop.permute.xlu0 %5708
      %5710 = vrot.lane.b32.xlu0 %v2470, 104
      %v5711 = vpop.permute.xlu0 %5710
      %5712 = vrot.lane.b32.xlu0 %v2471, 104
      %v5713 = vpop.permute.xlu0 %5712
      %5714 = vrot.lane.b32.xlu0 %v2472, 104
      %v5715 = vpop.permute.xlu0 %5714
      %5716 = vrot.lane.b32.xlu0 %v2559, 104
      %v5717 = vpop.permute.xlu0 %5716
      %5718 = vrot.lane.b32.xlu0 %v2564, 104
      %v5719 = vpop.permute.xlu0 %5718
      %5720 = vrot.lane.b32.xlu0 %v2569, 104
      %v5721 = vpop.permute.xlu0 %5720
      %5722 = vrot.lane.b32.xlu0 %v2574, 104
      %v5723 = vpop.permute.xlu0 %5722
      %5724 = vrot.lane.b32.xlu0 %v2579, 104
      %v5725 = vpop.permute.xlu0 %5724
      %5726 = vrot.lane.b32.xlu0 %v2584, 104
      %v5727 = vpop.permute.xlu0 %5726
      %5728 = vrot.lane.b32.xlu0 %v2589, 104
      %v5729 = vpop.permute.xlu0 %5728
      %5730 = vrot.lane.b32.xlu0 %v2594, 104
      %v5731 = vpop.permute.xlu0 %5730
      %v5732 = vsel %vm2645, %v5701, 0
      %v5734 = vsel %vm2645, %v5703, 0
      %v5736 = vsel %vm2645, %v5705, 0
      %v5738 = vsel %vm2645, %v5707, 0
      %v5740 = vsel %vm2645, %v5709, 0
      %v5742 = vsel %vm2645, %v5711, 0
      %v5744 = vsel %vm2645, %v5713, 0
      %v5746 = vsel %vm2645, %v5715, 0
      %v5748 = vsel %vm2645, %v5717, 0
      %v5750 = vsel %vm2645, %v5719, 0
      %v5752 = vsel %vm2645, %v5721, 0
      %v5754 = vsel %vm2645, %v5723, 0
      %v5756 = vsel %vm2645, %v5725, 0
      %v5758 = vsel %vm2645, %v5727, 0
      %v5760 = vsel %vm2645, %v5729, 0
      %v5762 = vsel %vm2645, %v5731, 0
      %5764 = vmatprep.subr.mxu0 0.0
      %5765 = vmatpush1.xpose.msra.mxu0 %v5748
      %5766 = vmatprep.subr.mxu0 0.0
      %5767 = vmatpush1.xpose.msra.mxu0 %v5750
      %5768 = vmatprep.subr.mxu0 0.0
      %5769 = vmatpush1.xpose.msra.mxu0 %v5752
      %5770 = vmatprep.subr.mxu0 0.0
      %5771 = vmatpush1.xpose.msra.mxu0 %v5754
      %5772 = vmatprep.subr.mxu0 0.0
      %5773 = vmatpush1.xpose.msra.mxu0 %v5756
      %5774 = vmatprep.subr.mxu0 0.0
      %5775 = vmatpush1.xpose.msra.mxu0 %v5758
      %5776 = vmatprep.subr.mxu0 0.0
      %5777 = vmatpush1.xpose.msra.mxu0 %v5760
      %5778 = vmatprep.subr.mxu0 0.0
      %5779 = vmatpush1.xpose.msra.mxu0 %v5762
      %5780 = vmatprep.subr.mxu0 0.0
      %5781 = vmatpush1.xpose.msra.mxu0 0.0
      %5782 = vmatprep.subr.mxu0 0.0
      %5783 = vmatpush1.xpose.msra.mxu0 0.0
      %5784 = vmatprep.subr.mxu0 0.0
      %5785 = vmatpush1.xpose.msra.mxu0 0.0
      %5786 = vmatprep.subr.mxu0 0.0
      %5787 = vmatpush1.xpose.msra.mxu0 0.0
      %5788 = vmatprep.subr.mxu0 0.0
      %5789 = vmatpush1.xpose.msra.mxu0 0.0
      %5790 = vmatprep.subr.mxu0 0.0
      %5791 = vmatpush1.xpose.msra.mxu0 0.0
      %5792 = vmatprep.subr.mxu0 0.0
      %5793 = vmatpush1.xpose.msra.mxu0 0.0
      %5794 = vmatprep.subr.mxu0 0.0
      %5795 = vmatpush1.xpose.msra.mxu0 0.0
      %5796 = vmatprep.subr.mxu0 0.0
      %5797 = vmatpush1.xpose.msra.mxu0 0.0
      %5798 = vmatprep.subr.mxu0 0.0
      %5799 = vmatpush1.xpose.msra.mxu0 0.0
      %5800 = vmatprep.subr.mxu0 0.0
      %5801 = vmatpush1.xpose.msra.mxu0 0.0
      %5802 = vmatprep.subr.mxu0 0.0
      %5803 = vmatpush1.xpose.msra.mxu0 0.0
      %5804 = vmatprep.subr.mxu0 0.0
      %5805 = vmatpush1.xpose.msra.mxu0 0.0
      %5806 = vmatprep.subr.mxu0 0.0
      %5807 = vmatpush1.xpose.msra.mxu0 0.0
      %5808 = vmatprep.subr.mxu0 0.0
      %5809 = vmatpush1.xpose.msra.mxu0 0.0
      %5810 = vmatprep.subr.mxu0 0.0
      %5811 = vmatpush1.xpose.msra.mxu0 0.0
      %5812 = vmatprep.subr.mxu0 0.0
      %5813 = vmatpush1.xpose.msra.mxu0 0.0
      %5814 = vmatprep.subr.mxu0 0.0
      %5815 = vmatpush1.xpose.msra.mxu0 0.0
      %5816 = vmatprep.subr.mxu0 0.0
      %5817 = vmatpush1.xpose.msra.mxu0 0.0
      %5818 = vmatprep.subr.mxu0 0.0
      %5819 = vmatpush1.xpose.msra.mxu0 0.0
      %5820 = vmatprep.subr.mxu0 0.0
      %5821 = vmatpush1.xpose.msra.mxu0 0.0
      %5822 = vmatprep.subr.mxu0 0.0
      %5823 = vmatpush1.xpose.msra.mxu0 0.0
      %5824 = vmatprep.subr.mxu0 0.0
      %5825 = vmatpush1.xpose.msra.mxu0 0.0
      %5826 = vmatprep.subr.mxu0 0.0
      %5827 = vmatpush1.xpose.msra.mxu0 0.0
      %5828 = vmatprep.mubr.f32.mxu0 0.0
      %5829 = vmatmul.mubr.f32.gmra.mrb[0].mxu0 %v5732
      %v5830 = vpop.f32.mrb[0].mxu0
      %v5831 = vadd.f32 %v5692, %v5830
      %v5832 = vpop.f32.mrb[0].mxu0
      %5833 = vmatprep.mubr.f32.mxu0 0.0
      %5834 = vmatmul.mubr.f32.gmra.mrb[0].mxu0 %v5734
      %v5835 = vpop.f32.mrb[0].mxu0
      %v5836 = vadd.f32 %v5693, %v5835
      %v5837 = vpop.f32.mrb[0].mxu0
      %5838 = vmatprep.mubr.f32.mxu0 0.0
      %5839 = vmatmul.mubr.f32.gmra.mrb[0].mxu0 %v5736
      %v5840 = vpop.f32.mrb[0].mxu0
      %v5841 = vadd.f32 %v5694, %v5840
      %v5842 = vpop.f32.mrb[0].mxu0
      %5843 = vmatprep.mubr.f32.mxu0 0.0
      %5844 = vmatmul.mubr.f32.gmra.mrb[0].mxu0 %v5738
      %v5845 = vpop.f32.mrb[0].mxu0
      %v5846 = vadd.f32 %v5695, %v5845
      %v5847 = vpop.f32.mrb[0].mxu0
      %5848 = vmatprep.mubr.f32.mxu0 0.0
      %5849 = vmatmul.mubr.f32.gmra.mrb[0].mxu0 %v5740
      %v5850 = vpop.f32.mrb[0].mxu0
      %v5851 = vadd.f32 %v5696, %v5850
      %v5852 = vpop.f32.mrb[0].mxu0
      %5853 = vmatprep.mubr.f32.mxu0 0.0
      %5854 = vmatmul.mubr.f32.gmra.mrb[0].mxu0 %v5742
      %v5855 = vpop.f32.mrb[0].mxu0
      %v5856 = vadd.f32 %v5697, %v5855
      %v5857 = vpop.f32.mrb[0].mxu0
      %5858 = vmatprep.mubr.f32.mxu0 0.0
      %5859 = vmatmul.mubr.f32.gmra.mrb[0].mxu0 %v5744
      %v5860 = vpop.f32.mrb[0].mxu0
      %v5861 = vadd.f32 %v5698, %v5860
      %v5862 = vpop.f32.mrb[0].mxu0
      %5863 = vmatprep.mubr.f32.mxu0 0.0
      %5864 = vmatmul.mubr.f32.gmra.mrb[0].mxu0 %v5746
      %v5865 = vpop.f32.mrb[0].mxu0
      %v5866 = vadd.f32 %v5699, %v5865
      %v5867 = vpop.f32.mrb[0].mxu0
      %5868 = vdwg.mxu0
      %5869 = vrot.lane.b32.xlu0 %v2473, 104
      %v5870 = vpop.permute.xlu0 %5869
      %5871 = vrot.lane.b32.xlu0 %v2474, 104
      %v5872 = vpop.permute.xlu0 %5871
      %5873 = vrot.lane.b32.xlu0 %v2475, 104
      %v5874 = vpop.permute.xlu0 %5873
      %5875 = vrot.lane.b32.xlu0 %v2476, 104
      %v5876 = vpop.permute.xlu0 %5875
      %5877 = vrot.lane.b32.xlu0 %v2477, 104
      %v5878 = vpop.permute.xlu0 %5877
      %5879 = vrot.lane.b32.xlu0 %v2478, 104
      %v5880 = vpop.permute.xlu0 %5879
      %5881 = vrot.lane.b32.xlu0 %v2479, 104
      %v5882 = vpop.permute.xlu0 %5881
      %5883 = vrot.lane.b32.xlu0 %v2480, 104
      %v5884 = vpop.permute.xlu0 %5883
      %5885 = vrot.lane.b32.xlu0 %v2599, 104
      %v5886 = vpop.permute.xlu0 %5885
      %5887 = vrot.lane.b32.xlu0 %v2604, 104
      %v5888 = vpop.permute.xlu0 %5887
      %5889 = vrot.lane.b32.xlu0 %v2609, 104
      %v5890 = vpop.permute.xlu0 %5889
      %5891 = vrot.lane.b32.xlu0 %v2614, 104
      %v5892 = vpop.permute.xlu0 %5891
      %5893 = vrot.lane.b32.xlu0 %v2619, 104
      %v5894 = vpop.permute.xlu0 %5893
      %5895 = vrot.lane.b32.xlu0 %v2624, 104
      %v5896 = vpop.permute.xlu0 %5895
      %5897 = vrot.lane.b32.xlu0 %v2629, 104
      %v5898 = vpop.permute.xlu0 %5897
      %5899 = vrot.lane.b32.xlu0 %v2634, 104
      %v5900 = vpop.permute.xlu0 %5899
      %v5901 = vsel %vm2645, %v5870, 0
      %v5903 = vsel %vm2645, %v5872, 0
      %v5905 = vsel %vm2645, %v5874, 0
      %v5907 = vsel %vm2645, %v5876, 0
      %v5909 = vsel %vm2645, %v5878, 0
      %v5911 = vsel %vm2645, %v5880, 0
      %v5913 = vsel %vm2645, %v5882, 0
      %v5915 = vsel %vm2645, %v5884, 0
      %v5917 = vsel %vm2645, %v5886, 0
      %v5919 = vsel %vm2645, %v5888, 0
      %v5921 = vsel %vm2645, %v5890, 0
      %v5923 = vsel %vm2645, %v5892, 0
      %v5925 = vsel %vm2645, %v5894, 0
      %v5927 = vsel %vm2645, %v5896, 0
      %v5929 = vsel %vm2645, %v5898, 0
      %v5931 = vsel %vm2645, %v5900, 0
      %5933 = vmatprep.subr.mxu0 0.0
      %5934 = vmatpush1.xpose.msra.mxu0 %v5917
      %5935 = vmatprep.subr.mxu0 0.0
      %5936 = vmatpush1.xpose.msra.mxu0 %v5919
      %5937 = vmatprep.subr.mxu0 0.0
      %5938 = vmatpush1.xpose.msra.mxu0 %v5921
      %5939 = vmatprep.subr.mxu0 0.0
      %5940 = vmatpush1.xpose.msra.mxu0 %v5923
      %5941 = vmatprep.subr.mxu0 0.0
      %5942 = vmatpush1.xpose.msra.mxu0 %v5925
      %5943 = vmatprep.subr.mxu0 0.0
      %5944 = vmatpush1.xpose.msra.mxu0 %v5927
      %5945 = vmatprep.subr.mxu0 0.0
      %5946 = vmatpush1.xpose.msra.mxu0 %v5929
      %5947 = vmatprep.subr.mxu0 0.0
      %5948 = vmatpush1.xpose.msra.mxu0 %v5931
      %5949 = vmatprep.subr.mxu0 0.0
      %5950 = vmatpush1.xpose.msra.mxu0 0.0
      %5951 = vmatprep.subr.mxu0 0.0
      %5952 = vmatpush1.xpose.msra.mxu0 0.0
      %5953 = vmatprep.subr.mxu0 0.0
      %5954 = vmatpush1.xpose.msra.mxu0 0.0
      %5955 = vmatprep.subr.mxu0 0.0
      %5956 = vmatpush1.xpose.msra.mxu0 0.0
      %5957 = vmatprep.subr.mxu0 0.0
      %5958 = vmatpush1.xpose.msra.mxu0 0.0
      %5959 = vmatprep.subr.mxu0 0.0
      %5960 = vmatpush1.xpose.msra.mxu0 0.0
      %5961 = vmatprep.subr.mxu0 0.0
      %5962 = vmatpush1.xpose.msra.mxu0 0.0
      %5963 = vmatprep.subr.mxu0 0.0
      %5964 = vmatpush1.xpose.msra.mxu0 0.0
      %5965 = vmatprep.subr.mxu0 0.0
      %5966 = vmatpush1.xpose.msra.mxu0 0.0
      %5967 = vmatprep.subr.mxu0 0.0
      %5968 = vmatpush1.xpose.msra.mxu0 0.0
      %5969 = vmatprep.subr.mxu0 0.0
      %5970 = vmatpush1.xpose.msra.mxu0 0.0
      %5971 = vmatprep.subr.mxu0 0.0
      %5972 = vmatpush1.xpose.msra.mxu0 0.0
      %5973 = vmatprep.subr.mxu0 0.0
      %5974 = vmatpush1.xpose.msra.mxu0 0.0
      %5975 = vmatprep.subr.mxu0 0.0
      %5976 = vmatpush1.xpose.msra.mxu0 0.0
      %5977 = vmatprep.subr.mxu0 0.0
      %5978 = vmatpush1.xpose.msra.mxu0 0.0
      %5979 = vmatprep.subr.mxu0 0.0
      %5980 = vmatpush1.xpose.msra.mxu0 0.0
      %5981 = vmatprep.subr.mxu0 0.0
      %5982 = vmatpush1.xpose.msra.mxu0 0.0
      %5983 = vmatprep.subr.mxu0 0.0
      %5984 = vmatpush1.xpose.msra.mxu0 0.0
      %5985 = vmatprep.subr.mxu0 0.0
      %5986 = vmatpush1.xpose.msra.mxu0 0.0
      %5987 = vmatprep.subr.mxu0 0.0
      %5988 = vmatpush1.xpose.msra.mxu0 0.0
      %5989 = vmatprep.subr.mxu0 0.0
      %5990 = vmatpush1.xpose.msra.mxu0 0.0
      %5991 = vmatprep.subr.mxu0 0.0
      %5992 = vmatpush1.xpose.msra.mxu0 0.0
      %5993 = vmatprep.subr.mxu0 0.0
      %5994 = vmatpush1.xpose.msra.mxu0 0.0
      %5995 = vmatprep.subr.mxu0 0.0
      %5996 = vmatpush1.xpose.msra.mxu0 0.0
      %5997 = vmatprep.mubr.f32.mxu0 0.0
      %5998 = vmatmul.mubr.f32.gmra.mrb[0].mxu0 %v5901
      %v5999 = vpop.f32.mrb[0].mxu0
      %v6000 = vadd.f32 %v5692, %v5999
      %v6001 = vpop.f32.mrb[0].mxu0
      %6002 = vmatprep.mubr.f32.mxu0 0.0
      %6003 = vmatmul.mubr.f32.gmra.mrb[0].mxu0 %v5903
      %v6004 = vpop.f32.mrb[0].mxu0
      %v6005 = vadd.f32 %v5693, %v6004
      %v6006 = vpop.f32.mrb[0].mxu0
      %6007 = vmatprep.mubr.f32.mxu0 0.0
      %6008 = vmatmul.mubr.f32.gmra.mrb[0].mxu0 %v5905
      %v6009 = vpop.f32.mrb[0].mxu0
      %v6010 = vadd.f32 %v5694, %v6009
      %v6011 = vpop.f32.mrb[0].mxu0
      %6012 = vmatprep.mubr.f32.mxu0 0.0
      %6013 = vmatmul.mubr.f32.gmra.mrb[0].mxu0 %v5907
      %v6014 = vpop.f32.mrb[0].mxu0
      %v6015 = vadd.f32 %v5695, %v6014
      %v6016 = vpop.f32.mrb[0].mxu0
      %6017 = vmatprep.mubr.f32.mxu0 0.0
      %6018 = vmatmul.mubr.f32.gmra.mrb[0].mxu0 %v5909
      %v6019 = vpop.f32.mrb[0].mxu0
      %v6020 = vadd.f32 %v5696, %v6019
      %v6021 = vpop.f32.mrb[0].mxu0
      %6022 = vmatprep.mubr.f32.mxu0 0.0
      %6023 = vmatmul.mubr.f32.gmra.mrb[0].mxu0 %v5911
      %v6024 = vpop.f32.mrb[0].mxu0
      %v6025 = vadd.f32 %v5697, %v6024
      %v6026 = vpop.f32.mrb[0].mxu0
      %6027 = vmatprep.mubr.f32.mxu0 0.0
      %6028 = vmatmul.mubr.f32.gmra.mrb[0].mxu0 %v5913
      %v6029 = vpop.f32.mrb[0].mxu0
      %v6030 = vadd.f32 %v5698, %v6029
      %v6031 = vpop.f32.mrb[0].mxu0
      %6032 = vmatprep.mubr.f32.mxu0 0.0
      %6033 = vmatmul.mubr.f32.gmra.mrb[0].mxu0 %v5915
      %v6034 = vpop.f32.mrb[0].mxu0
      %v6035 = vadd.f32 %v5699, %v6034
      %v6036 = vpop.f32.mrb[0].mxu0
      %6037 = vdwg.mxu0
      %v6038 = vsel %vm2952, %v5831, -inf
      %6039 = vmax.xlane.f32.xlu0 %v6038
      %v6040 = vpop.xlane.xlu0 %6039
      %v6041 = vsel %vm2952, %v5836, -inf
      %6042 = vmax.xlane.f32.xlu0 %v6041
      %v6043 = vpop.xlane.xlu0 %6042
      %v6044 = vsel %vm2952, %v5841, -inf
      %6045 = vmax.xlane.f32.xlu0 %v6044
      %v6046 = vpop.xlane.xlu0 %6045
      %v6047 = vsel %vm2952, %v5846, -inf
      %6048 = vmax.xlane.f32.xlu0 %v6047
      %v6049 = vpop.xlane.xlu0 %6048
      %v6050 = vsel %vm2952, %v5851, -inf
      %6051 = vmax.xlane.f32.xlu0 %v6050
      %v6052 = vpop.xlane.xlu0 %6051
      %v6053 = vsel %vm2952, %v5856, -inf
      %6054 = vmax.xlane.f32.xlu0 %v6053
      %v6055 = vpop.xlane.xlu0 %6054
      %v6056 = vsel %vm2952, %v5861, -inf
      %6057 = vmax.xlane.f32.xlu0 %v6056
      %v6058 = vpop.xlane.xlu0 %6057
      %v6059 = vsel %vm2952, %v5866, -inf
      %6060 = vmax.xlane.f32.xlu0 %v6059
      %v6061 = vpop.xlane.xlu0 %6060
      %v6062 = vsel %vm2952, %v6000, -inf
      %6063 = vmax.xlane.f32.xlu0 %v6062
      %v6064 = vpop.xlane.xlu0 %6063
      %v6065 = vsel %vm2952, %v6005, -inf
      %6066 = vmax.xlane.f32.xlu0 %v6065
      %v6067 = vpop.xlane.xlu0 %6066
      %v6068 = vsel %vm2952, %v6010, -inf
      %6069 = vmax.xlane.f32.xlu0 %v6068
      %v6070 = vpop.xlane.xlu0 %6069
      %v6071 = vsel %vm2952, %v6015, -inf
      %6072 = vmax.xlane.f32.xlu0 %v6071
      %v6073 = vpop.xlane.xlu0 %6072
      %v6074 = vsel %vm2952, %v6020, -inf
      %6075 = vmax.xlane.f32.xlu0 %v6074
      %v6076 = vpop.xlane.xlu0 %6075
      %v6077 = vsel %vm2952, %v6025, -inf
      %6078 = vmax.xlane.f32.xlu0 %v6077
      %v6079 = vpop.xlane.xlu0 %6078
      %v6080 = vsel %vm2952, %v6030, -inf
      %6081 = vmax.xlane.f32.xlu0 %v6080
      %v6082 = vpop.xlane.xlu0 %6081
      %v6083 = vsel %vm2952, %v6035, -inf
      %6084 = vmax.xlane.f32.xlu0 %v6083
      %v6085 = vpop.xlane.xlu0 %6084
      %v6086 = vsub.f32 %v5831, %v6040
      %v6087 = vsub.f32 %v5836, %v6043
      %v6088 = vsub.f32 %v5841, %v6046
      %v6089 = vsub.f32 %v5846, %v6049
      %v6090 = vsub.f32 %v5851, %v6052
      %v6091 = vsub.f32 %v5856, %v6055
      %v6092 = vsub.f32 %v5861, %v6058
      %v6093 = vsub.f32 %v5866, %v6061
      %v6094 = vsub.f32 %v6000, %v6064
      %v6095 = vsub.f32 %v6005, %v6067
      %v6096 = vsub.f32 %v6010, %v6070
      %v6097 = vsub.f32 %v6015, %v6073
      %v6098 = vsub.f32 %v6020, %v6076
      %v6099 = vsub.f32 %v6025, %v6079
      %v6100 = vsub.f32 %v6030, %v6082
      %v6101 = vsub.f32 %v6035, %v6085
      %v6102 = vmul.f32 %v6086, 1.442695
      %v6103 = vpow.pop %v6102
      %v6104 = vmul.f32 %v6087, 1.442695
      %v6105 = vpow.pop %v6104
      %v6106 = vmul.f32 %v6088, 1.442695
      %v6107 = vpow.pop %v6106
      %v6108 = vmul.f32 %v6089, 1.442695
      %v6109 = vpow.pop %v6108
      %v6110 = vmul.f32 %v6090, 1.442695
      %v6111 = vpow.pop %v6110
      %v6112 = vmul.f32 %v6091, 1.442695
      %v6113 = vpow.pop %v6112
      %v6114 = vmul.f32 %v6092, 1.442695
      %v6115 = vpow.pop %v6114
      %v6116 = vmul.f32 %v6093, 1.442695
      %v6117 = vpow.pop %v6116
      %v6118 = vmul.f32 %v6094, 1.442695
      %v6119 = vpow.pop %v6118
      %v6120 = vmul.f32 %v6095, 1.442695
      %v6121 = vpow.pop %v6120
      %v6122 = vmul.f32 %v6096, 1.442695
      %v6123 = vpow.pop %v6122
      %v6124 = vmul.f32 %v6097, 1.442695
      %v6125 = vpow.pop %v6124
      %v6126 = vmul.f32 %v6098, 1.442695
      %v6127 = vpow.pop %v6126
      %v6128 = vmul.f32 %v6099, 1.442695
      %v6129 = vpow.pop %v6128
      %v6130 = vmul.f32 %v6100, 1.442695
      %v6131 = vpow.pop %v6130
      %v6132 = vmul.f32 %v6101, 1.442695
      %v6133 = vpow.pop %v6132
      %v6134 = vsel %vm2952, %v6103, 0.0
      %6135 = vadd.xlane.f32.xlu0 %v6134
      %v6136 = vpop.xlane.xlu0 %6135
      %v6137 = vsel %vm2952, %v6105, 0.0
      %6138 = vadd.xlane.f32.xlu0 %v6137
      %v6139 = vpop.xlane.xlu0 %6138
      %v6140 = vsel %vm2952, %v6107, 0.0
      %6141 = vadd.xlane.f32.xlu0 %v6140
      %v6142 = vpop.xlane.xlu0 %6141
      %v6143 = vsel %vm2952, %v6109, 0.0
      %6144 = vadd.xlane.f32.xlu0 %v6143
      %v6145 = vpop.xlane.xlu0 %6144
      %v6146 = vsel %vm2952, %v6111, 0.0
      %6147 = vadd.xlane.f32.xlu0 %v6146
      %v6148 = vpop.xlane.xlu0 %6147
      %v6149 = vsel %vm2952, %v6113, 0.0
      %6150 = vadd.xlane.f32.xlu0 %v6149
      %v6151 = vpop.xlane.xlu0 %6150
      %v6152 = vsel %vm2952, %v6115, 0.0
      %6153 = vadd.xlane.f32.xlu0 %v6152
      %v6154 = vpop.xlane.xlu0 %6153
      %v6155 = vsel %vm2952, %v6117, 0.0
      %6156 = vadd.xlane.f32.xlu0 %v6155
      %v6157 = vpop.xlane.xlu0 %6156
      %v6158 = vsel %vm2952, %v6119, 0.0
      %6159 = vadd.xlane.f32.xlu0 %v6158
      %v6160 = vpop.xlane.xlu0 %6159
      %v6161 = vsel %vm2952, %v6121, 0.0
      %6162 = vadd.xlane.f32.xlu0 %v6161
      %v6163 = vpop.xlane.xlu0 %6162
      %v6164 = vsel %vm2952, %v6123, 0.0
      %6165 = vadd.xlane.f32.xlu0 %v6164
      %v6166 = vpop.xlane.xlu0 %6165
      %v6167 = vsel %vm2952, %v6125, 0.0
      %6168 = vadd.xlane.f32.xlu0 %v6167
      %v6169 = vpop.xlane.xlu0 %6168
      %v6170 = vsel %vm2952, %v6127, 0.0
      %6171 = vadd.xlane.f32.xlu0 %v6170
      %v6172 = vpop.xlane.xlu0 %6171
      %v6173 = vsel %vm2952, %v6129, 0.0
      %6174 = vadd.xlane.f32.xlu0 %v6173
      %v6175 = vpop.xlane.xlu0 %6174
      %v6176 = vsel %vm2952, %v6131, 0.0
      %6177 = vadd.xlane.f32.xlu0 %v6176
      %v6178 = vpop.xlane.xlu0 %6177
      %v6179 = vsel %vm2952, %v6133, 0.0
      %6180 = vadd.xlane.f32.xlu0 %v6179
      %v6181 = vpop.xlane.xlu0 %6180
      %v6182 = vrcp.pop %v6136
      %v6183 = vmul.f32 %v6103, %v6182
      %v6184 = vrcp.pop %v6139
      %v6185 = vmul.f32 %v6105, %v6184
      %v6186 = vrcp.pop %v6142
      %v6187 = vmul.f32 %v6107, %v6186
      %v6188 = vrcp.pop %v6145
      %v6189 = vmul.f32 %v6109, %v6188
      %v6190 = vrcp.pop %v6148
      %v6191 = vmul.f32 %v6111, %v6190
      %v6192 = vrcp.pop %v6151
      %v6193 = vmul.f32 %v6113, %v6192
      %v6194 = vrcp.pop %v6154
      %v6195 = vmul.f32 %v6115, %v6194
      %v6196 = vrcp.pop %v6157
      %v6197 = vmul.f32 %v6117, %v6196
      %v6198 = vrcp.pop %v6160
      %v6199 = vmul.f32 %v6119, %v6198
      %v6200 = vrcp.pop %v6163
      %v6201 = vmul.f32 %v6121, %v6200
      %v6202 = vrcp.pop %v6166
      %v6203 = vmul.f32 %v6123, %v6202
      %v6204 = vrcp.pop %v6169
      %v6205 = vmul.f32 %v6125, %v6204
      %v6206 = vrcp.pop %v6172
      %v6207 = vmul.f32 %v6127, %v6206
      %v6208 = vrcp.pop %v6175
      %v6209 = vmul.f32 %v6129, %v6208
      %v6210 = vrcp.pop %v6178
      %v6211 = vmul.f32 %v6131, %v6210
      %v6212 = vrcp.pop %v6181
      %v6213 = vmul.f32 %v6133, %v6212
      %6214 = vrot.lane.b32.xlu0 %v2559, 72
      %v6215 = vpop.permute.xlu0 %6214
      %6216 = vrot.lane.b32.xlu0 %v2564, 72
      %v6217 = vpop.permute.xlu0 %6216
      %6218 = vrot.lane.b32.xlu0 %v2569, 72
      %v6219 = vpop.permute.xlu0 %6218
      %6220 = vrot.lane.b32.xlu0 %v2574, 72
      %v6221 = vpop.permute.xlu0 %6220
      %6222 = vrot.lane.b32.xlu0 %v2579, 72
      %v6223 = vpop.permute.xlu0 %6222
      %6224 = vrot.lane.b32.xlu0 %v2584, 72
      %v6225 = vpop.permute.xlu0 %6224
      %6226 = vrot.lane.b32.xlu0 %v2589, 72
      %v6227 = vpop.permute.xlu0 %6226
      %6228 = vrot.lane.b32.xlu0 %v2594, 72
      %v6229 = vpop.permute.xlu0 %6228
      %v6239 = vsel %vm2952, %v6183, 0
      %v6242 = vsel %vm2952, %v6185, 0
      %v6245 = vsel %vm2952, %v6187, 0
      %v6248 = vsel %vm2952, %v6189, 0
      %v6251 = vsel %vm2952, %v6191, 0
      %v6254 = vsel %vm2952, %v6193, 0
      %v6257 = vsel %vm2952, %v6195, 0
      %v6260 = vsel %vm2952, %v6197, 0
      %6262 = vmatprep.subr.mxu0 0.0
      %6263 = vmatpush1.msra.mxu0 %v6215
      %6264 = vmatprep.subr.mxu0 0.0
      %6265 = vmatpush1.msra.mxu0 %v6217
      %6266 = vmatprep.subr.mxu0 0.0
      %6267 = vmatpush1.msra.mxu0 %v6219
      %6268 = vmatprep.subr.mxu0 0.0
      %6269 = vmatpush1.msra.mxu0 %v6221
      %6270 = vmatprep.subr.mxu0 0.0
      %6271 = vmatpush1.msra.mxu0 %v6223
      %6272 = vmatprep.subr.mxu0 0.0
      %6273 = vmatpush1.msra.mxu0 %v6225
      %6274 = vmatprep.subr.mxu0 0.0
      %6275 = vmatpush1.msra.mxu0 %v6227
      %6276 = vmatprep.subr.mxu0 0.0
      %6277 = vmatpush1.msra.mxu0 %v6229
      %6278 = vmatprep.subr.mxu0 0.0
      %6279 = vmatpush1.msra.mxu0 0.0
      %6280 = vmatprep.subr.mxu0 0.0
      %6281 = vmatpush1.msra.mxu0 0.0
      %6282 = vmatprep.subr.mxu0 0.0
      %6283 = vmatpush1.msra.mxu0 0.0
      %6284 = vmatprep.subr.mxu0 0.0
      %6285 = vmatpush1.msra.mxu0 0.0
      %6286 = vmatprep.subr.mxu0 0.0
      %6287 = vmatpush1.msra.mxu0 0.0
      %6288 = vmatprep.subr.mxu0 0.0
      %6289 = vmatpush1.msra.mxu0 0.0
      %6290 = vmatprep.subr.mxu0 0.0
      %6291 = vmatpush1.msra.mxu0 0.0
      %6292 = vmatprep.subr.mxu0 0.0
      %6293 = vmatpush1.msra.mxu0 0.0
      %6294 = vmatprep.subr.mxu0 0.0
      %6295 = vmatpush1.msra.mxu0 0.0
      %6296 = vmatprep.subr.mxu0 0.0
      %6297 = vmatpush1.msra.mxu0 0.0
      %6298 = vmatprep.subr.mxu0 0.0
      %6299 = vmatpush1.msra.mxu0 0.0
      %6300 = vmatprep.subr.mxu0 0.0
      %6301 = vmatpush1.msra.mxu0 0.0
      %6302 = vmatprep.subr.mxu0 0.0
      %6303 = vmatpush1.msra.mxu0 0.0
      %6304 = vmatprep.subr.mxu0 0.0
      %6305 = vmatpush1.msra.mxu0 0.0
      %6306 = vmatprep.subr.mxu0 0.0
      %6307 = vmatpush1.msra.mxu0 0.0
      %6308 = vmatprep.subr.mxu0 0.0
      %6309 = vmatpush1.msra.mxu0 0.0
      %6310 = vmatprep.subr.mxu0 0.0
      %6311 = vmatpush1.msra.mxu0 0.0
      %6312 = vmatprep.subr.mxu0 0.0
      %6313 = vmatpush1.msra.mxu0 0.0
      %6314 = vmatprep.subr.mxu0 0.0
      %6315 = vmatpush1.msra.mxu0 0.0
      %6316 = vmatprep.subr.mxu0 0.0
      %6317 = vmatpush1.msra.mxu0 0.0
      %6318 = vmatprep.subr.mxu0 0.0
      %6319 = vmatpush1.msra.mxu0 0.0
      %6320 = vmatprep.subr.mxu0 0.0
      %6321 = vmatpush1.msra.mxu0 0.0
      %6322 = vmatprep.subr.mxu0 0.0
      %6323 = vmatpush1.msra.mxu0 0.0
      %6324 = vmatprep.subr.mxu0 0.0
      %6325 = vmatpush1.msra.mxu0 0.0
      %6326 = vmatprep.mubr.f32.mxu0 0.0
      %6327 = vmatmul.mubr.f32.gmra.mrb[0].mxu0 %v6239
      %v6328 = vpop.f32.mrb[0].mxu0
      %v6329 = vadd.f32 0.0, %v6328
      %v6330 = vpop.f32.mrb[0].mxu0
      %6331 = vmatprep.mubr.f32.mxu0 0.0
      %6332 = vmatmul.mubr.f32.gmra.mrb[0].mxu0 %v6242
      %v6333 = vpop.f32.mrb[0].mxu0
      %v6334 = vadd.f32 0.0, %v6333
      %v6335 = vpop.f32.mrb[0].mxu0
      %6336 = vmatprep.mubr.f32.mxu0 0.0
      %6337 = vmatmul.mubr.f32.gmra.mrb[0].mxu0 %v6245
      %v6338 = vpop.f32.mrb[0].mxu0
      %v6339 = vadd.f32 0.0, %v6338
      %v6340 = vpop.f32.mrb[0].mxu0
      %6341 = vmatprep.mubr.f32.mxu0 0.0
      %6342 = vmatmul.mubr.f32.gmra.mrb[0].mxu0 %v6248
      %v6343 = vpop.f32.mrb[0].mxu0
      %v6344 = vadd.f32 0.0, %v6343
      %v6345 = vpop.f32.mrb[0].mxu0
      %6346 = vmatprep.mubr.f32.mxu0 0.0
      %6347 = vmatmul.mubr.f32.gmra.mrb[0].mxu0 %v6251
      %v6348 = vpop.f32.mrb[0].mxu0
      %v6349 = vadd.f32 0.0, %v6348
      %v6350 = vpop.f32.mrb[0].mxu0
      %6351 = vmatprep.mubr.f32.mxu0 0.0
      %6352 = vmatmul.mubr.f32.gmra.mrb[0].mxu0 %v6254
      %v6353 = vpop.f32.mrb[0].mxu0
      %v6354 = vadd.f32 0.0, %v6353
      %v6355 = vpop.f32.mrb[0].mxu0
      %6356 = vmatprep.mubr.f32.mxu0 0.0
      %6357 = vmatmul.mubr.f32.gmra.mrb[0].mxu0 %v6257
      %v6358 = vpop.f32.mrb[0].mxu0
      %v6359 = vadd.f32 0.0, %v6358
      %v6360 = vpop.f32.mrb[0].mxu0
      %6361 = vmatprep.mubr.f32.mxu0 0.0
      %6362 = vmatmul.mubr.f32.gmra.mrb[0].mxu0 %v6260
      %v6363 = vpop.f32.mrb[0].mxu0
      %v6364 = vadd.f32 0.0, %v6363
      %v6365 = vpop.f32.mrb[0].mxu0
      %6366 = vdwg.mxu0
      %6367 = vrot.lane.b32.xlu0 %v2599, 72
      %v6368 = vpop.permute.xlu0 %6367
      %6369 = vrot.lane.b32.xlu0 %v2604, 72
      %v6370 = vpop.permute.xlu0 %6369
      %6371 = vrot.lane.b32.xlu0 %v2609, 72
      %v6372 = vpop.permute.xlu0 %6371
      %6373 = vrot.lane.b32.xlu0 %v2614, 72
      %v6374 = vpop.permute.xlu0 %6373
      %6375 = vrot.lane.b32.xlu0 %v2619, 72
      %v6376 = vpop.permute.xlu0 %6375
      %6377 = vrot.lane.b32.xlu0 %v2624, 72
      %v6378 = vpop.permute.xlu0 %6377
      %6379 = vrot.lane.b32.xlu0 %v2629, 72
      %v6380 = vpop.permute.xlu0 %6379
      %6381 = vrot.lane.b32.xlu0 %v2634, 72
      %v6382 = vpop.permute.xlu0 %6381
      %v6392 = vsel %vm2952, %v6199, 0
      %v6395 = vsel %vm2952, %v6201, 0
      %v6398 = vsel %vm2952, %v6203, 0
      %v6401 = vsel %vm2952, %v6205, 0
      %v6404 = vsel %vm2952, %v6207, 0
      %v6407 = vsel %vm2952, %v6209, 0
      %v6410 = vsel %vm2952, %v6211, 0
      %v6413 = vsel %vm2952, %v6213, 0
      %6415 = vmatprep.subr.mxu0 0.0
      %6416 = vmatpush1.msra.mxu0 %v6368
      %6417 = vmatprep.subr.mxu0 0.0
      %6418 = vmatpush1.msra.mxu0 %v6370
      %6419 = vmatprep.subr.mxu0 0.0
      %6420 = vmatpush1.msra.mxu0 %v6372
      %6421 = vmatprep.subr.mxu0 0.0
      %6422 = vmatpush1.msra.mxu0 %v6374
      %6423 = vmatprep.subr.mxu0 0.0
      %6424 = vmatpush1.msra.mxu0 %v6376
      %6425 = vmatprep.subr.mxu0 0.0
      %6426 = vmatpush1.msra.mxu0 %v6378
      %6427 = vmatprep.subr.mxu0 0.0
      %6428 = vmatpush1.msra.mxu0 %v6380
      %6429 = vmatprep.subr.mxu0 0.0
      %6430 = vmatpush1.msra.mxu0 %v6382
      %6431 = vmatprep.subr.mxu0 0.0
      %6432 = vmatpush1.msra.mxu0 0.0
      %6433 = vmatprep.subr.mxu0 0.0
      %6434 = vmatpush1.msra.mxu0 0.0
      %6435 = vmatprep.subr.mxu0 0.0
      %6436 = vmatpush1.msra.mxu0 0.0
      %6437 = vmatprep.subr.mxu0 0.0
      %6438 = vmatpush1.msra.mxu0 0.0
      %6439 = vmatprep.subr.mxu0 0.0
      %6440 = vmatpush1.msra.mxu0 0.0
      %6441 = vmatprep.subr.mxu0 0.0
      %6442 = vmatpush1.msra.mxu0 0.0
      %6443 = vmatprep.subr.mxu0 0.0
      %6444 = vmatpush1.msra.mxu0 0.0
      %6445 = vmatprep.subr.mxu0 0.0
      %6446 = vmatpush1.msra.mxu0 0.0
      %6447 = vmatprep.subr.mxu0 0.0
      %6448 = vmatpush1.msra.mxu0 0.0
      %6449 = vmatprep.subr.mxu0 0.0
      %6450 = vmatpush1.msra.mxu0 0.0
      %6451 = vmatprep.subr.mxu0 0.0
      %6452 = vmatpush1.msra.mxu0 0.0
      %6453 = vmatprep.subr.mxu0 0.0
      %6454 = vmatpush1.msra.mxu0 0.0
      %6455 = vmatprep.subr.mxu0 0.0
      %6456 = vmatpush1.msra.mxu0 0.0
      %6457 = vmatprep.subr.mxu0 0.0
      %6458 = vmatpush1.msra.mxu0 0.0
      %6459 = vmatprep.subr.mxu0 0.0
      %6460 = vmatpush1.msra.mxu0 0.0
      %6461 = vmatprep.subr.mxu0 0.0
      %6462 = vmatpush1.msra.mxu0 0.0
      %6463 = vmatprep.subr.mxu0 0.0
      %6464 = vmatpush1.msra.mxu0 0.0
      %6465 = vmatprep.subr.mxu0 0.0
      %6466 = vmatpush1.msra.mxu0 0.0
      %6467 = vmatprep.subr.mxu0 0.0
      %6468 = vmatpush1.msra.mxu0 0.0
      %6469 = vmatprep.subr.mxu0 0.0
      %6470 = vmatpush1.msra.mxu0 0.0
      %6471 = vmatprep.subr.mxu0 0.0
      %6472 = vmatpush1.msra.mxu0 0.0
      %6473 = vmatprep.subr.mxu0 0.0
      %6474 = vmatpush1.msra.mxu0 0.0
      %6475 = vmatprep.subr.mxu0 0.0
      %6476 = vmatpush1.msra.mxu0 0.0
      %6477 = vmatprep.subr.mxu0 0.0
      %6478 = vmatpush1.msra.mxu0 0.0
      %6479 = vmatprep.mubr.f32.mxu0 0.0
      %6480 = vmatmul.mubr.f32.gmra.mrb[0].mxu0 %v6392
      %v6481 = vpop.f32.mrb[0].mxu0
      %v6482 = vadd.f32 0.0, %v6481
      %v6483 = vpop.f32.mrb[0].mxu0
      %6484 = vmatprep.mubr.f32.mxu0 0.0
      %6485 = vmatmul.mubr.f32.gmra.mrb[0].mxu0 %v6395
      %v6486 = vpop.f32.mrb[0].mxu0
      %v6487 = vadd.f32 0.0, %v6486
      %v6488 = vpop.f32.mrb[0].mxu0
      %6489 = vmatprep.mubr.f32.mxu0 0.0
      %6490 = vmatmul.mubr.f32.gmra.mrb[0].mxu0 %v6398
      %v6491 = vpop.f32.mrb[0].mxu0
      %v6492 = vadd.f32 0.0, %v6491
      %v6493 = vpop.f32.mrb[0].mxu0
      %6494 = vmatprep.mubr.f32.mxu0 0.0
      %6495 = vmatmul.mubr.f32.gmra.mrb[0].mxu0 %v6401
      %v6496 = vpop.f32.mrb[0].mxu0
      %v6497 = vadd.f32 0.0, %v6496
      %v6498 = vpop.f32.mrb[0].mxu0
      %6499 = vmatprep.mubr.f32.mxu0 0.0
      %6500 = vmatmul.mubr.f32.gmra.mrb[0].mxu0 %v6404
      %v6501 = vpop.f32.mrb[0].mxu0
      %v6502 = vadd.f32 0.0, %v6501
      %v6503 = vpop.f32.mrb[0].mxu0
      %6504 = vmatprep.mubr.f32.mxu0 0.0
      %6505 = vmatmul.mubr.f32.gmra.mrb[0].mxu0 %v6407
      %v6506 = vpop.f32.mrb[0].mxu0
      %v6507 = vadd.f32 0.0, %v6506
      %v6508 = vpop.f32.mrb[0].mxu0
      %6509 = vmatprep.mubr.f32.mxu0 0.0
      %6510 = vmatmul.mubr.f32.gmra.mrb[0].mxu0 %v6410
      %v6511 = vpop.f32.mrb[0].mxu0
      %v6512 = vadd.f32 0.0, %v6511
      %v6513 = vpop.f32.mrb[0].mxu0
      %6514 = vmatprep.mubr.f32.mxu0 0.0
      %6515 = vmatmul.mubr.f32.gmra.mrb[0].mxu0 %v6413
      %v6516 = vpop.f32.mrb[0].mxu0
      %v6517 = vadd.f32 0.0, %v6516
      %v6518 = vpop.f32.mrb[0].mxu0
      %6519 = vdwg.mxu0
      %v6520 = vld [vmem:[%s10 + $0x18] sm:$0xff]
      %v6522 = vsel %vm2645, %v6329, 0
      %v6525 = vsel %vm2645, %v6334, 0
      %v6528 = vsel %vm2645, %v6339, 0
      %v6531 = vsel %vm2645, %v6344, 0
      %v6534 = vsel %vm2645, %v6349, 0
      %v6537 = vsel %vm2645, %v6354, 0
      %v6540 = vsel %vm2645, %v6359, 0
      %v6543 = vsel %vm2645, %v6364, 0
      %v6546 = vsel %vm2645, %v6482, 0
      %v6549 = vsel %vm2645, %v6487, 0
      %v6552 = vsel %vm2645, %v6492, 0
      %v6555 = vsel %vm2645, %v6497, 0
      %v6558 = vsel %vm2645, %v6502, 0
      %v6561 = vsel %vm2645, %v6507, 0
      %v6564 = vsel %vm2645, %v6512, 0
      %v6567 = vsel %vm2645, %v6517, 0
      %6569 = vmatprep.subr.mxu0 0.0
      %6570 = vmatpush1.msra.mxu0 %v6520
      %6571 = vmatprep.subr.mxu0 0.0
      %6572 = vmatpush1.msra.mxu0 0.0
      %6573 = vmatprep.subr.mxu0 0.0
      %6574 = vmatpush1.msra.mxu0 0.0
      %6575 = vmatprep.subr.mxu0 0.0
      %6576 = vmatpush1.msra.mxu0 0.0
      %6577 = vmatprep.subr.mxu0 0.0
      %6578 = vmatpush1.msra.mxu0 0.0
      %6579 = vmatprep.subr.mxu0 0.0
      %6580 = vmatpush1.msra.mxu0 0.0
      %6581 = vmatprep.subr.mxu0 0.0
      %6582 = vmatpush1.msra.mxu0 0.0
      %6583 = vmatprep.subr.mxu0 0.0
      %6584 = vmatpush1.msra.mxu0 0.0
      %6585 = vmatprep.subr.mxu0 0.0
      %6586 = vmatpush1.msra.mxu0 0.0
      %6587 = vmatprep.subr.mxu0 0.0
      %6588 = vmatpush1.msra.mxu0 0.0
      %6589 = vmatprep.subr.mxu0 0.0
      %6590 = vmatpush1.msra.mxu0 0.0
      %6591 = vmatprep.subr.mxu0 0.0
      %6592 = vmatpush1.msra.mxu0 0.0
      %6593 = vmatprep.subr.mxu0 0.0
      %6594 = vmatpush1.msra.mxu0 0.0
      %6595 = vmatprep.subr.mxu0 0.0
      %6596 = vmatpush1.msra.mxu0 0.0
      %6597 = vmatprep.subr.mxu0 0.0
      %6598 = vmatpush1.msra.mxu0 0.0
      %6599 = vmatprep.subr.mxu0 0.0
      %6600 = vmatpush1.msra.mxu0 0.0
      %6601 = vmatprep.subr.mxu0 0.0
      %6602 = vmatpush1.msra.mxu0 0.0
      %6603 = vmatprep.subr.mxu0 0.0
      %6604 = vmatpush1.msra.mxu0 0.0
      %6605 = vmatprep.subr.mxu0 0.0
      %6606 = vmatpush1.msra.mxu0 0.0
      %6607 = vmatprep.subr.mxu0 0.0
      %6608 = vmatpush1.msra.mxu0 0.0
      %6609 = vmatprep.subr.mxu0 0.0
      %6610 = vmatpush1.msra.mxu0 0.0
      %6611 = vmatprep.subr.mxu0 0.0
      %6612 = vmatpush1.msra.mxu0 0.0
      %6613 = vmatprep.subr.mxu0 0.0
      %6614 = vmatpush1.msra.mxu0 0.0
      %6615 = vmatprep.subr.mxu0 0.0
      %6616 = vmatpush1.msra.mxu0 0.0
      %6617 = vmatprep.subr.mxu0 0.0
      %6618 = vmatpush1.msra.mxu0 0.0
      %6619 = vmatprep.subr.mxu0 0.0
      %6620 = vmatpush1.msra.mxu0 0.0
      %6621 = vmatprep.subr.mxu0 0.0
      %6622 = vmatpush1.msra.mxu0 0.0
      %6623 = vmatprep.subr.mxu0 0.0
      %6624 = vmatpush1.msra.mxu0 0.0
      %6625 = vmatprep.subr.mxu0 0.0
      %6626 = vmatpush1.msra.mxu0 0.0
      %6627 = vmatprep.subr.mxu0 0.0
      %6628 = vmatpush1.msra.mxu0 0.0
      %6629 = vmatprep.subr.mxu0 0.0
      %6630 = vmatpush1.msra.mxu0 0.0
      %6631 = vmatprep.subr.mxu0 0.0
      %6632 = vmatpush1.msra.mxu0 0.0
      %6633 = vmatprep.mubr.f32.mxu0 0.0
      %6634 = vmatmul.mubr.f32.gmra.mrb[0].mxu0 %v6522
      %v6635 = vpop.f32.mrb[0].mxu0
      %v6636 = vadd.f32 0.0, %v6635
      %v6637 = vpop.f32.mrb[0].mxu0
      %6638 = vmatprep.mubr.f32.mxu0 0.0
      %6639 = vmatmul.mubr.f32.gmra.mrb[0].mxu0 %v6525
      %v6640 = vpop.f32.mrb[0].mxu0
      %v6641 = vadd.f32 0.0, %v6640
      %v6642 = vpop.f32.mrb[0].mxu0
      %6643 = vmatprep.mubr.f32.mxu0 0.0
      %6644 = vmatmul.mubr.f32.gmra.mrb[0].mxu0 %v6528
      %v6645 = vpop.f32.mrb[0].mxu0
      %v6646 = vadd.f32 0.0, %v6645
      %v6647 = vpop.f32.mrb[0].mxu0
      %6648 = vmatprep.mubr.f32.mxu0 0.0
      %6649 = vmatmul.mubr.f32.gmra.mrb[0].mxu0 %v6531
      %v6650 = vpop.f32.mrb[0].mxu0
      %v6651 = vadd.f32 0.0, %v6650
      %v6652 = vpop.f32.mrb[0].mxu0
      %6653 = vmatprep.mubr.f32.mxu0 0.0
      %6654 = vmatmul.mubr.f32.gmra.mrb[0].mxu0 %v6534
      %v6655 = vpop.f32.mrb[0].mxu0
      %v6656 = vadd.f32 0.0, %v6655
      %v6657 = vpop.f32.mrb[0].mxu0
      %6658 = vmatprep.mubr.f32.mxu0 0.0
      %6659 = vmatmul.mubr.f32.gmra.mrb[0].mxu0 %v6537
      %v6660 = vpop.f32.mrb[0].mxu0
      %v6661 = vadd.f32 0.0, %v6660
      %v6662 = vpop.f32.mrb[0].mxu0
      %6663 = vmatprep.mubr.f32.mxu0 0.0
      %6664 = vmatmul.mubr.f32.gmra.mrb[0].mxu0 %v6540
      %v6665 = vpop.f32.mrb[0].mxu0
      %v6666 = vadd.f32 0.0, %v6665
      %v6667 = vpop.f32.mrb[0].mxu0
      %6668 = vmatprep.mubr.f32.mxu0 0.0
      %6669 = vmatmul.mubr.f32.gmra.mrb[0].mxu0 %v6543
      %v6670 = vpop.f32.mrb[0].mxu0
      %v6671 = vadd.f32 0.0, %v6670
      %v6672 = vpop.f32.mrb[0].mxu0
      %6673 = vmatprep.mubr.f32.mxu0 0.0
      %6674 = vmatmul.mubr.f32.gmra.mrb[0].mxu0 %v6546
      %v6675 = vpop.f32.mrb[0].mxu0
      %v6676 = vadd.f32 0.0, %v6675
      %v6677 = vpop.f32.mrb[0].mxu0
      %6678 = vmatprep.mubr.f32.mxu0 0.0
      %6679 = vmatmul.mubr.f32.gmra.mrb[0].mxu0 %v6549
      %v6680 = vpop.f32.mrb[0].mxu0
      %v6681 = vadd.f32 0.0, %v6680
      %v6682 = vpop.f32.mrb[0].mxu0
      %6683 = vmatprep.mubr.f32.mxu0 0.0
      %6684 = vmatmul.mubr.f32.gmra.mrb[0].mxu0 %v6552
      %v6685 = vpop.f32.mrb[0].mxu0
      %v6686 = vadd.f32 0.0, %v6685
      %v6687 = vpop.f32.mrb[0].mxu0
      %6688 = vmatprep.mubr.f32.mxu0 0.0
      %6689 = vmatmul.mubr.f32.gmra.mrb[0].mxu0 %v6555
      %v6690 = vpop.f32.mrb[0].mxu0
      %v6691 = vadd.f32 0.0, %v6690
      %v6692 = vpop.f32.mrb[0].mxu0
      %6693 = vmatprep.mubr.f32.mxu0 0.0
      %6694 = vmatmul.mubr.f32.gmra.mrb[0].mxu0 %v6558
      %v6695 = vpop.f32.mrb[0].mxu0
      %v6696 = vadd.f32 0.0, %v6695
      %v6697 = vpop.f32.mrb[0].mxu0
      %6698 = vmatprep.mubr.f32.mxu0 0.0
      %6699 = vmatmul.mubr.f32.gmra.mrb[0].mxu0 %v6561
      %v6700 = vpop.f32.mrb[0].mxu0
      %v6701 = vadd.f32 0.0, %v6700
      %v6702 = vpop.f32.mrb[0].mxu0
      %6703 = vmatprep.mubr.f32.mxu0 0.0
      %6704 = vmatmul.mubr.f32.gmra.mrb[0].mxu0 %v6564
      %v6705 = vpop.f32.mrb[0].mxu0
      %v6706 = vadd.f32 0.0, %v6705
      %v6707 = vpop.f32.mrb[0].mxu0
      %6708 = vmatprep.mubr.f32.mxu0 0.0
      %6709 = vmatmul.mubr.f32.gmra.mrb[0].mxu0 %v6567
      %v6710 = vpop.f32.mrb[0].mxu0
      %v6711 = vadd.f32 0.0, %v6710
      %v6712 = vpop.f32.mrb[0].mxu0
      %6713 = vdwg.mxu0
      %v6714 = vadd.f32 %v5675, %v6636
      %v6715 = vadd.f32 %v5676, %v6641
      %v6716 = vadd.f32 %v5677, %v6646
      %v6717 = vadd.f32 %v5678, %v6651
      %v6718 = vadd.f32 %v5679, %v6656
      %v6719 = vadd.f32 %v5680, %v6661
      %v6720 = vadd.f32 %v5681, %v6666
      %v6721 = vadd.f32 %v5682, %v6671
      %v6722 = vadd.f32 %v5683, %v6676
      %v6723 = vadd.f32 %v5684, %v6681
      %v6724 = vadd.f32 %v5685, %v6686
      %v6725 = vadd.f32 %v5686, %v6691
      %v6726 = vadd.f32 %v5687, %v6696
      %v6727 = vadd.f32 %v5688, %v6701
      %v6728 = vadd.f32 %v5689, %v6706
      %v6729 = vadd.f32 %v5690, %v6711
      %v6730 = vld [vmem:[%s11] sm:$0x1]
      %v6732 = vlaneseq
      %v6733 = vshrl.u32 %v6732, 7
      %v6734 = vsub.s32 0, %v6733
      %v6735 = vrot.slane %v6730, %v6734
      %v6737 = vadd.f32 %v6714, %v6735
      %v6738 = vadd.f32 %v6715, %v6735
      %v6739 = vadd.f32 %v6716, %v6735
      %v6740 = vadd.f32 %v6717, %v6735
      %v6741 = vadd.f32 %v6718, %v6735
      %v6742 = vadd.f32 %v6719, %v6735
      %v6743 = vadd.f32 %v6720, %v6735
      %v6744 = vadd.f32 %v6721, %v6735
      %v6745 = vadd.f32 %v6722, %v6735
      %v6746 = vadd.f32 %v6723, %v6735
      %v6747 = vadd.f32 %v6724, %v6735
      %v6748 = vadd.f32 %v6725, %v6735
      %v6749 = vadd.f32 %v6726, %v6735
      %v6750 = vadd.f32 %v6727, %v6735
      %v6751 = vadd.f32 %v6728, %v6735
      %v6752 = vadd.f32 %v6729, %v6735
      %6753 = vst.msk [vmem:[%s413] sm:$0xff] %vm414, %v6737
      %6754 = vst.msk [vmem:[%s413 + $0x8] sm:$0xff] %vm414, %v6738
      %6755 = vst.msk [vmem:[%s413 + $0x10] sm:$0xff] %vm414, %v6739
      %6756 = vst.msk [vmem:[%s413 + $0x18] sm:$0xff] %vm414, %v6740
      %6757 = vst.msk [vmem:[%s413 + $0x20] sm:$0xff] %vm414, %v6741
      %6758 = vst.msk [vmem:[%s413 + $0x28] sm:$0xff] %vm414, %v6742
      %6759 = vst.msk [vmem:[%s413 + $0x30] sm:$0xff] %vm414, %v6743
      %6760 = vst.msk [vmem:[%s413 + $0x38] sm:$0xff] %vm414, %v6744
      %6761 = vst.msk [vmem:[%s413 + $0x40] sm:$0xff] %vm414, %v6745
      %6762 = vst.msk [vmem:[%s413 + $0x48] sm:$0xff] %vm414, %v6746
      %6763 = vst.msk [vmem:[%s413 + $0x50] sm:$0xff] %vm414, %v6747
      %6764 = vst.msk [vmem:[%s413 + $0x58] sm:$0xff] %vm414, %v6748
      %6765 = vst.msk [vmem:[%s413 + $0x60] sm:$0xff] %vm414, %v6749
      %6766 = vst.msk [vmem:[%s413 + $0x68] sm:$0xff] %vm414, %v6750
      %6767 = vst.msk [vmem:[%s413 + $0x70] sm:$0xff] %vm414, %v6751
      %6768 = vst.msk [vmem:[%s413 + $0x78] sm:$0xff] %vm414, %v6752
      %p6769 = scmp.lt.s32.totalorder %s23, 1
      %s6770 = scalar_select %p6769, %s23, 1
      %s6771 = smul.addr %s6770, 16
      %s6772 = smul.addr %s6771, 8
      %s6773 = scalar_lea.vmem %s12, %s6772
      // Predicated region
      $region69: #{scse_block_forward.3} parent=67 // pred_check
        %p6774 = pneg %p298
      $region70: #{scse_block_forward.3} parent=67 // pred_check_branch
        %6776 = sbr.rel (%p6774) target = $region72
      $region71: #{scse_block_forward.3} parent=67 // pred_region
        _
      $region72: #{scse_block_forward.3} parent=67 // pred_fallthru
        _
    $region68: #{scse_block_forward.3} parent=5 // pred_fallthru
      _
    %p6777 = scmp.le.s32.totalorder 2, %s18
    // Predicated region
    $region73: #{scse_block_forward.3} parent=5 // pred_check
      %p6778 = pneg %p6777
    $region74: #{scse_block_forward.3} parent=5 // pred_check_branch
      %6780 = sbr.rel (%p6778) target = $region76
    $region75: #{scse_block_forward.3} parent=5 // pred_region
      %s6781 = ssub.s32 %s18, 2
      // Predicated region
      $region77: #{scse_block_forward.3} parent=75 // pred_check
        %p6782 = pneg %p304
      $region78: #{scse_block_forward.3} parent=75 // pred_check_branch
        %6784 = sbr.rel (%p6782) target = $region80
      $region79: #{scse_block_forward.3} parent=75 // pred_region
        %p6785 = scmp.lt.s32.totalorder %s24, 1
        %s6786 = scalar_select %p6785, %s24, 1
        %s6787 = smul.addr %s6786, 16
        %s6788 = smul.addr %s6787, 8
        %s6789 = scalar_lea.vmem %s12, %s6788
      $region80: #{scse_block_forward.3} parent=75 // pred_fallthru
        _
    $region76: #{scse_block_forward.3} parent=5 // pred_fallthru
      _
  $region6: #{scse_block_forward.3} parent=0 // loop_footer
    %s22 = sadd.s32 1, %s18
  $region7: #{scse_block_forward.3} parent=0 // loop_footer_branch
    %17 = sbr.rel target = $region3
  $region8: #{scse_block_forward.3} parent=0 // loop_exit
    _

// kernel: scse_block_forward.4
$region0: #{scse_block_forward.4}
  #allocation0 [shape = 'u32[]', space=smem, size = 0x4, offset = 0x4, fixed_abs, tag = 'smem constant byte address 0x4 - core index']
  #allocation1 [shape = 'u32[144,128]{1,0:T(1,128)}', space=vmem, size = 0x12000, scoped, tag = 'internal scratch']
  #allocation2 [shape = 'f32[10,18,128]{2,1,0:T(8,128)}', space=vmem, size = 0x1e000, scoped, tag = 'scratch operand']
  %s0 = inlined_call_operand.vmem [shape: f32[2,128,32], index: 0, kind: input, shape index: {}]
  %s1 = inlined_call_operand.vmem [shape: f32[1,32], index: 1, kind: input, shape index: {}]
  %s2 = inlined_call_operand.vmem [shape: f32[1,32], index: 2, kind: input, shape index: {}]
  %s3 = inlined_call_operand.vmem [shape: f32[32,128], index: 3, kind: input, shape index: {}]
  %s4 = inlined_call_operand.vmem [shape: f32[1,128], index: 4, kind: input, shape index: {}]
  %s5 = inlined_call_operand.vmem [shape: f32[3,3,128], index: 5, kind: input, shape index: {}]
  %s6 = inlined_call_operand.vmem [shape: f32[1,128], index: 6, kind: input, shape index: {}]
  %s7 = inlined_call_operand.vmem [shape: f32[128,32], index: 7, kind: input, shape index: {}]
  %s8 = inlined_call_operand.vmem [shape: f32[1,32], index: 8, kind: input, shape index: {}]
  %s9 = inlined_call_operand.vmem [shape: f32[2,128,32], index: 9, kind: output, shape index: {}]
  %s10 = sld [smem:[#allocation0]]
  $region69: #{scse_block_forward.4} parent=0
    _
  %s12 = ssub.s32 1, %s10
  %s13 = scalar_select 0, %s12, %s10
  loop: start=0, step=1, limit=4
  $region2: #{scse_block_forward.4} parent=0 // loop_pre_header
    _
  $region3: #{scse_block_forward.4} parent=0 // loop_header
    %s15 = sphi 0, %s19
    %p16 = scmp.ge.s32.totalorder %s15, 4
    %s25 = sphi 0, %s27
    %s28 = sphi 0, %s25
    %s29 = sphi 0, %s28
    %s45 = sphi 0, %s29
    %s49 = sphi 0, %s49
    %s51 = sphi 0, %s49
    %s52 = sphi 0, %s51
    %s66 = sphi 0, %s52
    %s70 = sphi 0, %s70
    %s72 = sphi 0, %s70
    %s73 = sphi 0, %s72
    %s87 = sphi 0, %s73
    %s91 = sphi 0, %s91
    %s93 = sphi 0, %s91
    %s94 = sphi 0, %s93
    %s108 = sphi 0, %s94
    %s112 = sphi 0, %s112
    %s114 = sphi 0, %s112
    %s115 = sphi 0, %s114
    %s129 = sphi 0, %s115
    %s133 = sphi 0, %s133
    %s135 = sphi 0, %s133
    %s136 = sphi 0, %s135
    %s150 = sphi 0, %s136
    %s154 = sphi 0, %s154
    %s156 = sphi 0, %s154
    %s157 = sphi 0, %s156
    %s171 = sphi 0, %s157
    %s175 = sphi 0, %s175
    %s177 = sphi 0, %s175
    %s178 = sphi 0, %s177
    %s192 = sphi 0, %s178
    %s196 = sphi 0, %s196
    %s198 = sphi 0, %s196
    %s199 = sphi 0, %s198
    %s213 = sphi 0, %s199
    %s219 = sphi 0, %s221
    %s222 = sphi 0, %s219
    %s223 = sphi 0, %s222
    %s239 = sphi 0, %s223
  $region4: #{scse_block_forward.4} parent=0 // loop_header_branch
    %18 = sbr.rel (%p16) target = $region8
  $region5: #{scse_block_forward.4} parent=0 // loop_body
    %s20 = ssub.s32 %s15, 1
    %s21 = ssub.s32 %s15, 2
    %s22 = sadd.s32 %s15, 1
    %s23 = ssub.s32 %s15, %s22
    %p24 = scmp.eq.s32.totalorder %s23, 0
    %s26 = sadd.s32 %s25, 1
    %s27 = scalar_select %p24, %s25, %s26
    %p30 = pneg %p24
    %p31 = scmp.eq.s32.totalorder %s15, 1
    %p32 = por %p30, %p31
    %p33 = scmp.ne.s32.totalorder %s25, %s28
    %p34 = scmp.eq.s32.totalorder %s15, 0
    %p35 = por %p33, %p34
    %p36 = scmp.ne.s32.totalorder %s25, %s28
    %p37 = scmp.eq.s32.totalorder %s20, 1
    %p38 = por %p36, %p37
    %p39 = scmp.ne.s32.totalorder %s28, %s29
    %p40 = scmp.eq.s32.totalorder %s20, 0
    %p41 = por %p39, %p40
    %p42 = scmp.ne.s32.totalorder %s28, %s29
    %p43 = scmp.eq.s32.totalorder %s21, 1
    %p44 = por %p42, %p43
    %p46 = scmp.ne.s32.totalorder %s29, %s45
    %p47 = scmp.eq.s32.totalorder %s21, 0
    %p48 = por %p46, %p47
    %s50 = sadd.s32 %s49, 1
    %p53 = scmp.eq.s32.totalorder %s15, 1
    %p54 = scmp.ne.s32.totalorder %s49, %s51
    %p55 = scmp.eq.s32.totalorder %s15, 0
    %p56 = por %p54, %p55
    %p57 = scmp.ne.s32.totalorder %s49, %s51
    %p58 = scmp.eq.s32.totalorder %s20, 1
    %p59 = por %p57, %p58
    %p60 = scmp.ne.s32.totalorder %s51, %s52
    %p61 = scmp.eq.s32.totalorder %s20, 0
    %p62 = por %p60, %p61
    %p63 = scmp.ne.s32.totalorder %s51, %s52
    %p64 = scmp.eq.s32.totalorder %s21, 1
    %p65 = por %p63, %p64
    %p67 = scmp.ne.s32.totalorder %s52, %s66
    %p68 = scmp.eq.s32.totalorder %s21, 0
    %p69 = por %p67, %p68
    %s71 = sadd.s32 %s70, 1
    %p74 = scmp.eq.s32.totalorder %s15, 1
    %p75 = scmp.ne.s32.totalorder %s70, %s72
    %p76 = scmp.eq.s32.totalorder %s15, 0
    %p77 = por %p75, %p76
    %p78 = scmp.ne.s32.totalorder %s70, %s72
    %p79 = scmp.eq.s32.totalorder %s20, 1
    %p80 = por %p78, %p79
    %p81 = scmp.ne.s32.totalorder %s72, %s73
    %p82 = scmp.eq.s32.totalorder %s20, 0
    %p83 = por %p81, %p82
    %p84 = scmp.ne.s32.totalorder %s72, %s73
    %p85 = scmp.eq.s32.totalorder %s21, 1
    %p86 = por %p84, %p85
    %p88 = scmp.ne.s32.totalorder %s73, %s87
    %p89 = scmp.eq.s32.totalorder %s21, 0
    %p90 = por %p88, %p89
    %s92 = sadd.s32 %s91, 1
    %p95 = scmp.eq.s32.totalorder %s15, 1
    %p96 = scmp.ne.s32.totalorder %s91, %s93
    %p97 = scmp.eq.s32.totalorder %s15, 0
    %p98 = por %p96, %p97
    %p99 = scmp.ne.s32.totalorder %s91, %s93
    %p100 = scmp.eq.s32.totalorder %s20, 1
    %p101 = por %p99, %p100
    %p102 = scmp.ne.s32.totalorder %s93, %s94
    %p103 = scmp.eq.s32.totalorder %s20, 0
    %p104 = por %p102, %p103
    %p105 = scmp.ne.s32.totalorder %s93, %s94
    %p106 = scmp.eq.s32.totalorder %s21, 1
    %p107 = por %p105, %p106
    %p109 = scmp.ne.s32.totalorder %s94, %s108
    %p110 = scmp.eq.s32.totalorder %s21, 0
    %p111 = por %p109, %p110
    %s113 = sadd.s32 %s112, 1
    %p116 = scmp.eq.s32.totalorder %s15, 1
    %p117 = scmp.ne.s32.totalorder %s112, %s114
    %p118 = scmp.eq.s32.totalorder %s15, 0
    %p119 = por %p117, %p118
    %p120 = scmp.ne.s32.totalorder %s112, %s114
    %p121 = scmp.eq.s32.totalorder %s20, 1
    %p122 = por %p120, %p121
    %p123 = scmp.ne.s32.totalorder %s114, %s115
    %p124 = scmp.eq.s32.totalorder %s20, 0
    %p125 = por %p123, %p124
    %p126 = scmp.ne.s32.totalorder %s114, %s115
    %p127 = scmp.eq.s32.totalorder %s21, 1
    %p128 = por %p126, %p127
    %p130 = scmp.ne.s32.totalorder %s115, %s129
    %p131 = scmp.eq.s32.totalorder %s21, 0
    %p132 = por %p130, %p131
    %s134 = sadd.s32 %s133, 1
    %p137 = scmp.eq.s32.totalorder %s15, 1
    %p138 = scmp.ne.s32.totalorder %s133, %s135
    %p139 = scmp.eq.s32.totalorder %s15, 0
    %p140 = por %p138, %p139
    %p141 = scmp.ne.s32.totalorder %s133, %s135
    %p142 = scmp.eq.s32.totalorder %s20, 1
    %p143 = por %p141, %p142
    %p144 = scmp.ne.s32.totalorder %s135, %s136
    %p145 = scmp.eq.s32.totalorder %s20, 0
    %p146 = por %p144, %p145
    %p147 = scmp.ne.s32.totalorder %s135, %s136
    %p148 = scmp.eq.s32.totalorder %s21, 1
    %p149 = por %p147, %p148
    %p151 = scmp.ne.s32.totalorder %s136, %s150
    %p152 = scmp.eq.s32.totalorder %s21, 0
    %p153 = por %p151, %p152
    %s155 = sadd.s32 %s154, 1
    %p158 = scmp.eq.s32.totalorder %s15, 1
    %p159 = scmp.ne.s32.totalorder %s154, %s156
    %p160 = scmp.eq.s32.totalorder %s15, 0
    %p161 = por %p159, %p160
    %p162 = scmp.ne.s32.totalorder %s154, %s156
    %p163 = scmp.eq.s32.totalorder %s20, 1
    %p164 = por %p162, %p163
    %p165 = scmp.ne.s32.totalorder %s156, %s157
    %p166 = scmp.eq.s32.totalorder %s20, 0
    %p167 = por %p165, %p166
    %p168 = scmp.ne.s32.totalorder %s156, %s157
    %p169 = scmp.eq.s32.totalorder %s21, 1
    %p170 = por %p168, %p169
    %p172 = scmp.ne.s32.totalorder %s157, %s171
    %p173 = scmp.eq.s32.totalorder %s21, 0
    %p174 = por %p172, %p173
    %s176 = sadd.s32 %s175, 1
    %p179 = scmp.eq.s32.totalorder %s15, 1
    %p180 = scmp.ne.s32.totalorder %s175, %s177
    %p181 = scmp.eq.s32.totalorder %s15, 0
    %p182 = por %p180, %p181
    %p183 = scmp.ne.s32.totalorder %s175, %s177
    %p184 = scmp.eq.s32.totalorder %s20, 1
    %p185 = por %p183, %p184
    %p186 = scmp.ne.s32.totalorder %s177, %s178
    %p187 = scmp.eq.s32.totalorder %s20, 0
    %p188 = por %p186, %p187
    %p189 = scmp.ne.s32.totalorder %s177, %s178
    %p190 = scmp.eq.s32.totalorder %s21, 1
    %p191 = por %p189, %p190
    %p193 = scmp.ne.s32.totalorder %s178, %s192
    %p194 = scmp.eq.s32.totalorder %s21, 0
    %p195 = por %p193, %p194
    %s197 = sadd.s32 %s196, 1
    %p200 = scmp.eq.s32.totalorder %s15, 1
    %p201 = scmp.ne.s32.totalorder %s196, %s198
    %p202 = scmp.eq.s32.totalorder %s15, 0
    %p203 = por %p201, %p202
    %p204 = scmp.ne.s32.totalorder %s196, %s198
    %p205 = scmp.eq.s32.totalorder %s20, 1
    %p206 = por %p204, %p205
    %p207 = scmp.ne.s32.totalorder %s198, %s199
    %p208 = scmp.eq.s32.totalorder %s20, 0
    %p209 = por %p207, %p208
    %p210 = scmp.ne.s32.totalorder %s198, %s199
    %p211 = scmp.eq.s32.totalorder %s21, 1
    %p212 = por %p210, %p211
    %p214 = scmp.ne.s32.totalorder %s199, %s213
    %p215 = scmp.eq.s32.totalorder %s21, 0
    %p216 = por %p214, %p215
    %s217 = ssub.s32 %s15, %s22
    %p218 = scmp.eq.s32.totalorder %s217, 0
    %s220 = sadd.s32 %s219, 1
    %s221 = scalar_select %p218, %s219, %s220
    %p224 = pneg %p218
    %p225 = scmp.eq.s32.totalorder %s15, 1
    %p226 = por %p224, %p225
    %p227 = scmp.ne.s32.totalorder %s219, %s222
    %p228 = scmp.eq.s32.totalorder %s15, 0
    %p229 = por %p227, %p228
    %p230 = scmp.ne.s32.totalorder %s219, %s222
    %p231 = scmp.eq.s32.totalorder %s20, 1
    %p232 = por %p230, %p231
    %p233 = scmp.ne.s32.totalorder %s222, %s223
    %p234 = scmp.eq.s32.totalorder %s20, 0
    %p235 = por %p233, %p234
    %p236 = scmp.ne.s32.totalorder %s222, %s223
    %p237 = scmp.eq.s32.totalorder %s21, 1
    %p238 = por %p236, %p237
    %p240 = scmp.ne.s32.totalorder %s223, %s239
    %p241 = scmp.eq.s32.totalorder %s21, 0
    %p242 = por %p240, %p241
    %p243 = scmp.le.s32.totalorder 1, %s15
    %p244 = scmp.lt.s32.totalorder %s15, 3
    %p245 = pnand %p243, %p244
    %p246 = pneg %p245
    // Predicated region
    $region9: #{scse_block_forward.4} parent=5 // pred_check
      _
    $region10: #{scse_block_forward.4} parent=5 // pred_check_branch
      %248 = sbr.rel (%p245) target = $region12
    $region11: #{scse_block_forward.4} parent=5 // pred_region
      %s249 = ssub.s32 %s15, 1
      // Predicated region
      $region13: #{scse_block_forward.4} parent=11 // pred_check
        %p250 = pneg %p62
      $region14: #{scse_block_forward.4} parent=11 // pred_check_branch
        %252 = sbr.rel (%p250) target = $region16
      $region15: #{scse_block_forward.4} parent=11 // pred_region
        _
      $region16: #{scse_block_forward.4} parent=11 // pred_fallthru
        _
      // Predicated region
      $region17: #{scse_block_forward.4} parent=11 // pred_check
        %p253 = pneg %p83
      $region18: #{scse_block_forward.4} parent=11 // pred_check_branch
        %255 = sbr.rel (%p253) target = $region20
      $region19: #{scse_block_forward.4} parent=11 // pred_region
        _
      $region20: #{scse_block_forward.4} parent=11 // pred_fallthru
        _
      // Predicated region
      $region21: #{scse_block_forward.4} parent=11 // pred_check
        %p256 = pneg %p104
      $region22: #{scse_block_forward.4} parent=11 // pred_check_branch
        %258 = sbr.rel (%p256) target = $region24
      $region23: #{scse_block_forward.4} parent=11 // pred_region
        _
      $region24: #{scse_block_forward.4} parent=11 // pred_fallthru
        _
      // Predicated region
      $region25: #{scse_block_forward.4} parent=11 // pred_check
        %p259 = pneg %p125
      $region26: #{scse_block_forward.4} parent=11 // pred_check_branch
        %261 = sbr.rel (%p259) target = $region28
      $region27: #{scse_block_forward.4} parent=11 // pred_region
        _
      $region28: #{scse_block_forward.4} parent=11 // pred_fallthru
        _
      // Predicated region
      $region29: #{scse_block_forward.4} parent=11 // pred_check
        %p262 = pneg %p146
      $region30: #{scse_block_forward.4} parent=11 // pred_check_branch
        %264 = sbr.rel (%p262) target = $region32
      $region31: #{scse_block_forward.4} parent=11 // pred_region
        _
      $region32: #{scse_block_forward.4} parent=11 // pred_fallthru
        _
      // Predicated region
      $region33: #{scse_block_forward.4} parent=11 // pred_check
        %p265 = pneg %p167
      $region34: #{scse_block_forward.4} parent=11 // pred_check_branch
        %267 = sbr.rel (%p265) target = $region36
      $region35: #{scse_block_forward.4} parent=11 // pred_region
        _
      $region36: #{scse_block_forward.4} parent=11 // pred_fallthru
        _
      // Predicated region
      $region37: #{scse_block_forward.4} parent=11 // pred_check
        %p268 = pneg %p188
      $region38: #{scse_block_forward.4} parent=11 // pred_check_branch
        %270 = sbr.rel (%p268) target = $region40
      $region39: #{scse_block_forward.4} parent=11 // pred_region
        _
      $region40: #{scse_block_forward.4} parent=11 // pred_fallthru
        _
      // Predicated region
      $region41: #{scse_block_forward.4} parent=11 // pred_check
        %p271 = pneg %p209
      $region42: #{scse_block_forward.4} parent=11 // pred_check_branch
        %273 = sbr.rel (%p271) target = $region44
      $region43: #{scse_block_forward.4} parent=11 // pred_region
        _
      $region44: #{scse_block_forward.4} parent=11 // pred_fallthru
        _
    $region12: #{scse_block_forward.4} parent=5 // pred_fallthru
      _
    %p274 = scmp.lt.s32.totalorder %s15, 2
    // Predicated region
    $region45: #{scse_block_forward.4} parent=5 // pred_check
      %p275 = pneg %p274
    $region46: #{scse_block_forward.4} parent=5 // pred_check_branch
      %277 = sbr.rel (%p275) target = $region48
    $region47: #{scse_block_forward.4} parent=5 // pred_region
      // Predicated region
      $region49: #{scse_block_forward.4} parent=47 // pred_check
        %p278 = pneg %p35
      $region50: #{scse_block_forward.4} parent=47 // pred_check_branch
        %280 = sbr.rel (%p278) target = $region52
      $region51: #{scse_block_forward.4} parent=47 // pred_region
        %p281 = scmp.lt.s32.totalorder %s15, 1
        %s282 = scalar_select %p281, %s15, 1
        %s283 = smul.addr %s282, 16
        %s284 = smul.addr %s283, 8
        %s285 = scalar_lea.vmem %s0, %s284
      $region52: #{scse_block_forward.4} parent=47 // pred_fallthru
        _
    $region48: #{scse_block_forward.4} parent=5 // pred_fallthru
      _
    %p286 = scmp.le.s32.totalorder 1, %s15
    %p287 = scmp.lt.s32.totalorder %s15, 3
    %p288 = pnand %p286, %p287
    %p289 = pneg %p288
    // Predicated region
    $region53: #{scse_block_forward.4} parent=5 // pred_check
      _
    $region54: #{scse_block_forward.4} parent=5 // pred_check_branch
      %291 = sbr.rel (%p288) target = $region56
    $region55: #{scse_block_forward.4} parent=5 // pred_region
      %s292 = ssub.s32 %s15, 1
      %p293 = scmp.lt.s32.totalorder %s20, 1
      %s294 = scalar_select %p293, %s20, 1
      %s295 = smul.addr %s294, 16
      %s296 = smul.addr %s295, 8
      %s297 = scalar_lea.vmem %s0, %s296
      %p298 = pneg %p41
      %p299 = pneg %p38
      %p300 = pneg %p62
      %p301 = pneg %p59
      %p302 = pneg %p83
      %p303 = pneg %p80
      %p304 = pneg %p104
      %p305 = pneg %p101
      %p306 = pneg %p125
      %p307 = pneg %p122
      %p308 = pneg %p146
      %p309 = pneg %p143
      %p310 = pneg %p167
      %p311 = pneg %p164
      %p312 = pneg %p188
      %p313 = pneg %p185
      %p314 = pneg %p209
      %p315 = pneg %p206
      %p316 = pneg %p235
      %p317 = pneg %p232
      %p318 = scmp.lt.s32.totalorder %s20, 1
      %s319 = scalar_select %p318, %s20, 1
      %s320 = smul.addr %s319, 16
      %s321 = smul.addr %s320, 8
      %s322 = scalar_lea.vmem %s9, %s321
      %p323 = scmp.lt.s32.totalorder %s20, 1
      %s324 = scalar_select %p323, %s20, 1
      %s325 = smul.addr %s324, 16
      %s326 = smul.addr %s325, 8
      %s327 = scalar_lea.vmem %s0, %s326
      %p328 = scmp.lt.s32.totalorder %s20, 1
      %s329 = scalar_select %p328, %s20, 1
      %s330 = smul.addr %s329, 16
      %s331 = smul.addr %s330, 8
      %s332 = scalar_lea.vmem %s9, %s331
      %v333 = vld [vmem:[%s327] sm:$0xff]
      %v334 = vld [vmem:[%s327 + $0x8] sm:$0xff]
      %v335 = vld [vmem:[%s327 + $0x10] sm:$0xff]
      %v336 = vld [vmem:[%s327 + $0x18] sm:$0xff]
      %v337 = vld [vmem:[%s327 + $0x20] sm:$0xff]
      %v338 = vld [vmem:[%s327 + $0x28] sm:$0xff]
      %v339 = vld [vmem:[%s327 + $0x30] sm:$0xff]
      %v340 = vld [vmem:[%s327 + $0x38] sm:$0xff]
      %v341 = vld [vmem:[%s327 + $0x40] sm:$0xff]
      %v342 = vld [vmem:[%s327 + $0x48] sm:$0xff]
      %v343 = vld [vmem:[%s327 + $0x50] sm:$0xff]
      %v344 = vld [vmem:[%s327 + $0x58] sm:$0xff]
      %v345 = vld [vmem:[%s327 + $0x60] sm:$0xff]
      %v346 = vld [vmem:[%s327 + $0x68] sm:$0xff]
      %v347 = vld [vmem:[%s327 + $0x70] sm:$0xff]
      %v348 = vld [vmem:[%s327 + $0x78] sm:$0xff]
      %vm349 = vcmask 261120
      %v350 = vsel %vm349, %v333, 0.0
      %351 = vadd.xlane.f32.xlu0 %v350
      %v352 = vpop.xlane.xlu0 %351
      %v353 = vsel %vm349, %v334, 0.0
      %354 = vadd.xlane.f32.xlu0 %v353
      %v355 = vpop.xlane.xlu0 %354
      %v356 = vsel %vm349, %v335, 0.0
      %357 = vadd.xlane.f32.xlu0 %v356
      %v358 = vpop.xlane.xlu0 %357
      %v359 = vsel %vm349, %v336, 0.0
      %360 = vadd.xlane.f32.xlu0 %v359
      %v361 = vpop.xlane.xlu0 %360
      %v362 = vsel %vm349, %v337, 0.0
      %363 = vadd.xlane.f32.xlu0 %v362
      %v364 = vpop.xlane.xlu0 %363
      %v365 = vsel %vm349, %v338, 0.0
      %366 = vadd.xlane.f32.xlu0 %v365
      %v367 = vpop.xlane.xlu0 %366
      %v368 = vsel %vm349, %v339, 0.0
      %369 = vadd.xlane.f32.xlu0 %v368
      %v370 = vpop.xlane.xlu0 %369
      %v371 = vsel %vm349, %v340, 0.0
      %372 = vadd.xlane.f32.xlu0 %v371
      %v373 = vpop.xlane.xlu0 %372
      %v374 = vsel %vm349, %v341, 0.0
      %375 = vadd.xlane.f32.xlu0 %v374
      %v376 = vpop.xlane.xlu0 %375
      %v377 = vsel %vm349, %v342, 0.0
      %378 = vadd.xlane.f32.xlu0 %v377
      %v379 = vpop.xlane.xlu0 %378
      %v380 = vsel %vm349, %v343, 0.0
      %381 = vadd.xlane.f32.xlu0 %v380
      %v382 = vpop.xlane.xlu0 %381
      %v383 = vsel %vm349, %v344, 0.0
      %384 = vadd.xlane.f32.xlu0 %v383
      %v385 = vpop.xlane.xlu0 %384
      %v386 = vsel %vm349, %v345, 0.0
      %387 = vadd.xlane.f32.xlu0 %v386
      %v388 = vpop.xlane.xlu0 %387
      %v389 = vsel %vm349, %v346, 0.0
      %390 = vadd.xlane.f32.xlu0 %v389
      %v391 = vpop.xlane.xlu0 %390
      %v392 = vsel %vm349, %v347, 0.0
      %393 = vadd.xlane.f32.xlu0 %v392
      %v394 = vpop.xlane.xlu0 %393
      %v395 = vsel %vm349, %v348, 0.0
      %396 = vadd.xlane.f32.xlu0 %v395
      %v397 = vpop.xlane.xlu0 %396
      %v398 = vrcp.pop 32.0
      %v399 = vmul.f32 %v352, %v398
      %v400 = vmul.f32 %v355, %v398
      %v401 = vmul.f32 %v358, %v398
      %v402 = vmul.f32 %v361, %v398
      %v403 = vmul.f32 %v364, %v398
      %v404 = vmul.f32 %v367, %v398
      %v405 = vmul.f32 %v370, %v398
      %v406 = vmul.f32 %v373, %v398
      %v407 = vmul.f32 %v376, %v398
      %v408 = vmul.f32 %v379, %v398
      %v409 = vmul.f32 %v382, %v398
      %v410 = vmul.f32 %v385, %v398
      %v411 = vmul.f32 %v388, %v398
      %v412 = vmul.f32 %v391, %v398
      %v413 = vmul.f32 %v394, %v398
      %v414 = vmul.f32 %v397, %v398
      %v415 = vsub.f32 %v333, %v399
      %v416 = vsub.f32 %v334, %v400
      %v417 = vsub.f32 %v335, %v401
      %v418 = vsub.f32 %v336, %v402
      %v419 = vsub.f32 %v337, %v403
      %v420 = vsub.f32 %v338, %v404
      %v421 = vsub.f32 %v339, %v405
      %v422 = vsub.f32 %v340, %v406
      %v423 = vsub.f32 %v341, %v407
      %v424 = vsub.f32 %v342, %v408
      %v425 = vsub.f32 %v343, %v409
      %v426 = vsub.f32 %v344, %v410
      %v427 = vsub.f32 %v345, %v411
      %v428 = vsub.f32 %v346, %v412
      %v429 = vsub.f32 %v347, %v413
      %v430 = vsub.f32 %v348, %v414
      %v431 = vmul.f32 %v415, %v415
      %v432 = vmul.f32 %v416, %v416
      %v433 = vmul.f32 %v417, %v417
      %v434 = vmul.f32 %v418, %v418
      %v435 = vmul.f32 %v419, %v419
      %v436 = vmul.f32 %v420, %v420
      %v437 = vmul.f32 %v421, %v421
      %v438 = vmul.f32 %v422, %v422
      %v439 = vmul.f32 %v423, %v423
      %v440 = vmul.f32 %v424, %v424
      %v441 = vmul.f32 %v425, %v425
      %v442 = vmul.f32 %v426, %v426
      %v443 = vmul.f32 %v427, %v427
      %v444 = vmul.f32 %v428, %v428
      %v445 = vmul.f32 %v429, %v429
      %v446 = vmul.f32 %v430, %v430
      %v447 = vsel %vm349, %v431, 0.0
      %448 = vadd.xlane.f32.xlu0 %v447
      %v449 = vpop.xlane.xlu0 %448
      %v450 = vsel %vm349, %v432, 0.0
      %451 = vadd.xlane.f32.xlu0 %v450
      %v452 = vpop.xlane.xlu0 %451
      %v453 = vsel %vm349, %v433, 0.0
      %454 = vadd.xlane.f32.xlu0 %v453
      %v455 = vpop.xlane.xlu0 %454
      %v456 = vsel %vm349, %v434, 0.0
      %457 = vadd.xlane.f32.xlu0 %v456
      %v458 = vpop.xlane.xlu0 %457
      %v459 = vsel %vm349, %v435, 0.0
      %460 = vadd.xlane.f32.xlu0 %v459
      %v461 = vpop.xlane.xlu0 %460
      %v462 = vsel %vm349, %v436, 0.0
      %463 = vadd.xlane.f32.xlu0 %v462
      %v464 = vpop.xlane.xlu0 %463
      %v465 = vsel %vm349, %v437, 0.0
      %466 = vadd.xlane.f32.xlu0 %v465
      %v467 = vpop.xlane.xlu0 %466
      %v468 = vsel %vm349, %v438, 0.0
      %469 = vadd.xlane.f32.xlu0 %v468
      %v470 = vpop.xlane.xlu0 %469
      %v471 = vsel %vm349, %v439, 0.0
      %472 = vadd.xlane.f32.xlu0 %v471
      %v473 = vpop.xlane.xlu0 %472
      %v474 = vsel %vm349, %v440, 0.0
      %475 = vadd.xlane.f32.xlu0 %v474
      %v476 = vpop.xlane.xlu0 %475
      %v477 = vsel %vm349, %v441, 0.0
      %478 = vadd.xlane.f32.xlu0 %v477
      %v479 = vpop.xlane.xlu0 %478
      %v480 = vsel %vm349, %v442, 0.0
      %481 = vadd.xlane.f32.xlu0 %v480
      %v482 = vpop.xlane.xlu0 %481
      %v483 = vsel %vm349, %v443, 0.0
      %484 = vadd.xlane.f32.xlu0 %v483
      %v485 = vpop.xlane.xlu0 %484
      %v486 = vsel %vm349, %v444, 0.0
      %487 = vadd.xlane.f32.xlu0 %v486
      %v488 = vpop.xlane.xlu0 %487
      %v489 = vsel %vm349, %v445, 0.0
      %490 = vadd.xlane.f32.xlu0 %v489
      %v491 = vpop.xlane.xlu0 %490
      %v492 = vsel %vm349, %v446, 0.0
      %493 = vadd.xlane.f32.xlu0 %v492
      %v494 = vpop.xlane.xlu0 %493
      %v495 = vmul.f32 %v449, %v398
      %v496 = vmul.f32 %v452, %v398
      %v497 = vmul.f32 %v455, %v398
      %v498 = vmul.f32 %v458, %v398
      %v499 = vmul.f32 %v461, %v398
      %v500 = vmul.f32 %v464, %v398
      %v501 = vmul.f32 %v467, %v398
      %v502 = vmul.f32 %v470, %v398
      %v503 = vmul.f32 %v473, %v398
      %v504 = vmul.f32 %v476, %v398
      %v505 = vmul.f32 %v479, %v398
      %v506 = vmul.f32 %v482, %v398
      %v507 = vmul.f32 %v485, %v398
      %v508 = vmul.f32 %v488, %v398
      %v509 = vmul.f32 %v491, %v398
      %v510 = vmul.f32 %v494, %v398
      %v511 = vadd.f32 %v495, 1e-05
      %v512 = vadd.f32 %v496, 1e-05
      %v513 = vadd.f32 %v497, 1e-05
      %v514 = vadd.f32 %v498, 1e-05
      %v515 = vadd.f32 %v499, 1e-05
      %v516 = vadd.f32 %v500, 1e-05
      %v517 = vadd.f32 %v501, 1e-05
      %v518 = vadd.f32 %v502, 1e-05
      %v519 = vadd.f32 %v503, 1e-05
      %v520 = vadd.f32 %v504, 1e-05
      %v521 = vadd.f32 %v505, 1e-05
      %v522 = vadd.f32 %v506, 1e-05
      %v523 = vadd.f32 %v507, 1e-05
      %v524 = vadd.f32 %v508, 1e-05
      %v525 = vadd.f32 %v509, 1e-05
      %v526 = vadd.f32 %v510, 1e-05
      %v527 = vrsqrt.pop %v511
      %v528 = vrsqrt.pop %v512
      %v529 = vrsqrt.pop %v513
      %v530 = vrsqrt.pop %v514
      %v531 = vrsqrt.pop %v515
      %v532 = vrsqrt.pop %v516
      %v533 = vrsqrt.pop %v517
      %v534 = vrsqrt.pop %v518
      %v535 = vrsqrt.pop %v519
      %v536 = vrsqrt.pop %v520
      %v537 = vrsqrt.pop %v521
      %v538 = vrsqrt.pop %v522
      %v539 = vrsqrt.pop %v523
      %v540 = vrsqrt.pop %v524
      %v541 = vrsqrt.pop %v525
      %v542 = vrsqrt.pop %v526
      %v543 = vmul.f32 %v415, %v527
      %v544 = vmul.f32 %v416, %v528
      %v545 = vmul.f32 %v417, %v529
      %v546 = vmul.f32 %v418, %v530
      %v547 = vmul.f32 %v419, %v531
      %v548 = vmul.f32 %v420, %v532
      %v549 = vmul.f32 %v421, %v533
      %v550 = vmul.f32 %v422, %v534
      %v551 = vmul.f32 %v423, %v535
      %v552 = vmul.f32 %v424, %v536
      %v553 = vmul.f32 %v425, %v537
      %v554 = vmul.f32 %v426, %v538
      %v555 = vmul.f32 %v427, %v539
      %v556 = vmul.f32 %v428, %v540
      %v557 = vmul.f32 %v429, %v541
      %v558 = vmul.f32 %v430, %v542
      %v559 = vld [vmem:[%s1] sm:$0x1]
      %v561 = vlaneseq
      %v562 = vshrl.u32 %v561, 7
      %v563 = vsub.s32 0, %v562
      %v564 = vrot.slane %v559, %v563
      %v566 = vmul.f32 %v543, %v564
      %v567 = vmul.f32 %v544, %v564
      %v568 = vmul.f32 %v545, %v564
      %v569 = vmul.f32 %v546, %v564
      %v570 = vmul.f32 %v547, %v564
      %v571 = vmul.f32 %v548, %v564
      %v572 = vmul.f32 %v549, %v564
      %v573 = vmul.f32 %v550, %v564
      %v574 = vmul.f32 %v551, %v564
      %v575 = vmul.f32 %v552, %v564
      %v576 = vmul.f32 %v553, %v564
      %v577 = vmul.f32 %v554, %v564
      %v578 = vmul.f32 %v555, %v564
      %v579 = vmul.f32 %v556, %v564
      %v580 = vmul.f32 %v557, %v564
      %v581 = vmul.f32 %v558, %v564
      %v582 = vld [vmem:[%s2] sm:$0x1]
      %v584 = vlaneseq
      %v585 = vshrl.u32 %v584, 7
      %v586 = vsub.s32 0, %v585
      %v587 = vrot.slane %v582, %v586
      %v589 = vadd.f32 %v566, %v587
      %v590 = vadd.f32 %v567, %v587
      %v591 = vadd.f32 %v568, %v587
      %v592 = vadd.f32 %v569, %v587
      %v593 = vadd.f32 %v570, %v587
      %v594 = vadd.f32 %v571, %v587
      %v595 = vadd.f32 %v572, %v587
      %v596 = vadd.f32 %v573, %v587
      %v597 = vadd.f32 %v574, %v587
      %v598 = vadd.f32 %v575, %v587
      %v599 = vadd.f32 %v576, %v587
      %v600 = vadd.f32 %v577, %v587
      %v601 = vadd.f32 %v578, %v587
      %v602 = vadd.f32 %v579, %v587
      %v603 = vadd.f32 %v580, %v587
      %v604 = vadd.f32 %v581, %v587
      %v605 = vld [vmem:[%s3] sm:$0xff]
      %v606 = vld [vmem:[%s3 + $0x8] sm:$0xff]
      %v607 = vld [vmem:[%s3 + $0x10] sm:$0xff]
      %v608 = vld [vmem:[%s3 + $0x18] sm:$0xff]
      %v609 = vld [vmem:[%s4] sm:$0x1]
      %v611 = vlaneseq
      %v612 = vshrl.u32 %v611, 7
      %v613 = vsub.s32 0, %v612
      %v614 = vrot.slane %v609, %v613
      %v617 = vsel %vm349, %v589, 0
      %v620 = vsel %vm349, %v590, 0
      %v623 = vsel %vm349, %v591, 0
      %v626 = vsel %vm349, %v592, 0
      %v629 = vsel %vm349, %v593, 0
      %v632 = vsel %vm349, %v594, 0
      %v635 = vsel %vm349, %v595, 0
      %v638 = vsel %vm349, %v596, 0
      %v641 = vsel %vm349, %v597, 0
      %v644 = vsel %vm349, %v598, 0
      %v647 = vsel %vm349, %v599, 0
      %v650 = vsel %vm349, %v600, 0
      %v653 = vsel %vm349, %v601, 0
      %v656 = vsel %vm349, %v602, 0
      %v659 = vsel %vm349, %v603, 0
      %v662 = vsel %vm349, %v604, 0
      %664 = vmatprep.subr.mxu0 0.0
      %665 = vmatpush1.msra.mxu0 %v605
      %666 = vmatprep.subr.mxu0 0.0
      %667 = vmatpush1.msra.mxu0 %v606
      %668 = vmatprep.subr.mxu0 0.0
      %669 = vmatpush1.msra.mxu0 %v607
      %670 = vmatprep.subr.mxu0 0.0
      %671 = vmatpush1.msra.mxu0 %v608
      %672 = vmatprep.subr.mxu0 0.0
      %673 = vmatpush1.msra.mxu0 0.0
      %674 = vmatprep.subr.mxu0 0.0
      %675 = vmatpush1.msra.mxu0 0.0
      %676 = vmatprep.subr.mxu0 0.0
      %677 = vmatpush1.msra.mxu0 0.0
      %678 = vmatprep.subr.mxu0 0.0
      %679 = vmatpush1.msra.mxu0 0.0
      %680 = vmatprep.subr.mxu0 0.0
      %681 = vmatpush1.msra.mxu0 0.0
      %682 = vmatprep.subr.mxu0 0.0
      %683 = vmatpush1.msra.mxu0 0.0
      %684 = vmatprep.subr.mxu0 0.0
      %685 = vmatpush1.msra.mxu0 0.0
      %686 = vmatprep.subr.mxu0 0.0
      %687 = vmatpush1.msra.mxu0 0.0
      %688 = vmatprep.subr.mxu0 0.0
      %689 = vmatpush1.msra.mxu0 0.0
      %690 = vmatprep.subr.mxu0 0.0
      %691 = vmatpush1.msra.mxu0 0.0
      %692 = vmatprep.subr.mxu0 0.0
      %693 = vmatpush1.msra.mxu0 0.0
      %694 = vmatprep.subr.mxu0 0.0
      %695 = vmatpush1.msra.mxu0 0.0
      %696 = vmatprep.subr.mxu0 0.0
      %697 = vmatpush1.msra.mxu0 0.0
      %698 = vmatprep.subr.mxu0 0.0
      %699 = vmatpush1.msra.mxu0 0.0
      %700 = vmatprep.subr.mxu0 0.0
      %701 = vmatpush1.msra.mxu0 0.0
      %702 = vmatprep.subr.mxu0 0.0
      %703 = vmatpush1.msra.mxu0 0.0
      %704 = vmatprep.subr.mxu0 0.0
      %705 = vmatpush1.msra.mxu0 0.0
      %706 = vmatprep.subr.mxu0 0.0
      %707 = vmatpush1.msra.mxu0 0.0
      %708 = vmatprep.subr.mxu0 0.0
      %709 = vmatpush1.msra.mxu0 0.0
      %710 = vmatprep.subr.mxu0 0.0
      %711 = vmatpush1.msra.mxu0 0.0
      %712 = vmatprep.subr.mxu0 0.0
      %713 = vmatpush1.msra.mxu0 0.0
      %714 = vmatprep.subr.mxu0 0.0
      %715 = vmatpush1.msra.mxu0 0.0
      %716 = vmatprep.subr.mxu0 0.0
      %717 = vmatpush1.msra.mxu0 0.0
      %718 = vmatprep.subr.mxu0 0.0
      %719 = vmatpush1.msra.mxu0 0.0
      %720 = vmatprep.subr.mxu0 0.0
      %721 = vmatpush1.msra.mxu0 0.0
      %722 = vmatprep.subr.mxu0 0.0
      %723 = vmatpush1.msra.mxu0 0.0
      %724 = vmatprep.subr.mxu0 0.0
      %725 = vmatpush1.msra.mxu0 0.0
      %726 = vmatprep.subr.mxu0 0.0
      %727 = vmatpush1.msra.mxu0 0.0
      %728 = vmatprep.mubr.f32.mxu0 0.0
      %729 = vmatmul.mubr.f32.gmra.mrb[0].mxu0 %v617
      %v730 = vpop.f32.mrb[0].mxu0
      %v731 = vadd.f32 %v614, %v730
      %v732 = vpop.f32.mrb[0].mxu0
      %733 = vmatprep.mubr.f32.mxu0 0.0
      %734 = vmatmul.mubr.f32.gmra.mrb[0].mxu0 %v620
      %v735 = vpop.f32.mrb[0].mxu0
      %v736 = vadd.f32 %v614, %v735
      %v737 = vpop.f32.mrb[0].mxu0
      %738 = vmatprep.mubr.f32.mxu0 0.0
      %739 = vmatmul.mubr.f32.gmra.mrb[0].mxu0 %v623
      %v740 = vpop.f32.mrb[0].mxu0
      %v741 = vadd.f32 %v614, %v740
      %v742 = vpop.f32.mrb[0].mxu0
      %743 = vmatprep.mubr.f32.mxu0 0.0
      %744 = vmatmul.mubr.f32.gmra.mrb[0].mxu0 %v626
      %v745 = vpop.f32.mrb[0].mxu0
      %v746 = vadd.f32 %v614, %v745
      %v747 = vpop.f32.mrb[0].mxu0
      %748 = vmatprep.mubr.f32.mxu0 0.0
      %749 = vmatmul.mubr.f32.gmra.mrb[0].mxu0 %v629
      %v750 = vpop.f32.mrb[0].mxu0
      %v751 = vadd.f32 %v614, %v750
      %v752 = vpop.f32.mrb[0].mxu0
      %753 = vmatprep.mubr.f32.mxu0 0.0
      %754 = vmatmul.mubr.f32.gmra.mrb[0].mxu0 %v632
      %v755 = vpop.f32.mrb[0].mxu0
      %v756 = vadd.f32 %v614, %v755
      %v757 = vpop.f32.mrb[0].mxu0
      %758 = vmatprep.mubr.f32.mxu0 0.0
      %759 = vmatmul.mubr.f32.gmra.mrb[0].mxu0 %v635
      %v760 = vpop.f32.mrb[0].mxu0
      %v761 = vadd.f32 %v614, %v760
      %v762 = vpop.f32.mrb[0].mxu0
      %763 = vmatprep.mubr.f32.mxu0 0.0
      %764 = vmatmul.mubr.f32.gmra.mrb[0].mxu0 %v638
      %v765 = vpop.f32.mrb[0].mxu0
      %v766 = vadd.f32 %v614, %v765
      %v767 = vpop.f32.mrb[0].mxu0
      %768 = vmatprep.mubr.f32.mxu0 0.0
      %769 = vmatmul.mubr.f32.gmra.mrb[0].mxu0 %v641
      %v770 = vpop.f32.mrb[0].mxu0
      %v771 = vadd.f32 %v614, %v770
      %v772 = vpop.f32.mrb[0].mxu0
      %773 = vmatprep.mubr.f32.mxu0 0.0
      %774 = vmatmul.mubr.f32.gmra.mrb[0].mxu0 %v644
      %v775 = vpop.f32.mrb[0].mxu0
      %v776 = vadd.f32 %v614, %v775
      %v777 = vpop.f32.mrb[0].mxu0
      %778 = vmatprep.mubr.f32.mxu0 0.0
      %779 = vmatmul.mubr.f32.gmra.mrb[0].mxu0 %v647
      %v780 = vpop.f32.mrb[0].mxu0
      %v781 = vadd.f32 %v614, %v780
      %v782 = vpop.f32.mrb[0].mxu0
      %783 = vmatprep.mubr.f32.mxu0 0.0
      %784 = vmatmul.mubr.f32.gmra.mrb[0].mxu0 %v650
      %v785 = vpop.f32.mrb[0].mxu0
      %v786 = vadd.f32 %v614, %v785
      %v787 = vpop.f32.mrb[0].mxu0
      %788 = vmatprep.mubr.f32.mxu0 0.0
      %789 = vmatmul.mubr.f32.gmra.mrb[0].mxu0 %v653
      %v790 = vpop.f32.mrb[0].mxu0
      %v791 = vadd.f32 %v614, %v790
      %v792 = vpop.f32.mrb[0].mxu0
      %793 = vmatprep.mubr.f32.mxu0 0.0
      %794 = vmatmul.mubr.f32.gmra.mrb[0].mxu0 %v656
      %v795 = vpop.f32.mrb[0].mxu0
      %v796 = vadd.f32 %v614, %v795
      %v797 = vpop.f32.mrb[0].mxu0
      %798 = vmatprep.mubr.f32.mxu0 0.0
      %799 = vmatmul.mubr.f32.gmra.mrb[0].mxu0 %v659
      %v800 = vpop.f32.mrb[0].mxu0
      %v801 = vadd.f32 %v614, %v800
      %v802 = vpop.f32.mrb[0].mxu0
      %803 = vmatprep.mubr.f32.mxu0 0.0
      %804 = vmatmul.mubr.f32.gmra.mrb[0].mxu0 %v662
      %v805 = vpop.f32.mrb[0].mxu0
      %v806 = vadd.f32 %v614, %v805
      %v807 = vpop.f32.mrb[0].mxu0
      %808 = vdwg.mxu0
      %v809 = vmul.f32 %v731, %v731
      %v810 = vmul.f32 %v736, %v736
      %v811 = vmul.f32 %v741, %v741
      %v812 = vmul.f32 %v746, %v746
      %v813 = vmul.f32 %v751, %v751
      %v814 = vmul.f32 %v756, %v756
      %v815 = vmul.f32 %v761, %v761
      %v816 = vmul.f32 %v766, %v766
      %v817 = vmul.f32 %v771, %v771
      %v818 = vmul.f32 %v776, %v776
      %v819 = vmul.f32 %v781, %v781
      %v820 = vmul.f32 %v786, %v786
      %v821 = vmul.f32 %v791, %v791
      %v822 = vmul.f32 %v796, %v796
      %v823 = vmul.f32 %v801, %v801
      %v824 = vmul.f32 %v806, %v806
      %v825 = vmul.f32 %v731, %v809
      %v826 = vmul.f32 %v736, %v810
      %v827 = vmul.f32 %v741, %v811
      %v828 = vmul.f32 %v746, %v812
      %v829 = vmul.f32 %v751, %v813
      %v830 = vmul.f32 %v756, %v814
      %v831 = vmul.f32 %v761, %v815
      %v832 = vmul.f32 %v766, %v816
      %v833 = vmul.f32 %v771, %v817
      %v834 = vmul.f32 %v776, %v818
      %v835 = vmul.f32 %v781, %v819
      %v836 = vmul.f32 %v786, %v820
      %v837 = vmul.f32 %v791, %v821
      %v838 = vmul.f32 %v796, %v822
      %v839 = vmul.f32 %v801, %v823
      %v840 = vmul.f32 %v806, %v824
      %v841 = vmul.f32 %v825, 0.044715
      %v842 = vmul.f32 %v826, 0.044715
      %v843 = vmul.f32 %v827, 0.044715
      %v844 = vmul.f32 %v828, 0.044715
      %v845 = vmul.f32 %v829, 0.044715
      %v846 = vmul.f32 %v830, 0.044715
      %v847 = vmul.f32 %v831, 0.044715
      %v848 = vmul.f32 %v832, 0.044715
      %v849 = vmul.f32 %v833, 0.044715
      %v850 = vmul.f32 %v834, 0.044715
      %v851 = vmul.f32 %v835, 0.044715
      %v852 = vmul.f32 %v836, 0.044715
      %v853 = vmul.f32 %v837, 0.044715
      %v854 = vmul.f32 %v838, 0.044715
      %v855 = vmul.f32 %v839, 0.044715
      %v856 = vmul.f32 %v840, 0.044715
      %v857 = vadd.f32 %v731, %v841
      %v858 = vadd.f32 %v736, %v842
      %v859 = vadd.f32 %v741, %v843
      %v860 = vadd.f32 %v746, %v844
      %v861 = vadd.f32 %v751, %v845
      %v862 = vadd.f32 %v756, %v846
      %v863 = vadd.f32 %v761, %v847
      %v864 = vadd.f32 %v766, %v848
      %v865 = vadd.f32 %v771, %v849
      %v866 = vadd.f32 %v776, %v850
      %v867 = vadd.f32 %v781, %v851
      %v868 = vadd.f32 %v786, %v852
      %v869 = vadd.f32 %v791, %v853
      %v870 = vadd.f32 %v796, %v854
      %v871 = vadd.f32 %v801, %v855
      %v872 = vadd.f32 %v806, %v856
      %v873 = vmul.f32 %v857, 0.7978846
      %v874 = vmul.f32 %v858, 0.7978846
      %v875 = vmul.f32 %v859, 0.7978846
      %v876 = vmul.f32 %v860, 0.7978846
      %v877 = vmul.f32 %v861, 0.7978846
      %v878 = vmul.f32 %v862, 0.7978846
      %v879 = vmul.f32 %v863, 0.7978846
      %v880 = vmul.f32 %v864, 0.7978846
      %v881 = vmul.f32 %v865, 0.7978846
      %v882 = vmul.f32 %v866, 0.7978846
      %v883 = vmul.f32 %v867, 0.7978846
      %v884 = vmul.f32 %v868, 0.7978846
      %v885 = vmul.f32 %v869, 0.7978846
      %v886 = vmul.f32 %v870, 0.7978846
      %v887 = vmul.f32 %v871, 0.7978846
      %v888 = vmul.f32 %v872, 0.7978846
      %v889 = vtanh.pop %v873
      %v890 = vtanh.pop %v874
      %v891 = vtanh.pop %v875
      %v892 = vtanh.pop %v876
      %v893 = vtanh.pop %v877
      %v894 = vtanh.pop %v878
      %v895 = vtanh.pop %v879
      %v896 = vtanh.pop %v880
      %v897 = vtanh.pop %v881
      %v898 = vtanh.pop %v882
      %v899 = vtanh.pop %v883
      %v900 = vtanh.pop %v884
      %v901 = vtanh.pop %v885
      %v902 = vtanh.pop %v886
      %v903 = vtanh.pop %v887
      %v904 = vtanh.pop %v888
      %v905 = vadd.f32 %v889, 1.0
      %v906 = vadd.f32 %v890, 1.0
      %v907 = vadd.f32 %v891, 1.0
      %v908 = vadd.f32 %v892, 1.0
      %v909 = vadd.f32 %v893, 1.0
      %v910 = vadd.f32 %v894, 1.0
      %v911 = vadd.f32 %v895, 1.0
      %v912 = vadd.f32 %v896, 1.0
      %v913 = vadd.f32 %v897, 1.0
      %v914 = vadd.f32 %v898, 1.0
      %v915 = vadd.f32 %v899, 1.0
      %v916 = vadd.f32 %v900, 1.0
      %v917 = vadd.f32 %v901, 1.0
      %v918 = vadd.f32 %v902, 1.0
      %v919 = vadd.f32 %v903, 1.0
      %v920 = vadd.f32 %v904, 1.0
      %v921 = vmul.f32 %v905, 0.5
      %v922 = vmul.f32 %v906, 0.5
      %v923 = vmul.f32 %v907, 0.5
      %v924 = vmul.f32 %v908, 0.5
      %v925 = vmul.f32 %v909, 0.5
      %v926 = vmul.f32 %v910, 0.5
      %v927 = vmul.f32 %v911, 0.5
      %v928 = vmul.f32 %v912, 0.5
      %v929 = vmul.f32 %v913, 0.5
      %v930 = vmul.f32 %v914, 0.5
      %v931 = vmul.f32 %v915, 0.5
      %v932 = vmul.f32 %v916, 0.5
      %v933 = vmul.f32 %v917, 0.5
      %v934 = vmul.f32 %v918, 0.5
      %v935 = vmul.f32 %v919, 0.5
      %v936 = vmul.f32 %v920, 0.5
      %v937 = vmul.f32 %v731, %v921
      %v938 = vmul.f32 %v736, %v922
      %v939 = vmul.f32 %v741, %v923
      %v940 = vmul.f32 %v746, %v924
      %v941 = vmul.f32 %v751, %v925
      %v942 = vmul.f32 %v756, %v926
      %v943 = vmul.f32 %v761, %v927
      %v944 = vmul.f32 %v766, %v928
      %v945 = vmul.f32 %v771, %v929
      %v946 = vmul.f32 %v776, %v930
      %v947 = vmul.f32 %v781, %v931
      %v948 = vmul.f32 %v786, %v932
      %v949 = vmul.f32 %v791, %v933
      %v950 = vmul.f32 %v796, %v934
      %v951 = vmul.f32 %v801, %v935
      %v952 = vmul.f32 %v806, %v936
      %953 = vst [vmem:[#allocation2] sm:$0xff] 0.0
      %954 = vst [vmem:[#allocation2 + $0x8] sm:$0xff] 0.0
      %955 = vst [vmem:[#allocation2 + $0x10] sm:$0x3] 0.0
      %956 = vst [vmem:[#allocation2 + $0x18] sm:$0xff] 0.0
      %957 = vst [vmem:[#allocation2 + $0x20] sm:$0xff] 0.0
      %958 = vst [vmem:[#allocation2 + $0x28] sm:$0x3] 0.0
      %959 = vst [vmem:[#allocation2 + $0x30] sm:$0xff] 0.0
      %960 = vst [vmem:[#allocation2 + $0x38] sm:$0xff] 0.0
      %961 = vst [vmem:[#allocation2 + $0x40] sm:$0x3] 0.0
      %962 = vst [vmem:[#allocation2 + $0x48] sm:$0xff] 0.0
      %963 = vst [vmem:[#allocation2 + $0x50] sm:$0xff] 0.0
      %964 = vst [vmem:[#allocation2 + $0x58] sm:$0x3] 0.0
      %965 = vst [vmem:[#allocation2 + $0x60] sm:$0xff] 0.0
      %966 = vst [vmem:[#allocation2 + $0x68] sm:$0xff] 0.0
      %967 = vst [vmem:[#allocation2 + $0x70] sm:$0x3] 0.0
      %968 = vst [vmem:[#allocation2 + $0x78] sm:$0xff] 0.0
      %969 = vst [vmem:[#allocation2 + $0x80] sm:$0xff] 0.0
      %970 = vst [vmem:[#allocation2 + $0x88] sm:$0x3] 0.0
      %971 = vst [vmem:[#allocation2 + $0x90] sm:$0xff] 0.0
      %972 = vst [vmem:[#allocation2 + $0x98] sm:$0xff] 0.0
      %973 = vst [vmem:[#allocation2 + $0xa0] sm:$0x3] 0.0
      %974 = vst [vmem:[#allocation2 + $0xa8] sm:$0xff] 0.0
      %975 = vst [vmem:[#allocation2 + $0xb0] sm:$0xff] 0.0
      %976 = vst [vmem:[#allocation2 + $0xb8] sm:$0x3] 0.0
      %977 = vst [vmem:[#allocation2 + $0xc0] sm:$0xff] 0.0
      %978 = vst [vmem:[#allocation2 + $0xc8] sm:$0xff] 0.0
      %979 = vst [vmem:[#allocation2 + $0xd0] sm:$0x3] 0.0
      %980 = vst [vmem:[#allocation2 + $0xd8] sm:$0xff] 0.0
      %981 = vst [vmem:[#allocation2 + $0xe0] sm:$0xff] 0.0
      %982 = vst [vmem:[#allocation2 + $0xe8] sm:$0x3] 0.0
      %s983 = scalar_lea.vmem [#allocation2], 24
      %984 = vst [vmem:[%s983 + $0x1] sm:$0xff] %v937
      %985 = vst [vmem:[%s983 + $0x9] sm:$0xff] %v938
      %986 = vst [vmem:[%s983 + $0x19] sm:$0xff] %v939
      %987 = vst [vmem:[%s983 + $0x21] sm:$0xff] %v940
      %988 = vst [vmem:[%s983 + $0x31] sm:$0xff] %v941
      %989 = vst [vmem:[%s983 + $0x39] sm:$0xff] %v942
      %990 = vst [vmem:[%s983 + $0x49] sm:$0xff] %v943
      %991 = vst [vmem:[%s983 + $0x51] sm:$0xff] %v944
      %992 = vst [vmem:[%s983 + $0x61] sm:$0xff] %v945
      %993 = vst [vmem:[%s983 + $0x69] sm:$0xff] %v946
      %994 = vst [vmem:[%s983 + $0x79] sm:$0xff] %v947
      %995 = vst [vmem:[%s983 + $0x81] sm:$0xff] %v948
      %996 = vst [vmem:[%s983 + $0x91] sm:$0xff] %v949
      %997 = vst [vmem:[%s983 + $0x99] sm:$0xff] %v950
      %998 = vst [vmem:[%s983 + $0xa9] sm:$0xff] %v951
      %999 = vst [vmem:[%s983 + $0xb1] sm:$0xff] %v952
      %v1000 = vld [vmem:[#allocation2] sm:$0xff]
      %v1001 = vld [vmem:[#allocation2 + $0x8] sm:$0xff]
      %v1002 = vld [vmem:[#allocation2 + $0x18] sm:$0xff]
      %v1003 = vld [vmem:[#allocation2 + $0x20] sm:$0xff]
      %v1004 = vld [vmem:[#allocation2 + $0x30] sm:$0xff]
      %v1005 = vld [vmem:[#allocation2 + $0x38] sm:$0xff]
      %v1006 = vld [vmem:[#allocation2 + $0x48] sm:$0xff]
      %v1007 = vld [vmem:[#allocation2 + $0x50] sm:$0xff]
      %v1008 = vld [vmem:[#allocation2 + $0x60] sm:$0xff]
      %v1009 = vld [vmem:[#allocation2 + $0x68] sm:$0xff]
      %v1010 = vld [vmem:[#allocation2 + $0x78] sm:$0xff]
      %v1011 = vld [vmem:[#allocation2 + $0x80] sm:$0xff]
      %v1012 = vld [vmem:[#allocation2 + $0x90] sm:$0xff]
      %v1013 = vld [vmem:[#allocation2 + $0x98] sm:$0xff]
      %v1014 = vld [vmem:[#allocation2 + $0xa8] sm:$0xff]
      %v1015 = vld [vmem:[#allocation2 + $0xb0] sm:$0xff]
      %v1016 = vld [vmem:[%s5] sm:$0x1]
      %v1017 = vlaneseq
      %v1018 = vshrl.u32 %v1017, 7
      %v1019 = vsub.s32 0, %v1018
      %v1020 = vrot.slane %v1016, %v1019
      %v1021 = vmul.f32 %v1000, %v1020
      %v1022 = vmul.f32 %v1001, %v1020
      %v1023 = vmul.f32 %v1002, %v1020
      %v1024 = vmul.f32 %v1003, %v1020
      %v1025 = vmul.f32 %v1004, %v1020
      %v1026 = vmul.f32 %v1005, %v1020
      %v1027 = vmul.f32 %v1006, %v1020
      %v1028 = vmul.f32 %v1007, %v1020
      %v1029 = vmul.f32 %v1008, %v1020
      %v1030 = vmul.f32 %v1009, %v1020
      %v1031 = vmul.f32 %v1010, %v1020
      %v1032 = vmul.f32 %v1011, %v1020
      %v1033 = vmul.f32 %v1012, %v1020
      %v1034 = vmul.f32 %v1013, %v1020
      %v1035 = vmul.f32 %v1014, %v1020
      %v1036 = vmul.f32 %v1015, %v1020
      %v1037 = vadd.f32 %v1021, 0.0
      %v1038 = vadd.f32 %v1022, 0.0
      %v1039 = vadd.f32 %v1023, 0.0
      %v1040 = vadd.f32 %v1024, 0.0
      %v1041 = vadd.f32 %v1025, 0.0
      %v1042 = vadd.f32 %v1026, 0.0
      %v1043 = vadd.f32 %v1027, 0.0
      %v1044 = vadd.f32 %v1028, 0.0
      %v1045 = vadd.f32 %v1029, 0.0
      %v1046 = vadd.f32 %v1030, 0.0
      %v1047 = vadd.f32 %v1031, 0.0
      %v1048 = vadd.f32 %v1032, 0.0
      %v1049 = vadd.f32 %v1033, 0.0
      %v1050 = vadd.f32 %v1034, 0.0
      %v1051 = vadd.f32 %v1035, 0.0
      %v1052 = vadd.f32 %v1036, 0.0
      %v1053 = vld [vmem:[#allocation2 + $0x1] sm:$0xff]
      %v1054 = vld [vmem:[#allocation2 + $0x9] sm:$0xff]
      %v1055 = vld [vmem:[#allocation2 + $0x19] sm:$0xff]
      %v1056 = vld [vmem:[#allocation2 + $0x21] sm:$0xff]
      %v1057 = vld [vmem:[#allocation2 + $0x31] sm:$0xff]
      %v1058 = vld [vmem:[#allocation2 + $0x39] sm:$0xff]
      %v1059 = vld [vmem:[#allocation2 + $0x49] sm:$0xff]
      %v1060 = vld [vmem:[#allocation2 + $0x51] sm:$0xff]
      %v1061 = vld [vmem:[#allocation2 + $0x61] sm:$0xff]
      %v1062 = vld [vmem:[#allocation2 + $0x69] sm:$0xff]
      %v1063 = vld [vmem:[#allocation2 + $0x79] sm:$0xff]
      %v1064 = vld [vmem:[#allocation2 + $0x81] sm:$0xff]
      %v1065 = vld [vmem:[#allocation2 + $0x91] sm:$0xff]
      %v1066 = vld [vmem:[#allocation2 + $0x99] sm:$0xff]
      %v1067 = vld [vmem:[#allocation2 + $0xa9] sm:$0xff]
      %v1068 = vld [vmem:[#allocation2 + $0xb1] sm:$0xff]
      %v1069 = vld [vmem:[%s5 + $0x1] sm:$0x1]
      %v1070 = vlaneseq
      %v1071 = vshrl.u32 %v1070, 7
      %v1072 = vsub.s32 0, %v1071
      %v1073 = vrot.slane %v1069, %v1072
      %v1074 = vmul.f32 %v1053, %v1073
      %v1075 = vmul.f32 %v1054, %v1073
      %v1076 = vmul.f32 %v1055, %v1073
      %v1077 = vmul.f32 %v1056, %v1073
      %v1078 = vmul.f32 %v1057, %v1073
      %v1079 = vmul.f32 %v1058, %v1073
      %v1080 = vmul.f32 %v1059, %v1073
      %v1081 = vmul.f32 %v1060, %v1073
      %v1082 = vmul.f32 %v1061, %v1073
      %v1083 = vmul.f32 %v1062, %v1073
      %v1084 = vmul.f32 %v1063, %v1073
      %v1085 = vmul.f32 %v1064, %v1073
      %v1086 = vmul.f32 %v1065, %v1073
      %v1087 = vmul.f32 %v1066, %v1073
      %v1088 = vmul.f32 %v1067, %v1073
      %v1089 = vmul.f32 %v1068, %v1073
      %v1090 = vadd.f32 %v1037, %v1074
      %v1091 = vadd.f32 %v1038, %v1075
      %v1092 = vadd.f32 %v1039, %v1076
      %v1093 = vadd.f32 %v1040, %v1077
      %v1094 = vadd.f32 %v1041, %v1078
      %v1095 = vadd.f32 %v1042, %v1079
      %v1096 = vadd.f32 %v1043, %v1080
      %v1097 = vadd.f32 %v1044, %v1081
      %v1098 = vadd.f32 %v1045, %v1082
      %v1099 = vadd.f32 %v1046, %v1083
      %v1100 = vadd.f32 %v1047, %v1084
      %v1101 = vadd.f32 %v1048, %v1085
      %v1102 = vadd.f32 %v1049, %v1086
      %v1103 = vadd.f32 %v1050, %v1087
      %v1104 = vadd.f32 %v1051, %v1088
      %v1105 = vadd.f32 %v1052, %v1089
      %v1106 = vld [vmem:[#allocation2 + $0x2] sm:$0xff]
      %v1107 = vld [vmem:[#allocation2 + $0xa] sm:$0xff]
      %v1108 = vld [vmem:[#allocation2 + $0x1a] sm:$0xff]
      %v1109 = vld [vmem:[#allocation2 + $0x22] sm:$0xff]
      %v1110 = vld [vmem:[#allocation2 + $0x32] sm:$0xff]
      %v1111 = vld [vmem:[#allocation2 + $0x3a] sm:$0xff]
      %v1112 = vld [vmem:[#allocation2 + $0x4a] sm:$0xff]
      %v1113 = vld [vmem:[#allocation2 + $0x52] sm:$0xff]
      %v1114 = vld [vmem:[#allocation2 + $0x62] sm:$0xff]
      %v1115 = vld [vmem:[#allocation2 + $0x6a] sm:$0xff]
      %v1116 = vld [vmem:[#allocation2 + $0x7a] sm:$0xff]
      %v1117 = vld [vmem:[#allocation2 + $0x82] sm:$0xff]
      %v1118 = vld [vmem:[#allocation2 + $0x92] sm:$0xff]
      %v1119 = vld [vmem:[#allocation2 + $0x9a] sm:$0xff]
      %v1120 = vld [vmem:[#allocation2 + $0xaa] sm:$0xff]
      %v1121 = vld [vmem:[#allocation2 + $0xb2] sm:$0xff]
      %v1122 = vld [vmem:[%s5 + $0x2] sm:$0x1]
      %v1123 = vlaneseq
      %v1124 = vshrl.u32 %v1123, 7
      %v1125 = vsub.s32 0, %v1124
      %v1126 = vrot.slane %v1122, %v1125
      %v1127 = vmul.f32 %v1106, %v1126
      %v1128 = vmul.f32 %v1107, %v1126
      %v1129 = vmul.f32 %v1108, %v1126
      %v1130 = vmul.f32 %v1109, %v1126
      %v1131 = vmul.f32 %v1110, %v1126
      %v1132 = vmul.f32 %v1111, %v1126
      %v1133 = vmul.f32 %v1112, %v1126
      %v1134 = vmul.f32 %v1113, %v1126
      %v1135 = vmul.f32 %v1114, %v1126
      %v1136 = vmul.f32 %v1115, %v1126
      %v1137 = vmul.f32 %v1116, %v1126
      %v1138 = vmul.f32 %v1117, %v1126
      %v1139 = vmul.f32 %v1118, %v1126
      %v1140 = vmul.f32 %v1119, %v1126
      %v1141 = vmul.f32 %v1120, %v1126
      %v1142 = vmul.f32 %v1121, %v1126
      %v1143 = vadd.f32 %v1090, %v1127
      %v1144 = vadd.f32 %v1091, %v1128
      %v1145 = vadd.f32 %v1092, %v1129
      %v1146 = vadd.f32 %v1093, %v1130
      %v1147 = vadd.f32 %v1094, %v1131
      %v1148 = vadd.f32 %v1095, %v1132
      %v1149 = vadd.f32 %v1096, %v1133
      %v1150 = vadd.f32 %v1097, %v1134
      %v1151 = vadd.f32 %v1098, %v1135
      %v1152 = vadd.f32 %v1099, %v1136
      %v1153 = vadd.f32 %v1100, %v1137
      %v1154 = vadd.f32 %v1101, %v1138
      %v1155 = vadd.f32 %v1102, %v1139
      %v1156 = vadd.f32 %v1103, %v1140
      %v1157 = vadd.f32 %v1104, %v1141
      %v1158 = vadd.f32 %v1105, %v1142
      %v1159 = vld [vmem:[%s983] sm:$0xff]
      %v1160 = vld [vmem:[%s983 + $0x8] sm:$0xff]
      %v1161 = vld [vmem:[%s983 + $0x18] sm:$0xff]
      %v1162 = vld [vmem:[%s983 + $0x20] sm:$0xff]
      %v1163 = vld [vmem:[%s983 + $0x30] sm:$0xff]
      %v1164 = vld [vmem:[%s983 + $0x38] sm:$0xff]
      %v1165 = vld [vmem:[%s983 + $0x48] sm:$0xff]
      %v1166 = vld [vmem:[%s983 + $0x50] sm:$0xff]
      %v1167 = vld [vmem:[%s983 + $0x60] sm:$0xff]
      %v1168 = vld [vmem:[%s983 + $0x68] sm:$0xff]
      %v1169 = vld [vmem:[%s983 + $0x78] sm:$0xff]
      %v1170 = vld [vmem:[%s983 + $0x80] sm:$0xff]
      %v1171 = vld [vmem:[%s983 + $0x90] sm:$0xff]
      %v1172 = vld [vmem:[%s983 + $0x98] sm:$0xff]
      %v1173 = vld [vmem:[%s983 + $0xa8] sm:$0xff]
      %v1174 = vld [vmem:[%s983 + $0xb0] sm:$0xff]
      %s1175 = scalar_lea.vmem %s5, 4
      %v1176 = vld [vmem:[%s1175] sm:$0x1]
      %v1177 = vlaneseq
      %v1178 = vshrl.u32 %v1177, 7
      %v1179 = vsub.s32 0, %v1178
      %v1180 = vrot.slane %v1176, %v1179
      %v1181 = vmul.f32 %v1159, %v1180
      %v1182 = vmul.f32 %v1160, %v1180
      %v1183 = vmul.f32 %v1161, %v1180
      %v1184 = vmul.f32 %v1162, %v1180
      %v1185 = vmul.f32 %v1163, %v1180
      %v1186 = vmul.f32 %v1164, %v1180
      %v1187 = vmul.f32 %v1165, %v1180
      %v1188 = vmul.f32 %v1166, %v1180
      %v1189 = vmul.f32 %v1167, %v1180
      %v1190 = vmul.f32 %v1168, %v1180
      %v1191 = vmul.f32 %v1169, %v1180
      %v1192 = vmul.f32 %v1170, %v1180
      %v1193 = vmul.f32 %v1171, %v1180
      %v1194 = vmul.f32 %v1172, %v1180
      %v1195 = vmul.f32 %v1173, %v1180
      %v1196 = vmul.f32 %v1174, %v1180
      %v1197 = vadd.f32 %v1143, %v1181
      %v1198 = vadd.f32 %v1144, %v1182
      %v1199 = vadd.f32 %v1145, %v1183
      %v1200 = vadd.f32 %v1146, %v1184
      %v1201 = vadd.f32 %v1147, %v1185
      %v1202 = vadd.f32 %v1148, %v1186
      %v1203 = vadd.f32 %v1149, %v1187
      %v1204 = vadd.f32 %v1150, %v1188
      %v1205 = vadd.f32 %v1151, %v1189
      %v1206 = vadd.f32 %v1152, %v1190
      %v1207 = vadd.f32 %v1153, %v1191
      %v1208 = vadd.f32 %v1154, %v1192
      %v1209 = vadd.f32 %v1155, %v1193
      %v1210 = vadd.f32 %v1156, %v1194
      %v1211 = vadd.f32 %v1157, %v1195
      %v1212 = vadd.f32 %v1158, %v1196
      %v1213 = vld [vmem:[%s983 + $0x1] sm:$0xff]
      %v1214 = vld [vmem:[%s983 + $0x9] sm:$0xff]
      %v1215 = vld [vmem:[%s983 + $0x19] sm:$0xff]
      %v1216 = vld [vmem:[%s983 + $0x21] sm:$0xff]
      %v1217 = vld [vmem:[%s983 + $0x31] sm:$0xff]
      %v1218 = vld [vmem:[%s983 + $0x39] sm:$0xff]
      %v1219 = vld [vmem:[%s983 + $0x49] sm:$0xff]
      %v1220 = vld [vmem:[%s983 + $0x51] sm:$0xff]
      %v1221 = vld [vmem:[%s983 + $0x61] sm:$0xff]
      %v1222 = vld [vmem:[%s983 + $0x69] sm:$0xff]
      %v1223 = vld [vmem:[%s983 + $0x79] sm:$0xff]
      %v1224 = vld [vmem:[%s983 + $0x81] sm:$0xff]
      %v1225 = vld [vmem:[%s983 + $0x91] sm:$0xff]
      %v1226 = vld [vmem:[%s983 + $0x99] sm:$0xff]
      %v1227 = vld [vmem:[%s983 + $0xa9] sm:$0xff]
      %v1228 = vld [vmem:[%s983 + $0xb1] sm:$0xff]
      %v1229 = vld [vmem:[%s1175 + $0x1] sm:$0x1]
      %v1230 = vlaneseq
      %v1231 = vshrl.u32 %v1230, 7
      %v1232 = vsub.s32 0, %v1231
      %v1233 = vrot.slane %v1229, %v1232
      %v1234 = vmul.f32 %v1213, %v1233
      %v1235 = vmul.f32 %v1214, %v1233
      %v1236 = vmul.f32 %v1215, %v1233
      %v1237 = vmul.f32 %v1216, %v1233
      %v1238 = vmul.f32 %v1217, %v1233
      %v1239 = vmul.f32 %v1218, %v1233
      %v1240 = vmul.f32 %v1219, %v1233
      %v1241 = vmul.f32 %v1220, %v1233
      %v1242 = vmul.f32 %v1221, %v1233
      %v1243 = vmul.f32 %v1222, %v1233
      %v1244 = vmul.f32 %v1223, %v1233
      %v1245 = vmul.f32 %v1224, %v1233
      %v1246 = vmul.f32 %v1225, %v1233
      %v1247 = vmul.f32 %v1226, %v1233
      %v1248 = vmul.f32 %v1227, %v1233
      %v1249 = vmul.f32 %v1228, %v1233
      %v1250 = vadd.f32 %v1197, %v1234
      %v1251 = vadd.f32 %v1198, %v1235
      %v1252 = vadd.f32 %v1199, %v1236
      %v1253 = vadd.f32 %v1200, %v1237
      %v1254 = vadd.f32 %v1201, %v1238
      %v1255 = vadd.f32 %v1202, %v1239
      %v1256 = vadd.f32 %v1203, %v1240
      %v1257 = vadd.f32 %v1204, %v1241
      %v1258 = vadd.f32 %v1205, %v1242
      %v1259 = vadd.f32 %v1206, %v1243
      %v1260 = vadd.f32 %v1207, %v1244
      %v1261 = vadd.f32 %v1208, %v1245
      %v1262 = vadd.f32 %v1209, %v1246
      %v1263 = vadd.f32 %v1210, %v1247
      %v1264 = vadd.f32 %v1211, %v1248
      %v1265 = vadd.f32 %v1212, %v1249
      %v1266 = vld [vmem:[%s983 + $0x2] sm:$0xff]
      %v1267 = vld [vmem:[%s983 + $0xa] sm:$0xff]
      %v1268 = vld [vmem:[%s983 + $0x1a] sm:$0xff]
      %v1269 = vld [vmem:[%s983 + $0x22] sm:$0xff]
      %v1270 = vld [vmem:[%s983 + $0x32] sm:$0xff]
      %v1271 = vld [vmem:[%s983 + $0x3a] sm:$0xff]
      %v1272 = vld [vmem:[%s983 + $0x4a] sm:$0xff]
      %v1273 = vld [vmem:[%s983 + $0x52] sm:$0xff]
      %v1274 = vld [vmem:[%s983 + $0x62] sm:$0xff]
      %v1275 = vld [vmem:[%s983 + $0x6a] sm:$0xff]
      %v1276 = vld [vmem:[%s983 + $0x7a] sm:$0xff]
      %v1277 = vld [vmem:[%s983 + $0x82] sm:$0xff]
      %v1278 = vld [vmem:[%s983 + $0x92] sm:$0xff]
      %v1279 = vld [vmem:[%s983 + $0x9a] sm:$0xff]
      %v1280 = vld [vmem:[%s983 + $0xaa] sm:$0xff]
      %v1281 = vld [vmem:[%s983 + $0xb2] sm:$0xff]
      %v1282 = vld [vmem:[%s1175 + $0x2] sm:$0x1]
      %v1283 = vlaneseq
      %v1284 = vshrl.u32 %v1283, 7
      %v1285 = vsub.s32 0, %v1284
      %v1286 = vrot.slane %v1282, %v1285
      %v1287 = vmul.f32 %v1266, %v1286
      %v1288 = vmul.f32 %v1267, %v1286
      %v1289 = vmul.f32 %v1268, %v1286
      %v1290 = vmul.f32 %v1269, %v1286
      %v1291 = vmul.f32 %v1270, %v1286
      %v1292 = vmul.f32 %v1271, %v1286
      %v1293 = vmul.f32 %v1272, %v1286
      %v1294 = vmul.f32 %v1273, %v1286
      %v1295 = vmul.f32 %v1274, %v1286
      %v1296 = vmul.f32 %v1275, %v1286
      %v1297 = vmul.f32 %v1276, %v1286
      %v1298 = vmul.f32 %v1277, %v1286
      %v1299 = vmul.f32 %v1278, %v1286
      %v1300 = vmul.f32 %v1279, %v1286
      %v1301 = vmul.f32 %v1280, %v1286
      %v1302 = vmul.f32 %v1281, %v1286
      %v1303 = vadd.f32 %v1250, %v1287
      %v1304 = vadd.f32 %v1251, %v1288
      %v1305 = vadd.f32 %v1252, %v1289
      %v1306 = vadd.f32 %v1253, %v1290
      %v1307 = vadd.f32 %v1254, %v1291
      %v1308 = vadd.f32 %v1255, %v1292
      %v1309 = vadd.f32 %v1256, %v1293
      %v1310 = vadd.f32 %v1257, %v1294
      %v1311 = vadd.f32 %v1258, %v1295
      %v1312 = vadd.f32 %v1259, %v1296
      %v1313 = vadd.f32 %v1260, %v1297
      %v1314 = vadd.f32 %v1261, %v1298
      %v1315 = vadd.f32 %v1262, %v1299
      %v1316 = vadd.f32 %v1263, %v1300
      %v1317 = vadd.f32 %v1264, %v1301
      %v1318 = vadd.f32 %v1265, %v1302
      %s1319 = scalar_lea.vmem [#allocation2], 48
      %v1320 = vld [vmem:[%s1319] sm:$0xff]
      %v1321 = vld [vmem:[%s1319 + $0x8] sm:$0xff]
      %v1322 = vld [vmem:[%s1319 + $0x18] sm:$0xff]
      %v1323 = vld [vmem:[%s1319 + $0x20] sm:$0xff]
      %v1324 = vld [vmem:[%s1319 + $0x30] sm:$0xff]
      %v1325 = vld [vmem:[%s1319 + $0x38] sm:$0xff]
      %v1326 = vld [vmem:[%s1319 + $0x48] sm:$0xff]
      %v1327 = vld [vmem:[%s1319 + $0x50] sm:$0xff]
      %v1328 = vld [vmem:[%s1319 + $0x60] sm:$0xff]
      %v1329 = vld [vmem:[%s1319 + $0x68] sm:$0xff]
      %v1330 = vld [vmem:[%s1319 + $0x78] sm:$0xff]
      %v1331 = vld [vmem:[%s1319 + $0x80] sm:$0xff]
      %v1332 = vld [vmem:[%s1319 + $0x90] sm:$0xff]
      %v1333 = vld [vmem:[%s1319 + $0x98] sm:$0xff]
      %v1334 = vld [vmem:[%s1319 + $0xa8] sm:$0xff]
      %v1335 = vld [vmem:[%s1319 + $0xb0] sm:$0xff]
      %s1336 = scalar_lea.vmem %s5, 8
      %v1337 = vld [vmem:[%s1336] sm:$0x1]
      %v1338 = vlaneseq
      %v1339 = vshrl.u32 %v1338, 7
      %v1340 = vsub.s32 0, %v1339
      %v1341 = vrot.slane %v1337, %v1340
      %v1342 = vmul.f32 %v1320, %v1341
      %v1343 = vmul.f32 %v1321, %v1341
      %v1344 = vmul.f32 %v1322, %v1341
      %v1345 = vmul.f32 %v1323, %v1341
      %v1346 = vmul.f32 %v1324, %v1341
      %v1347 = vmul.f32 %v1325, %v1341
      %v1348 = vmul.f32 %v1326, %v1341
      %v1349 = vmul.f32 %v1327, %v1341
      %v1350 = vmul.f32 %v1328, %v1341
      %v1351 = vmul.f32 %v1329, %v1341
      %v1352 = vmul.f32 %v1330, %v1341
      %v1353 = vmul.f32 %v1331, %v1341
      %v1354 = vmul.f32 %v1332, %v1341
      %v1355 = vmul.f32 %v1333, %v1341
      %v1356 = vmul.f32 %v1334, %v1341
      %v1357 = vmul.f32 %v1335, %v1341
      %v1358 = vadd.f32 %v1303, %v1342
      %v1359 = vadd.f32 %v1304, %v1343
      %v1360 = vadd.f32 %v1305, %v1344
      %v1361 = vadd.f32 %v1306, %v1345
      %v1362 = vadd.f32 %v1307, %v1346
      %v1363 = vadd.f32 %v1308, %v1347
      %v1364 = vadd.f32 %v1309, %v1348
      %v1365 = vadd.f32 %v1310, %v1349
      %v1366 = vadd.f32 %v1311, %v1350
      %v1367 = vadd.f32 %v1312, %v1351
      %v1368 = vadd.f32 %v1313, %v1352
      %v1369 = vadd.f32 %v1314, %v1353
      %v1370 = vadd.f32 %v1315, %v1354
      %v1371 = vadd.f32 %v1316, %v1355
      %v1372 = vadd.f32 %v1317, %v1356
      %v1373 = vadd.f32 %v1318, %v1357
      %v1374 = vld [vmem:[%s1319 + $0x1] sm:$0xff]
      %v1375 = vld [vmem:[%s1319 + $0x9] sm:$0xff]
      %v1376 = vld [vmem:[%s1319 + $0x19] sm:$0xff]
      %v1377 = vld [vmem:[%s1319 + $0x21] sm:$0xff]
      %v1378 = vld [vmem:[%s1319 + $0x31] sm:$0xff]
      %v1379 = vld [vmem:[%s1319 + $0x39] sm:$0xff]
      %v1380 = vld [vmem:[%s1319 + $0x49] sm:$0xff]
      %v1381 = vld [vmem:[%s1319 + $0x51] sm:$0xff]
      %v1382 = vld [vmem:[%s1319 + $0x61] sm:$0xff]
      %v1383 = vld [vmem:[%s1319 + $0x69] sm:$0xff]
      %v1384 = vld [vmem:[%s1319 + $0x79] sm:$0xff]
      %v1385 = vld [vmem:[%s1319 + $0x81] sm:$0xff]
      %v1386 = vld [vmem:[%s1319 + $0x91] sm:$0xff]
      %v1387 = vld [vmem:[%s1319 + $0x99] sm:$0xff]
      %v1388 = vld [vmem:[%s1319 + $0xa9] sm:$0xff]
      %v1389 = vld [vmem:[%s1319 + $0xb1] sm:$0xff]
      %v1390 = vld [vmem:[%s1336 + $0x1] sm:$0x1]
      %v1391 = vlaneseq
      %v1392 = vshrl.u32 %v1391, 7
      %v1393 = vsub.s32 0, %v1392
      %v1394 = vrot.slane %v1390, %v1393
      %v1395 = vmul.f32 %v1374, %v1394
      %v1396 = vmul.f32 %v1375, %v1394
      %v1397 = vmul.f32 %v1376, %v1394
      %v1398 = vmul.f32 %v1377, %v1394
      %v1399 = vmul.f32 %v1378, %v1394
      %v1400 = vmul.f32 %v1379, %v1394
      %v1401 = vmul.f32 %v1380, %v1394
      %v1402 = vmul.f32 %v1381, %v1394
      %v1403 = vmul.f32 %v1382, %v1394
      %v1404 = vmul.f32 %v1383, %v1394
      %v1405 = vmul.f32 %v1384, %v1394
      %v1406 = vmul.f32 %v1385, %v1394
      %v1407 = vmul.f32 %v1386, %v1394
      %v1408 = vmul.f32 %v1387, %v1394
      %v1409 = vmul.f32 %v1388, %v1394
      %v1410 = vmul.f32 %v1389, %v1394
      %v1411 = vadd.f32 %v1358, %v1395
      %v1412 = vadd.f32 %v1359, %v1396
      %v1413 = vadd.f32 %v1360, %v1397
      %v1414 = vadd.f32 %v1361, %v1398
      %v1415 = vadd.f32 %v1362, %v1399
      %v1416 = vadd.f32 %v1363, %v1400
      %v1417 = vadd.f32 %v1364, %v1401
      %v1418 = vadd.f32 %v1365, %v1402
      %v1419 = vadd.f32 %v1366, %v1403
      %v1420 = vadd.f32 %v1367, %v1404
      %v1421 = vadd.f32 %v1368, %v1405
      %v1422 = vadd.f32 %v1369, %v1406
      %v1423 = vadd.f32 %v1370, %v1407
      %v1424 = vadd.f32 %v1371, %v1408
      %v1425 = vadd.f32 %v1372, %v1409
      %v1426 = vadd.f32 %v1373, %v1410
      %v1427 = vld [vmem:[%s1319 + $0x2] sm:$0xff]
      %v1428 = vld [vmem:[%s1319 + $0xa] sm:$0xff]
      %v1429 = vld [vmem:[%s1319 + $0x1a] sm:$0xff]
      %v1430 = vld [vmem:[%s1319 + $0x22] sm:$0xff]
      %v1431 = vld [vmem:[%s1319 + $0x32] sm:$0xff]
      %v1432 = vld [vmem:[%s1319 + $0x3a] sm:$0xff]
      %v1433 = vld [vmem:[%s1319 + $0x4a] sm:$0xff]
      %v1434 = vld [vmem:[%s1319 + $0x52] sm:$0xff]
      %v1435 = vld [vmem:[%s1319 + $0x62] sm:$0xff]
      %v1436 = vld [vmem:[%s1319 + $0x6a] sm:$0xff]
      %v1437 = vld [vmem:[%s1319 + $0x7a] sm:$0xff]
      %v1438 = vld [vmem:[%s1319 + $0x82] sm:$0xff]
      %v1439 = vld [vmem:[%s1319 + $0x92] sm:$0xff]
      %v1440 = vld [vmem:[%s1319 + $0x9a] sm:$0xff]
      %v1441 = vld [vmem:[%s1319 + $0xaa] sm:$0xff]
      %v1442 = vld [vmem:[%s1319 + $0xb2] sm:$0xff]
      %v1443 = vld [vmem:[%s1336 + $0x2] sm:$0x1]
      %v1444 = vlaneseq
      %v1445 = vshrl.u32 %v1444, 7
      %v1446 = vsub.s32 0, %v1445
      %v1447 = vrot.slane %v1443, %v1446
      %v1448 = vmul.f32 %v1427, %v1447
      %v1449 = vmul.f32 %v1428, %v1447
      %v1450 = vmul.f32 %v1429, %v1447
      %v1451 = vmul.f32 %v1430, %v1447
      %v1452 = vmul.f32 %v1431, %v1447
      %v1453 = vmul.f32 %v1432, %v1447
      %v1454 = vmul.f32 %v1433, %v1447
      %v1455 = vmul.f32 %v1434, %v1447
      %v1456 = vmul.f32 %v1435, %v1447
      %v1457 = vmul.f32 %v1436, %v1447
      %v1458 = vmul.f32 %v1437, %v1447
      %v1459 = vmul.f32 %v1438, %v1447
      %v1460 = vmul.f32 %v1439, %v1447
      %v1461 = vmul.f32 %v1440, %v1447
      %v1462 = vmul.f32 %v1441, %v1447
      %v1463 = vmul.f32 %v1442, %v1447
      %v1464 = vadd.f32 %v1411, %v1448
      %v1465 = vadd.f32 %v1412, %v1449
      %v1466 = vadd.f32 %v1413, %v1450
      %v1467 = vadd.f32 %v1414, %v1451
      %v1468 = vadd.f32 %v1415, %v1452
      %v1469 = vadd.f32 %v1416, %v1453
      %v1470 = vadd.f32 %v1417, %v1454
      %v1471 = vadd.f32 %v1418, %v1455
      %v1472 = vadd.f32 %v1419, %v1456
      %v1473 = vadd.f32 %v1420, %v1457
      %v1474 = vadd.f32 %v1421, %v1458
      %v1475 = vadd.f32 %v1422, %v1459
      %v1476 = vadd.f32 %v1423, %v1460
      %v1477 = vadd.f32 %v1424, %v1461
      %v1478 = vadd.f32 %v1425, %v1462
      %v1479 = vadd.f32 %v1426, %v1463
      %v1480 = vld [vmem:[%s6] sm:$0x1]
      %v1482 = vlaneseq
      %v1483 = vshrl.u32 %v1482, 7
      %v1484 = vsub.s32 0, %v1483
      %v1485 = vrot.slane %v1480, %v1484
      %v1487 = vadd.f32 %v1464, %v1485
      %v1488 = vadd.f32 %v1465, %v1485
      %v1489 = vadd.f32 %v1466, %v1485
      %v1490 = vadd.f32 %v1467, %v1485
      %v1491 = vadd.f32 %v1468, %v1485
      %v1492 = vadd.f32 %v1469, %v1485
      %v1493 = vadd.f32 %v1470, %v1485
      %v1494 = vadd.f32 %v1471, %v1485
      %v1495 = vadd.f32 %v1472, %v1485
      %v1496 = vadd.f32 %v1473, %v1485
      %v1497 = vadd.f32 %v1474, %v1485
      %v1498 = vadd.f32 %v1475, %v1485
      %v1499 = vadd.f32 %v1476, %v1485
      %v1500 = vadd.f32 %v1477, %v1485
      %v1501 = vadd.f32 %v1478, %v1485
      %v1502 = vadd.f32 %v1479, %v1485
      %v1503 = vmul.f32 %v1487, %v1487
      %v1504 = vmul.f32 %v1488, %v1488
      %v1505 = vmul.f32 %v1489, %v1489
      %v1506 = vmul.f32 %v1490, %v1490
      %v1507 = vmul.f32 %v1491, %v1491
      %v1508 = vmul.f32 %v1492, %v1492
      %v1509 = vmul.f32 %v1493, %v1493
      %v1510 = vmul.f32 %v1494, %v1494
      %v1511 = vmul.f32 %v1495, %v1495
      %v1512 = vmul.f32 %v1496, %v1496
      %v1513 = vmul.f32 %v1497, %v1497
      %v1514 = vmul.f32 %v1498, %v1498
      %v1515 = vmul.f32 %v1499, %v1499
      %v1516 = vmul.f32 %v1500, %v1500
      %v1517 = vmul.f32 %v1501, %v1501
      %v1518 = vmul.f32 %v1502, %v1502
      %v1519 = vmul.f32 %v1487, %v1503
      %v1520 = vmul.f32 %v1488, %v1504
      %v1521 = vmul.f32 %v1489, %v1505
      %v1522 = vmul.f32 %v1490, %v1506
      %v1523 = vmul.f32 %v1491, %v1507
      %v1524 = vmul.f32 %v1492, %v1508
      %v1525 = vmul.f32 %v1493, %v1509
      %v1526 = vmul.f32 %v1494, %v1510
      %v1527 = vmul.f32 %v1495, %v1511
      %v1528 = vmul.f32 %v1496, %v1512
      %v1529 = vmul.f32 %v1497, %v1513
      %v1530 = vmul.f32 %v1498, %v1514
      %v1531 = vmul.f32 %v1499, %v1515
      %v1532 = vmul.f32 %v1500, %v1516
      %v1533 = vmul.f32 %v1501, %v1517
      %v1534 = vmul.f32 %v1502, %v1518
      %v1535 = vmul.f32 %v1519, 0.044715
      %v1536 = vmul.f32 %v1520, 0.044715
      %v1537 = vmul.f32 %v1521, 0.044715
      %v1538 = vmul.f32 %v1522, 0.044715
      %v1539 = vmul.f32 %v1523, 0.044715
      %v1540 = vmul.f32 %v1524, 0.044715
      %v1541 = vmul.f32 %v1525, 0.044715
      %v1542 = vmul.f32 %v1526, 0.044715
      %v1543 = vmul.f32 %v1527, 0.044715
      %v1544 = vmul.f32 %v1528, 0.044715
      %v1545 = vmul.f32 %v1529, 0.044715
      %v1546 = vmul.f32 %v1530, 0.044715
      %v1547 = vmul.f32 %v1531, 0.044715
      %v1548 = vmul.f32 %v1532, 0.044715
      %v1549 = vmul.f32 %v1533, 0.044715
      %v1550 = vmul.f32 %v1534, 0.044715
      %v1551 = vadd.f32 %v1487, %v1535
      %v1552 = vadd.f32 %v1488, %v1536
      %v1553 = vadd.f32 %v1489, %v1537
      %v1554 = vadd.f32 %v1490, %v1538
      %v1555 = vadd.f32 %v1491, %v1539
      %v1556 = vadd.f32 %v1492, %v1540
      %v1557 = vadd.f32 %v1493, %v1541
      %v1558 = vadd.f32 %v1494, %v1542
      %v1559 = vadd.f32 %v1495, %v1543
      %v1560 = vadd.f32 %v1496, %v1544
      %v1561 = vadd.f32 %v1497, %v1545
      %v1562 = vadd.f32 %v1498, %v1546
      %v1563 = vadd.f32 %v1499, %v1547
      %v1564 = vadd.f32 %v1500, %v1548
      %v1565 = vadd.f32 %v1501, %v1549
      %v1566 = vadd.f32 %v1502, %v1550
      %v1567 = vmul.f32 %v1551, 0.7978846
      %v1568 = vmul.f32 %v1552, 0.7978846
      %v1569 = vmul.f32 %v1553, 0.7978846
      %v1570 = vmul.f32 %v1554, 0.7978846
      %v1571 = vmul.f32 %v1555, 0.7978846
      %v1572 = vmul.f32 %v1556, 0.7978846
      %v1573 = vmul.f32 %v1557, 0.7978846
      %v1574 = vmul.f32 %v1558, 0.7978846
      %v1575 = vmul.f32 %v1559, 0.7978846
      %v1576 = vmul.f32 %v1560, 0.7978846
      %v1577 = vmul.f32 %v1561, 0.7978846
      %v1578 = vmul.f32 %v1562, 0.7978846
      %v1579 = vmul.f32 %v1563, 0.7978846
      %v1580 = vmul.f32 %v1564, 0.7978846
      %v1581 = vmul.f32 %v1565, 0.7978846
      %v1582 = vmul.f32 %v1566, 0.7978846
      %v1583 = vtanh.pop %v1567
      %v1584 = vtanh.pop %v1568
      %v1585 = vtanh.pop %v1569
      %v1586 = vtanh.pop %v1570
      %v1587 = vtanh.pop %v1571
      %v1588 = vtanh.pop %v1572
      %v1589 = vtanh.pop %v1573
      %v1590 = vtanh.pop %v1574
      %v1591 = vtanh.pop %v1575
      %v1592 = vtanh.pop %v1576
      %v1593 = vtanh.pop %v1577
      %v1594 = vtanh.pop %v1578
      %v1595 = vtanh.pop %v1579
      %v1596 = vtanh.pop %v1580
      %v1597 = vtanh.pop %v1581
      %v1598 = vtanh.pop %v1582
      %v1599 = vadd.f32 %v1583, 1.0
      %v1600 = vadd.f32 %v1584, 1.0
      %v1601 = vadd.f32 %v1585, 1.0
      %v1602 = vadd.f32 %v1586, 1.0
      %v1603 = vadd.f32 %v1587, 1.0
      %v1604 = vadd.f32 %v1588, 1.0
      %v1605 = vadd.f32 %v1589, 1.0
      %v1606 = vadd.f32 %v1590, 1.0
      %v1607 = vadd.f32 %v1591, 1.0
      %v1608 = vadd.f32 %v1592, 1.0
      %v1609 = vadd.f32 %v1593, 1.0
      %v1610 = vadd.f32 %v1594, 1.0
      %v1611 = vadd.f32 %v1595, 1.0
      %v1612 = vadd.f32 %v1596, 1.0
      %v1613 = vadd.f32 %v1597, 1.0
      %v1614 = vadd.f32 %v1598, 1.0
      %v1615 = vmul.f32 %v1599, 0.5
      %v1616 = vmul.f32 %v1600, 0.5
      %v1617 = vmul.f32 %v1601, 0.5
      %v1618 = vmul.f32 %v1602, 0.5
      %v1619 = vmul.f32 %v1603, 0.5
      %v1620 = vmul.f32 %v1604, 0.5
      %v1621 = vmul.f32 %v1605, 0.5
      %v1622 = vmul.f32 %v1606, 0.5
      %v1623 = vmul.f32 %v1607, 0.5
      %v1624 = vmul.f32 %v1608, 0.5
      %v1625 = vmul.f32 %v1609, 0.5
      %v1626 = vmul.f32 %v1610, 0.5
      %v1627 = vmul.f32 %v1611, 0.5
      %v1628 = vmul.f32 %v1612, 0.5
      %v1629 = vmul.f32 %v1613, 0.5
      %v1630 = vmul.f32 %v1614, 0.5
      %v1631 = vmul.f32 %v1487, %v1615
      %v1632 = vmul.f32 %v1488, %v1616
      %v1633 = vmul.f32 %v1489, %v1617
      %v1634 = vmul.f32 %v1490, %v1618
      %v1635 = vmul.f32 %v1491, %v1619
      %v1636 = vmul.f32 %v1492, %v1620
      %v1637 = vmul.f32 %v1493, %v1621
      %v1638 = vmul.f32 %v1494, %v1622
      %v1639 = vmul.f32 %v1495, %v1623
      %v1640 = vmul.f32 %v1496, %v1624
      %v1641 = vmul.f32 %v1497, %v1625
      %v1642 = vmul.f32 %v1498, %v1626
      %v1643 = vmul.f32 %v1499, %v1627
      %v1644 = vmul.f32 %v1500, %v1628
      %v1645 = vmul.f32 %v1501, %v1629
      %v1646 = vmul.f32 %v1502, %v1630
      %v1647 = vld [vmem:[%s7] sm:$0xff]
      %v1648 = vld [vmem:[%s7 + $0x8] sm:$0xff]
      %v1649 = vld [vmem:[%s7 + $0x10] sm:$0xff]
      %v1650 = vld [vmem:[%s7 + $0x18] sm:$0xff]
      %v1651 = vld [vmem:[%s7 + $0x20] sm:$0xff]
      %v1652 = vld [vmem:[%s7 + $0x28] sm:$0xff]
      %v1653 = vld [vmem:[%s7 + $0x30] sm:$0xff]
      %v1654 = vld [vmem:[%s7 + $0x38] sm:$0xff]
      %v1655 = vld [vmem:[%s7 + $0x40] sm:$0xff]
      %v1656 = vld [vmem:[%s7 + $0x48] sm:$0xff]
      %v1657 = vld [vmem:[%s7 + $0x50] sm:$0xff]
      %v1658 = vld [vmem:[%s7 + $0x58] sm:$0xff]
      %v1659 = vld [vmem:[%s7 + $0x60] sm:$0xff]
      %v1660 = vld [vmem:[%s7 + $0x68] sm:$0xff]
      %v1661 = vld [vmem:[%s7 + $0x70] sm:$0xff]
      %v1662 = vld [vmem:[%s7 + $0x78] sm:$0xff]
      %v1663 = vld [vmem:[%s8] sm:$0x1]
      %v1665 = vlaneseq
      %v1666 = vshrl.u32 %v1665, 7
      %v1667 = vsub.s32 0, %v1666
      %v1668 = vrot.slane %v1663, %v1667
      %1670 = vmatprep.subr.mxu0 0.0
      %1671 = vmatpush1.msra.mxu0 %v1647
      %1672 = vmatprep.subr.mxu0 0.0
      %1673 = vmatpush1.msra.mxu0 %v1648
      %1674 = vmatprep.subr.mxu0 0.0
      %1675 = vmatpush1.msra.mxu0 %v1649
      %1676 = vmatprep.subr.mxu0 0.0
      %1677 = vmatpush1.msra.mxu0 %v1650
      %1678 = vmatprep.subr.mxu0 0.0
      %1679 = vmatpush1.msra.mxu0 %v1651
      %1680 = vmatprep.subr.mxu0 0.0
      %1681 = vmatpush1.msra.mxu0 %v1652
      %1682 = vmatprep.subr.mxu0 0.0
      %1683 = vmatpush1.msra.mxu0 %v1653
      %1684 = vmatprep.subr.mxu0 0.0
      %1685 = vmatpush1.msra.mxu0 %v1654
      %1686 = vmatprep.subr.mxu0 0.0
      %1687 = vmatpush1.msra.mxu0 %v1655
      %1688 = vmatprep.subr.mxu0 0.0
      %1689 = vmatpush1.msra.mxu0 %v1656
      %1690 = vmatprep.subr.mxu0 0.0
      %1691 = vmatpush1.msra.mxu0 %v1657
      %1692 = vmatprep.subr.mxu0 0.0
      %1693 = vmatpush1.msra.mxu0 %v1658
      %1694 = vmatprep.subr.mxu0 0.0
      %1695 = vmatpush1.msra.mxu0 %v1659
      %1696 = vmatprep.subr.mxu0 0.0
      %1697 = vmatpush1.msra.mxu0 %v1660
      %1698 = vmatprep.subr.mxu0 0.0
      %1699 = vmatpush1.msra.mxu0 %v1661
      %1700 = vmatprep.subr.mxu0 0.0
      %1701 = vmatpush1.msra.mxu0 %v1662
      %1702 = vmatprep.subr.mxu0 0.0
      %1703 = vmatpush1.msra.mxu0 0.0
      %1704 = vmatprep.subr.mxu0 0.0
      %1705 = vmatpush1.msra.mxu0 0.0
      %1706 = vmatprep.subr.mxu0 0.0
      %1707 = vmatpush1.msra.mxu0 0.0
      %1708 = vmatprep.subr.mxu0 0.0
      %1709 = vmatpush1.msra.mxu0 0.0
      %1710 = vmatprep.subr.mxu0 0.0
      %1711 = vmatpush1.msra.mxu0 0.0
      %1712 = vmatprep.subr.mxu0 0.0
      %1713 = vmatpush1.msra.mxu0 0.0
      %1714 = vmatprep.subr.mxu0 0.0
      %1715 = vmatpush1.msra.mxu0 0.0
      %1716 = vmatprep.subr.mxu0 0.0
      %1717 = vmatpush1.msra.mxu0 0.0
      %1718 = vmatprep.subr.mxu0 0.0
      %1719 = vmatpush1.msra.mxu0 0.0
      %1720 = vmatprep.subr.mxu0 0.0
      %1721 = vmatpush1.msra.mxu0 0.0
      %1722 = vmatprep.subr.mxu0 0.0
      %1723 = vmatpush1.msra.mxu0 0.0
      %1724 = vmatprep.subr.mxu0 0.0
      %1725 = vmatpush1.msra.mxu0 0.0
      %1726 = vmatprep.subr.mxu0 0.0
      %1727 = vmatpush1.msra.mxu0 0.0
      %1728 = vmatprep.subr.mxu0 0.0
      %1729 = vmatpush1.msra.mxu0 0.0
      %1730 = vmatprep.subr.mxu0 0.0
      %1731 = vmatpush1.msra.mxu0 0.0
      %1732 = vmatprep.subr.mxu0 0.0
      %1733 = vmatpush1.msra.mxu0 0.0
      %1734 = vmatprep.mubr.f32.mxu0 0.0
      %1735 = vmatmul.mubr.f32.gmra.mrb[0].mxu0 %v1631
      %v1736 = vpop.f32.mrb[0].mxu0
      %v1737 = vadd.f32 %v1668, %v1736
      %v1738 = vpop.f32.mrb[0].mxu0
      %1739 = vmatprep.mubr.f32.mxu0 0.0
      %1740 = vmatmul.mubr.f32.gmra.mrb[0].mxu0 %v1632
      %v1741 = vpop.f32.mrb[0].mxu0
      %v1742 = vadd.f32 %v1668, %v1741
      %v1743 = vpop.f32.mrb[0].mxu0
      %1744 = vmatprep.mubr.f32.mxu0 0.0
      %1745 = vmatmul.mubr.f32.gmra.mrb[0].mxu0 %v1633
      %v1746 = vpop.f32.mrb[0].mxu0
      %v1747 = vadd.f32 %v1668, %v1746
      %v1748 = vpop.f32.mrb[0].mxu0
      %1749 = vmatprep.mubr.f32.mxu0 0.0
      %1750 = vmatmul.mubr.f32.gmra.mrb[0].mxu0 %v1634
      %v1751 = vpop.f32.mrb[0].mxu0
      %v1752 = vadd.f32 %v1668, %v1751
      %v1753 = vpop.f32.mrb[0].mxu0
      %1754 = vmatprep.mubr.f32.mxu0 0.0
      %1755 = vmatmul.mubr.f32.gmra.mrb[0].mxu0 %v1635
      %v1756 = vpop.f32.mrb[0].mxu0
      %v1757 = vadd.f32 %v1668, %v1756
      %v1758 = vpop.f32.mrb[0].mxu0
      %1759 = vmatprep.mubr.f32.mxu0 0.0
      %1760 = vmatmul.mubr.f32.gmra.mrb[0].mxu0 %v1636
      %v1761 = vpop.f32.mrb[0].mxu0
      %v1762 = vadd.f32 %v1668, %v1761
      %v1763 = vpop.f32.mrb[0].mxu0
      %1764 = vmatprep.mubr.f32.mxu0 0.0
      %1765 = vmatmul.mubr.f32.gmra.mrb[0].mxu0 %v1637
      %v1766 = vpop.f32.mrb[0].mxu0
      %v1767 = vadd.f32 %v1668, %v1766
      %v1768 = vpop.f32.mrb[0].mxu0
      %1769 = vmatprep.mubr.f32.mxu0 0.0
      %1770 = vmatmul.mubr.f32.gmra.mrb[0].mxu0 %v1638
      %v1771 = vpop.f32.mrb[0].mxu0
      %v1772 = vadd.f32 %v1668, %v1771
      %v1773 = vpop.f32.mrb[0].mxu0
      %1774 = vmatprep.mubr.f32.mxu0 0.0
      %1775 = vmatmul.mubr.f32.gmra.mrb[0].mxu0 %v1639
      %v1776 = vpop.f32.mrb[0].mxu0
      %v1777 = vadd.f32 %v1668, %v1776
      %v1778 = vpop.f32.mrb[0].mxu0
      %1779 = vmatprep.mubr.f32.mxu0 0.0
      %1780 = vmatmul.mubr.f32.gmra.mrb[0].mxu0 %v1640
      %v1781 = vpop.f32.mrb[0].mxu0
      %v1782 = vadd.f32 %v1668, %v1781
      %v1783 = vpop.f32.mrb[0].mxu0
      %1784 = vmatprep.mubr.f32.mxu0 0.0
      %1785 = vmatmul.mubr.f32.gmra.mrb[0].mxu0 %v1641
      %v1786 = vpop.f32.mrb[0].mxu0
      %v1787 = vadd.f32 %v1668, %v1786
      %v1788 = vpop.f32.mrb[0].mxu0
      %1789 = vmatprep.mubr.f32.mxu0 0.0
      %1790 = vmatmul.mubr.f32.gmra.mrb[0].mxu0 %v1642
      %v1791 = vpop.f32.mrb[0].mxu0
      %v1792 = vadd.f32 %v1668, %v1791
      %v1793 = vpop.f32.mrb[0].mxu0
      %1794 = vmatprep.mubr.f32.mxu0 0.0
      %1795 = vmatmul.mubr.f32.gmra.mrb[0].mxu0 %v1643
      %v1796 = vpop.f32.mrb[0].mxu0
      %v1797 = vadd.f32 %v1668, %v1796
      %v1798 = vpop.f32.mrb[0].mxu0
      %1799 = vmatprep.mubr.f32.mxu0 0.0
      %1800 = vmatmul.mubr.f32.gmra.mrb[0].mxu0 %v1644
      %v1801 = vpop.f32.mrb[0].mxu0
      %v1802 = vadd.f32 %v1668, %v1801
      %v1803 = vpop.f32.mrb[0].mxu0
      %1804 = vmatprep.mubr.f32.mxu0 0.0
      %1805 = vmatmul.mubr.f32.gmra.mrb[0].mxu0 %v1645
      %v1806 = vpop.f32.mrb[0].mxu0
      %v1807 = vadd.f32 %v1668, %v1806
      %v1808 = vpop.f32.mrb[0].mxu0
      %1809 = vmatprep.mubr.f32.mxu0 0.0
      %1810 = vmatmul.mubr.f32.gmra.mrb[0].mxu0 %v1646
      %v1811 = vpop.f32.mrb[0].mxu0
      %v1812 = vadd.f32 %v1668, %v1811
      %v1813 = vpop.f32.mrb[0].mxu0
      %1814 = vdwg.mxu0
      %v1815 = vadd.f32 %v589, %v1737
      %v1816 = vadd.f32 %v590, %v1742
      %v1817 = vadd.f32 %v591, %v1747
      %v1818 = vadd.f32 %v592, %v1752
      %v1819 = vadd.f32 %v593, %v1757
      %v1820 = vadd.f32 %v594, %v1762
      %v1821 = vadd.f32 %v595, %v1767
      %v1822 = vadd.f32 %v596, %v1772
      %v1823 = vadd.f32 %v597, %v1777
      %v1824 = vadd.f32 %v598, %v1782
      %v1825 = vadd.f32 %v599, %v1787
      %v1826 = vadd.f32 %v600, %v1792
      %v1827 = vadd.f32 %v601, %v1797
      %v1828 = vadd.f32 %v602, %v1802
      %v1829 = vadd.f32 %v603, %v1807
      %v1830 = vadd.f32 %v604, %v1812
      %1831 = vst.msk [vmem:[%s332] sm:$0xff] %vm349, %v1815
      %1832 = vst.msk [vmem:[%s332 + $0x8] sm:$0xff] %vm349, %v1816
      %1833 = vst.msk [vmem:[%s332 + $0x10] sm:$0xff] %vm349, %v1817
      %1834 = vst.msk [vmem:[%s332 + $0x18] sm:$0xff] %vm349, %v1818
      %1835 = vst.msk [vmem:[%s332 + $0x20] sm:$0xff] %vm349, %v1819
      %1836 = vst.msk [vmem:[%s332 + $0x28] sm:$0xff] %vm349, %v1820
      %1837 = vst.msk [vmem:[%s332 + $0x30] sm:$0xff] %vm349, %v1821
      %1838 = vst.msk [vmem:[%s332 + $0x38] sm:$0xff] %vm349, %v1822
      %1839 = vst.msk [vmem:[%s332 + $0x40] sm:$0xff] %vm349, %v1823
      %1840 = vst.msk [vmem:[%s332 + $0x48] sm:$0xff] %vm349, %v1824
      %1841 = vst.msk [vmem:[%s332 + $0x50] sm:$0xff] %vm349, %v1825
      %1842 = vst.msk [vmem:[%s332 + $0x58] sm:$0xff] %vm349, %v1826
      %1843 = vst.msk [vmem:[%s332 + $0x60] sm:$0xff] %vm349, %v1827
      %1844 = vst.msk [vmem:[%s332 + $0x68] sm:$0xff] %vm349, %v1828
      %1845 = vst.msk [vmem:[%s332 + $0x70] sm:$0xff] %vm349, %v1829
      %1846 = vst.msk [vmem:[%s332 + $0x78] sm:$0xff] %vm349, %v1830
      %p1847 = scmp.lt.s32.totalorder %s20, 1
      %s1848 = scalar_select %p1847, %s20, 1
      %s1849 = smul.addr %s1848, 16
      %s1850 = smul.addr %s1849, 8
      %s1851 = scalar_lea.vmem %s9, %s1850
      // Predicated region
      $region57: #{scse_block_forward.4} parent=55 // pred_check
        %p1852 = pneg %p232
      $region58: #{scse_block_forward.4} parent=55 // pred_check_branch
        %1854 = sbr.rel (%p1852) target = $region60
      $region59: #{scse_block_forward.4} parent=55 // pred_region
        _
      $region60: #{scse_block_forward.4} parent=55 // pred_fallthru
        _
    $region56: #{scse_block_forward.4} parent=5 // pred_fallthru
      _
    %p1855 = scmp.le.s32.totalorder 2, %s15
    // Predicated region
    $region61: #{scse_block_forward.4} parent=5 // pred_check
      %p1856 = pneg %p1855
    $region62: #{scse_block_forward.4} parent=5 // pred_check_branch
      %1858 = sbr.rel (%p1856) target = $region64
    $region63: #{scse_block_forward.4} parent=5 // pred_region
      %s1859 = ssub.s32 %s15, 2
      // Predicated region
      $region65: #{scse_block_forward.4} parent=63 // pred_check
        %p1860 = pneg %p238
      $region66: #{scse_block_forward.4} parent=63 // pred_check_branch
        %1862 = sbr.rel (%p1860) target = $region68
      $region67: #{scse_block_forward.4} parent=63 // pred_region
        %p1863 = scmp.lt.s32.totalorder %s21, 1
        %s1864 = scalar_select %p1863, %s21, 1
        %s1865 = smul.addr %s1864, 16
        %s1866 = smul.addr %s1865, 8
        %s1867 = scalar_lea.vmem %s9, %s1866
      $region68: #{scse_block_forward.4} parent=63 // pred_fallthru
        _
    $region64: #{scse_block_forward.4} parent=5 // pred_fallthru
      _
  $region6: #{scse_block_forward.4} parent=0 // loop_footer
    %s19 = sadd.s32 1, %s15
  $region7: #{scse_block_forward.4} parent=0 // loop_footer_branch
    %14 = sbr.rel target = $region3
  $region8: #{scse_block_forward.4} parent=0 // loop_exit
    _

</llo_original>
